<compile_context>
chip_gen: v5e
topology: v5e:2x2
jax: 0.10.0
libtpu: 0.0.40
codegen_flags: <defaults>
</compile_context>

<pallas_src>
import math
import jax
import jax.numpy as jnp
from jax.experimental import pallas as pl
from jax.experimental.pallas import tpu as pltpu

# ----------------------------- model dims -----------------------------------
D_MODEL = 32
N_HEADS = 4
D_HEAD = D_MODEL // N_HEADS
D_FF = 64
N_LAYERS = 2
SRC_VOCAB = 16
TRG_VOCAB = 16
EPS = 1e-6
ATTN_SCALE = 1.0 / math.sqrt(D_HEAD)
NEG_INF = -1e9

# Parameter ordering for the fused kernel (per-layer params stacked on axis 0).
PARAM_ORDER = (
    # encoder
    "e_wqkv", "e_bqkv", "e_wo", "e_bo",
    "e_w1", "e_b1", "e_w2", "e_b2",
    "e_ln1g", "e_ln1b", "e_ln2g", "e_ln2b",
    "e_lnfg", "e_lnfb",
    # decoder
    "d_wqkv", "d_bqkv", "d_wos", "d_bos",
    "d_wqc", "d_bqc", "d_wkvc", "d_bkvc", "d_woc", "d_boc",
    "d_w1", "d_b1", "d_w2", "d_b2",
    "d_ln1g", "d_ln1b", "d_ln2g", "d_ln2b", "d_ln3g", "d_ln3b",
    "d_lnfg", "d_lnfb",
)


# ----------------------------- fused kernel ----------------------------------
def _transformer_kernel(
    # activations & additive attention biases
    xsrc_ref, xtrg_ref, sbias_ref, tbias_ref, cbias_ref,
    # encoder params (stacked over layers on axis 0)
    e_wqkv_ref, e_bqkv_ref, e_wo_ref, e_bo_ref,
    e_w1_ref, e_b1_ref, e_w2_ref, e_b2_ref,
    e_ln1g_ref, e_ln1b_ref, e_ln2g_ref, e_ln2b_ref,
    e_lnfg_ref, e_lnfb_ref,
    # decoder params (stacked over layers on axis 0)
    d_wqkv_ref, d_bqkv_ref, d_wos_ref, d_bos_ref,
    d_wqc_ref, d_bqc_ref, d_wkvc_ref, d_bkvc_ref, d_woc_ref, d_boc_ref,
    d_w1_ref, d_b1_ref, d_w2_ref, d_b2_ref,
    d_ln1g_ref, d_ln1b_ref, d_ln2g_ref, d_ln2b_ref, d_ln3g_ref, d_ln3b_ref,
    d_lnfg_ref, d_lnfb_ref,
    # output
    o_ref,
):
    batch, s_src, _ = sbias_ref.shape
    s_trg = tbias_ref.shape[1]

    def layer_norm(x, g, b):
        # fp32 statistics on the VPU (v5e has no bf16 VPU path).
        mean = jnp.mean(x, axis=-1, keepdims=True)
        var = jnp.mean((x - mean) ** 2, axis=-1, keepdims=True)
        return (x - mean) * jax.lax.rsqrt(var + EPS) * g + b

    def mm(x, w):
        # bf16 operands on the MXU, fp32 accumulation.
        return jnp.dot(x.astype(jnp.bfloat16), w.astype(jnp.bfloat16),
                       preferred_element_type=jnp.float32)

    def attention(q, k, v, bias, b, sq, sk):
        # q: (b*sq, D), k/v: (b*sk, D), bias: (b, sq, sk) additive (0 / -1e9).
        q3 = q.reshape(b, sq, D_MODEL)
        k3 = k.reshape(b, sk, D_MODEL)
        v3 = v.reshape(b, sk, D_MODEL)
        heads = []
        for h in range(N_HEADS):
            lo = h * D_HEAD
            qh = q3[:, :, lo:lo + D_HEAD].astype(jnp.bfloat16)
            kh = k3[:, :, lo:lo + D_HEAD].astype(jnp.bfloat16)
            vh = v3[:, :, lo:lo + D_HEAD].astype(jnp.bfloat16)
            # contraction on the last dim of both operands -> no k transpose.
            s = jnp.einsum("bqd,bkd->bqk", qh, kh,
                           preferred_element_type=jnp.float32)
            s = s * ATTN_SCALE + bias
            s = s - jnp.max(s, axis=-1, keepdims=True)
            p = jnp.exp(s)
            p = p * pl.reciprocal(jnp.sum(p, axis=-1, keepdims=True),
                                  approx=True)
            heads.append(jnp.einsum("bqk,bkd->bqd", p.astype(jnp.bfloat16), vh,
                                    preferred_element_type=jnp.float32))
        ctx = jnp.concatenate(heads, axis=-1)          # (b, sq, D)
        return ctx.reshape(b * sq, D_MODEL)

    def self_attn(x, bias, wqkv, bqkv, wo, bo, b, s):
        qkv = mm(x, wqkv) + bqkv                        # fused Q,K,V projection
        q = qkv[:, 0 * D_MODEL:1 * D_MODEL]
        k = qkv[:, 1 * D_MODEL:2 * D_MODEL]
        v = qkv[:, 2 * D_MODEL:3 * D_MODEL]
        ctx = attention(q, k, v, bias, b, s, s)
        return mm(ctx, wo) + bo

    def cross_attn(x, mem, bias, wq, bq, wkv, bkv, wo, bo, b, sq, sk):
        q = mm(x, wq) + bq
        kv = mm(mem, wkv) + bkv                         # fused K,V projection
        k = kv[:, :D_MODEL]
        v = kv[:, D_MODEL:]
        ctx = attention(q, k, v, bias, b, sq, sk)
        return mm(ctx, wo) + bo

    def feed_forward(x, w1, b1, w2, b2):
        h = jnp.maximum(mm(x, w1) + b1, 0.0)
        return mm(h, w2) + b2

    # ------------------------------ encoder ----------------------------------
    x = xsrc_ref[...]
    sbias = sbias_ref[...]
    for l in range(N_LAYERS):
        y = layer_norm(x, e_ln1g_ref[l], e_ln1b_ref[l])
        x = x + self_attn(y, sbias, e_wqkv_ref[l], e_bqkv_ref[l],
                          e_wo_ref[l], e_bo_ref[l], batch, s_src)
        y = layer_norm(x, e_ln2g_ref[l], e_ln2b_ref[l])
        x = x + feed_forward(y, e_w1_ref[l], e_b1_ref[l],
                             e_w2_ref[l], e_b2_ref[l])
    memory = layer_norm(x, e_lnfg_ref[...], e_lnfb_ref[...])

    # ------------------------------ decoder ----------------------------------
    x = xtrg_ref[...]
    tbias = tbias_ref[...]
    cbias = cbias_ref[...]
    for l in range(N_LAYERS):
        y = layer_norm(x, d_ln1g_ref[l], d_ln1b_ref[l])
        x = x + self_attn(y, tbias, d_wqkv_ref[l], d_bqkv_ref[l],
                          d_wos_ref[l], d_bos_ref[l], batch, s_trg)
        y = layer_norm(x, d_ln2g_ref[l], d_ln2b_ref[l])
        x = x + cross_attn(y, memory, cbias, d_wqc_ref[l], d_bqc_ref[l],
                           d_wkvc_ref[l], d_bkvc_ref[l],
                           d_woc_ref[l], d_boc_ref[l], batch, s_trg, s_src)
        y = layer_norm(x, d_ln3g_ref[l], d_ln3b_ref[l])
        x = x + feed_forward(y, d_w1_ref[l], d_b1_ref[l],
                             d_w2_ref[l], d_b2_ref[l])
    o_ref[...] = layer_norm(x, d_lnfg_ref[...], d_lnfb_ref[...])


# ----------------------------- JAX-side glue ----------------------------------
def embed(table, ids, pe):
    # TODO(synk): embedding gather kept in plain JAX (jnp.take) — glue, not hot path.
    B, S = ids.shape
    x = jnp.take(table, ids, axis=0) * math.sqrt(D_MODEL) + pe[:S][None, :, :]
    return x.reshape(B * S, D_MODEL).astype(jnp.float32)


def transformer_forward(params, src, trg, src_mask, trg_mask):
    B, S_src = src.shape
    _, S_trg = trg.shape

    x_src = embed(params["src_emb"], src, params["pe"])
    x_trg = embed(params["trg_emb"], trg, params["pe"])

    # Additive attention biases (0 keep / -1e9 masked), computed once and
    # shared by every head and every layer inside the kernel.
    sbias = jnp.where(jnp.broadcast_to(src_mask, (B, S_src, S_src)) == 0,
                      NEG_INF, 0.0).astype(jnp.float32)
    tbias = jnp.where(trg_mask == 0, NEG_INF, 0.0).astype(jnp.float32)
    cbias = jnp.where(jnp.broadcast_to(src_mask, (B, S_trg, S_src)) == 0,
                      NEG_INF, 0.0).astype(jnp.float32)

    inputs = [x_src, x_trg, sbias, tbias, cbias] + [params[k] for k in PARAM_ORDER]
    vmem = pl.BlockSpec(memory_space=pltpu.MemorySpace.VMEM)

    out = pl.pallas_call(
        _transformer_kernel,
        out_shape=jax.ShapeDtypeStruct((B * S_trg, D_MODEL), jnp.float32),
        in_specs=[vmem] * len(inputs),
        out_specs=vmem,
    )(*inputs)
    return out.reshape(B, S_trg, D_MODEL)


# ----------------------------- parameter init ---------------------------------
def positional_encoding(max_len, d):
    pos = jnp.arange(max_len, dtype=jnp.float32)[:, None]
    div = jnp.exp(
        jnp.arange(0, d, 2, dtype=jnp.float32) * (-math.log(10000.0) / d)
    )
    pe = jnp.zeros((max_len, d), jnp.float32)
    pe = pe.at[:, 0::2].set(jnp.sin(pos * div))
    pe = pe.at[:, 1::2].set(jnp.cos(pos * div))
    return pe


def init_params(key, max_len=64):
    keys = iter(jax.random.split(key, 128))

    def w(din, dout):
        return (jax.random.normal(next(keys), (din, dout), jnp.float32)
                / math.sqrt(din))

    def stack_w(din, dout):
        return jnp.stack([w(din, dout) for _ in range(N_LAYERS)], axis=0)

    def zeros(dout):
        return jnp.zeros((N_LAYERS, 1, dout), jnp.float32)

    def ones(dout):
        return jnp.ones((N_LAYERS, 1, dout), jnp.float32)

    return dict(
        src_emb=jax.random.normal(next(keys), (SRC_VOCAB, D_MODEL), jnp.float32),
        trg_emb=jax.random.normal(next(keys), (TRG_VOCAB, D_MODEL), jnp.float32),
        pe=positional_encoding(max_len, D_MODEL),
        # encoder (fused QKV)
        e_wqkv=stack_w(D_MODEL, 3 * D_MODEL), e_bqkv=zeros(3 * D_MODEL),
        e_wo=stack_w(D_MODEL, D_MODEL), e_bo=zeros(D_MODEL),
        e_w1=stack_w(D_MODEL, D_FF), e_b1=zeros(D_FF),
        e_w2=stack_w(D_FF, D_MODEL), e_b2=zeros(D_MODEL),
        e_ln1g=ones(D_MODEL), e_ln1b=zeros(D_MODEL),
        e_ln2g=ones(D_MODEL), e_ln2b=zeros(D_MODEL),
        e_lnfg=jnp.ones((1, D_MODEL), jnp.float32),
        e_lnfb=jnp.zeros((1, D_MODEL), jnp.float32),
        # decoder (fused self QKV, fused cross KV)
        d_wqkv=stack_w(D_MODEL, 3 * D_MODEL), d_bqkv=zeros(3 * D_MODEL),
        d_wos=stack_w(D_MODEL, D_MODEL), d_bos=zeros(D_MODEL),
        d_wqc=stack_w(D_MODEL, D_MODEL), d_bqc=zeros(D_MODEL),
        d_wkvc=stack_w(D_MODEL, 2 * D_MODEL), d_bkvc=zeros(2 * D_MODEL),
        d_woc=stack_w(D_MODEL, D_MODEL), d_boc=zeros(D_MODEL),
        d_w1=stack_w(D_MODEL, D_FF), d_b1=zeros(D_FF),
        d_w2=stack_w(D_FF, D_MODEL), d_b2=zeros(D_MODEL),
        d_ln1g=ones(D_MODEL), d_ln1b=zeros(D_MODEL),
        d_ln2g=ones(D_MODEL), d_ln2b=zeros(D_MODEL),
        d_ln3g=ones(D_MODEL), d_ln3b=zeros(D_MODEL),
        d_lnfg=jnp.ones((1, D_MODEL), jnp.float32),
        d_lnfb=jnp.zeros((1, D_MODEL), jnp.float32),
    )


# ----------------------------- main -------------------------------------------
if __name__ == "__main__":
    key = jax.random.PRNGKey(0)
    kp, ks, kt = jax.random.split(key, 3)

    B, S_SRC, S_TRG = 2, 8, 8
    params = init_params(kp)

    src = jax.random.randint(ks, (B, S_SRC), 0, SRC_VOCAB, dtype=jnp.int32)
    trg = jax.random.randint(kt, (B, S_TRG), 0, TRG_VOCAB, dtype=jnp.int32)
    src_mask = jnp.ones((B, 1, S_SRC), jnp.float32)                    # all tokens valid
    trg_mask = jnp.tril(jnp.ones((S_TRG, S_TRG), jnp.float32))[None]   # causal
    trg_mask = jnp.broadcast_to(trg_mask, (B, S_TRG, S_TRG))

    fwd = jax.jit(transformer_forward)
    out = fwd(params, src, trg, src_mask, trg_mask)
    out = jax.block_until_ready(out)

    assert out.shape == (B, S_TRG, D_MODEL)
    assert bool(jnp.all(jnp.isfinite(out)))
    print("KERNEL_OK")
</pallas_src>

<mosaic_0001>
module attributes {stable_mosaic.version = 11 : i64} {
  func.func @_transformer_kernel(%arg0: memref<16x32xf32, #tpu.memory_space<vmem>>, %arg1: memref<16x32xf32, #tpu.memory_space<vmem>>, %arg2: memref<2x8x8xf32, #tpu.memory_space<vmem>>, %arg3: memref<2x8x8xf32, #tpu.memory_space<vmem>>, %arg4: memref<2x8x8xf32, #tpu.memory_space<vmem>>, %arg5: memref<2x32x96xf32, #tpu.memory_space<vmem>>, %arg6: memref<2x1x96xf32, #tpu.memory_space<vmem>>, %arg7: memref<2x32x32xf32, #tpu.memory_space<vmem>>, %arg8: memref<2x1x32xf32, #tpu.memory_space<vmem>>, %arg9: memref<2x32x64xf32, #tpu.memory_space<vmem>>, %arg10: memref<2x1x64xf32, #tpu.memory_space<vmem>>, %arg11: memref<2x64x32xf32, #tpu.memory_space<vmem>>, %arg12: memref<2x1x32xf32, #tpu.memory_space<vmem>>, %arg13: memref<2x1x32xf32, #tpu.memory_space<vmem>>, %arg14: memref<2x1x32xf32, #tpu.memory_space<vmem>>, %arg15: memref<2x1x32xf32, #tpu.memory_space<vmem>>, %arg16: memref<2x1x32xf32, #tpu.memory_space<vmem>>, %arg17: memref<1x32xf32, #tpu.memory_space<vmem>>, %arg18: memref<1x32xf32, #tpu.memory_space<vmem>>, %arg19: memref<2x32x96xf32, #tpu.memory_space<vmem>>, %arg20: memref<2x1x96xf32, #tpu.memory_space<vmem>>, %arg21: memref<2x32x32xf32, #tpu.memory_space<vmem>>, %arg22: memref<2x1x32xf32, #tpu.memory_space<vmem>>, %arg23: memref<2x32x32xf32, #tpu.memory_space<vmem>>, %arg24: memref<2x1x32xf32, #tpu.memory_space<vmem>>, %arg25: memref<2x32x64xf32, #tpu.memory_space<vmem>>, %arg26: memref<2x1x64xf32, #tpu.memory_space<vmem>>, %arg27: memref<2x32x32xf32, #tpu.memory_space<vmem>>, %arg28: memref<2x1x32xf32, #tpu.memory_space<vmem>>, %arg29: memref<2x32x64xf32, #tpu.memory_space<vmem>>, %arg30: memref<2x1x64xf32, #tpu.memory_space<vmem>>, %arg31: memref<2x64x32xf32, #tpu.memory_space<vmem>>, %arg32: memref<2x1x32xf32, #tpu.memory_space<vmem>>, %arg33: memref<2x1x32xf32, #tpu.memory_space<vmem>>, %arg34: memref<2x1x32xf32, #tpu.memory_space<vmem>>, %arg35: memref<2x1x32xf32, #tpu.memory_space<vmem>>, %arg36: memref<2x1x32xf32, #tpu.memory_space<vmem>>, %arg37: memref<2x1x32xf32, #tpu.memory_space<vmem>>, %arg38: memref<2x1x32xf32, #tpu.memory_space<vmem>>, %arg39: memref<1x32xf32, #tpu.memory_space<vmem>>, %arg40: memref<1x32xf32, #tpu.memory_space<vmem>>, %arg41: memref<16x32xf32, #tpu.memory_space<vmem>>) attributes {dimension_semantics = [], scalar_prefetch = 0 : i64, scratch_operands = 0 : i64, tpu.core_type = #tpu.core_type<tc>} {
    %c0 = arith.constant 0 : index
    %c0_0 = arith.constant 0 : index
    %0 = vector.load %arg0[%c0, %c0_0] : memref<16x32xf32, #tpu.memory_space<vmem>>, vector<16x32xf32>
    %c0_1 = arith.constant 0 : index
    %c0_2 = arith.constant 0 : index
    %c0_3 = arith.constant 0 : index
    %1 = vector.load %arg2[%c0_1, %c0_2, %c0_3] : memref<2x8x8xf32, #tpu.memory_space<vmem>>, vector<2x8x8xf32>
    %c0_4 = arith.constant 0 : index
    %c0_5 = arith.constant 0 : index
    %c0_6 = arith.constant 0 : index
    %2 = vector.load %arg13[%c0_4, %c0_5, %c0_6] : memref<2x1x32xf32, #tpu.memory_space<vmem>>, vector<1x1x32xf32>
    %3 = vector.shape_cast %2 : vector<1x1x32xf32> to vector<1x32xf32>
    %c0_7 = arith.constant 0 : index
    %c0_8 = arith.constant 0 : index
    %c0_9 = arith.constant 0 : index
    %4 = vector.load %arg14[%c0_7, %c0_8, %c0_9] : memref<2x1x32xf32, #tpu.memory_space<vmem>>, vector<1x1x32xf32>
    %5 = vector.shape_cast %4 : vector<1x1x32xf32> to vector<1x32xf32>
    %cst = arith.constant dense<0.000000e+00> : vector<16xf32>
    %6 = vector.multi_reduction <add>, %0, %cst [1] : vector<16x32xf32> to vector<16xf32>
    %7 = vector.shape_cast %6 : vector<16xf32> to vector<16x1xf32>
    %cst_10 = arith.constant 3.200000e+01 : f32
    %8 = vector.broadcast %cst_10 : f32 to vector<16x1xf32>
    %9 = arith.divf %7, %8 : vector<16x1xf32>
    %10 = vector.broadcast %9 : vector<16x1xf32> to vector<16x32xf32>
    %11 = arith.subf %0, %10 : vector<16x32xf32>
    %12 = arith.mulf %11, %11 : vector<16x32xf32>
    %cst_11 = arith.constant dense<0.000000e+00> : vector<16xf32>
    %13 = vector.multi_reduction <add>, %12, %cst_11 [1] : vector<16x32xf32> to vector<16xf32>
    %14 = vector.shape_cast %13 : vector<16xf32> to vector<16x1xf32>
    %cst_12 = arith.constant 3.200000e+01 : f32
    %15 = vector.broadcast %cst_12 : f32 to vector<16x1xf32>
    %16 = arith.divf %14, %15 : vector<16x1xf32>
    %17 = vector.broadcast %9 : vector<16x1xf32> to vector<16x32xf32>
    %18 = arith.subf %0, %17 : vector<16x32xf32>
    %cst_13 = arith.constant 9.99999997E-7 : f32
    %19 = vector.broadcast %cst_13 : f32 to vector<16x1xf32>
    %20 = arith.addf %16, %19 : vector<16x1xf32>
    %21 = math.rsqrt %20 : vector<16x1xf32>
    %22 = vector.broadcast %21 : vector<16x1xf32> to vector<16x32xf32>
    %23 = arith.mulf %18, %22 : vector<16x32xf32>
    %24 = vector.broadcast %3 : vector<1x32xf32> to vector<16x32xf32>
    %25 = arith.mulf %23, %24 : vector<16x32xf32>
    %26 = vector.broadcast %5 : vector<1x32xf32> to vector<16x32xf32>
    %27 = arith.addf %25, %26 : vector<16x32xf32>
    %c0_14 = arith.constant 0 : index
    %c0_15 = arith.constant 0 : index
    %c0_16 = arith.constant 0 : index
    %28 = vector.load %arg5[%c0_14, %c0_15, %c0_16] : memref<2x32x96xf32, #tpu.memory_space<vmem>>, vector<1x32x96xf32>
    %29 = vector.shape_cast %28 : vector<1x32x96xf32> to vector<32x96xf32>
    %c0_17 = arith.constant 0 : index
    %c0_18 = arith.constant 0 : index
    %c0_19 = arith.constant 0 : index
    %30 = vector.load %arg6[%c0_17, %c0_18, %c0_19] : memref<2x1x96xf32, #tpu.memory_space<vmem>>, vector<1x1x96xf32>
    %31 = vector.shape_cast %30 : vector<1x1x96xf32> to vector<1x96xf32>
    %c0_20 = arith.constant 0 : index
    %c0_21 = arith.constant 0 : index
    %c0_22 = arith.constant 0 : index
    %32 = vector.load %arg7[%c0_20, %c0_21, %c0_22] : memref<2x32x32xf32, #tpu.memory_space<vmem>>, vector<1x32x32xf32>
    %33 = vector.shape_cast %32 : vector<1x32x32xf32> to vector<32x32xf32>
    %c0_23 = arith.constant 0 : index
    %c0_24 = arith.constant 0 : index
    %c0_25 = arith.constant 0 : index
    %34 = vector.load %arg8[%c0_23, %c0_24, %c0_25] : memref<2x1x32xf32, #tpu.memory_space<vmem>>, vector<1x1x32xf32>
    %35 = vector.shape_cast %34 : vector<1x1x32xf32> to vector<1x32xf32>
    %36 = arith.truncf %27 : vector<16x32xf32> to vector<16x32xbf16>
    %37 = arith.truncf %29 : vector<32x96xf32> to vector<32x96xbf16>
    %cst_26 = arith.constant dense<0.000000e+00> : vector<16x96xf32>
    %38 = tpu.matmul %36, %37, %cst_26 {dimension_numbers = #tpu.dot_dimension_numbers<[1], [0], [0], [1], [0, 0, 1, 1], [], []>} : vector<16x32xbf16>, vector<32x96xbf16>, vector<16x96xf32> -> vector<16x96xf32>
    %39 = vector.broadcast %31 : vector<1x96xf32> to vector<16x96xf32>
    %40 = arith.addf %38, %39 : vector<16x96xf32>
    %41 = vector.extract_strided_slice %40 {offsets = [0, 0], sizes = [16, 32], strides = [1, 1]} : vector<16x96xf32> to vector<16x32xf32>
    %42 = vector.extract_strided_slice %40 {offsets = [0, 32], sizes = [16, 32], strides = [1, 1]} : vector<16x96xf32> to vector<16x32xf32>
    %43 = vector.extract_strided_slice %40 {offsets = [0, 64], sizes = [16, 32], strides = [1, 1]} : vector<16x96xf32> to vector<16x32xf32>
    %44 = vector.shape_cast %41 : vector<16x32xf32> to vector<2x8x32xf32>
    %45 = vector.shape_cast %42 : vector<16x32xf32> to vector<2x8x32xf32>
    %46 = vector.shape_cast %43 : vector<16x32xf32> to vector<2x8x32xf32>
    %47 = vector.extract_strided_slice %44 {offsets = [0, 0, 0], sizes = [2, 8, 8], strides = [1, 1, 1]} : vector<2x8x32xf32> to vector<2x8x8xf32>
    %48 = arith.truncf %47 : vector<2x8x8xf32> to vector<2x8x8xbf16>
    %49 = vector.extract_strided_slice %45 {offsets = [0, 0, 0], sizes = [2, 8, 8], strides = [1, 1, 1]} : vector<2x8x32xf32> to vector<2x8x8xf32>
    %50 = arith.truncf %49 : vector<2x8x8xf32> to vector<2x8x8xbf16>
    %51 = vector.extract_strided_slice %46 {offsets = [0, 0, 0], sizes = [2, 8, 8], strides = [1, 1, 1]} : vector<2x8x32xf32> to vector<2x8x8xf32>
    %52 = arith.truncf %51 : vector<2x8x8xf32> to vector<2x8x8xbf16>
    "tpu.trace_start"() <{level = 10 : i32, message = "bqd,bkd->bqk"}> : () -> ()
    %cst_27 = arith.constant dense<0.000000e+00> : vector<2x8x8xf32>
    %53 = tpu.matmul %48, %50, %cst_27 {dimension_numbers = #tpu.dot_dimension_numbers<[2], [2], [1], [1], [0, 0, 0, 1, 1, 1], [0], [0]>} : vector<2x8x8xbf16>, vector<2x8x8xbf16>, vector<2x8x8xf32> -> vector<2x8x8xf32>
    "tpu.trace_stop"() : () -> ()
    %cst_28 = arith.constant 0.353553385 : f32
    %54 = vector.broadcast %cst_28 : f32 to vector<2x8x8xf32>
    %55 = arith.mulf %53, %54 : vector<2x8x8xf32>
    %56 = arith.addf %55, %1 : vector<2x8x8xf32>
    %cst_29 = arith.constant dense<0xFF800000> : vector<2x8xf32>
    %57 = vector.multi_reduction <maximumf>, %56, %cst_29 [2] : vector<2x8x8xf32> to vector<2x8xf32>
    %58 = vector.shape_cast %57 : vector<2x8xf32> to vector<2x8x1xf32>
    %59 = vector.broadcast %58 : vector<2x8x1xf32> to vector<2x8x8xf32>
    %60 = arith.subf %56, %59 : vector<2x8x8xf32>
    %61 = math.exp %60 : vector<2x8x8xf32>
    %cst_30 = arith.constant dense<0.000000e+00> : vector<2x8xf32>
    %62 = vector.multi_reduction <add>, %61, %cst_30 [2] : vector<2x8x8xf32> to vector<2x8xf32>
    %63 = vector.shape_cast %62 : vector<2x8xf32> to vector<2x8x1xf32>
    %64 = tpu.reciprocal %63 {approx = true} : vector<2x8x1xf32> -> vector<2x8x1xf32>
    %65 = vector.broadcast %64 : vector<2x8x1xf32> to vector<2x8x8xf32>
    %66 = arith.mulf %61, %65 : vector<2x8x8xf32>
    %67 = arith.truncf %66 : vector<2x8x8xf32> to vector<2x8x8xbf16>
    "tpu.trace_start"() <{level = 10 : i32, message = "bqk,bkd->bqd"}> : () -> ()
    %cst_31 = arith.constant dense<0.000000e+00> : vector<2x8x8xf32>
    %68 = tpu.matmul %67, %52, %cst_31 {dimension_numbers = #tpu.dot_dimension_numbers<[2], [1], [1], [2], [0, 0, 0, 1, 1, 2], [0], [0]>} : vector<2x8x8xbf16>, vector<2x8x8xbf16>, vector<2x8x8xf32> -> vector<2x8x8xf32>
    "tpu.trace_stop"() : () -> ()
    %69 = vector.extract_strided_slice %44 {offsets = [0, 0, 8], sizes = [2, 8, 8], strides = [1, 1, 1]} : vector<2x8x32xf32> to vector<2x8x8xf32>
    %70 = arith.truncf %69 : vector<2x8x8xf32> to vector<2x8x8xbf16>
    %71 = vector.extract_strided_slice %45 {offsets = [0, 0, 8], sizes = [2, 8, 8], strides = [1, 1, 1]} : vector<2x8x32xf32> to vector<2x8x8xf32>
    %72 = arith.truncf %71 : vector<2x8x8xf32> to vector<2x8x8xbf16>
    %73 = vector.extract_strided_slice %46 {offsets = [0, 0, 8], sizes = [2, 8, 8], strides = [1, 1, 1]} : vector<2x8x32xf32> to vector<2x8x8xf32>
    %74 = arith.truncf %73 : vector<2x8x8xf32> to vector<2x8x8xbf16>
    "tpu.trace_start"() <{level = 10 : i32, message = "bqd,bkd->bqk"}> : () -> ()
    %cst_32 = arith.constant dense<0.000000e+00> : vector<2x8x8xf32>
    %75 = tpu.matmul %70, %72, %cst_32 {dimension_numbers = #tpu.dot_dimension_numbers<[2], [2], [1], [1], [0, 0, 0, 1, 1, 1], [0], [0]>} : vector<2x8x8xbf16>, vector<2x8x8xbf16>, vector<2x8x8xf32> -> vector<2x8x8xf32>
    "tpu.trace_stop"() : () -> ()
    %cst_33 = arith.constant 0.353553385 : f32
    %76 = vector.broadcast %cst_33 : f32 to vector<2x8x8xf32>
    %77 = arith.mulf %75, %76 : vector<2x8x8xf32>
    %78 = arith.addf %77, %1 : vector<2x8x8xf32>
    %cst_34 = arith.constant dense<0xFF800000> : vector<2x8xf32>
    %79 = vector.multi_reduction <maximumf>, %78, %cst_34 [2] : vector<2x8x8xf32> to vector<2x8xf32>
    %80 = vector.shape_cast %79 : vector<2x8xf32> to vector<2x8x1xf32>
    %81 = vector.broadcast %80 : vector<2x8x1xf32> to vector<2x8x8xf32>
    %82 = arith.subf %78, %81 : vector<2x8x8xf32>
    %83 = math.exp %82 : vector<2x8x8xf32>
    %cst_35 = arith.constant dense<0.000000e+00> : vector<2x8xf32>
    %84 = vector.multi_reduction <add>, %83, %cst_35 [2] : vector<2x8x8xf32> to vector<2x8xf32>
    %85 = vector.shape_cast %84 : vector<2x8xf32> to vector<2x8x1xf32>
    %86 = tpu.reciprocal %85 {approx = true} : vector<2x8x1xf32> -> vector<2x8x1xf32>
    %87 = vector.broadcast %86 : vector<2x8x1xf32> to vector<2x8x8xf32>
    %88 = arith.mulf %83, %87 : vector<2x8x8xf32>
    %89 = arith.truncf %88 : vector<2x8x8xf32> to vector<2x8x8xbf16>
    "tpu.trace_start"() <{level = 10 : i32, message = "bqk,bkd->bqd"}> : () -> ()
    %cst_36 = arith.constant dense<0.000000e+00> : vector<2x8x8xf32>
    %90 = tpu.matmul %89, %74, %cst_36 {dimension_numbers = #tpu.dot_dimension_numbers<[2], [1], [1], [2], [0, 0, 0, 1, 1, 2], [0], [0]>} : vector<2x8x8xbf16>, vector<2x8x8xbf16>, vector<2x8x8xf32> -> vector<2x8x8xf32>
    "tpu.trace_stop"() : () -> ()
    %91 = vector.extract_strided_slice %44 {offsets = [0, 0, 16], sizes = [2, 8, 8], strides = [1, 1, 1]} : vector<2x8x32xf32> to vector<2x8x8xf32>
    %92 = arith.truncf %91 : vector<2x8x8xf32> to vector<2x8x8xbf16>
    %93 = vector.extract_strided_slice %45 {offsets = [0, 0, 16], sizes = [2, 8, 8], strides = [1, 1, 1]} : vector<2x8x32xf32> to vector<2x8x8xf32>
    %94 = arith.truncf %93 : vector<2x8x8xf32> to vector<2x8x8xbf16>
    %95 = vector.extract_strided_slice %46 {offsets = [0, 0, 16], sizes = [2, 8, 8], strides = [1, 1, 1]} : vector<2x8x32xf32> to vector<2x8x8xf32>
    %96 = arith.truncf %95 : vector<2x8x8xf32> to vector<2x8x8xbf16>
    "tpu.trace_start"() <{level = 10 : i32, message = "bqd,bkd->bqk"}> : () -> ()
    %cst_37 = arith.constant dense<0.000000e+00> : vector<2x8x8xf32>
    %97 = tpu.matmul %92, %94, %cst_37 {dimension_numbers = #tpu.dot_dimension_numbers<[2], [2], [1], [1], [0, 0, 0, 1, 1, 1], [0], [0]>} : vector<2x8x8xbf16>, vector<2x8x8xbf16>, vector<2x8x8xf32> -> vector<2x8x8xf32>
    "tpu.trace_stop"() : () -> ()
    %cst_38 = arith.constant 0.353553385 : f32
    %98 = vector.broadcast %cst_38 : f32 to vector<2x8x8xf32>
    %99 = arith.mulf %97, %98 : vector<2x8x8xf32>
    %100 = arith.addf %99, %1 : vector<2x8x8xf32>
    %cst_39 = arith.constant dense<0xFF800000> : vector<2x8xf32>
    %101 = vector.multi_reduction <maximumf>, %100, %cst_39 [2] : vector<2x8x8xf32> to vector<2x8xf32>
    %102 = vector.shape_cast %101 : vector<2x8xf32> to vector<2x8x1xf32>
    %103 = vector.broadcast %102 : vector<2x8x1xf32> to vector<2x8x8xf32>
    %104 = arith.subf %100, %103 : vector<2x8x8xf32>
    %105 = math.exp %104 : vector<2x8x8xf32>
    %cst_40 = arith.constant dense<0.000000e+00> : vector<2x8xf32>
    %106 = vector.multi_reduction <add>, %105, %cst_40 [2] : vector<2x8x8xf32> to vector<2x8xf32>
    %107 = vector.shape_cast %106 : vector<2x8xf32> to vector<2x8x1xf32>
    %108 = tpu.reciprocal %107 {approx = true} : vector<2x8x1xf32> -> vector<2x8x1xf32>
    %109 = vector.broadcast %108 : vector<2x8x1xf32> to vector<2x8x8xf32>
    %110 = arith.mulf %105, %109 : vector<2x8x8xf32>
    %111 = arith.truncf %110 : vector<2x8x8xf32> to vector<2x8x8xbf16>
    "tpu.trace_start"() <{level = 10 : i32, message = "bqk,bkd->bqd"}> : () -> ()
    %cst_41 = arith.constant dense<0.000000e+00> : vector<2x8x8xf32>
    %112 = tpu.matmul %111, %96, %cst_41 {dimension_numbers = #tpu.dot_dimension_numbers<[2], [1], [1], [2], [0, 0, 0, 1, 1, 2], [0], [0]>} : vector<2x8x8xbf16>, vector<2x8x8xbf16>, vector<2x8x8xf32> -> vector<2x8x8xf32>
    "tpu.trace_stop"() : () -> ()
    %113 = vector.extract_strided_slice %44 {offsets = [0, 0, 24], sizes = [2, 8, 8], strides = [1, 1, 1]} : vector<2x8x32xf32> to vector<2x8x8xf32>
    %114 = arith.truncf %113 : vector<2x8x8xf32> to vector<2x8x8xbf16>
    %115 = vector.extract_strided_slice %45 {offsets = [0, 0, 24], sizes = [2, 8, 8], strides = [1, 1, 1]} : vector<2x8x32xf32> to vector<2x8x8xf32>
    %116 = arith.truncf %115 : vector<2x8x8xf32> to vector<2x8x8xbf16>
    %117 = vector.extract_strided_slice %46 {offsets = [0, 0, 24], sizes = [2, 8, 8], strides = [1, 1, 1]} : vector<2x8x32xf32> to vector<2x8x8xf32>
    %118 = arith.truncf %117 : vector<2x8x8xf32> to vector<2x8x8xbf16>
    "tpu.trace_start"() <{level = 10 : i32, message = "bqd,bkd->bqk"}> : () -> ()
    %cst_42 = arith.constant dense<0.000000e+00> : vector<2x8x8xf32>
    %119 = tpu.matmul %114, %116, %cst_42 {dimension_numbers = #tpu.dot_dimension_numbers<[2], [2], [1], [1], [0, 0, 0, 1, 1, 1], [0], [0]>} : vector<2x8x8xbf16>, vector<2x8x8xbf16>, vector<2x8x8xf32> -> vector<2x8x8xf32>
    "tpu.trace_stop"() : () -> ()
    %cst_43 = arith.constant 0.353553385 : f32
    %120 = vector.broadcast %cst_43 : f32 to vector<2x8x8xf32>
    %121 = arith.mulf %119, %120 : vector<2x8x8xf32>
    %122 = arith.addf %121, %1 : vector<2x8x8xf32>
    %cst_44 = arith.constant dense<0xFF800000> : vector<2x8xf32>
    %123 = vector.multi_reduction <maximumf>, %122, %cst_44 [2] : vector<2x8x8xf32> to vector<2x8xf32>
    %124 = vector.shape_cast %123 : vector<2x8xf32> to vector<2x8x1xf32>
    %125 = vector.broadcast %124 : vector<2x8x1xf32> to vector<2x8x8xf32>
    %126 = arith.subf %122, %125 : vector<2x8x8xf32>
    %127 = math.exp %126 : vector<2x8x8xf32>
    %cst_45 = arith.constant dense<0.000000e+00> : vector<2x8xf32>
    %128 = vector.multi_reduction <add>, %127, %cst_45 [2] : vector<2x8x8xf32> to vector<2x8xf32>
    %129 = vector.shape_cast %128 : vector<2x8xf32> to vector<2x8x1xf32>
    %130 = tpu.reciprocal %129 {approx = true} : vector<2x8x1xf32> -> vector<2x8x1xf32>
    %131 = vector.broadcast %130 : vector<2x8x1xf32> to vector<2x8x8xf32>
    %132 = arith.mulf %127, %131 : vector<2x8x8xf32>
    %133 = arith.truncf %132 : vector<2x8x8xf32> to vector<2x8x8xbf16>
    "tpu.trace_start"() <{level = 10 : i32, message = "bqk,bkd->bqd"}> : () -> ()
    %cst_46 = arith.constant dense<0.000000e+00> : vector<2x8x8xf32>
    %134 = tpu.matmul %133, %118, %cst_46 {dimension_numbers = #tpu.dot_dimension_numbers<[2], [1], [1], [2], [0, 0, 0, 1, 1, 2], [0], [0]>} : vector<2x8x8xbf16>, vector<2x8x8xbf16>, vector<2x8x8xf32> -> vector<2x8x8xf32>
    "tpu.trace_stop"() : () -> ()
    %135 = tpu.concatenate %68, %90, %112, %134 in 2 : vector<2x8x8xf32>, vector<2x8x8xf32>, vector<2x8x8xf32>, vector<2x8x8xf32> -> vector<2x8x32xf32>
    %136 = vector.shape_cast %135 : vector<2x8x32xf32> to vector<16x32xf32>
    %137 = arith.truncf %136 : vector<16x32xf32> to vector<16x32xbf16>
    %138 = arith.truncf %33 : vector<32x32xf32> to vector<32x32xbf16>
    %cst_47 = arith.constant dense<0.000000e+00> : vector<16x32xf32>
    %139 = tpu.matmul %137, %138, %cst_47 {dimension_numbers = #tpu.dot_dimension_numbers<[1], [0], [0], [1], [0, 0, 1, 1], [], []>} : vector<16x32xbf16>, vector<32x32xbf16>, vector<16x32xf32> -> vector<16x32xf32>
    %140 = vector.broadcast %35 : vector<1x32xf32> to vector<16x32xf32>
    %141 = arith.addf %139, %140 : vector<16x32xf32>
    %142 = arith.addf %0, %141 : vector<16x32xf32>
    %c0_48 = arith.constant 0 : index
    %c0_49 = arith.constant 0 : index
    %c0_50 = arith.constant 0 : index
    %143 = vector.load %arg15[%c0_48, %c0_49, %c0_50] : memref<2x1x32xf32, #tpu.memory_space<vmem>>, vector<1x1x32xf32>
    %144 = vector.shape_cast %143 : vector<1x1x32xf32> to vector<1x32xf32>
    %c0_51 = arith.constant 0 : index
    %c0_52 = arith.constant 0 : index
    %c0_53 = arith.constant 0 : index
    %145 = vector.load %arg16[%c0_51, %c0_52, %c0_53] : memref<2x1x32xf32, #tpu.memory_space<vmem>>, vector<1x1x32xf32>
    %146 = vector.shape_cast %145 : vector<1x1x32xf32> to vector<1x32xf32>
    %cst_54 = arith.constant dense<0.000000e+00> : vector<16xf32>
    %147 = vector.multi_reduction <add>, %142, %cst_54 [1] : vector<16x32xf32> to vector<16xf32>
    %148 = vector.shape_cast %147 : vector<16xf32> to vector<16x1xf32>
    %cst_55 = arith.constant 3.200000e+01 : f32
    %149 = vector.broadcast %cst_55 : f32 to vector<16x1xf32>
    %150 = arith.divf %148, %149 : vector<16x1xf32>
    %151 = vector.broadcast %150 : vector<16x1xf32> to vector<16x32xf32>
    %152 = arith.subf %142, %151 : vector<16x32xf32>
    %153 = arith.mulf %152, %152 : vector<16x32xf32>
    %cst_56 = arith.constant dense<0.000000e+00> : vector<16xf32>
    %154 = vector.multi_reduction <add>, %153, %cst_56 [1] : vector<16x32xf32> to vector<16xf32>
    %155 = vector.shape_cast %154 : vector<16xf32> to vector<16x1xf32>
    %cst_57 = arith.constant 3.200000e+01 : f32
    %156 = vector.broadcast %cst_57 : f32 to vector<16x1xf32>
    %157 = arith.divf %155, %156 : vector<16x1xf32>
    %158 = vector.broadcast %150 : vector<16x1xf32> to vector<16x32xf32>
    %159 = arith.subf %142, %158 : vector<16x32xf32>
    %cst_58 = arith.constant 9.99999997E-7 : f32
    %160 = vector.broadcast %cst_58 : f32 to vector<16x1xf32>
    %161 = arith.addf %157, %160 : vector<16x1xf32>
    %162 = math.rsqrt %161 : vector<16x1xf32>
    %163 = vector.broadcast %162 : vector<16x1xf32> to vector<16x32xf32>
    %164 = arith.mulf %159, %163 : vector<16x32xf32>
    %165 = vector.broadcast %144 : vector<1x32xf32> to vector<16x32xf32>
    %166 = arith.mulf %164, %165 : vector<16x32xf32>
    %167 = vector.broadcast %146 : vector<1x32xf32> to vector<16x32xf32>
    %168 = arith.addf %166, %167 : vector<16x32xf32>
    %c0_59 = arith.constant 0 : index
    %c0_60 = arith.constant 0 : index
    %c0_61 = arith.constant 0 : index
    %169 = vector.load %arg9[%c0_59, %c0_60, %c0_61] : memref<2x32x64xf32, #tpu.memory_space<vmem>>, vector<1x32x64xf32>
    %170 = vector.shape_cast %169 : vector<1x32x64xf32> to vector<32x64xf32>
    %c0_62 = arith.constant 0 : index
    %c0_63 = arith.constant 0 : index
    %c0_64 = arith.constant 0 : index
    %171 = vector.load %arg10[%c0_62, %c0_63, %c0_64] : memref<2x1x64xf32, #tpu.memory_space<vmem>>, vector<1x1x64xf32>
    %172 = vector.shape_cast %171 : vector<1x1x64xf32> to vector<1x64xf32>
    %c0_65 = arith.constant 0 : index
    %c0_66 = arith.constant 0 : index
    %c0_67 = arith.constant 0 : index
    %173 = vector.load %arg11[%c0_65, %c0_66, %c0_67] : memref<2x64x32xf32, #tpu.memory_space<vmem>>, vector<1x64x32xf32>
    %174 = vector.shape_cast %173 : vector<1x64x32xf32> to vector<64x32xf32>
    %c0_68 = arith.constant 0 : index
    %c0_69 = arith.constant 0 : index
    %c0_70 = arith.constant 0 : index
    %175 = vector.load %arg12[%c0_68, %c0_69, %c0_70] : memref<2x1x32xf32, #tpu.memory_space<vmem>>, vector<1x1x32xf32>
    %176 = vector.shape_cast %175 : vector<1x1x32xf32> to vector<1x32xf32>
    %177 = arith.truncf %168 : vector<16x32xf32> to vector<16x32xbf16>
    %178 = arith.truncf %170 : vector<32x64xf32> to vector<32x64xbf16>
    %cst_71 = arith.constant dense<0.000000e+00> : vector<16x64xf32>
    %179 = tpu.matmul %177, %178, %cst_71 {dimension_numbers = #tpu.dot_dimension_numbers<[1], [0], [0], [1], [0, 0, 1, 1], [], []>} : vector<16x32xbf16>, vector<32x64xbf16>, vector<16x64xf32> -> vector<16x64xf32>
    %180 = vector.broadcast %172 : vector<1x64xf32> to vector<16x64xf32>
    %181 = arith.addf %179, %180 : vector<16x64xf32>
    %cst_72 = arith.constant 0.000000e+00 : f32
    %182 = vector.broadcast %cst_72 : f32 to vector<16x64xf32>
    %183 = arith.maximumf %181, %182 : vector<16x64xf32>
    %184 = arith.truncf %183 : vector<16x64xf32> to vector<16x64xbf16>
    %185 = arith.truncf %174 : vector<64x32xf32> to vector<64x32xbf16>
    %cst_73 = arith.constant dense<0.000000e+00> : vector<16x32xf32>
    %186 = tpu.matmul %184, %185, %cst_73 {dimension_numbers = #tpu.dot_dimension_numbers<[1], [0], [0], [1], [0, 0, 1, 1], [], []>} : vector<16x64xbf16>, vector<64x32xbf16>, vector<16x32xf32> -> vector<16x32xf32>
    %187 = vector.broadcast %176 : vector<1x32xf32> to vector<16x32xf32>
    %188 = arith.addf %186, %187 : vector<16x32xf32>
    %189 = arith.addf %142, %188 : vector<16x32xf32>
    %c1 = arith.constant 1 : index
    %c0_74 = arith.constant 0 : index
    %c0_75 = arith.constant 0 : index
    %190 = vector.load %arg13[%c1, %c0_74, %c0_75] : memref<2x1x32xf32, #tpu.memory_space<vmem>>, vector<1x1x32xf32>
    %191 = vector.shape_cast %190 : vector<1x1x32xf32> to vector<1x32xf32>
    %c1_76 = arith.constant 1 : index
    %c0_77 = arith.constant 0 : index
    %c0_78 = arith.constant 0 : index
    %192 = vector.load %arg14[%c1_76, %c0_77, %c0_78] : memref<2x1x32xf32, #tpu.memory_space<vmem>>, vector<1x1x32xf32>
    %193 = vector.shape_cast %192 : vector<1x1x32xf32> to vector<1x32xf32>
    %cst_79 = arith.constant dense<0.000000e+00> : vector<16xf32>
    %194 = vector.multi_reduction <add>, %189, %cst_79 [1] : vector<16x32xf32> to vector<16xf32>
    %195 = vector.shape_cast %194 : vector<16xf32> to vector<16x1xf32>
    %cst_80 = arith.constant 3.200000e+01 : f32
    %196 = vector.broadcast %cst_80 : f32 to vector<16x1xf32>
    %197 = arith.divf %195, %196 : vector<16x1xf32>
    %198 = vector.broadcast %197 : vector<16x1xf32> to vector<16x32xf32>
    %199 = arith.subf %189, %198 : vector<16x32xf32>
    %200 = arith.mulf %199, %199 : vector<16x32xf32>
    %cst_81 = arith.constant dense<0.000000e+00> : vector<16xf32>
    %201 = vector.multi_reduction <add>, %200, %cst_81 [1] : vector<16x32xf32> to vector<16xf32>
    %202 = vector.shape_cast %201 : vector<16xf32> to vector<16x1xf32>
    %cst_82 = arith.constant 3.200000e+01 : f32
    %203 = vector.broadcast %cst_82 : f32 to vector<16x1xf32>
    %204 = arith.divf %202, %203 : vector<16x1xf32>
    %205 = vector.broadcast %197 : vector<16x1xf32> to vector<16x32xf32>
    %206 = arith.subf %189, %205 : vector<16x32xf32>
    %cst_83 = arith.constant 9.99999997E-7 : f32
    %207 = vector.broadcast %cst_83 : f32 to vector<16x1xf32>
    %208 = arith.addf %204, %207 : vector<16x1xf32>
    %209 = math.rsqrt %208 : vector<16x1xf32>
    %210 = vector.broadcast %209 : vector<16x1xf32> to vector<16x32xf32>
    %211 = arith.mulf %206, %210 : vector<16x32xf32>
    %212 = vector.broadcast %191 : vector<1x32xf32> to vector<16x32xf32>
    %213 = arith.mulf %211, %212 : vector<16x32xf32>
    %214 = vector.broadcast %193 : vector<1x32xf32> to vector<16x32xf32>
    %215 = arith.addf %213, %214 : vector<16x32xf32>
    %c1_84 = arith.constant 1 : index
    %c0_85 = arith.constant 0 : index
    %c0_86 = arith.constant 0 : index
    %216 = vector.load %arg5[%c1_84, %c0_85, %c0_86] : memref<2x32x96xf32, #tpu.memory_space<vmem>>, vector<1x32x96xf32>
    %217 = vector.shape_cast %216 : vector<1x32x96xf32> to vector<32x96xf32>
    %c1_87 = arith.constant 1 : index
    %c0_88 = arith.constant 0 : index
    %c0_89 = arith.constant 0 : index
    %218 = vector.load %arg6[%c1_87, %c0_88, %c0_89] : memref<2x1x96xf32, #tpu.memory_space<vmem>>, vector<1x1x96xf32>
    %219 = vector.shape_cast %218 : vector<1x1x96xf32> to vector<1x96xf32>
    %c1_90 = arith.constant 1 : index
    %c0_91 = arith.constant 0 : index
    %c0_92 = arith.constant 0 : index
    %220 = vector.load %arg7[%c1_90, %c0_91, %c0_92] : memref<2x32x32xf32, #tpu.memory_space<vmem>>, vector<1x32x32xf32>
    %221 = vector.shape_cast %220 : vector<1x32x32xf32> to vector<32x32xf32>
    %c1_93 = arith.constant 1 : index
    %c0_94 = arith.constant 0 : index
    %c0_95 = arith.constant 0 : index
    %222 = vector.load %arg8[%c1_93, %c0_94, %c0_95] : memref<2x1x32xf32, #tpu.memory_space<vmem>>, vector<1x1x32xf32>
    %223 = vector.shape_cast %222 : vector<1x1x32xf32> to vector<1x32xf32>
    %224 = arith.truncf %215 : vector<16x32xf32> to vector<16x32xbf16>
    %225 = arith.truncf %217 : vector<32x96xf32> to vector<32x96xbf16>
    %cst_96 = arith.constant dense<0.000000e+00> : vector<16x96xf32>
    %226 = tpu.matmul %224, %225, %cst_96 {dimension_numbers = #tpu.dot_dimension_numbers<[1], [0], [0], [1], [0, 0, 1, 1], [], []>} : vector<16x32xbf16>, vector<32x96xbf16>, vector<16x96xf32> -> vector<16x96xf32>
    %227 = vector.broadcast %219 : vector<1x96xf32> to vector<16x96xf32>
    %228 = arith.addf %226, %227 : vector<16x96xf32>
    %229 = vector.extract_strided_slice %228 {offsets = [0, 0], sizes = [16, 32], strides = [1, 1]} : vector<16x96xf32> to vector<16x32xf32>
    %230 = vector.extract_strided_slice %228 {offsets = [0, 32], sizes = [16, 32], strides = [1, 1]} : vector<16x96xf32> to vector<16x32xf32>
    %231 = vector.extract_strided_slice %228 {offsets = [0, 64], sizes = [16, 32], strides = [1, 1]} : vector<16x96xf32> to vector<16x32xf32>
    %232 = vector.shape_cast %229 : vector<16x32xf32> to vector<2x8x32xf32>
    %233 = vector.shape_cast %230 : vector<16x32xf32> to vector<2x8x32xf32>
    %234 = vector.shape_cast %231 : vector<16x32xf32> to vector<2x8x32xf32>
    %235 = vector.extract_strided_slice %232 {offsets = [0, 0, 0], sizes = [2, 8, 8], strides = [1, 1, 1]} : vector<2x8x32xf32> to vector<2x8x8xf32>
    %236 = arith.truncf %235 : vector<2x8x8xf32> to vector<2x8x8xbf16>
    %237 = vector.extract_strided_slice %233 {offsets = [0, 0, 0], sizes = [2, 8, 8], strides = [1, 1, 1]} : vector<2x8x32xf32> to vector<2x8x8xf32>
    %238 = arith.truncf %237 : vector<2x8x8xf32> to vector<2x8x8xbf16>
    %239 = vector.extract_strided_slice %234 {offsets = [0, 0, 0], sizes = [2, 8, 8], strides = [1, 1, 1]} : vector<2x8x32xf32> to vector<2x8x8xf32>
    %240 = arith.truncf %239 : vector<2x8x8xf32> to vector<2x8x8xbf16>
    "tpu.trace_start"() <{level = 10 : i32, message = "bqd,bkd->bqk"}> : () -> ()
    %cst_97 = arith.constant dense<0.000000e+00> : vector<2x8x8xf32>
    %241 = tpu.matmul %236, %238, %cst_97 {dimension_numbers = #tpu.dot_dimension_numbers<[2], [2], [1], [1], [0, 0, 0, 1, 1, 1], [0], [0]>} : vector<2x8x8xbf16>, vector<2x8x8xbf16>, vector<2x8x8xf32> -> vector<2x8x8xf32>
    "tpu.trace_stop"() : () -> ()
    %cst_98 = arith.constant 0.353553385 : f32
    %242 = vector.broadcast %cst_98 : f32 to vector<2x8x8xf32>
    %243 = arith.mulf %241, %242 : vector<2x8x8xf32>
    %244 = arith.addf %243, %1 : vector<2x8x8xf32>
    %cst_99 = arith.constant dense<0xFF800000> : vector<2x8xf32>
    %245 = vector.multi_reduction <maximumf>, %244, %cst_99 [2] : vector<2x8x8xf32> to vector<2x8xf32>
    %246 = vector.shape_cast %245 : vector<2x8xf32> to vector<2x8x1xf32>
    %247 = vector.broadcast %246 : vector<2x8x1xf32> to vector<2x8x8xf32>
    %248 = arith.subf %244, %247 : vector<2x8x8xf32>
    %249 = math.exp %248 : vector<2x8x8xf32>
    %cst_100 = arith.constant dense<0.000000e+00> : vector<2x8xf32>
    %250 = vector.multi_reduction <add>, %249, %cst_100 [2] : vector<2x8x8xf32> to vector<2x8xf32>
    %251 = vector.shape_cast %250 : vector<2x8xf32> to vector<2x8x1xf32>
    %252 = tpu.reciprocal %251 {approx = true} : vector<2x8x1xf32> -> vector<2x8x1xf32>
    %253 = vector.broadcast %252 : vector<2x8x1xf32> to vector<2x8x8xf32>
    %254 = arith.mulf %249, %253 : vector<2x8x8xf32>
    %255 = arith.truncf %254 : vector<2x8x8xf32> to vector<2x8x8xbf16>
    "tpu.trace_start"() <{level = 10 : i32, message = "bqk,bkd->bqd"}> : () -> ()
    %cst_101 = arith.constant dense<0.000000e+00> : vector<2x8x8xf32>
    %256 = tpu.matmul %255, %240, %cst_101 {dimension_numbers = #tpu.dot_dimension_numbers<[2], [1], [1], [2], [0, 0, 0, 1, 1, 2], [0], [0]>} : vector<2x8x8xbf16>, vector<2x8x8xbf16>, vector<2x8x8xf32> -> vector<2x8x8xf32>
    "tpu.trace_stop"() : () -> ()
    %257 = vector.extract_strided_slice %232 {offsets = [0, 0, 8], sizes = [2, 8, 8], strides = [1, 1, 1]} : vector<2x8x32xf32> to vector<2x8x8xf32>
    %258 = arith.truncf %257 : vector<2x8x8xf32> to vector<2x8x8xbf16>
    %259 = vector.extract_strided_slice %233 {offsets = [0, 0, 8], sizes = [2, 8, 8], strides = [1, 1, 1]} : vector<2x8x32xf32> to vector<2x8x8xf32>
    %260 = arith.truncf %259 : vector<2x8x8xf32> to vector<2x8x8xbf16>
    %261 = vector.extract_strided_slice %234 {offsets = [0, 0, 8], sizes = [2, 8, 8], strides = [1, 1, 1]} : vector<2x8x32xf32> to vector<2x8x8xf32>
    %262 = arith.truncf %261 : vector<2x8x8xf32> to vector<2x8x8xbf16>
    "tpu.trace_start"() <{level = 10 : i32, message = "bqd,bkd->bqk"}> : () -> ()
    %cst_102 = arith.constant dense<0.000000e+00> : vector<2x8x8xf32>
    %263 = tpu.matmul %258, %260, %cst_102 {dimension_numbers = #tpu.dot_dimension_numbers<[2], [2], [1], [1], [0, 0, 0, 1, 1, 1], [0], [0]>} : vector<2x8x8xbf16>, vector<2x8x8xbf16>, vector<2x8x8xf32> -> vector<2x8x8xf32>
    "tpu.trace_stop"() : () -> ()
    %cst_103 = arith.constant 0.353553385 : f32
    %264 = vector.broadcast %cst_103 : f32 to vector<2x8x8xf32>
    %265 = arith.mulf %263, %264 : vector<2x8x8xf32>
    %266 = arith.addf %265, %1 : vector<2x8x8xf32>
    %cst_104 = arith.constant dense<0xFF800000> : vector<2x8xf32>
    %267 = vector.multi_reduction <maximumf>, %266, %cst_104 [2] : vector<2x8x8xf32> to vector<2x8xf32>
    %268 = vector.shape_cast %267 : vector<2x8xf32> to vector<2x8x1xf32>
    %269 = vector.broadcast %268 : vector<2x8x1xf32> to vector<2x8x8xf32>
    %270 = arith.subf %266, %269 : vector<2x8x8xf32>
    %271 = math.exp %270 : vector<2x8x8xf32>
    %cst_105 = arith.constant dense<0.000000e+00> : vector<2x8xf32>
    %272 = vector.multi_reduction <add>, %271, %cst_105 [2] : vector<2x8x8xf32> to vector<2x8xf32>
    %273 = vector.shape_cast %272 : vector<2x8xf32> to vector<2x8x1xf32>
    %274 = tpu.reciprocal %273 {approx = true} : vector<2x8x1xf32> -> vector<2x8x1xf32>
    %275 = vector.broadcast %274 : vector<2x8x1xf32> to vector<2x8x8xf32>
    %276 = arith.mulf %271, %275 : vector<2x8x8xf32>
    %277 = arith.truncf %276 : vector<2x8x8xf32> to vector<2x8x8xbf16>
    "tpu.trace_start"() <{level = 10 : i32, message = "bqk,bkd->bqd"}> : () -> ()
    %cst_106 = arith.constant dense<0.000000e+00> : vector<2x8x8xf32>
    %278 = tpu.matmul %277, %262, %cst_106 {dimension_numbers = #tpu.dot_dimension_numbers<[2], [1], [1], [2], [0, 0, 0, 1, 1, 2], [0], [0]>} : vector<2x8x8xbf16>, vector<2x8x8xbf16>, vector<2x8x8xf32> -> vector<2x8x8xf32>
    "tpu.trace_stop"() : () -> ()
    %279 = vector.extract_strided_slice %232 {offsets = [0, 0, 16], sizes = [2, 8, 8], strides = [1, 1, 1]} : vector<2x8x32xf32> to vector<2x8x8xf32>
    %280 = arith.truncf %279 : vector<2x8x8xf32> to vector<2x8x8xbf16>
    %281 = vector.extract_strided_slice %233 {offsets = [0, 0, 16], sizes = [2, 8, 8], strides = [1, 1, 1]} : vector<2x8x32xf32> to vector<2x8x8xf32>
    %282 = arith.truncf %281 : vector<2x8x8xf32> to vector<2x8x8xbf16>
    %283 = vector.extract_strided_slice %234 {offsets = [0, 0, 16], sizes = [2, 8, 8], strides = [1, 1, 1]} : vector<2x8x32xf32> to vector<2x8x8xf32>
    %284 = arith.truncf %283 : vector<2x8x8xf32> to vector<2x8x8xbf16>
    "tpu.trace_start"() <{level = 10 : i32, message = "bqd,bkd->bqk"}> : () -> ()
    %cst_107 = arith.constant dense<0.000000e+00> : vector<2x8x8xf32>
    %285 = tpu.matmul %280, %282, %cst_107 {dimension_numbers = #tpu.dot_dimension_numbers<[2], [2], [1], [1], [0, 0, 0, 1, 1, 1], [0], [0]>} : vector<2x8x8xbf16>, vector<2x8x8xbf16>, vector<2x8x8xf32> -> vector<2x8x8xf32>
    "tpu.trace_stop"() : () -> ()
    %cst_108 = arith.constant 0.353553385 : f32
    %286 = vector.broadcast %cst_108 : f32 to vector<2x8x8xf32>
    %287 = arith.mulf %285, %286 : vector<2x8x8xf32>
    %288 = arith.addf %287, %1 : vector<2x8x8xf32>
    %cst_109 = arith.constant dense<0xFF800000> : vector<2x8xf32>
    %289 = vector.multi_reduction <maximumf>, %288, %cst_109 [2] : vector<2x8x8xf32> to vector<2x8xf32>
    %290 = vector.shape_cast %289 : vector<2x8xf32> to vector<2x8x1xf32>
    %291 = vector.broadcast %290 : vector<2x8x1xf32> to vector<2x8x8xf32>
    %292 = arith.subf %288, %291 : vector<2x8x8xf32>
    %293 = math.exp %292 : vector<2x8x8xf32>
    %cst_110 = arith.constant dense<0.000000e+00> : vector<2x8xf32>
    %294 = vector.multi_reduction <add>, %293, %cst_110 [2] : vector<2x8x8xf32> to vector<2x8xf32>
    %295 = vector.shape_cast %294 : vector<2x8xf32> to vector<2x8x1xf32>
    %296 = tpu.reciprocal %295 {approx = true} : vector<2x8x1xf32> -> vector<2x8x1xf32>
    %297 = vector.broadcast %296 : vector<2x8x1xf32> to vector<2x8x8xf32>
    %298 = arith.mulf %293, %297 : vector<2x8x8xf32>
    %299 = arith.truncf %298 : vector<2x8x8xf32> to vector<2x8x8xbf16>
    "tpu.trace_start"() <{level = 10 : i32, message = "bqk,bkd->bqd"}> : () -> ()
    %cst_111 = arith.constant dense<0.000000e+00> : vector<2x8x8xf32>
    %300 = tpu.matmul %299, %284, %cst_111 {dimension_numbers = #tpu.dot_dimension_numbers<[2], [1], [1], [2], [0, 0, 0, 1, 1, 2], [0], [0]>} : vector<2x8x8xbf16>, vector<2x8x8xbf16>, vector<2x8x8xf32> -> vector<2x8x8xf32>
    "tpu.trace_stop"() : () -> ()
    %301 = vector.extract_strided_slice %232 {offsets = [0, 0, 24], sizes = [2, 8, 8], strides = [1, 1, 1]} : vector<2x8x32xf32> to vector<2x8x8xf32>
    %302 = arith.truncf %301 : vector<2x8x8xf32> to vector<2x8x8xbf16>
    %303 = vector.extract_strided_slice %233 {offsets = [0, 0, 24], sizes = [2, 8, 8], strides = [1, 1, 1]} : vector<2x8x32xf32> to vector<2x8x8xf32>
    %304 = arith.truncf %303 : vector<2x8x8xf32> to vector<2x8x8xbf16>
    %305 = vector.extract_strided_slice %234 {offsets = [0, 0, 24], sizes = [2, 8, 8], strides = [1, 1, 1]} : vector<2x8x32xf32> to vector<2x8x8xf32>
    %306 = arith.truncf %305 : vector<2x8x8xf32> to vector<2x8x8xbf16>
    "tpu.trace_start"() <{level = 10 : i32, message = "bqd,bkd->bqk"}> : () -> ()
    %cst_112 = arith.constant dense<0.000000e+00> : vector<2x8x8xf32>
    %307 = tpu.matmul %302, %304, %cst_112 {dimension_numbers = #tpu.dot_dimension_numbers<[2], [2], [1], [1], [0, 0, 0, 1, 1, 1], [0], [0]>} : vector<2x8x8xbf16>, vector<2x8x8xbf16>, vector<2x8x8xf32> -> vector<2x8x8xf32>
    "tpu.trace_stop"() : () -> ()
    %cst_113 = arith.constant 0.353553385 : f32
    %308 = vector.broadcast %cst_113 : f32 to vector<2x8x8xf32>
    %309 = arith.mulf %307, %308 : vector<2x8x8xf32>
    %310 = arith.addf %309, %1 : vector<2x8x8xf32>
    %cst_114 = arith.constant dense<0xFF800000> : vector<2x8xf32>
    %311 = vector.multi_reduction <maximumf>, %310, %cst_114 [2] : vector<2x8x8xf32> to vector<2x8xf32>
    %312 = vector.shape_cast %311 : vector<2x8xf32> to vector<2x8x1xf32>
    %313 = vector.broadcast %312 : vector<2x8x1xf32> to vector<2x8x8xf32>
    %314 = arith.subf %310, %313 : vector<2x8x8xf32>
    %315 = math.exp %314 : vector<2x8x8xf32>
    %cst_115 = arith.constant dense<0.000000e+00> : vector<2x8xf32>
    %316 = vector.multi_reduction <add>, %315, %cst_115 [2] : vector<2x8x8xf32> to vector<2x8xf32>
    %317 = vector.shape_cast %316 : vector<2x8xf32> to vector<2x8x1xf32>
    %318 = tpu.reciprocal %317 {approx = true} : vector<2x8x1xf32> -> vector<2x8x1xf32>
    %319 = vector.broadcast %318 : vector<2x8x1xf32> to vector<2x8x8xf32>
    %320 = arith.mulf %315, %319 : vector<2x8x8xf32>
    %321 = arith.truncf %320 : vector<2x8x8xf32> to vector<2x8x8xbf16>
    "tpu.trace_start"() <{level = 10 : i32, message = "bqk,bkd->bqd"}> : () -> ()
    %cst_116 = arith.constant dense<0.000000e+00> : vector<2x8x8xf32>
    %322 = tpu.matmul %321, %306, %cst_116 {dimension_numbers = #tpu.dot_dimension_numbers<[2], [1], [1], [2], [0, 0, 0, 1, 1, 2], [0], [0]>} : vector<2x8x8xbf16>, vector<2x8x8xbf16>, vector<2x8x8xf32> -> vector<2x8x8xf32>
    "tpu.trace_stop"() : () -> ()
    %323 = tpu.concatenate %256, %278, %300, %322 in 2 : vector<2x8x8xf32>, vector<2x8x8xf32>, vector<2x8x8xf32>, vector<2x8x8xf32> -> vector<2x8x32xf32>
    %324 = vector.shape_cast %323 : vector<2x8x32xf32> to vector<16x32xf32>
    %325 = arith.truncf %324 : vector<16x32xf32> to vector<16x32xbf16>
    %326 = arith.truncf %221 : vector<32x32xf32> to vector<32x32xbf16>
    %cst_117 = arith.constant dense<0.000000e+00> : vector<16x32xf32>
    %327 = tpu.matmul %325, %326, %cst_117 {dimension_numbers = #tpu.dot_dimension_numbers<[1], [0], [0], [1], [0, 0, 1, 1], [], []>} : vector<16x32xbf16>, vector<32x32xbf16>, vector<16x32xf32> -> vector<16x32xf32>
    %328 = vector.broadcast %223 : vector<1x32xf32> to vector<16x32xf32>
    %329 = arith.addf %327, %328 : vector<16x32xf32>
    %330 = arith.addf %189, %329 : vector<16x32xf32>
    %c1_118 = arith.constant 1 : index
    %c0_119 = arith.constant 0 : index
    %c0_120 = arith.constant 0 : index
    %331 = vector.load %arg15[%c1_118, %c0_119, %c0_120] : memref<2x1x32xf32, #tpu.memory_space<vmem>>, vector<1x1x32xf32>
    %332 = vector.shape_cast %331 : vector<1x1x32xf32> to vector<1x32xf32>
    %c1_121 = arith.constant 1 : index
    %c0_122 = arith.constant 0 : index
    %c0_123 = arith.constant 0 : index
    %333 = vector.load %arg16[%c1_121, %c0_122, %c0_123] : memref<2x1x32xf32, #tpu.memory_space<vmem>>, vector<1x1x32xf32>
    %334 = vector.shape_cast %333 : vector<1x1x32xf32> to vector<1x32xf32>
    %cst_124 = arith.constant dense<0.000000e+00> : vector<16xf32>
    %335 = vector.multi_reduction <add>, %330, %cst_124 [1] : vector<16x32xf32> to vector<16xf32>
    %336 = vector.shape_cast %335 : vector<16xf32> to vector<16x1xf32>
    %cst_125 = arith.constant 3.200000e+01 : f32
    %337 = vector.broadcast %cst_125 : f32 to vector<16x1xf32>
    %338 = arith.divf %336, %337 : vector<16x1xf32>
    %339 = vector.broadcast %338 : vector<16x1xf32> to vector<16x32xf32>
    %340 = arith.subf %330, %339 : vector<16x32xf32>
    %341 = arith.mulf %340, %340 : vector<16x32xf32>
    %cst_126 = arith.constant dense<0.000000e+00> : vector<16xf32>
    %342 = vector.multi_reduction <add>, %341, %cst_126 [1] : vector<16x32xf32> to vector<16xf32>
    %343 = vector.shape_cast %342 : vector<16xf32> to vector<16x1xf32>
    %cst_127 = arith.constant 3.200000e+01 : f32
    %344 = vector.broadcast %cst_127 : f32 to vector<16x1xf32>
    %345 = arith.divf %343, %344 : vector<16x1xf32>
    %346 = vector.broadcast %338 : vector<16x1xf32> to vector<16x32xf32>
    %347 = arith.subf %330, %346 : vector<16x32xf32>
    %cst_128 = arith.constant 9.99999997E-7 : f32
    %348 = vector.broadcast %cst_128 : f32 to vector<16x1xf32>
    %349 = arith.addf %345, %348 : vector<16x1xf32>
    %350 = math.rsqrt %349 : vector<16x1xf32>
    %351 = vector.broadcast %350 : vector<16x1xf32> to vector<16x32xf32>
    %352 = arith.mulf %347, %351 : vector<16x32xf32>
    %353 = vector.broadcast %332 : vector<1x32xf32> to vector<16x32xf32>
    %354 = arith.mulf %352, %353 : vector<16x32xf32>
    %355 = vector.broadcast %334 : vector<1x32xf32> to vector<16x32xf32>
    %356 = arith.addf %354, %355 : vector<16x32xf32>
    %c1_129 = arith.constant 1 : index
    %c0_130 = arith.constant 0 : index
    %c0_131 = arith.constant 0 : index
    %357 = vector.load %arg9[%c1_129, %c0_130, %c0_131] : memref<2x32x64xf32, #tpu.memory_space<vmem>>, vector<1x32x64xf32>
    %358 = vector.shape_cast %357 : vector<1x32x64xf32> to vector<32x64xf32>
    %c1_132 = arith.constant 1 : index
    %c0_133 = arith.constant 0 : index
    %c0_134 = arith.constant 0 : index
    %359 = vector.load %arg10[%c1_132, %c0_133, %c0_134] : memref<2x1x64xf32, #tpu.memory_space<vmem>>, vector<1x1x64xf32>
    %360 = vector.shape_cast %359 : vector<1x1x64xf32> to vector<1x64xf32>
    %c1_135 = arith.constant 1 : index
    %c0_136 = arith.constant 0 : index
    %c0_137 = arith.constant 0 : index
    %361 = vector.load %arg11[%c1_135, %c0_136, %c0_137] : memref<2x64x32xf32, #tpu.memory_space<vmem>>, vector<1x64x32xf32>
    %362 = vector.shape_cast %361 : vector<1x64x32xf32> to vector<64x32xf32>
    %c1_138 = arith.constant 1 : index
    %c0_139 = arith.constant 0 : index
    %c0_140 = arith.constant 0 : index
    %363 = vector.load %arg12[%c1_138, %c0_139, %c0_140] : memref<2x1x32xf32, #tpu.memory_space<vmem>>, vector<1x1x32xf32>
    %364 = vector.shape_cast %363 : vector<1x1x32xf32> to vector<1x32xf32>
    %365 = arith.truncf %356 : vector<16x32xf32> to vector<16x32xbf16>
    %366 = arith.truncf %358 : vector<32x64xf32> to vector<32x64xbf16>
    %cst_141 = arith.constant dense<0.000000e+00> : vector<16x64xf32>
    %367 = tpu.matmul %365, %366, %cst_141 {dimension_numbers = #tpu.dot_dimension_numbers<[1], [0], [0], [1], [0, 0, 1, 1], [], []>} : vector<16x32xbf16>, vector<32x64xbf16>, vector<16x64xf32> -> vector<16x64xf32>
    %368 = vector.broadcast %360 : vector<1x64xf32> to vector<16x64xf32>
    %369 = arith.addf %367, %368 : vector<16x64xf32>
    %cst_142 = arith.constant 0.000000e+00 : f32
    %370 = vector.broadcast %cst_142 : f32 to vector<16x64xf32>
    %371 = arith.maximumf %369, %370 : vector<16x64xf32>
    %372 = arith.truncf %371 : vector<16x64xf32> to vector<16x64xbf16>
    %373 = arith.truncf %362 : vector<64x32xf32> to vector<64x32xbf16>
    %cst_143 = arith.constant dense<0.000000e+00> : vector<16x32xf32>
    %374 = tpu.matmul %372, %373, %cst_143 {dimension_numbers = #tpu.dot_dimension_numbers<[1], [0], [0], [1], [0, 0, 1, 1], [], []>} : vector<16x64xbf16>, vector<64x32xbf16>, vector<16x32xf32> -> vector<16x32xf32>
    %375 = vector.broadcast %364 : vector<1x32xf32> to vector<16x32xf32>
    %376 = arith.addf %374, %375 : vector<16x32xf32>
    %377 = arith.addf %330, %376 : vector<16x32xf32>
    %c0_144 = arith.constant 0 : index
    %c0_145 = arith.constant 0 : index
    %378 = vector.load %arg17[%c0_144, %c0_145] : memref<1x32xf32, #tpu.memory_space<vmem>>, vector<1x32xf32>
    %c0_146 = arith.constant 0 : index
    %c0_147 = arith.constant 0 : index
    %379 = vector.load %arg18[%c0_146, %c0_147] : memref<1x32xf32, #tpu.memory_space<vmem>>, vector<1x32xf32>
    %cst_148 = arith.constant dense<0.000000e+00> : vector<16xf32>
    %380 = vector.multi_reduction <add>, %377, %cst_148 [1] : vector<16x32xf32> to vector<16xf32>
    %381 = vector.shape_cast %380 : vector<16xf32> to vector<16x1xf32>
    %cst_149 = arith.constant 3.200000e+01 : f32
    %382 = vector.broadcast %cst_149 : f32 to vector<16x1xf32>
    %383 = arith.divf %381, %382 : vector<16x1xf32>
    %384 = vector.broadcast %383 : vector<16x1xf32> to vector<16x32xf32>
    %385 = arith.subf %377, %384 : vector<16x32xf32>
    %386 = arith.mulf %385, %385 : vector<16x32xf32>
    %cst_150 = arith.constant dense<0.000000e+00> : vector<16xf32>
    %387 = vector.multi_reduction <add>, %386, %cst_150 [1] : vector<16x32xf32> to vector<16xf32>
    %388 = vector.shape_cast %387 : vector<16xf32> to vector<16x1xf32>
    %cst_151 = arith.constant 3.200000e+01 : f32
    %389 = vector.broadcast %cst_151 : f32 to vector<16x1xf32>
    %390 = arith.divf %388, %389 : vector<16x1xf32>
    %391 = vector.broadcast %383 : vector<16x1xf32> to vector<16x32xf32>
    %392 = arith.subf %377, %391 : vector<16x32xf32>
    %cst_152 = arith.constant 9.99999997E-7 : f32
    %393 = vector.broadcast %cst_152 : f32 to vector<16x1xf32>
    %394 = arith.addf %390, %393 : vector<16x1xf32>
    %395 = math.rsqrt %394 : vector<16x1xf32>
    %396 = vector.broadcast %395 : vector<16x1xf32> to vector<16x32xf32>
    %397 = arith.mulf %392, %396 : vector<16x32xf32>
    %398 = vector.broadcast %378 : vector<1x32xf32> to vector<16x32xf32>
    %399 = arith.mulf %397, %398 : vector<16x32xf32>
    %400 = vector.broadcast %379 : vector<1x32xf32> to vector<16x32xf32>
    %401 = arith.addf %399, %400 : vector<16x32xf32>
    %c0_153 = arith.constant 0 : index
    %c0_154 = arith.constant 0 : index
    %402 = vector.load %arg1[%c0_153, %c0_154] : memref<16x32xf32, #tpu.memory_space<vmem>>, vector<16x32xf32>
    %c0_155 = arith.constant 0 : index
    %c0_156 = arith.constant 0 : index
    %c0_157 = arith.constant 0 : index
    %403 = vector.load %arg3[%c0_155, %c0_156, %c0_157] : memref<2x8x8xf32, #tpu.memory_space<vmem>>, vector<2x8x8xf32>
    %c0_158 = arith.constant 0 : index
    %c0_159 = arith.constant 0 : index
    %c0_160 = arith.constant 0 : index
    %404 = vector.load %arg4[%c0_158, %c0_159, %c0_160] : memref<2x8x8xf32, #tpu.memory_space<vmem>>, vector<2x8x8xf32>
    %c0_161 = arith.constant 0 : index
    %c0_162 = arith.constant 0 : index
    %c0_163 = arith.constant 0 : index
    %405 = vector.load %arg33[%c0_161, %c0_162, %c0_163] : memref<2x1x32xf32, #tpu.memory_space<vmem>>, vector<1x1x32xf32>
    %406 = vector.shape_cast %405 : vector<1x1x32xf32> to vector<1x32xf32>
    %c0_164 = arith.constant 0 : index
    %c0_165 = arith.constant 0 : index
    %c0_166 = arith.constant 0 : index
    %407 = vector.load %arg34[%c0_164, %c0_165, %c0_166] : memref<2x1x32xf32, #tpu.memory_space<vmem>>, vector<1x1x32xf32>
    %408 = vector.shape_cast %407 : vector<1x1x32xf32> to vector<1x32xf32>
    %cst_167 = arith.constant dense<0.000000e+00> : vector<16xf32>
    %409 = vector.multi_reduction <add>, %402, %cst_167 [1] : vector<16x32xf32> to vector<16xf32>
    %410 = vector.shape_cast %409 : vector<16xf32> to vector<16x1xf32>
    %cst_168 = arith.constant 3.200000e+01 : f32
    %411 = vector.broadcast %cst_168 : f32 to vector<16x1xf32>
    %412 = arith.divf %410, %411 : vector<16x1xf32>
    %413 = vector.broadcast %412 : vector<16x1xf32> to vector<16x32xf32>
    %414 = arith.subf %402, %413 : vector<16x32xf32>
    %415 = arith.mulf %414, %414 : vector<16x32xf32>
    %cst_169 = arith.constant dense<0.000000e+00> : vector<16xf32>
    %416 = vector.multi_reduction <add>, %415, %cst_169 [1] : vector<16x32xf32> to vector<16xf32>
    %417 = vector.shape_cast %416 : vector<16xf32> to vector<16x1xf32>
    %cst_170 = arith.constant 3.200000e+01 : f32
    %418 = vector.broadcast %cst_170 : f32 to vector<16x1xf32>
    %419 = arith.divf %417, %418 : vector<16x1xf32>
    %420 = vector.broadcast %412 : vector<16x1xf32> to vector<16x32xf32>
    %421 = arith.subf %402, %420 : vector<16x32xf32>
    %cst_171 = arith.constant 9.99999997E-7 : f32
    %422 = vector.broadcast %cst_171 : f32 to vector<16x1xf32>
    %423 = arith.addf %419, %422 : vector<16x1xf32>
    %424 = math.rsqrt %423 : vector<16x1xf32>
    %425 = vector.broadcast %424 : vector<16x1xf32> to vector<16x32xf32>
    %426 = arith.mulf %421, %425 : vector<16x32xf32>
    %427 = vector.broadcast %406 : vector<1x32xf32> to vector<16x32xf32>
    %428 = arith.mulf %426, %427 : vector<16x32xf32>
    %429 = vector.broadcast %408 : vector<1x32xf32> to vector<16x32xf32>
    %430 = arith.addf %428, %429 : vector<16x32xf32>
    %c0_172 = arith.constant 0 : index
    %c0_173 = arith.constant 0 : index
    %c0_174 = arith.constant 0 : index
    %431 = vector.load %arg19[%c0_172, %c0_173, %c0_174] : memref<2x32x96xf32, #tpu.memory_space<vmem>>, vector<1x32x96xf32>
    %432 = vector.shape_cast %431 : vector<1x32x96xf32> to vector<32x96xf32>
    %c0_175 = arith.constant 0 : index
    %c0_176 = arith.constant 0 : index
    %c0_177 = arith.constant 0 : index
    %433 = vector.load %arg20[%c0_175, %c0_176, %c0_177] : memref<2x1x96xf32, #tpu.memory_space<vmem>>, vector<1x1x96xf32>
    %434 = vector.shape_cast %433 : vector<1x1x96xf32> to vector<1x96xf32>
    %c0_178 = arith.constant 0 : index
    %c0_179 = arith.constant 0 : index
    %c0_180 = arith.constant 0 : index
    %435 = vector.load %arg21[%c0_178, %c0_179, %c0_180] : memref<2x32x32xf32, #tpu.memory_space<vmem>>, vector<1x32x32xf32>
    %436 = vector.shape_cast %435 : vector<1x32x32xf32> to vector<32x32xf32>
    %c0_181 = arith.constant 0 : index
    %c0_182 = arith.constant 0 : index
    %c0_183 = arith.constant 0 : index
    %437 = vector.load %arg22[%c0_181, %c0_182, %c0_183] : memref<2x1x32xf32, #tpu.memory_space<vmem>>, vector<1x1x32xf32>
    %438 = vector.shape_cast %437 : vector<1x1x32xf32> to vector<1x32xf32>
    %439 = arith.truncf %430 : vector<16x32xf32> to vector<16x32xbf16>
    %440 = arith.truncf %432 : vector<32x96xf32> to vector<32x96xbf16>
    %cst_184 = arith.constant dense<0.000000e+00> : vector<16x96xf32>
    %441 = tpu.matmul %439, %440, %cst_184 {dimension_numbers = #tpu.dot_dimension_numbers<[1], [0], [0], [1], [0, 0, 1, 1], [], []>} : vector<16x32xbf16>, vector<32x96xbf16>, vector<16x96xf32> -> vector<16x96xf32>
    %442 = vector.broadcast %434 : vector<1x96xf32> to vector<16x96xf32>
    %443 = arith.addf %441, %442 : vector<16x96xf32>
    %444 = vector.extract_strided_slice %443 {offsets = [0, 0], sizes = [16, 32], strides = [1, 1]} : vector<16x96xf32> to vector<16x32xf32>
    %445 = vector.extract_strided_slice %443 {offsets = [0, 32], sizes = [16, 32], strides = [1, 1]} : vector<16x96xf32> to vector<16x32xf32>
    %446 = vector.extract_strided_slice %443 {offsets = [0, 64], sizes = [16, 32], strides = [1, 1]} : vector<16x96xf32> to vector<16x32xf32>
    %447 = vector.shape_cast %444 : vector<16x32xf32> to vector<2x8x32xf32>
    %448 = vector.shape_cast %445 : vector<16x32xf32> to vector<2x8x32xf32>
    %449 = vector.shape_cast %446 : vector<16x32xf32> to vector<2x8x32xf32>
    %450 = vector.extract_strided_slice %447 {offsets = [0, 0, 0], sizes = [2, 8, 8], strides = [1, 1, 1]} : vector<2x8x32xf32> to vector<2x8x8xf32>
    %451 = arith.truncf %450 : vector<2x8x8xf32> to vector<2x8x8xbf16>
    %452 = vector.extract_strided_slice %448 {offsets = [0, 0, 0], sizes = [2, 8, 8], strides = [1, 1, 1]} : vector<2x8x32xf32> to vector<2x8x8xf32>
    %453 = arith.truncf %452 : vector<2x8x8xf32> to vector<2x8x8xbf16>
    %454 = vector.extract_strided_slice %449 {offsets = [0, 0, 0], sizes = [2, 8, 8], strides = [1, 1, 1]} : vector<2x8x32xf32> to vector<2x8x8xf32>
    %455 = arith.truncf %454 : vector<2x8x8xf32> to vector<2x8x8xbf16>
    "tpu.trace_start"() <{level = 10 : i32, message = "bqd,bkd->bqk"}> : () -> ()
    %cst_185 = arith.constant dense<0.000000e+00> : vector<2x8x8xf32>
    %456 = tpu.matmul %451, %453, %cst_185 {dimension_numbers = #tpu.dot_dimension_numbers<[2], [2], [1], [1], [0, 0, 0, 1, 1, 1], [0], [0]>} : vector<2x8x8xbf16>, vector<2x8x8xbf16>, vector<2x8x8xf32> -> vector<2x8x8xf32>
    "tpu.trace_stop"() : () -> ()
    %cst_186 = arith.constant 0.353553385 : f32
    %457 = vector.broadcast %cst_186 : f32 to vector<2x8x8xf32>
    %458 = arith.mulf %456, %457 : vector<2x8x8xf32>
    %459 = arith.addf %458, %403 : vector<2x8x8xf32>
    %cst_187 = arith.constant dense<0xFF800000> : vector<2x8xf32>
    %460 = vector.multi_reduction <maximumf>, %459, %cst_187 [2] : vector<2x8x8xf32> to vector<2x8xf32>
    %461 = vector.shape_cast %460 : vector<2x8xf32> to vector<2x8x1xf32>
    %462 = vector.broadcast %461 : vector<2x8x1xf32> to vector<2x8x8xf32>
    %463 = arith.subf %459, %462 : vector<2x8x8xf32>
    %464 = math.exp %463 : vector<2x8x8xf32>
    %cst_188 = arith.constant dense<0.000000e+00> : vector<2x8xf32>
    %465 = vector.multi_reduction <add>, %464, %cst_188 [2] : vector<2x8x8xf32> to vector<2x8xf32>
    %466 = vector.shape_cast %465 : vector<2x8xf32> to vector<2x8x1xf32>
    %467 = tpu.reciprocal %466 {approx = true} : vector<2x8x1xf32> -> vector<2x8x1xf32>
    %468 = vector.broadcast %467 : vector<2x8x1xf32> to vector<2x8x8xf32>
    %469 = arith.mulf %464, %468 : vector<2x8x8xf32>
    %470 = arith.truncf %469 : vector<2x8x8xf32> to vector<2x8x8xbf16>
    "tpu.trace_start"() <{level = 10 : i32, message = "bqk,bkd->bqd"}> : () -> ()
    %cst_189 = arith.constant dense<0.000000e+00> : vector<2x8x8xf32>
    %471 = tpu.matmul %470, %455, %cst_189 {dimension_numbers = #tpu.dot_dimension_numbers<[2], [1], [1], [2], [0, 0, 0, 1, 1, 2], [0], [0]>} : vector<2x8x8xbf16>, vector<2x8x8xbf16>, vector<2x8x8xf32> -> vector<2x8x8xf32>
    "tpu.trace_stop"() : () -> ()
    %472 = vector.extract_strided_slice %447 {offsets = [0, 0, 8], sizes = [2, 8, 8], strides = [1, 1, 1]} : vector<2x8x32xf32> to vector<2x8x8xf32>
    %473 = arith.truncf %472 : vector<2x8x8xf32> to vector<2x8x8xbf16>
    %474 = vector.extract_strided_slice %448 {offsets = [0, 0, 8], sizes = [2, 8, 8], strides = [1, 1, 1]} : vector<2x8x32xf32> to vector<2x8x8xf32>
    %475 = arith.truncf %474 : vector<2x8x8xf32> to vector<2x8x8xbf16>
    %476 = vector.extract_strided_slice %449 {offsets = [0, 0, 8], sizes = [2, 8, 8], strides = [1, 1, 1]} : vector<2x8x32xf32> to vector<2x8x8xf32>
    %477 = arith.truncf %476 : vector<2x8x8xf32> to vector<2x8x8xbf16>
    "tpu.trace_start"() <{level = 10 : i32, message = "bqd,bkd->bqk"}> : () -> ()
    %cst_190 = arith.constant dense<0.000000e+00> : vector<2x8x8xf32>
    %478 = tpu.matmul %473, %475, %cst_190 {dimension_numbers = #tpu.dot_dimension_numbers<[2], [2], [1], [1], [0, 0, 0, 1, 1, 1], [0], [0]>} : vector<2x8x8xbf16>, vector<2x8x8xbf16>, vector<2x8x8xf32> -> vector<2x8x8xf32>
    "tpu.trace_stop"() : () -> ()
    %cst_191 = arith.constant 0.353553385 : f32
    %479 = vector.broadcast %cst_191 : f32 to vector<2x8x8xf32>
    %480 = arith.mulf %478, %479 : vector<2x8x8xf32>
    %481 = arith.addf %480, %403 : vector<2x8x8xf32>
    %cst_192 = arith.constant dense<0xFF800000> : vector<2x8xf32>
    %482 = vector.multi_reduction <maximumf>, %481, %cst_192 [2] : vector<2x8x8xf32> to vector<2x8xf32>
    %483 = vector.shape_cast %482 : vector<2x8xf32> to vector<2x8x1xf32>
    %484 = vector.broadcast %483 : vector<2x8x1xf32> to vector<2x8x8xf32>
    %485 = arith.subf %481, %484 : vector<2x8x8xf32>
    %486 = math.exp %485 : vector<2x8x8xf32>
    %cst_193 = arith.constant dense<0.000000e+00> : vector<2x8xf32>
    %487 = vector.multi_reduction <add>, %486, %cst_193 [2] : vector<2x8x8xf32> to vector<2x8xf32>
    %488 = vector.shape_cast %487 : vector<2x8xf32> to vector<2x8x1xf32>
    %489 = tpu.reciprocal %488 {approx = true} : vector<2x8x1xf32> -> vector<2x8x1xf32>
    %490 = vector.broadcast %489 : vector<2x8x1xf32> to vector<2x8x8xf32>
    %491 = arith.mulf %486, %490 : vector<2x8x8xf32>
    %492 = arith.truncf %491 : vector<2x8x8xf32> to vector<2x8x8xbf16>
    "tpu.trace_start"() <{level = 10 : i32, message = "bqk,bkd->bqd"}> : () -> ()
    %cst_194 = arith.constant dense<0.000000e+00> : vector<2x8x8xf32>
    %493 = tpu.matmul %492, %477, %cst_194 {dimension_numbers = #tpu.dot_dimension_numbers<[2], [1], [1], [2], [0, 0, 0, 1, 1, 2], [0], [0]>} : vector<2x8x8xbf16>, vector<2x8x8xbf16>, vector<2x8x8xf32> -> vector<2x8x8xf32>
    "tpu.trace_stop"() : () -> ()
    %494 = vector.extract_strided_slice %447 {offsets = [0, 0, 16], sizes = [2, 8, 8], strides = [1, 1, 1]} : vector<2x8x32xf32> to vector<2x8x8xf32>
    %495 = arith.truncf %494 : vector<2x8x8xf32> to vector<2x8x8xbf16>
    %496 = vector.extract_strided_slice %448 {offsets = [0, 0, 16], sizes = [2, 8, 8], strides = [1, 1, 1]} : vector<2x8x32xf32> to vector<2x8x8xf32>
    %497 = arith.truncf %496 : vector<2x8x8xf32> to vector<2x8x8xbf16>
    %498 = vector.extract_strided_slice %449 {offsets = [0, 0, 16], sizes = [2, 8, 8], strides = [1, 1, 1]} : vector<2x8x32xf32> to vector<2x8x8xf32>
    %499 = arith.truncf %498 : vector<2x8x8xf32> to vector<2x8x8xbf16>
    "tpu.trace_start"() <{level = 10 : i32, message = "bqd,bkd->bqk"}> : () -> ()
    %cst_195 = arith.constant dense<0.000000e+00> : vector<2x8x8xf32>
    %500 = tpu.matmul %495, %497, %cst_195 {dimension_numbers = #tpu.dot_dimension_numbers<[2], [2], [1], [1], [0, 0, 0, 1, 1, 1], [0], [0]>} : vector<2x8x8xbf16>, vector<2x8x8xbf16>, vector<2x8x8xf32> -> vector<2x8x8xf32>
    "tpu.trace_stop"() : () -> ()
    %cst_196 = arith.constant 0.353553385 : f32
    %501 = vector.broadcast %cst_196 : f32 to vector<2x8x8xf32>
    %502 = arith.mulf %500, %501 : vector<2x8x8xf32>
    %503 = arith.addf %502, %403 : vector<2x8x8xf32>
    %cst_197 = arith.constant dense<0xFF800000> : vector<2x8xf32>
    %504 = vector.multi_reduction <maximumf>, %503, %cst_197 [2] : vector<2x8x8xf32> to vector<2x8xf32>
    %505 = vector.shape_cast %504 : vector<2x8xf32> to vector<2x8x1xf32>
    %506 = vector.broadcast %505 : vector<2x8x1xf32> to vector<2x8x8xf32>
    %507 = arith.subf %503, %506 : vector<2x8x8xf32>
    %508 = math.exp %507 : vector<2x8x8xf32>
    %cst_198 = arith.constant dense<0.000000e+00> : vector<2x8xf32>
    %509 = vector.multi_reduction <add>, %508, %cst_198 [2] : vector<2x8x8xf32> to vector<2x8xf32>
    %510 = vector.shape_cast %509 : vector<2x8xf32> to vector<2x8x1xf32>
    %511 = tpu.reciprocal %510 {approx = true} : vector<2x8x1xf32> -> vector<2x8x1xf32>
    %512 = vector.broadcast %511 : vector<2x8x1xf32> to vector<2x8x8xf32>
    %513 = arith.mulf %508, %512 : vector<2x8x8xf32>
    %514 = arith.truncf %513 : vector<2x8x8xf32> to vector<2x8x8xbf16>
    "tpu.trace_start"() <{level = 10 : i32, message = "bqk,bkd->bqd"}> : () -> ()
    %cst_199 = arith.constant dense<0.000000e+00> : vector<2x8x8xf32>
    %515 = tpu.matmul %514, %499, %cst_199 {dimension_numbers = #tpu.dot_dimension_numbers<[2], [1], [1], [2], [0, 0, 0, 1, 1, 2], [0], [0]>} : vector<2x8x8xbf16>, vector<2x8x8xbf16>, vector<2x8x8xf32> -> vector<2x8x8xf32>
    "tpu.trace_stop"() : () -> ()
    %516 = vector.extract_strided_slice %447 {offsets = [0, 0, 24], sizes = [2, 8, 8], strides = [1, 1, 1]} : vector<2x8x32xf32> to vector<2x8x8xf32>
    %517 = arith.truncf %516 : vector<2x8x8xf32> to vector<2x8x8xbf16>
    %518 = vector.extract_strided_slice %448 {offsets = [0, 0, 24], sizes = [2, 8, 8], strides = [1, 1, 1]} : vector<2x8x32xf32> to vector<2x8x8xf32>
    %519 = arith.truncf %518 : vector<2x8x8xf32> to vector<2x8x8xbf16>
    %520 = vector.extract_strided_slice %449 {offsets = [0, 0, 24], sizes = [2, 8, 8], strides = [1, 1, 1]} : vector<2x8x32xf32> to vector<2x8x8xf32>
    %521 = arith.truncf %520 : vector<2x8x8xf32> to vector<2x8x8xbf16>
    "tpu.trace_start"() <{level = 10 : i32, message = "bqd,bkd->bqk"}> : () -> ()
    %cst_200 = arith.constant dense<0.000000e+00> : vector<2x8x8xf32>
    %522 = tpu.matmul %517, %519, %cst_200 {dimension_numbers = #tpu.dot_dimension_numbers<[2], [2], [1], [1], [0, 0, 0, 1, 1, 1], [0], [0]>} : vector<2x8x8xbf16>, vector<2x8x8xbf16>, vector<2x8x8xf32> -> vector<2x8x8xf32>
    "tpu.trace_stop"() : () -> ()
    %cst_201 = arith.constant 0.353553385 : f32
    %523 = vector.broadcast %cst_201 : f32 to vector<2x8x8xf32>
    %524 = arith.mulf %522, %523 : vector<2x8x8xf32>
    %525 = arith.addf %524, %403 : vector<2x8x8xf32>
    %cst_202 = arith.constant dense<0xFF800000> : vector<2x8xf32>
    %526 = vector.multi_reduction <maximumf>, %525, %cst_202 [2] : vector<2x8x8xf32> to vector<2x8xf32>
    %527 = vector.shape_cast %526 : vector<2x8xf32> to vector<2x8x1xf32>
    %528 = vector.broadcast %527 : vector<2x8x1xf32> to vector<2x8x8xf32>
    %529 = arith.subf %525, %528 : vector<2x8x8xf32>
    %530 = math.exp %529 : vector<2x8x8xf32>
    %cst_203 = arith.constant dense<0.000000e+00> : vector<2x8xf32>
    %531 = vector.multi_reduction <add>, %530, %cst_203 [2] : vector<2x8x8xf32> to vector<2x8xf32>
    %532 = vector.shape_cast %531 : vector<2x8xf32> to vector<2x8x1xf32>
    %533 = tpu.reciprocal %532 {approx = true} : vector<2x8x1xf32> -> vector<2x8x1xf32>
    %534 = vector.broadcast %533 : vector<2x8x1xf32> to vector<2x8x8xf32>
    %535 = arith.mulf %530, %534 : vector<2x8x8xf32>
    %536 = arith.truncf %535 : vector<2x8x8xf32> to vector<2x8x8xbf16>
    "tpu.trace_start"() <{level = 10 : i32, message = "bqk,bkd->bqd"}> : () -> ()
    %cst_204 = arith.constant dense<0.000000e+00> : vector<2x8x8xf32>
    %537 = tpu.matmul %536, %521, %cst_204 {dimension_numbers = #tpu.dot_dimension_numbers<[2], [1], [1], [2], [0, 0, 0, 1, 1, 2], [0], [0]>} : vector<2x8x8xbf16>, vector<2x8x8xbf16>, vector<2x8x8xf32> -> vector<2x8x8xf32>
    "tpu.trace_stop"() : () -> ()
    %538 = tpu.concatenate %471, %493, %515, %537 in 2 : vector<2x8x8xf32>, vector<2x8x8xf32>, vector<2x8x8xf32>, vector<2x8x8xf32> -> vector<2x8x32xf32>
    %539 = vector.shape_cast %538 : vector<2x8x32xf32> to vector<16x32xf32>
    %540 = arith.truncf %539 : vector<16x32xf32> to vector<16x32xbf16>
    %541 = arith.truncf %436 : vector<32x32xf32> to vector<32x32xbf16>
    %cst_205 = arith.constant dense<0.000000e+00> : vector<16x32xf32>
    %542 = tpu.matmul %540, %541, %cst_205 {dimension_numbers = #tpu.dot_dimension_numbers<[1], [0], [0], [1], [0, 0, 1, 1], [], []>} : vector<16x32xbf16>, vector<32x32xbf16>, vector<16x32xf32> -> vector<16x32xf32>
    %543 = vector.broadcast %438 : vector<1x32xf32> to vector<16x32xf32>
    %544 = arith.addf %542, %543 : vector<16x32xf32>
    %545 = arith.addf %402, %544 : vector<16x32xf32>
    %c0_206 = arith.constant 0 : index
    %c0_207 = arith.constant 0 : index
    %c0_208 = arith.constant 0 : index
    %546 = vector.load %arg35[%c0_206, %c0_207, %c0_208] : memref<2x1x32xf32, #tpu.memory_space<vmem>>, vector<1x1x32xf32>
    %547 = vector.shape_cast %546 : vector<1x1x32xf32> to vector<1x32xf32>
    %c0_209 = arith.constant 0 : index
    %c0_210 = arith.constant 0 : index
    %c0_211 = arith.constant 0 : index
    %548 = vector.load %arg36[%c0_209, %c0_210, %c0_211] : memref<2x1x32xf32, #tpu.memory_space<vmem>>, vector<1x1x32xf32>
    %549 = vector.shape_cast %548 : vector<1x1x32xf32> to vector<1x32xf32>
    %cst_212 = arith.constant dense<0.000000e+00> : vector<16xf32>
    %550 = vector.multi_reduction <add>, %545, %cst_212 [1] : vector<16x32xf32> to vector<16xf32>
    %551 = vector.shape_cast %550 : vector<16xf32> to vector<16x1xf32>
    %cst_213 = arith.constant 3.200000e+01 : f32
    %552 = vector.broadcast %cst_213 : f32 to vector<16x1xf32>
    %553 = arith.divf %551, %552 : vector<16x1xf32>
    %554 = vector.broadcast %553 : vector<16x1xf32> to vector<16x32xf32>
    %555 = arith.subf %545, %554 : vector<16x32xf32>
    %556 = arith.mulf %555, %555 : vector<16x32xf32>
    %cst_214 = arith.constant dense<0.000000e+00> : vector<16xf32>
    %557 = vector.multi_reduction <add>, %556, %cst_214 [1] : vector<16x32xf32> to vector<16xf32>
    %558 = vector.shape_cast %557 : vector<16xf32> to vector<16x1xf32>
    %cst_215 = arith.constant 3.200000e+01 : f32
    %559 = vector.broadcast %cst_215 : f32 to vector<16x1xf32>
    %560 = arith.divf %558, %559 : vector<16x1xf32>
    %561 = vector.broadcast %553 : vector<16x1xf32> to vector<16x32xf32>
    %562 = arith.subf %545, %561 : vector<16x32xf32>
    %cst_216 = arith.constant 9.99999997E-7 : f32
    %563 = vector.broadcast %cst_216 : f32 to vector<16x1xf32>
    %564 = arith.addf %560, %563 : vector<16x1xf32>
    %565 = math.rsqrt %564 : vector<16x1xf32>
    %566 = vector.broadcast %565 : vector<16x1xf32> to vector<16x32xf32>
    %567 = arith.mulf %562, %566 : vector<16x32xf32>
    %568 = vector.broadcast %547 : vector<1x32xf32> to vector<16x32xf32>
    %569 = arith.mulf %567, %568 : vector<16x32xf32>
    %570 = vector.broadcast %549 : vector<1x32xf32> to vector<16x32xf32>
    %571 = arith.addf %569, %570 : vector<16x32xf32>
    %c0_217 = arith.constant 0 : index
    %c0_218 = arith.constant 0 : index
    %c0_219 = arith.constant 0 : index
    %572 = vector.load %arg23[%c0_217, %c0_218, %c0_219] : memref<2x32x32xf32, #tpu.memory_space<vmem>>, vector<1x32x32xf32>
    %573 = vector.shape_cast %572 : vector<1x32x32xf32> to vector<32x32xf32>
    %c0_220 = arith.constant 0 : index
    %c0_221 = arith.constant 0 : index
    %c0_222 = arith.constant 0 : index
    %574 = vector.load %arg24[%c0_220, %c0_221, %c0_222] : memref<2x1x32xf32, #tpu.memory_space<vmem>>, vector<1x1x32xf32>
    %575 = vector.shape_cast %574 : vector<1x1x32xf32> to vector<1x32xf32>
    %c0_223 = arith.constant 0 : index
    %c0_224 = arith.constant 0 : index
    %c0_225 = arith.constant 0 : index
    %576 = vector.load %arg25[%c0_223, %c0_224, %c0_225] : memref<2x32x64xf32, #tpu.memory_space<vmem>>, vector<1x32x64xf32>
    %577 = vector.shape_cast %576 : vector<1x32x64xf32> to vector<32x64xf32>
    %c0_226 = arith.constant 0 : index
    %c0_227 = arith.constant 0 : index
    %c0_228 = arith.constant 0 : index
    %578 = vector.load %arg26[%c0_226, %c0_227, %c0_228] : memref<2x1x64xf32, #tpu.memory_space<vmem>>, vector<1x1x64xf32>
    %579 = vector.shape_cast %578 : vector<1x1x64xf32> to vector<1x64xf32>
    %c0_229 = arith.constant 0 : index
    %c0_230 = arith.constant 0 : index
    %c0_231 = arith.constant 0 : index
    %580 = vector.load %arg27[%c0_229, %c0_230, %c0_231] : memref<2x32x32xf32, #tpu.memory_space<vmem>>, vector<1x32x32xf32>
    %581 = vector.shape_cast %580 : vector<1x32x32xf32> to vector<32x32xf32>
    %c0_232 = arith.constant 0 : index
    %c0_233 = arith.constant 0 : index
    %c0_234 = arith.constant 0 : index
    %582 = vector.load %arg28[%c0_232, %c0_233, %c0_234] : memref<2x1x32xf32, #tpu.memory_space<vmem>>, vector<1x1x32xf32>
    %583 = vector.shape_cast %582 : vector<1x1x32xf32> to vector<1x32xf32>
    %584 = arith.truncf %571 : vector<16x32xf32> to vector<16x32xbf16>
    %585 = arith.truncf %573 : vector<32x32xf32> to vector<32x32xbf16>
    %cst_235 = arith.constant dense<0.000000e+00> : vector<16x32xf32>
    %586 = tpu.matmul %584, %585, %cst_235 {dimension_numbers = #tpu.dot_dimension_numbers<[1], [0], [0], [1], [0, 0, 1, 1], [], []>} : vector<16x32xbf16>, vector<32x32xbf16>, vector<16x32xf32> -> vector<16x32xf32>
    %587 = vector.broadcast %575 : vector<1x32xf32> to vector<16x32xf32>
    %588 = arith.addf %586, %587 : vector<16x32xf32>
    %589 = arith.truncf %401 : vector<16x32xf32> to vector<16x32xbf16>
    %590 = arith.truncf %577 : vector<32x64xf32> to vector<32x64xbf16>
    %cst_236 = arith.constant dense<0.000000e+00> : vector<16x64xf32>
    %591 = tpu.matmul %589, %590, %cst_236 {dimension_numbers = #tpu.dot_dimension_numbers<[1], [0], [0], [1], [0, 0, 1, 1], [], []>} : vector<16x32xbf16>, vector<32x64xbf16>, vector<16x64xf32> -> vector<16x64xf32>
    %592 = vector.broadcast %579 : vector<1x64xf32> to vector<16x64xf32>
    %593 = arith.addf %591, %592 : vector<16x64xf32>
    %594 = vector.extract_strided_slice %593 {offsets = [0, 0], sizes = [16, 32], strides = [1, 1]} : vector<16x64xf32> to vector<16x32xf32>
    %595 = vector.extract_strided_slice %593 {offsets = [0, 32], sizes = [16, 32], strides = [1, 1]} : vector<16x64xf32> to vector<16x32xf32>
    %596 = vector.shape_cast %588 : vector<16x32xf32> to vector<2x8x32xf32>
    %597 = vector.shape_cast %594 : vector<16x32xf32> to vector<2x8x32xf32>
    %598 = vector.shape_cast %595 : vector<16x32xf32> to vector<2x8x32xf32>
    %599 = vector.extract_strided_slice %596 {offsets = [0, 0, 0], sizes = [2, 8, 8], strides = [1, 1, 1]} : vector<2x8x32xf32> to vector<2x8x8xf32>
    %600 = arith.truncf %599 : vector<2x8x8xf32> to vector<2x8x8xbf16>
    %601 = vector.extract_strided_slice %597 {offsets = [0, 0, 0], sizes = [2, 8, 8], strides = [1, 1, 1]} : vector<2x8x32xf32> to vector<2x8x8xf32>
    %602 = arith.truncf %601 : vector<2x8x8xf32> to vector<2x8x8xbf16>
    %603 = vector.extract_strided_slice %598 {offsets = [0, 0, 0], sizes = [2, 8, 8], strides = [1, 1, 1]} : vector<2x8x32xf32> to vector<2x8x8xf32>
    %604 = arith.truncf %603 : vector<2x8x8xf32> to vector<2x8x8xbf16>
    "tpu.trace_start"() <{level = 10 : i32, message = "bqd,bkd->bqk"}> : () -> ()
    %cst_237 = arith.constant dense<0.000000e+00> : vector<2x8x8xf32>
    %605 = tpu.matmul %600, %602, %cst_237 {dimension_numbers = #tpu.dot_dimension_numbers<[2], [2], [1], [1], [0, 0, 0, 1, 1, 1], [0], [0]>} : vector<2x8x8xbf16>, vector<2x8x8xbf16>, vector<2x8x8xf32> -> vector<2x8x8xf32>
    "tpu.trace_stop"() : () -> ()
    %cst_238 = arith.constant 0.353553385 : f32
    %606 = vector.broadcast %cst_238 : f32 to vector<2x8x8xf32>
    %607 = arith.mulf %605, %606 : vector<2x8x8xf32>
    %608 = arith.addf %607, %404 : vector<2x8x8xf32>
    %cst_239 = arith.constant dense<0xFF800000> : vector<2x8xf32>
    %609 = vector.multi_reduction <maximumf>, %608, %cst_239 [2] : vector<2x8x8xf32> to vector<2x8xf32>
    %610 = vector.shape_cast %609 : vector<2x8xf32> to vector<2x8x1xf32>
    %611 = vector.broadcast %610 : vector<2x8x1xf32> to vector<2x8x8xf32>
    %612 = arith.subf %608, %611 : vector<2x8x8xf32>
    %613 = math.exp %612 : vector<2x8x8xf32>
    %cst_240 = arith.constant dense<0.000000e+00> : vector<2x8xf32>
    %614 = vector.multi_reduction <add>, %613, %cst_240 [2] : vector<2x8x8xf32> to vector<2x8xf32>
    %615 = vector.shape_cast %614 : vector<2x8xf32> to vector<2x8x1xf32>
    %616 = tpu.reciprocal %615 {approx = true} : vector<2x8x1xf32> -> vector<2x8x1xf32>
    %617 = vector.broadcast %616 : vector<2x8x1xf32> to vector<2x8x8xf32>
    %618 = arith.mulf %613, %617 : vector<2x8x8xf32>
    %619 = arith.truncf %618 : vector<2x8x8xf32> to vector<2x8x8xbf16>
    "tpu.trace_start"() <{level = 10 : i32, message = "bqk,bkd->bqd"}> : () -> ()
    %cst_241 = arith.constant dense<0.000000e+00> : vector<2x8x8xf32>
    %620 = tpu.matmul %619, %604, %cst_241 {dimension_numbers = #tpu.dot_dimension_numbers<[2], [1], [1], [2], [0, 0, 0, 1, 1, 2], [0], [0]>} : vector<2x8x8xbf16>, vector<2x8x8xbf16>, vector<2x8x8xf32> -> vector<2x8x8xf32>
    "tpu.trace_stop"() : () -> ()
    %621 = vector.extract_strided_slice %596 {offsets = [0, 0, 8], sizes = [2, 8, 8], strides = [1, 1, 1]} : vector<2x8x32xf32> to vector<2x8x8xf32>
    %622 = arith.truncf %621 : vector<2x8x8xf32> to vector<2x8x8xbf16>
    %623 = vector.extract_strided_slice %597 {offsets = [0, 0, 8], sizes = [2, 8, 8], strides = [1, 1, 1]} : vector<2x8x32xf32> to vector<2x8x8xf32>
    %624 = arith.truncf %623 : vector<2x8x8xf32> to vector<2x8x8xbf16>
    %625 = vector.extract_strided_slice %598 {offsets = [0, 0, 8], sizes = [2, 8, 8], strides = [1, 1, 1]} : vector<2x8x32xf32> to vector<2x8x8xf32>
    %626 = arith.truncf %625 : vector<2x8x8xf32> to vector<2x8x8xbf16>
    "tpu.trace_start"() <{level = 10 : i32, message = "bqd,bkd->bqk"}> : () -> ()
    %cst_242 = arith.constant dense<0.000000e+00> : vector<2x8x8xf32>
    %627 = tpu.matmul %622, %624, %cst_242 {dimension_numbers = #tpu.dot_dimension_numbers<[2], [2], [1], [1], [0, 0, 0, 1, 1, 1], [0], [0]>} : vector<2x8x8xbf16>, vector<2x8x8xbf16>, vector<2x8x8xf32> -> vector<2x8x8xf32>
    "tpu.trace_stop"() : () -> ()
    %cst_243 = arith.constant 0.353553385 : f32
    %628 = vector.broadcast %cst_243 : f32 to vector<2x8x8xf32>
    %629 = arith.mulf %627, %628 : vector<2x8x8xf32>
    %630 = arith.addf %629, %404 : vector<2x8x8xf32>
    %cst_244 = arith.constant dense<0xFF800000> : vector<2x8xf32>
    %631 = vector.multi_reduction <maximumf>, %630, %cst_244 [2] : vector<2x8x8xf32> to vector<2x8xf32>
    %632 = vector.shape_cast %631 : vector<2x8xf32> to vector<2x8x1xf32>
    %633 = vector.broadcast %632 : vector<2x8x1xf32> to vector<2x8x8xf32>
    %634 = arith.subf %630, %633 : vector<2x8x8xf32>
    %635 = math.exp %634 : vector<2x8x8xf32>
    %cst_245 = arith.constant dense<0.000000e+00> : vector<2x8xf32>
    %636 = vector.multi_reduction <add>, %635, %cst_245 [2] : vector<2x8x8xf32> to vector<2x8xf32>
    %637 = vector.shape_cast %636 : vector<2x8xf32> to vector<2x8x1xf32>
    %638 = tpu.reciprocal %637 {approx = true} : vector<2x8x1xf32> -> vector<2x8x1xf32>
    %639 = vector.broadcast %638 : vector<2x8x1xf32> to vector<2x8x8xf32>
    %640 = arith.mulf %635, %639 : vector<2x8x8xf32>
    %641 = arith.truncf %640 : vector<2x8x8xf32> to vector<2x8x8xbf16>
    "tpu.trace_start"() <{level = 10 : i32, message = "bqk,bkd->bqd"}> : () -> ()
    %cst_246 = arith.constant dense<0.000000e+00> : vector<2x8x8xf32>
    %642 = tpu.matmul %641, %626, %cst_246 {dimension_numbers = #tpu.dot_dimension_numbers<[2], [1], [1], [2], [0, 0, 0, 1, 1, 2], [0], [0]>} : vector<2x8x8xbf16>, vector<2x8x8xbf16>, vector<2x8x8xf32> -> vector<2x8x8xf32>
    "tpu.trace_stop"() : () -> ()
    %643 = vector.extract_strided_slice %596 {offsets = [0, 0, 16], sizes = [2, 8, 8], strides = [1, 1, 1]} : vector<2x8x32xf32> to vector<2x8x8xf32>
    %644 = arith.truncf %643 : vector<2x8x8xf32> to vector<2x8x8xbf16>
    %645 = vector.extract_strided_slice %597 {offsets = [0, 0, 16], sizes = [2, 8, 8], strides = [1, 1, 1]} : vector<2x8x32xf32> to vector<2x8x8xf32>
    %646 = arith.truncf %645 : vector<2x8x8xf32> to vector<2x8x8xbf16>
    %647 = vector.extract_strided_slice %598 {offsets = [0, 0, 16], sizes = [2, 8, 8], strides = [1, 1, 1]} : vector<2x8x32xf32> to vector<2x8x8xf32>
    %648 = arith.truncf %647 : vector<2x8x8xf32> to vector<2x8x8xbf16>
    "tpu.trace_start"() <{level = 10 : i32, message = "bqd,bkd->bqk"}> : () -> ()
    %cst_247 = arith.constant dense<0.000000e+00> : vector<2x8x8xf32>
    %649 = tpu.matmul %644, %646, %cst_247 {dimension_numbers = #tpu.dot_dimension_numbers<[2], [2], [1], [1], [0, 0, 0, 1, 1, 1], [0], [0]>} : vector<2x8x8xbf16>, vector<2x8x8xbf16>, vector<2x8x8xf32> -> vector<2x8x8xf32>
    "tpu.trace_stop"() : () -> ()
    %cst_248 = arith.constant 0.353553385 : f32
    %650 = vector.broadcast %cst_248 : f32 to vector<2x8x8xf32>
    %651 = arith.mulf %649, %650 : vector<2x8x8xf32>
    %652 = arith.addf %651, %404 : vector<2x8x8xf32>
    %cst_249 = arith.constant dense<0xFF800000> : vector<2x8xf32>
    %653 = vector.multi_reduction <maximumf>, %652, %cst_249 [2] : vector<2x8x8xf32> to vector<2x8xf32>
    %654 = vector.shape_cast %653 : vector<2x8xf32> to vector<2x8x1xf32>
    %655 = vector.broadcast %654 : vector<2x8x1xf32> to vector<2x8x8xf32>
    %656 = arith.subf %652, %655 : vector<2x8x8xf32>
    %657 = math.exp %656 : vector<2x8x8xf32>
    %cst_250 = arith.constant dense<0.000000e+00> : vector<2x8xf32>
    %658 = vector.multi_reduction <add>, %657, %cst_250 [2] : vector<2x8x8xf32> to vector<2x8xf32>
    %659 = vector.shape_cast %658 : vector<2x8xf32> to vector<2x8x1xf32>
    %660 = tpu.reciprocal %659 {approx = true} : vector<2x8x1xf32> -> vector<2x8x1xf32>
    %661 = vector.broadcast %660 : vector<2x8x1xf32> to vector<2x8x8xf32>
    %662 = arith.mulf %657, %661 : vector<2x8x8xf32>
    %663 = arith.truncf %662 : vector<2x8x8xf32> to vector<2x8x8xbf16>
    "tpu.trace_start"() <{level = 10 : i32, message = "bqk,bkd->bqd"}> : () -> ()
    %cst_251 = arith.constant dense<0.000000e+00> : vector<2x8x8xf32>
    %664 = tpu.matmul %663, %648, %cst_251 {dimension_numbers = #tpu.dot_dimension_numbers<[2], [1], [1], [2], [0, 0, 0, 1, 1, 2], [0], [0]>} : vector<2x8x8xbf16>, vector<2x8x8xbf16>, vector<2x8x8xf32> -> vector<2x8x8xf32>
    "tpu.trace_stop"() : () -> ()
    %665 = vector.extract_strided_slice %596 {offsets = [0, 0, 24], sizes = [2, 8, 8], strides = [1, 1, 1]} : vector<2x8x32xf32> to vector<2x8x8xf32>
    %666 = arith.truncf %665 : vector<2x8x8xf32> to vector<2x8x8xbf16>
    %667 = vector.extract_strided_slice %597 {offsets = [0, 0, 24], sizes = [2, 8, 8], strides = [1, 1, 1]} : vector<2x8x32xf32> to vector<2x8x8xf32>
    %668 = arith.truncf %667 : vector<2x8x8xf32> to vector<2x8x8xbf16>
    %669 = vector.extract_strided_slice %598 {offsets = [0, 0, 24], sizes = [2, 8, 8], strides = [1, 1, 1]} : vector<2x8x32xf32> to vector<2x8x8xf32>
    %670 = arith.truncf %669 : vector<2x8x8xf32> to vector<2x8x8xbf16>
    "tpu.trace_start"() <{level = 10 : i32, message = "bqd,bkd->bqk"}> : () -> ()
    %cst_252 = arith.constant dense<0.000000e+00> : vector<2x8x8xf32>
    %671 = tpu.matmul %666, %668, %cst_252 {dimension_numbers = #tpu.dot_dimension_numbers<[2], [2], [1], [1], [0, 0, 0, 1, 1, 1], [0], [0]>} : vector<2x8x8xbf16>, vector<2x8x8xbf16>, vector<2x8x8xf32> -> vector<2x8x8xf32>
    "tpu.trace_stop"() : () -> ()
    %cst_253 = arith.constant 0.353553385 : f32
    %672 = vector.broadcast %cst_253 : f32 to vector<2x8x8xf32>
    %673 = arith.mulf %671, %672 : vector<2x8x8xf32>
    %674 = arith.addf %673, %404 : vector<2x8x8xf32>
    %cst_254 = arith.constant dense<0xFF800000> : vector<2x8xf32>
    %675 = vector.multi_reduction <maximumf>, %674, %cst_254 [2] : vector<2x8x8xf32> to vector<2x8xf32>
    %676 = vector.shape_cast %675 : vector<2x8xf32> to vector<2x8x1xf32>
    %677 = vector.broadcast %676 : vector<2x8x1xf32> to vector<2x8x8xf32>
    %678 = arith.subf %674, %677 : vector<2x8x8xf32>
    %679 = math.exp %678 : vector<2x8x8xf32>
    %cst_255 = arith.constant dense<0.000000e+00> : vector<2x8xf32>
    %680 = vector.multi_reduction <add>, %679, %cst_255 [2] : vector<2x8x8xf32> to vector<2x8xf32>
    %681 = vector.shape_cast %680 : vector<2x8xf32> to vector<2x8x1xf32>
    %682 = tpu.reciprocal %681 {approx = true} : vector<2x8x1xf32> -> vector<2x8x1xf32>
    %683 = vector.broadcast %682 : vector<2x8x1xf32> to vector<2x8x8xf32>
    %684 = arith.mulf %679, %683 : vector<2x8x8xf32>
    %685 = arith.truncf %684 : vector<2x8x8xf32> to vector<2x8x8xbf16>
    "tpu.trace_start"() <{level = 10 : i32, message = "bqk,bkd->bqd"}> : () -> ()
    %cst_256 = arith.constant dense<0.000000e+00> : vector<2x8x8xf32>
    %686 = tpu.matmul %685, %670, %cst_256 {dimension_numbers = #tpu.dot_dimension_numbers<[2], [1], [1], [2], [0, 0, 0, 1, 1, 2], [0], [0]>} : vector<2x8x8xbf16>, vector<2x8x8xbf16>, vector<2x8x8xf32> -> vector<2x8x8xf32>
    "tpu.trace_stop"() : () -> ()
    %687 = tpu.concatenate %620, %642, %664, %686 in 2 : vector<2x8x8xf32>, vector<2x8x8xf32>, vector<2x8x8xf32>, vector<2x8x8xf32> -> vector<2x8x32xf32>
    %688 = vector.shape_cast %687 : vector<2x8x32xf32> to vector<16x32xf32>
    %689 = arith.truncf %688 : vector<16x32xf32> to vector<16x32xbf16>
    %690 = arith.truncf %581 : vector<32x32xf32> to vector<32x32xbf16>
    %cst_257 = arith.constant dense<0.000000e+00> : vector<16x32xf32>
    %691 = tpu.matmul %689, %690, %cst_257 {dimension_numbers = #tpu.dot_dimension_numbers<[1], [0], [0], [1], [0, 0, 1, 1], [], []>} : vector<16x32xbf16>, vector<32x32xbf16>, vector<16x32xf32> -> vector<16x32xf32>
    %692 = vector.broadcast %583 : vector<1x32xf32> to vector<16x32xf32>
    %693 = arith.addf %691, %692 : vector<16x32xf32>
    %694 = arith.addf %545, %693 : vector<16x32xf32>
    %c0_258 = arith.constant 0 : index
    %c0_259 = arith.constant 0 : index
    %c0_260 = arith.constant 0 : index
    %695 = vector.load %arg37[%c0_258, %c0_259, %c0_260] : memref<2x1x32xf32, #tpu.memory_space<vmem>>, vector<1x1x32xf32>
    %696 = vector.shape_cast %695 : vector<1x1x32xf32> to vector<1x32xf32>
    %c0_261 = arith.constant 0 : index
    %c0_262 = arith.constant 0 : index
    %c0_263 = arith.constant 0 : index
    %697 = vector.load %arg38[%c0_261, %c0_262, %c0_263] : memref<2x1x32xf32, #tpu.memory_space<vmem>>, vector<1x1x32xf32>
    %698 = vector.shape_cast %697 : vector<1x1x32xf32> to vector<1x32xf32>
    %cst_264 = arith.constant dense<0.000000e+00> : vector<16xf32>
    %699 = vector.multi_reduction <add>, %694, %cst_264 [1] : vector<16x32xf32> to vector<16xf32>
    %700 = vector.shape_cast %699 : vector<16xf32> to vector<16x1xf32>
    %cst_265 = arith.constant 3.200000e+01 : f32
    %701 = vector.broadcast %cst_265 : f32 to vector<16x1xf32>
    %702 = arith.divf %700, %701 : vector<16x1xf32>
    %703 = vector.broadcast %702 : vector<16x1xf32> to vector<16x32xf32>
    %704 = arith.subf %694, %703 : vector<16x32xf32>
    %705 = arith.mulf %704, %704 : vector<16x32xf32>
    %cst_266 = arith.constant dense<0.000000e+00> : vector<16xf32>
    %706 = vector.multi_reduction <add>, %705, %cst_266 [1] : vector<16x32xf32> to vector<16xf32>
    %707 = vector.shape_cast %706 : vector<16xf32> to vector<16x1xf32>
    %cst_267 = arith.constant 3.200000e+01 : f32
    %708 = vector.broadcast %cst_267 : f32 to vector<16x1xf32>
    %709 = arith.divf %707, %708 : vector<16x1xf32>
    %710 = vector.broadcast %702 : vector<16x1xf32> to vector<16x32xf32>
    %711 = arith.subf %694, %710 : vector<16x32xf32>
    %cst_268 = arith.constant 9.99999997E-7 : f32
    %712 = vector.broadcast %cst_268 : f32 to vector<16x1xf32>
    %713 = arith.addf %709, %712 : vector<16x1xf32>
    %714 = math.rsqrt %713 : vector<16x1xf32>
    %715 = vector.broadcast %714 : vector<16x1xf32> to vector<16x32xf32>
    %716 = arith.mulf %711, %715 : vector<16x32xf32>
    %717 = vector.broadcast %696 : vector<1x32xf32> to vector<16x32xf32>
    %718 = arith.mulf %716, %717 : vector<16x32xf32>
    %719 = vector.broadcast %698 : vector<1x32xf32> to vector<16x32xf32>
    %720 = arith.addf %718, %719 : vector<16x32xf32>
    %c0_269 = arith.constant 0 : index
    %c0_270 = arith.constant 0 : index
    %c0_271 = arith.constant 0 : index
    %721 = vector.load %arg29[%c0_269, %c0_270, %c0_271] : memref<2x32x64xf32, #tpu.memory_space<vmem>>, vector<1x32x64xf32>
    %722 = vector.shape_cast %721 : vector<1x32x64xf32> to vector<32x64xf32>
    %c0_272 = arith.constant 0 : index
    %c0_273 = arith.constant 0 : index
    %c0_274 = arith.constant 0 : index
    %723 = vector.load %arg30[%c0_272, %c0_273, %c0_274] : memref<2x1x64xf32, #tpu.memory_space<vmem>>, vector<1x1x64xf32>
    %724 = vector.shape_cast %723 : vector<1x1x64xf32> to vector<1x64xf32>
    %c0_275 = arith.constant 0 : index
    %c0_276 = arith.constant 0 : index
    %c0_277 = arith.constant 0 : index
    %725 = vector.load %arg31[%c0_275, %c0_276, %c0_277] : memref<2x64x32xf32, #tpu.memory_space<vmem>>, vector<1x64x32xf32>
    %726 = vector.shape_cast %725 : vector<1x64x32xf32> to vector<64x32xf32>
    %c0_278 = arith.constant 0 : index
    %c0_279 = arith.constant 0 : index
    %c0_280 = arith.constant 0 : index
    %727 = vector.load %arg32[%c0_278, %c0_279, %c0_280] : memref<2x1x32xf32, #tpu.memory_space<vmem>>, vector<1x1x32xf32>
    %728 = vector.shape_cast %727 : vector<1x1x32xf32> to vector<1x32xf32>
    %729 = arith.truncf %720 : vector<16x32xf32> to vector<16x32xbf16>
    %730 = arith.truncf %722 : vector<32x64xf32> to vector<32x64xbf16>
    %cst_281 = arith.constant dense<0.000000e+00> : vector<16x64xf32>
    %731 = tpu.matmul %729, %730, %cst_281 {dimension_numbers = #tpu.dot_dimension_numbers<[1], [0], [0], [1], [0, 0, 1, 1], [], []>} : vector<16x32xbf16>, vector<32x64xbf16>, vector<16x64xf32> -> vector<16x64xf32>
    %732 = vector.broadcast %724 : vector<1x64xf32> to vector<16x64xf32>
    %733 = arith.addf %731, %732 : vector<16x64xf32>
    %cst_282 = arith.constant 0.000000e+00 : f32
    %734 = vector.broadcast %cst_282 : f32 to vector<16x64xf32>
    %735 = arith.maximumf %733, %734 : vector<16x64xf32>
    %736 = arith.truncf %735 : vector<16x64xf32> to vector<16x64xbf16>
    %737 = arith.truncf %726 : vector<64x32xf32> to vector<64x32xbf16>
    %cst_283 = arith.constant dense<0.000000e+00> : vector<16x32xf32>
    %738 = tpu.matmul %736, %737, %cst_283 {dimension_numbers = #tpu.dot_dimension_numbers<[1], [0], [0], [1], [0, 0, 1, 1], [], []>} : vector<16x64xbf16>, vector<64x32xbf16>, vector<16x32xf32> -> vector<16x32xf32>
    %739 = vector.broadcast %728 : vector<1x32xf32> to vector<16x32xf32>
    %740 = arith.addf %738, %739 : vector<16x32xf32>
    %741 = arith.addf %694, %740 : vector<16x32xf32>
    %c1_284 = arith.constant 1 : index
    %c0_285 = arith.constant 0 : index
    %c0_286 = arith.constant 0 : index
    %742 = vector.load %arg33[%c1_284, %c0_285, %c0_286] : memref<2x1x32xf32, #tpu.memory_space<vmem>>, vector<1x1x32xf32>
    %743 = vector.shape_cast %742 : vector<1x1x32xf32> to vector<1x32xf32>
    %c1_287 = arith.constant 1 : index
    %c0_288 = arith.constant 0 : index
    %c0_289 = arith.constant 0 : index
    %744 = vector.load %arg34[%c1_287, %c0_288, %c0_289] : memref<2x1x32xf32, #tpu.memory_space<vmem>>, vector<1x1x32xf32>
    %745 = vector.shape_cast %744 : vector<1x1x32xf32> to vector<1x32xf32>
    %cst_290 = arith.constant dense<0.000000e+00> : vector<16xf32>
    %746 = vector.multi_reduction <add>, %741, %cst_290 [1] : vector<16x32xf32> to vector<16xf32>
    %747 = vector.shape_cast %746 : vector<16xf32> to vector<16x1xf32>
    %cst_291 = arith.constant 3.200000e+01 : f32
    %748 = vector.broadcast %cst_291 : f32 to vector<16x1xf32>
    %749 = arith.divf %747, %748 : vector<16x1xf32>
    %750 = vector.broadcast %749 : vector<16x1xf32> to vector<16x32xf32>
    %751 = arith.subf %741, %750 : vector<16x32xf32>
    %752 = arith.mulf %751, %751 : vector<16x32xf32>
    %cst_292 = arith.constant dense<0.000000e+00> : vector<16xf32>
    %753 = vector.multi_reduction <add>, %752, %cst_292 [1] : vector<16x32xf32> to vector<16xf32>
    %754 = vector.shape_cast %753 : vector<16xf32> to vector<16x1xf32>
    %cst_293 = arith.constant 3.200000e+01 : f32
    %755 = vector.broadcast %cst_293 : f32 to vector<16x1xf32>
    %756 = arith.divf %754, %755 : vector<16x1xf32>
    %757 = vector.broadcast %749 : vector<16x1xf32> to vector<16x32xf32>
    %758 = arith.subf %741, %757 : vector<16x32xf32>
    %cst_294 = arith.constant 9.99999997E-7 : f32
    %759 = vector.broadcast %cst_294 : f32 to vector<16x1xf32>
    %760 = arith.addf %756, %759 : vector<16x1xf32>
    %761 = math.rsqrt %760 : vector<16x1xf32>
    %762 = vector.broadcast %761 : vector<16x1xf32> to vector<16x32xf32>
    %763 = arith.mulf %758, %762 : vector<16x32xf32>
    %764 = vector.broadcast %743 : vector<1x32xf32> to vector<16x32xf32>
    %765 = arith.mulf %763, %764 : vector<16x32xf32>
    %766 = vector.broadcast %745 : vector<1x32xf32> to vector<16x32xf32>
    %767 = arith.addf %765, %766 : vector<16x32xf32>
    %c1_295 = arith.constant 1 : index
    %c0_296 = arith.constant 0 : index
    %c0_297 = arith.constant 0 : index
    %768 = vector.load %arg19[%c1_295, %c0_296, %c0_297] : memref<2x32x96xf32, #tpu.memory_space<vmem>>, vector<1x32x96xf32>
    %769 = vector.shape_cast %768 : vector<1x32x96xf32> to vector<32x96xf32>
    %c1_298 = arith.constant 1 : index
    %c0_299 = arith.constant 0 : index
    %c0_300 = arith.constant 0 : index
    %770 = vector.load %arg20[%c1_298, %c0_299, %c0_300] : memref<2x1x96xf32, #tpu.memory_space<vmem>>, vector<1x1x96xf32>
    %771 = vector.shape_cast %770 : vector<1x1x96xf32> to vector<1x96xf32>
    %c1_301 = arith.constant 1 : index
    %c0_302 = arith.constant 0 : index
    %c0_303 = arith.constant 0 : index
    %772 = vector.load %arg21[%c1_301, %c0_302, %c0_303] : memref<2x32x32xf32, #tpu.memory_space<vmem>>, vector<1x32x32xf32>
    %773 = vector.shape_cast %772 : vector<1x32x32xf32> to vector<32x32xf32>
    %c1_304 = arith.constant 1 : index
    %c0_305 = arith.constant 0 : index
    %c0_306 = arith.constant 0 : index
    %774 = vector.load %arg22[%c1_304, %c0_305, %c0_306] : memref<2x1x32xf32, #tpu.memory_space<vmem>>, vector<1x1x32xf32>
    %775 = vector.shape_cast %774 : vector<1x1x32xf32> to vector<1x32xf32>
    %776 = arith.truncf %767 : vector<16x32xf32> to vector<16x32xbf16>
    %777 = arith.truncf %769 : vector<32x96xf32> to vector<32x96xbf16>
    %cst_307 = arith.constant dense<0.000000e+00> : vector<16x96xf32>
    %778 = tpu.matmul %776, %777, %cst_307 {dimension_numbers = #tpu.dot_dimension_numbers<[1], [0], [0], [1], [0, 0, 1, 1], [], []>} : vector<16x32xbf16>, vector<32x96xbf16>, vector<16x96xf32> -> vector<16x96xf32>
    %779 = vector.broadcast %771 : vector<1x96xf32> to vector<16x96xf32>
    %780 = arith.addf %778, %779 : vector<16x96xf32>
    %781 = vector.extract_strided_slice %780 {offsets = [0, 0], sizes = [16, 32], strides = [1, 1]} : vector<16x96xf32> to vector<16x32xf32>
    %782 = vector.extract_strided_slice %780 {offsets = [0, 32], sizes = [16, 32], strides = [1, 1]} : vector<16x96xf32> to vector<16x32xf32>
    %783 = vector.extract_strided_slice %780 {offsets = [0, 64], sizes = [16, 32], strides = [1, 1]} : vector<16x96xf32> to vector<16x32xf32>
    %784 = vector.shape_cast %781 : vector<16x32xf32> to vector<2x8x32xf32>
    %785 = vector.shape_cast %782 : vector<16x32xf32> to vector<2x8x32xf32>
    %786 = vector.shape_cast %783 : vector<16x32xf32> to vector<2x8x32xf32>
    %787 = vector.extract_strided_slice %784 {offsets = [0, 0, 0], sizes = [2, 8, 8], strides = [1, 1, 1]} : vector<2x8x32xf32> to vector<2x8x8xf32>
    %788 = arith.truncf %787 : vector<2x8x8xf32> to vector<2x8x8xbf16>
    %789 = vector.extract_strided_slice %785 {offsets = [0, 0, 0], sizes = [2, 8, 8], strides = [1, 1, 1]} : vector<2x8x32xf32> to vector<2x8x8xf32>
    %790 = arith.truncf %789 : vector<2x8x8xf32> to vector<2x8x8xbf16>
    %791 = vector.extract_strided_slice %786 {offsets = [0, 0, 0], sizes = [2, 8, 8], strides = [1, 1, 1]} : vector<2x8x32xf32> to vector<2x8x8xf32>
    %792 = arith.truncf %791 : vector<2x8x8xf32> to vector<2x8x8xbf16>
    "tpu.trace_start"() <{level = 10 : i32, message = "bqd,bkd->bqk"}> : () -> ()
    %cst_308 = arith.constant dense<0.000000e+00> : vector<2x8x8xf32>
    %793 = tpu.matmul %788, %790, %cst_308 {dimension_numbers = #tpu.dot_dimension_numbers<[2], [2], [1], [1], [0, 0, 0, 1, 1, 1], [0], [0]>} : vector<2x8x8xbf16>, vector<2x8x8xbf16>, vector<2x8x8xf32> -> vector<2x8x8xf32>
    "tpu.trace_stop"() : () -> ()
    %cst_309 = arith.constant 0.353553385 : f32
    %794 = vector.broadcast %cst_309 : f32 to vector<2x8x8xf32>
    %795 = arith.mulf %793, %794 : vector<2x8x8xf32>
    %796 = arith.addf %795, %403 : vector<2x8x8xf32>
    %cst_310 = arith.constant dense<0xFF800000> : vector<2x8xf32>
    %797 = vector.multi_reduction <maximumf>, %796, %cst_310 [2] : vector<2x8x8xf32> to vector<2x8xf32>
    %798 = vector.shape_cast %797 : vector<2x8xf32> to vector<2x8x1xf32>
    %799 = vector.broadcast %798 : vector<2x8x1xf32> to vector<2x8x8xf32>
    %800 = arith.subf %796, %799 : vector<2x8x8xf32>
    %801 = math.exp %800 : vector<2x8x8xf32>
    %cst_311 = arith.constant dense<0.000000e+00> : vector<2x8xf32>
    %802 = vector.multi_reduction <add>, %801, %cst_311 [2] : vector<2x8x8xf32> to vector<2x8xf32>
    %803 = vector.shape_cast %802 : vector<2x8xf32> to vector<2x8x1xf32>
    %804 = tpu.reciprocal %803 {approx = true} : vector<2x8x1xf32> -> vector<2x8x1xf32>
    %805 = vector.broadcast %804 : vector<2x8x1xf32> to vector<2x8x8xf32>
    %806 = arith.mulf %801, %805 : vector<2x8x8xf32>
    %807 = arith.truncf %806 : vector<2x8x8xf32> to vector<2x8x8xbf16>
    "tpu.trace_start"() <{level = 10 : i32, message = "bqk,bkd->bqd"}> : () -> ()
    %cst_312 = arith.constant dense<0.000000e+00> : vector<2x8x8xf32>
    %808 = tpu.matmul %807, %792, %cst_312 {dimension_numbers = #tpu.dot_dimension_numbers<[2], [1], [1], [2], [0, 0, 0, 1, 1, 2], [0], [0]>} : vector<2x8x8xbf16>, vector<2x8x8xbf16>, vector<2x8x8xf32> -> vector<2x8x8xf32>
    "tpu.trace_stop"() : () -> ()
    %809 = vector.extract_strided_slice %784 {offsets = [0, 0, 8], sizes = [2, 8, 8], strides = [1, 1, 1]} : vector<2x8x32xf32> to vector<2x8x8xf32>
    %810 = arith.truncf %809 : vector<2x8x8xf32> to vector<2x8x8xbf16>
    %811 = vector.extract_strided_slice %785 {offsets = [0, 0, 8], sizes = [2, 8, 8], strides = [1, 1, 1]} : vector<2x8x32xf32> to vector<2x8x8xf32>
    %812 = arith.truncf %811 : vector<2x8x8xf32> to vector<2x8x8xbf16>
    %813 = vector.extract_strided_slice %786 {offsets = [0, 0, 8], sizes = [2, 8, 8], strides = [1, 1, 1]} : vector<2x8x32xf32> to vector<2x8x8xf32>
    %814 = arith.truncf %813 : vector<2x8x8xf32> to vector<2x8x8xbf16>
    "tpu.trace_start"() <{level = 10 : i32, message = "bqd,bkd->bqk"}> : () -> ()
    %cst_313 = arith.constant dense<0.000000e+00> : vector<2x8x8xf32>
    %815 = tpu.matmul %810, %812, %cst_313 {dimension_numbers = #tpu.dot_dimension_numbers<[2], [2], [1], [1], [0, 0, 0, 1, 1, 1], [0], [0]>} : vector<2x8x8xbf16>, vector<2x8x8xbf16>, vector<2x8x8xf32> -> vector<2x8x8xf32>
    "tpu.trace_stop"() : () -> ()
    %cst_314 = arith.constant 0.353553385 : f32
    %816 = vector.broadcast %cst_314 : f32 to vector<2x8x8xf32>
    %817 = arith.mulf %815, %816 : vector<2x8x8xf32>
    %818 = arith.addf %817, %403 : vector<2x8x8xf32>
    %cst_315 = arith.constant dense<0xFF800000> : vector<2x8xf32>
    %819 = vector.multi_reduction <maximumf>, %818, %cst_315 [2] : vector<2x8x8xf32> to vector<2x8xf32>
    %820 = vector.shape_cast %819 : vector<2x8xf32> to vector<2x8x1xf32>
    %821 = vector.broadcast %820 : vector<2x8x1xf32> to vector<2x8x8xf32>
    %822 = arith.subf %818, %821 : vector<2x8x8xf32>
    %823 = math.exp %822 : vector<2x8x8xf32>
    %cst_316 = arith.constant dense<0.000000e+00> : vector<2x8xf32>
    %824 = vector.multi_reduction <add>, %823, %cst_316 [2] : vector<2x8x8xf32> to vector<2x8xf32>
    %825 = vector.shape_cast %824 : vector<2x8xf32> to vector<2x8x1xf32>
    %826 = tpu.reciprocal %825 {approx = true} : vector<2x8x1xf32> -> vector<2x8x1xf32>
    %827 = vector.broadcast %826 : vector<2x8x1xf32> to vector<2x8x8xf32>
    %828 = arith.mulf %823, %827 : vector<2x8x8xf32>
    %829 = arith.truncf %828 : vector<2x8x8xf32> to vector<2x8x8xbf16>
    "tpu.trace_start"() <{level = 10 : i32, message = "bqk,bkd->bqd"}> : () -> ()
    %cst_317 = arith.constant dense<0.000000e+00> : vector<2x8x8xf32>
    %830 = tpu.matmul %829, %814, %cst_317 {dimension_numbers = #tpu.dot_dimension_numbers<[2], [1], [1], [2], [0, 0, 0, 1, 1, 2], [0], [0]>} : vector<2x8x8xbf16>, vector<2x8x8xbf16>, vector<2x8x8xf32> -> vector<2x8x8xf32>
    "tpu.trace_stop"() : () -> ()
    %831 = vector.extract_strided_slice %784 {offsets = [0, 0, 16], sizes = [2, 8, 8], strides = [1, 1, 1]} : vector<2x8x32xf32> to vector<2x8x8xf32>
    %832 = arith.truncf %831 : vector<2x8x8xf32> to vector<2x8x8xbf16>
    %833 = vector.extract_strided_slice %785 {offsets = [0, 0, 16], sizes = [2, 8, 8], strides = [1, 1, 1]} : vector<2x8x32xf32> to vector<2x8x8xf32>
    %834 = arith.truncf %833 : vector<2x8x8xf32> to vector<2x8x8xbf16>
    %835 = vector.extract_strided_slice %786 {offsets = [0, 0, 16], sizes = [2, 8, 8], strides = [1, 1, 1]} : vector<2x8x32xf32> to vector<2x8x8xf32>
    %836 = arith.truncf %835 : vector<2x8x8xf32> to vector<2x8x8xbf16>
    "tpu.trace_start"() <{level = 10 : i32, message = "bqd,bkd->bqk"}> : () -> ()
    %cst_318 = arith.constant dense<0.000000e+00> : vector<2x8x8xf32>
    %837 = tpu.matmul %832, %834, %cst_318 {dimension_numbers = #tpu.dot_dimension_numbers<[2], [2], [1], [1], [0, 0, 0, 1, 1, 1], [0], [0]>} : vector<2x8x8xbf16>, vector<2x8x8xbf16>, vector<2x8x8xf32> -> vector<2x8x8xf32>
    "tpu.trace_stop"() : () -> ()
    %cst_319 = arith.constant 0.353553385 : f32
    %838 = vector.broadcast %cst_319 : f32 to vector<2x8x8xf32>
    %839 = arith.mulf %837, %838 : vector<2x8x8xf32>
    %840 = arith.addf %839, %403 : vector<2x8x8xf32>
    %cst_320 = arith.constant dense<0xFF800000> : vector<2x8xf32>
    %841 = vector.multi_reduction <maximumf>, %840, %cst_320 [2] : vector<2x8x8xf32> to vector<2x8xf32>
    %842 = vector.shape_cast %841 : vector<2x8xf32> to vector<2x8x1xf32>
    %843 = vector.broadcast %842 : vector<2x8x1xf32> to vector<2x8x8xf32>
    %844 = arith.subf %840, %843 : vector<2x8x8xf32>
    %845 = math.exp %844 : vector<2x8x8xf32>
    %cst_321 = arith.constant dense<0.000000e+00> : vector<2x8xf32>
    %846 = vector.multi_reduction <add>, %845, %cst_321 [2] : vector<2x8x8xf32> to vector<2x8xf32>
    %847 = vector.shape_cast %846 : vector<2x8xf32> to vector<2x8x1xf32>
    %848 = tpu.reciprocal %847 {approx = true} : vector<2x8x1xf32> -> vector<2x8x1xf32>
    %849 = vector.broadcast %848 : vector<2x8x1xf32> to vector<2x8x8xf32>
    %850 = arith.mulf %845, %849 : vector<2x8x8xf32>
    %851 = arith.truncf %850 : vector<2x8x8xf32> to vector<2x8x8xbf16>
    "tpu.trace_start"() <{level = 10 : i32, message = "bqk,bkd->bqd"}> : () -> ()
    %cst_322 = arith.constant dense<0.000000e+00> : vector<2x8x8xf32>
    %852 = tpu.matmul %851, %836, %cst_322 {dimension_numbers = #tpu.dot_dimension_numbers<[2], [1], [1], [2], [0, 0, 0, 1, 1, 2], [0], [0]>} : vector<2x8x8xbf16>, vector<2x8x8xbf16>, vector<2x8x8xf32> -> vector<2x8x8xf32>
    "tpu.trace_stop"() : () -> ()
    %853 = vector.extract_strided_slice %784 {offsets = [0, 0, 24], sizes = [2, 8, 8], strides = [1, 1, 1]} : vector<2x8x32xf32> to vector<2x8x8xf32>
    %854 = arith.truncf %853 : vector<2x8x8xf32> to vector<2x8x8xbf16>
    %855 = vector.extract_strided_slice %785 {offsets = [0, 0, 24], sizes = [2, 8, 8], strides = [1, 1, 1]} : vector<2x8x32xf32> to vector<2x8x8xf32>
    %856 = arith.truncf %855 : vector<2x8x8xf32> to vector<2x8x8xbf16>
    %857 = vector.extract_strided_slice %786 {offsets = [0, 0, 24], sizes = [2, 8, 8], strides = [1, 1, 1]} : vector<2x8x32xf32> to vector<2x8x8xf32>
    %858 = arith.truncf %857 : vector<2x8x8xf32> to vector<2x8x8xbf16>
    "tpu.trace_start"() <{level = 10 : i32, message = "bqd,bkd->bqk"}> : () -> ()
    %cst_323 = arith.constant dense<0.000000e+00> : vector<2x8x8xf32>
    %859 = tpu.matmul %854, %856, %cst_323 {dimension_numbers = #tpu.dot_dimension_numbers<[2], [2], [1], [1], [0, 0, 0, 1, 1, 1], [0], [0]>} : vector<2x8x8xbf16>, vector<2x8x8xbf16>, vector<2x8x8xf32> -> vector<2x8x8xf32>
    "tpu.trace_stop"() : () -> ()
    %cst_324 = arith.constant 0.353553385 : f32
    %860 = vector.broadcast %cst_324 : f32 to vector<2x8x8xf32>
    %861 = arith.mulf %859, %860 : vector<2x8x8xf32>
    %862 = arith.addf %861, %403 : vector<2x8x8xf32>
    %cst_325 = arith.constant dense<0xFF800000> : vector<2x8xf32>
    %863 = vector.multi_reduction <maximumf>, %862, %cst_325 [2] : vector<2x8x8xf32> to vector<2x8xf32>
    %864 = vector.shape_cast %863 : vector<2x8xf32> to vector<2x8x1xf32>
    %865 = vector.broadcast %864 : vector<2x8x1xf32> to vector<2x8x8xf32>
    %866 = arith.subf %862, %865 : vector<2x8x8xf32>
    %867 = math.exp %866 : vector<2x8x8xf32>
    %cst_326 = arith.constant dense<0.000000e+00> : vector<2x8xf32>
    %868 = vector.multi_reduction <add>, %867, %cst_326 [2] : vector<2x8x8xf32> to vector<2x8xf32>
    %869 = vector.shape_cast %868 : vector<2x8xf32> to vector<2x8x1xf32>
    %870 = tpu.reciprocal %869 {approx = true} : vector<2x8x1xf32> -> vector<2x8x1xf32>
    %871 = vector.broadcast %870 : vector<2x8x1xf32> to vector<2x8x8xf32>
    %872 = arith.mulf %867, %871 : vector<2x8x8xf32>
    %873 = arith.truncf %872 : vector<2x8x8xf32> to vector<2x8x8xbf16>
    "tpu.trace_start"() <{level = 10 : i32, message = "bqk,bkd->bqd"}> : () -> ()
    %cst_327 = arith.constant dense<0.000000e+00> : vector<2x8x8xf32>
    %874 = tpu.matmul %873, %858, %cst_327 {dimension_numbers = #tpu.dot_dimension_numbers<[2], [1], [1], [2], [0, 0, 0, 1, 1, 2], [0], [0]>} : vector<2x8x8xbf16>, vector<2x8x8xbf16>, vector<2x8x8xf32> -> vector<2x8x8xf32>
    "tpu.trace_stop"() : () -> ()
    %875 = tpu.concatenate %808, %830, %852, %874 in 2 : vector<2x8x8xf32>, vector<2x8x8xf32>, vector<2x8x8xf32>, vector<2x8x8xf32> -> vector<2x8x32xf32>
    %876 = vector.shape_cast %875 : vector<2x8x32xf32> to vector<16x32xf32>
    %877 = arith.truncf %876 : vector<16x32xf32> to vector<16x32xbf16>
    %878 = arith.truncf %773 : vector<32x32xf32> to vector<32x32xbf16>
    %cst_328 = arith.constant dense<0.000000e+00> : vector<16x32xf32>
    %879 = tpu.matmul %877, %878, %cst_328 {dimension_numbers = #tpu.dot_dimension_numbers<[1], [0], [0], [1], [0, 0, 1, 1], [], []>} : vector<16x32xbf16>, vector<32x32xbf16>, vector<16x32xf32> -> vector<16x32xf32>
    %880 = vector.broadcast %775 : vector<1x32xf32> to vector<16x32xf32>
    %881 = arith.addf %879, %880 : vector<16x32xf32>
    %882 = arith.addf %741, %881 : vector<16x32xf32>
    %c1_329 = arith.constant 1 : index
    %c0_330 = arith.constant 0 : index
    %c0_331 = arith.constant 0 : index
    %883 = vector.load %arg35[%c1_329, %c0_330, %c0_331] : memref<2x1x32xf32, #tpu.memory_space<vmem>>, vector<1x1x32xf32>
    %884 = vector.shape_cast %883 : vector<1x1x32xf32> to vector<1x32xf32>
    %c1_332 = arith.constant 1 : index
    %c0_333 = arith.constant 0 : index
    %c0_334 = arith.constant 0 : index
    %885 = vector.load %arg36[%c1_332, %c0_333, %c0_334] : memref<2x1x32xf32, #tpu.memory_space<vmem>>, vector<1x1x32xf32>
    %886 = vector.shape_cast %885 : vector<1x1x32xf32> to vector<1x32xf32>
    %cst_335 = arith.constant dense<0.000000e+00> : vector<16xf32>
    %887 = vector.multi_reduction <add>, %882, %cst_335 [1] : vector<16x32xf32> to vector<16xf32>
    %888 = vector.shape_cast %887 : vector<16xf32> to vector<16x1xf32>
    %cst_336 = arith.constant 3.200000e+01 : f32
    %889 = vector.broadcast %cst_336 : f32 to vector<16x1xf32>
    %890 = arith.divf %888, %889 : vector<16x1xf32>
    %891 = vector.broadcast %890 : vector<16x1xf32> to vector<16x32xf32>
    %892 = arith.subf %882, %891 : vector<16x32xf32>
    %893 = arith.mulf %892, %892 : vector<16x32xf32>
    %cst_337 = arith.constant dense<0.000000e+00> : vector<16xf32>
    %894 = vector.multi_reduction <add>, %893, %cst_337 [1] : vector<16x32xf32> to vector<16xf32>
    %895 = vector.shape_cast %894 : vector<16xf32> to vector<16x1xf32>
    %cst_338 = arith.constant 3.200000e+01 : f32
    %896 = vector.broadcast %cst_338 : f32 to vector<16x1xf32>
    %897 = arith.divf %895, %896 : vector<16x1xf32>
    %898 = vector.broadcast %890 : vector<16x1xf32> to vector<16x32xf32>
    %899 = arith.subf %882, %898 : vector<16x32xf32>
    %cst_339 = arith.constant 9.99999997E-7 : f32
    %900 = vector.broadcast %cst_339 : f32 to vector<16x1xf32>
    %901 = arith.addf %897, %900 : vector<16x1xf32>
    %902 = math.rsqrt %901 : vector<16x1xf32>
    %903 = vector.broadcast %902 : vector<16x1xf32> to vector<16x32xf32>
    %904 = arith.mulf %899, %903 : vector<16x32xf32>
    %905 = vector.broadcast %884 : vector<1x32xf32> to vector<16x32xf32>
    %906 = arith.mulf %904, %905 : vector<16x32xf32>
    %907 = vector.broadcast %886 : vector<1x32xf32> to vector<16x32xf32>
    %908 = arith.addf %906, %907 : vector<16x32xf32>
    %c1_340 = arith.constant 1 : index
    %c0_341 = arith.constant 0 : index
    %c0_342 = arith.constant 0 : index
    %909 = vector.load %arg23[%c1_340, %c0_341, %c0_342] : memref<2x32x32xf32, #tpu.memory_space<vmem>>, vector<1x32x32xf32>
    %910 = vector.shape_cast %909 : vector<1x32x32xf32> to vector<32x32xf32>
    %c1_343 = arith.constant 1 : index
    %c0_344 = arith.constant 0 : index
    %c0_345 = arith.constant 0 : index
    %911 = vector.load %arg24[%c1_343, %c0_344, %c0_345] : memref<2x1x32xf32, #tpu.memory_space<vmem>>, vector<1x1x32xf32>
    %912 = vector.shape_cast %911 : vector<1x1x32xf32> to vector<1x32xf32>
    %c1_346 = arith.constant 1 : index
    %c0_347 = arith.constant 0 : index
    %c0_348 = arith.constant 0 : index
    %913 = vector.load %arg25[%c1_346, %c0_347, %c0_348] : memref<2x32x64xf32, #tpu.memory_space<vmem>>, vector<1x32x64xf32>
    %914 = vector.shape_cast %913 : vector<1x32x64xf32> to vector<32x64xf32>
    %c1_349 = arith.constant 1 : index
    %c0_350 = arith.constant 0 : index
    %c0_351 = arith.constant 0 : index
    %915 = vector.load %arg26[%c1_349, %c0_350, %c0_351] : memref<2x1x64xf32, #tpu.memory_space<vmem>>, vector<1x1x64xf32>
    %916 = vector.shape_cast %915 : vector<1x1x64xf32> to vector<1x64xf32>
    %c1_352 = arith.constant 1 : index
    %c0_353 = arith.constant 0 : index
    %c0_354 = arith.constant 0 : index
    %917 = vector.load %arg27[%c1_352, %c0_353, %c0_354] : memref<2x32x32xf32, #tpu.memory_space<vmem>>, vector<1x32x32xf32>
    %918 = vector.shape_cast %917 : vector<1x32x32xf32> to vector<32x32xf32>
    %c1_355 = arith.constant 1 : index
    %c0_356 = arith.constant 0 : index
    %c0_357 = arith.constant 0 : index
    %919 = vector.load %arg28[%c1_355, %c0_356, %c0_357] : memref<2x1x32xf32, #tpu.memory_space<vmem>>, vector<1x1x32xf32>
    %920 = vector.shape_cast %919 : vector<1x1x32xf32> to vector<1x32xf32>
    %921 = arith.truncf %908 : vector<16x32xf32> to vector<16x32xbf16>
    %922 = arith.truncf %910 : vector<32x32xf32> to vector<32x32xbf16>
    %cst_358 = arith.constant dense<0.000000e+00> : vector<16x32xf32>
    %923 = tpu.matmul %921, %922, %cst_358 {dimension_numbers = #tpu.dot_dimension_numbers<[1], [0], [0], [1], [0, 0, 1, 1], [], []>} : vector<16x32xbf16>, vector<32x32xbf16>, vector<16x32xf32> -> vector<16x32xf32>
    %924 = vector.broadcast %912 : vector<1x32xf32> to vector<16x32xf32>
    %925 = arith.addf %923, %924 : vector<16x32xf32>
    %926 = arith.truncf %401 : vector<16x32xf32> to vector<16x32xbf16>
    %927 = arith.truncf %914 : vector<32x64xf32> to vector<32x64xbf16>
    %cst_359 = arith.constant dense<0.000000e+00> : vector<16x64xf32>
    %928 = tpu.matmul %926, %927, %cst_359 {dimension_numbers = #tpu.dot_dimension_numbers<[1], [0], [0], [1], [0, 0, 1, 1], [], []>} : vector<16x32xbf16>, vector<32x64xbf16>, vector<16x64xf32> -> vector<16x64xf32>
    %929 = vector.broadcast %916 : vector<1x64xf32> to vector<16x64xf32>
    %930 = arith.addf %928, %929 : vector<16x64xf32>
    %931 = vector.extract_strided_slice %930 {offsets = [0, 0], sizes = [16, 32], strides = [1, 1]} : vector<16x64xf32> to vector<16x32xf32>
    %932 = vector.extract_strided_slice %930 {offsets = [0, 32], sizes = [16, 32], strides = [1, 1]} : vector<16x64xf32> to vector<16x32xf32>
    %933 = vector.shape_cast %925 : vector<16x32xf32> to vector<2x8x32xf32>
    %934 = vector.shape_cast %931 : vector<16x32xf32> to vector<2x8x32xf32>
    %935 = vector.shape_cast %932 : vector<16x32xf32> to vector<2x8x32xf32>
    %936 = vector.extract_strided_slice %933 {offsets = [0, 0, 0], sizes = [2, 8, 8], strides = [1, 1, 1]} : vector<2x8x32xf32> to vector<2x8x8xf32>
    %937 = arith.truncf %936 : vector<2x8x8xf32> to vector<2x8x8xbf16>
    %938 = vector.extract_strided_slice %934 {offsets = [0, 0, 0], sizes = [2, 8, 8], strides = [1, 1, 1]} : vector<2x8x32xf32> to vector<2x8x8xf32>
    %939 = arith.truncf %938 : vector<2x8x8xf32> to vector<2x8x8xbf16>
    %940 = vector.extract_strided_slice %935 {offsets = [0, 0, 0], sizes = [2, 8, 8], strides = [1, 1, 1]} : vector<2x8x32xf32> to vector<2x8x8xf32>
    %941 = arith.truncf %940 : vector<2x8x8xf32> to vector<2x8x8xbf16>
    "tpu.trace_start"() <{level = 10 : i32, message = "bqd,bkd->bqk"}> : () -> ()
    %cst_360 = arith.constant dense<0.000000e+00> : vector<2x8x8xf32>
    %942 = tpu.matmul %937, %939, %cst_360 {dimension_numbers = #tpu.dot_dimension_numbers<[2], [2], [1], [1], [0, 0, 0, 1, 1, 1], [0], [0]>} : vector<2x8x8xbf16>, vector<2x8x8xbf16>, vector<2x8x8xf32> -> vector<2x8x8xf32>
    "tpu.trace_stop"() : () -> ()
    %cst_361 = arith.constant 0.353553385 : f32
    %943 = vector.broadcast %cst_361 : f32 to vector<2x8x8xf32>
    %944 = arith.mulf %942, %943 : vector<2x8x8xf32>
    %945 = arith.addf %944, %404 : vector<2x8x8xf32>
    %cst_362 = arith.constant dense<0xFF800000> : vector<2x8xf32>
    %946 = vector.multi_reduction <maximumf>, %945, %cst_362 [2] : vector<2x8x8xf32> to vector<2x8xf32>
    %947 = vector.shape_cast %946 : vector<2x8xf32> to vector<2x8x1xf32>
    %948 = vector.broadcast %947 : vector<2x8x1xf32> to vector<2x8x8xf32>
    %949 = arith.subf %945, %948 : vector<2x8x8xf32>
    %950 = math.exp %949 : vector<2x8x8xf32>
    %cst_363 = arith.constant dense<0.000000e+00> : vector<2x8xf32>
    %951 = vector.multi_reduction <add>, %950, %cst_363 [2] : vector<2x8x8xf32> to vector<2x8xf32>
    %952 = vector.shape_cast %951 : vector<2x8xf32> to vector<2x8x1xf32>
    %953 = tpu.reciprocal %952 {approx = true} : vector<2x8x1xf32> -> vector<2x8x1xf32>
    %954 = vector.broadcast %953 : vector<2x8x1xf32> to vector<2x8x8xf32>
    %955 = arith.mulf %950, %954 : vector<2x8x8xf32>
    %956 = arith.truncf %955 : vector<2x8x8xf32> to vector<2x8x8xbf16>
    "tpu.trace_start"() <{level = 10 : i32, message = "bqk,bkd->bqd"}> : () -> ()
    %cst_364 = arith.constant dense<0.000000e+00> : vector<2x8x8xf32>
    %957 = tpu.matmul %956, %941, %cst_364 {dimension_numbers = #tpu.dot_dimension_numbers<[2], [1], [1], [2], [0, 0, 0, 1, 1, 2], [0], [0]>} : vector<2x8x8xbf16>, vector<2x8x8xbf16>, vector<2x8x8xf32> -> vector<2x8x8xf32>
    "tpu.trace_stop"() : () -> ()
    %958 = vector.extract_strided_slice %933 {offsets = [0, 0, 8], sizes = [2, 8, 8], strides = [1, 1, 1]} : vector<2x8x32xf32> to vector<2x8x8xf32>
    %959 = arith.truncf %958 : vector<2x8x8xf32> to vector<2x8x8xbf16>
    %960 = vector.extract_strided_slice %934 {offsets = [0, 0, 8], sizes = [2, 8, 8], strides = [1, 1, 1]} : vector<2x8x32xf32> to vector<2x8x8xf32>
    %961 = arith.truncf %960 : vector<2x8x8xf32> to vector<2x8x8xbf16>
    %962 = vector.extract_strided_slice %935 {offsets = [0, 0, 8], sizes = [2, 8, 8], strides = [1, 1, 1]} : vector<2x8x32xf32> to vector<2x8x8xf32>
    %963 = arith.truncf %962 : vector<2x8x8xf32> to vector<2x8x8xbf16>
    "tpu.trace_start"() <{level = 10 : i32, message = "bqd,bkd->bqk"}> : () -> ()
    %cst_365 = arith.constant dense<0.000000e+00> : vector<2x8x8xf32>
    %964 = tpu.matmul %959, %961, %cst_365 {dimension_numbers = #tpu.dot_dimension_numbers<[2], [2], [1], [1], [0, 0, 0, 1, 1, 1], [0], [0]>} : vector<2x8x8xbf16>, vector<2x8x8xbf16>, vector<2x8x8xf32> -> vector<2x8x8xf32>
    "tpu.trace_stop"() : () -> ()
    %cst_366 = arith.constant 0.353553385 : f32
    %965 = vector.broadcast %cst_366 : f32 to vector<2x8x8xf32>
    %966 = arith.mulf %964, %965 : vector<2x8x8xf32>
    %967 = arith.addf %966, %404 : vector<2x8x8xf32>
    %cst_367 = arith.constant dense<0xFF800000> : vector<2x8xf32>
    %968 = vector.multi_reduction <maximumf>, %967, %cst_367 [2] : vector<2x8x8xf32> to vector<2x8xf32>
    %969 = vector.shape_cast %968 : vector<2x8xf32> to vector<2x8x1xf32>
    %970 = vector.broadcast %969 : vector<2x8x1xf32> to vector<2x8x8xf32>
    %971 = arith.subf %967, %970 : vector<2x8x8xf32>
    %972 = math.exp %971 : vector<2x8x8xf32>
    %cst_368 = arith.constant dense<0.000000e+00> : vector<2x8xf32>
    %973 = vector.multi_reduction <add>, %972, %cst_368 [2] : vector<2x8x8xf32> to vector<2x8xf32>
    %974 = vector.shape_cast %973 : vector<2x8xf32> to vector<2x8x1xf32>
    %975 = tpu.reciprocal %974 {approx = true} : vector<2x8x1xf32> -> vector<2x8x1xf32>
    %976 = vector.broadcast %975 : vector<2x8x1xf32> to vector<2x8x8xf32>
    %977 = arith.mulf %972, %976 : vector<2x8x8xf32>
    %978 = arith.truncf %977 : vector<2x8x8xf32> to vector<2x8x8xbf16>
    "tpu.trace_start"() <{level = 10 : i32, message = "bqk,bkd->bqd"}> : () -> ()
    %cst_369 = arith.constant dense<0.000000e+00> : vector<2x8x8xf32>
    %979 = tpu.matmul %978, %963, %cst_369 {dimension_numbers = #tpu.dot_dimension_numbers<[2], [1], [1], [2], [0, 0, 0, 1, 1, 2], [0], [0]>} : vector<2x8x8xbf16>, vector<2x8x8xbf16>, vector<2x8x8xf32> -> vector<2x8x8xf32>
    "tpu.trace_stop"() : () -> ()
    %980 = vector.extract_strided_slice %933 {offsets = [0, 0, 16], sizes = [2, 8, 8], strides = [1, 1, 1]} : vector<2x8x32xf32> to vector<2x8x8xf32>
    %981 = arith.truncf %980 : vector<2x8x8xf32> to vector<2x8x8xbf16>
    %982 = vector.extract_strided_slice %934 {offsets = [0, 0, 16], sizes = [2, 8, 8], strides = [1, 1, 1]} : vector<2x8x32xf32> to vector<2x8x8xf32>
    %983 = arith.truncf %982 : vector<2x8x8xf32> to vector<2x8x8xbf16>
    %984 = vector.extract_strided_slice %935 {offsets = [0, 0, 16], sizes = [2, 8, 8], strides = [1, 1, 1]} : vector<2x8x32xf32> to vector<2x8x8xf32>
    %985 = arith.truncf %984 : vector<2x8x8xf32> to vector<2x8x8xbf16>
    "tpu.trace_start"() <{level = 10 : i32, message = "bqd,bkd->bqk"}> : () -> ()
    %cst_370 = arith.constant dense<0.000000e+00> : vector<2x8x8xf32>
    %986 = tpu.matmul %981, %983, %cst_370 {dimension_numbers = #tpu.dot_dimension_numbers<[2], [2], [1], [1], [0, 0, 0, 1, 1, 1], [0], [0]>} : vector<2x8x8xbf16>, vector<2x8x8xbf16>, vector<2x8x8xf32> -> vector<2x8x8xf32>
    "tpu.trace_stop"() : () -> ()
    %cst_371 = arith.constant 0.353553385 : f32
    %987 = vector.broadcast %cst_371 : f32 to vector<2x8x8xf32>
    %988 = arith.mulf %986, %987 : vector<2x8x8xf32>
    %989 = arith.addf %988, %404 : vector<2x8x8xf32>
    %cst_372 = arith.constant dense<0xFF800000> : vector<2x8xf32>
    %990 = vector.multi_reduction <maximumf>, %989, %cst_372 [2] : vector<2x8x8xf32> to vector<2x8xf32>
    %991 = vector.shape_cast %990 : vector<2x8xf32> to vector<2x8x1xf32>
    %992 = vector.broadcast %991 : vector<2x8x1xf32> to vector<2x8x8xf32>
    %993 = arith.subf %989, %992 : vector<2x8x8xf32>
    %994 = math.exp %993 : vector<2x8x8xf32>
    %cst_373 = arith.constant dense<0.000000e+00> : vector<2x8xf32>
    %995 = vector.multi_reduction <add>, %994, %cst_373 [2] : vector<2x8x8xf32> to vector<2x8xf32>
    %996 = vector.shape_cast %995 : vector<2x8xf32> to vector<2x8x1xf32>
    %997 = tpu.reciprocal %996 {approx = true} : vector<2x8x1xf32> -> vector<2x8x1xf32>
    %998 = vector.broadcast %997 : vector<2x8x1xf32> to vector<2x8x8xf32>
    %999 = arith.mulf %994, %998 : vector<2x8x8xf32>
    %1000 = arith.truncf %999 : vector<2x8x8xf32> to vector<2x8x8xbf16>
    "tpu.trace_start"() <{level = 10 : i32, message = "bqk,bkd->bqd"}> : () -> ()
    %cst_374 = arith.constant dense<0.000000e+00> : vector<2x8x8xf32>
    %1001 = tpu.matmul %1000, %985, %cst_374 {dimension_numbers = #tpu.dot_dimension_numbers<[2], [1], [1], [2], [0, 0, 0, 1, 1, 2], [0], [0]>} : vector<2x8x8xbf16>, vector<2x8x8xbf16>, vector<2x8x8xf32> -> vector<2x8x8xf32>
    "tpu.trace_stop"() : () -> ()
    %1002 = vector.extract_strided_slice %933 {offsets = [0, 0, 24], sizes = [2, 8, 8], strides = [1, 1, 1]} : vector<2x8x32xf32> to vector<2x8x8xf32>
    %1003 = arith.truncf %1002 : vector<2x8x8xf32> to vector<2x8x8xbf16>
    %1004 = vector.extract_strided_slice %934 {offsets = [0, 0, 24], sizes = [2, 8, 8], strides = [1, 1, 1]} : vector<2x8x32xf32> to vector<2x8x8xf32>
    %1005 = arith.truncf %1004 : vector<2x8x8xf32> to vector<2x8x8xbf16>
    %1006 = vector.extract_strided_slice %935 {offsets = [0, 0, 24], sizes = [2, 8, 8], strides = [1, 1, 1]} : vector<2x8x32xf32> to vector<2x8x8xf32>
    %1007 = arith.truncf %1006 : vector<2x8x8xf32> to vector<2x8x8xbf16>
    "tpu.trace_start"() <{level = 10 : i32, message = "bqd,bkd->bqk"}> : () -> ()
    %cst_375 = arith.constant dense<0.000000e+00> : vector<2x8x8xf32>
    %1008 = tpu.matmul %1003, %1005, %cst_375 {dimension_numbers = #tpu.dot_dimension_numbers<[2], [2], [1], [1], [0, 0, 0, 1, 1, 1], [0], [0]>} : vector<2x8x8xbf16>, vector<2x8x8xbf16>, vector<2x8x8xf32> -> vector<2x8x8xf32>
    "tpu.trace_stop"() : () -> ()
    %cst_376 = arith.constant 0.353553385 : f32
    %1009 = vector.broadcast %cst_376 : f32 to vector<2x8x8xf32>
    %1010 = arith.mulf %1008, %1009 : vector<2x8x8xf32>
    %1011 = arith.addf %1010, %404 : vector<2x8x8xf32>
    %cst_377 = arith.constant dense<0xFF800000> : vector<2x8xf32>
    %1012 = vector.multi_reduction <maximumf>, %1011, %cst_377 [2] : vector<2x8x8xf32> to vector<2x8xf32>
    %1013 = vector.shape_cast %1012 : vector<2x8xf32> to vector<2x8x1xf32>
    %1014 = vector.broadcast %1013 : vector<2x8x1xf32> to vector<2x8x8xf32>
    %1015 = arith.subf %1011, %1014 : vector<2x8x8xf32>
    %1016 = math.exp %1015 : vector<2x8x8xf32>
    %cst_378 = arith.constant dense<0.000000e+00> : vector<2x8xf32>
    %1017 = vector.multi_reduction <add>, %1016, %cst_378 [2] : vector<2x8x8xf32> to vector<2x8xf32>
    %1018 = vector.shape_cast %1017 : vector<2x8xf32> to vector<2x8x1xf32>
    %1019 = tpu.reciprocal %1018 {approx = true} : vector<2x8x1xf32> -> vector<2x8x1xf32>
    %1020 = vector.broadcast %1019 : vector<2x8x1xf32> to vector<2x8x8xf32>
    %1021 = arith.mulf %1016, %1020 : vector<2x8x8xf32>
    %1022 = arith.truncf %1021 : vector<2x8x8xf32> to vector<2x8x8xbf16>
    "tpu.trace_start"() <{level = 10 : i32, message = "bqk,bkd->bqd"}> : () -> ()
    %cst_379 = arith.constant dense<0.000000e+00> : vector<2x8x8xf32>
    %1023 = tpu.matmul %1022, %1007, %cst_379 {dimension_numbers = #tpu.dot_dimension_numbers<[2], [1], [1], [2], [0, 0, 0, 1, 1, 2], [0], [0]>} : vector<2x8x8xbf16>, vector<2x8x8xbf16>, vector<2x8x8xf32> -> vector<2x8x8xf32>
    "tpu.trace_stop"() : () -> ()
    %1024 = tpu.concatenate %957, %979, %1001, %1023 in 2 : vector<2x8x8xf32>, vector<2x8x8xf32>, vector<2x8x8xf32>, vector<2x8x8xf32> -> vector<2x8x32xf32>
    %1025 = vector.shape_cast %1024 : vector<2x8x32xf32> to vector<16x32xf32>
    %1026 = arith.truncf %1025 : vector<16x32xf32> to vector<16x32xbf16>
    %1027 = arith.truncf %918 : vector<32x32xf32> to vector<32x32xbf16>
    %cst_380 = arith.constant dense<0.000000e+00> : vector<16x32xf32>
    %1028 = tpu.matmul %1026, %1027, %cst_380 {dimension_numbers = #tpu.dot_dimension_numbers<[1], [0], [0], [1], [0, 0, 1, 1], [], []>} : vector<16x32xbf16>, vector<32x32xbf16>, vector<16x32xf32> -> vector<16x32xf32>
    %1029 = vector.broadcast %920 : vector<1x32xf32> to vector<16x32xf32>
    %1030 = arith.addf %1028, %1029 : vector<16x32xf32>
    %1031 = arith.addf %882, %1030 : vector<16x32xf32>
    %c1_381 = arith.constant 1 : index
    %c0_382 = arith.constant 0 : index
    %c0_383 = arith.constant 0 : index
    %1032 = vector.load %arg37[%c1_381, %c0_382, %c0_383] : memref<2x1x32xf32, #tpu.memory_space<vmem>>, vector<1x1x32xf32>
    %1033 = vector.shape_cast %1032 : vector<1x1x32xf32> to vector<1x32xf32>
    %c1_384 = arith.constant 1 : index
    %c0_385 = arith.constant 0 : index
    %c0_386 = arith.constant 0 : index
    %1034 = vector.load %arg38[%c1_384, %c0_385, %c0_386] : memref<2x1x32xf32, #tpu.memory_space<vmem>>, vector<1x1x32xf32>
    %1035 = vector.shape_cast %1034 : vector<1x1x32xf32> to vector<1x32xf32>
    %cst_387 = arith.constant dense<0.000000e+00> : vector<16xf32>
    %1036 = vector.multi_reduction <add>, %1031, %cst_387 [1] : vector<16x32xf32> to vector<16xf32>
    %1037 = vector.shape_cast %1036 : vector<16xf32> to vector<16x1xf32>
    %cst_388 = arith.constant 3.200000e+01 : f32
    %1038 = vector.broadcast %cst_388 : f32 to vector<16x1xf32>
    %1039 = arith.divf %1037, %1038 : vector<16x1xf32>
    %1040 = vector.broadcast %1039 : vector<16x1xf32> to vector<16x32xf32>
    %1041 = arith.subf %1031, %1040 : vector<16x32xf32>
    %1042 = arith.mulf %1041, %1041 : vector<16x32xf32>
    %cst_389 = arith.constant dense<0.000000e+00> : vector<16xf32>
    %1043 = vector.multi_reduction <add>, %1042, %cst_389 [1] : vector<16x32xf32> to vector<16xf32>
    %1044 = vector.shape_cast %1043 : vector<16xf32> to vector<16x1xf32>
    %cst_390 = arith.constant 3.200000e+01 : f32
    %1045 = vector.broadcast %cst_390 : f32 to vector<16x1xf32>
    %1046 = arith.divf %1044, %1045 : vector<16x1xf32>
    %1047 = vector.broadcast %1039 : vector<16x1xf32> to vector<16x32xf32>
    %1048 = arith.subf %1031, %1047 : vector<16x32xf32>
    %cst_391 = arith.constant 9.99999997E-7 : f32
    %1049 = vector.broadcast %cst_391 : f32 to vector<16x1xf32>
    %1050 = arith.addf %1046, %1049 : vector<16x1xf32>
    %1051 = math.rsqrt %1050 : vector<16x1xf32>
    %1052 = vector.broadcast %1051 : vector<16x1xf32> to vector<16x32xf32>
    %1053 = arith.mulf %1048, %1052 : vector<16x32xf32>
    %1054 = vector.broadcast %1033 : vector<1x32xf32> to vector<16x32xf32>
    %1055 = arith.mulf %1053, %1054 : vector<16x32xf32>
    %1056 = vector.broadcast %1035 : vector<1x32xf32> to vector<16x32xf32>
    %1057 = arith.addf %1055, %1056 : vector<16x32xf32>
    %c1_392 = arith.constant 1 : index
    %c0_393 = arith.constant 0 : index
    %c0_394 = arith.constant 0 : index
    %1058 = vector.load %arg29[%c1_392, %c0_393, %c0_394] : memref<2x32x64xf32, #tpu.memory_space<vmem>>, vector<1x32x64xf32>
    %1059 = vector.shape_cast %1058 : vector<1x32x64xf32> to vector<32x64xf32>
    %c1_395 = arith.constant 1 : index
    %c0_396 = arith.constant 0 : index
    %c0_397 = arith.constant 0 : index
    %1060 = vector.load %arg30[%c1_395, %c0_396, %c0_397] : memref<2x1x64xf32, #tpu.memory_space<vmem>>, vector<1x1x64xf32>
    %1061 = vector.shape_cast %1060 : vector<1x1x64xf32> to vector<1x64xf32>
    %c1_398 = arith.constant 1 : index
    %c0_399 = arith.constant 0 : index
    %c0_400 = arith.constant 0 : index
    %1062 = vector.load %arg31[%c1_398, %c0_399, %c0_400] : memref<2x64x32xf32, #tpu.memory_space<vmem>>, vector<1x64x32xf32>
    %1063 = vector.shape_cast %1062 : vector<1x64x32xf32> to vector<64x32xf32>
    %c1_401 = arith.constant 1 : index
    %c0_402 = arith.constant 0 : index
    %c0_403 = arith.constant 0 : index
    %1064 = vector.load %arg32[%c1_401, %c0_402, %c0_403] : memref<2x1x32xf32, #tpu.memory_space<vmem>>, vector<1x1x32xf32>
    %1065 = vector.shape_cast %1064 : vector<1x1x32xf32> to vector<1x32xf32>
    %1066 = arith.truncf %1057 : vector<16x32xf32> to vector<16x32xbf16>
    %1067 = arith.truncf %1059 : vector<32x64xf32> to vector<32x64xbf16>
    %cst_404 = arith.constant dense<0.000000e+00> : vector<16x64xf32>
    %1068 = tpu.matmul %1066, %1067, %cst_404 {dimension_numbers = #tpu.dot_dimension_numbers<[1], [0], [0], [1], [0, 0, 1, 1], [], []>} : vector<16x32xbf16>, vector<32x64xbf16>, vector<16x64xf32> -> vector<16x64xf32>
    %1069 = vector.broadcast %1061 : vector<1x64xf32> to vector<16x64xf32>
    %1070 = arith.addf %1068, %1069 : vector<16x64xf32>
    %cst_405 = arith.constant 0.000000e+00 : f32
    %1071 = vector.broadcast %cst_405 : f32 to vector<16x64xf32>
    %1072 = arith.maximumf %1070, %1071 : vector<16x64xf32>
    %1073 = arith.truncf %1072 : vector<16x64xf32> to vector<16x64xbf16>
    %1074 = arith.truncf %1063 : vector<64x32xf32> to vector<64x32xbf16>
    %cst_406 = arith.constant dense<0.000000e+00> : vector<16x32xf32>
    %1075 = tpu.matmul %1073, %1074, %cst_406 {dimension_numbers = #tpu.dot_dimension_numbers<[1], [0], [0], [1], [0, 0, 1, 1], [], []>} : vector<16x64xbf16>, vector<64x32xbf16>, vector<16x32xf32> -> vector<16x32xf32>
    %1076 = vector.broadcast %1065 : vector<1x32xf32> to vector<16x32xf32>
    %1077 = arith.addf %1075, %1076 : vector<16x32xf32>
    %1078 = arith.addf %1031, %1077 : vector<16x32xf32>
    %c0_407 = arith.constant 0 : index
    %c0_408 = arith.constant 0 : index
    %1079 = vector.load %arg39[%c0_407, %c0_408] : memref<1x32xf32, #tpu.memory_space<vmem>>, vector<1x32xf32>
    %c0_409 = arith.constant 0 : index
    %c0_410 = arith.constant 0 : index
    %1080 = vector.load %arg40[%c0_409, %c0_410] : memref<1x32xf32, #tpu.memory_space<vmem>>, vector<1x32xf32>
    %cst_411 = arith.constant dense<0.000000e+00> : vector<16xf32>
    %1081 = vector.multi_reduction <add>, %1078, %cst_411 [1] : vector<16x32xf32> to vector<16xf32>
    %1082 = vector.shape_cast %1081 : vector<16xf32> to vector<16x1xf32>
    %cst_412 = arith.constant 3.200000e+01 : f32
    %1083 = vector.broadcast %cst_412 : f32 to vector<16x1xf32>
    %1084 = arith.divf %1082, %1083 : vector<16x1xf32>
    %1085 = vector.broadcast %1084 : vector<16x1xf32> to vector<16x32xf32>
    %1086 = arith.subf %1078, %1085 : vector<16x32xf32>
    %1087 = arith.mulf %1086, %1086 : vector<16x32xf32>
    %cst_413 = arith.constant dense<0.000000e+00> : vector<16xf32>
    %1088 = vector.multi_reduction <add>, %1087, %cst_413 [1] : vector<16x32xf32> to vector<16xf32>
    %1089 = vector.shape_cast %1088 : vector<16xf32> to vector<16x1xf32>
    %cst_414 = arith.constant 3.200000e+01 : f32
    %1090 = vector.broadcast %cst_414 : f32 to vector<16x1xf32>
    %1091 = arith.divf %1089, %1090 : vector<16x1xf32>
    %1092 = vector.broadcast %1084 : vector<16x1xf32> to vector<16x32xf32>
    %1093 = arith.subf %1078, %1092 : vector<16x32xf32>
    %cst_415 = arith.constant 9.99999997E-7 : f32
    %1094 = vector.broadcast %cst_415 : f32 to vector<16x1xf32>
    %1095 = arith.addf %1091, %1094 : vector<16x1xf32>
    %1096 = math.rsqrt %1095 : vector<16x1xf32>
    %1097 = vector.broadcast %1096 : vector<16x1xf32> to vector<16x32xf32>
    %1098 = arith.mulf %1093, %1097 : vector<16x32xf32>
    %1099 = vector.broadcast %1079 : vector<1x32xf32> to vector<16x32xf32>
    %1100 = arith.mulf %1098, %1099 : vector<16x32xf32>
    %1101 = vector.broadcast %1080 : vector<1x32xf32> to vector<16x32xf32>
    %1102 = arith.addf %1100, %1101 : vector<16x32xf32>
    %c0_416 = arith.constant 0 : index
    %c0_417 = arith.constant 0 : index
    %1103 = vector.load %arg41[%c0_416, %c0_417] : memref<16x32xf32, #tpu.memory_space<vmem>>, vector<16x32xf32>
    tpu.vector_store %arg41[%c0_416, %c0_417], %1102 {strides = array<i32>} : memref<16x32xf32, #tpu.memory_space<vmem>>, vector<16x32xf32>,
    return
  }
}

</mosaic_0001>

<llo_original>
// kernel: transformer_forward.1
$region0: #{transformer_forward.1}
  #allocation0 [shape = 'u32[]', space=smem, size = 0x4, offset = 0x4, fixed_abs, tag = 'smem constant byte address 0x4 - core index']
  #allocation1 [shape = 'u32[72,128]{1,0:T(1,128)}', space=vmem, size = 0x9000, scoped, tag = 'internal scratch']
  %s0 = inlined_call_operand.smem [shape: u32[42], index: -1, kind: input, shape index: {}]
  %s1 = sld [smem:[%s0]]
  %s2 = scalar_lea.smem %s0, 1
  %s3 = sld [smem:[%s2]]
  %s4 = scalar_lea.smem %s0, 2
  %s5 = sld [smem:[%s4]]
  %s6 = scalar_lea.smem %s0, 3
  %s7 = sld [smem:[%s6]]
  %s8 = scalar_lea.smem %s0, 4
  %s9 = sld [smem:[%s8]]
  %s10 = scalar_lea.smem %s0, 5
  %s11 = sld [smem:[%s10]]
  %s12 = scalar_lea.smem %s0, 6
  %s13 = sld [smem:[%s12]]
  %s14 = scalar_lea.smem %s0, 7
  %s15 = sld [smem:[%s14]]
  %s16 = scalar_lea.smem %s0, 8
  %s17 = sld [smem:[%s16]]
  %s18 = scalar_lea.smem %s0, 9
  %s19 = sld [smem:[%s18]]
  %s20 = scalar_lea.smem %s0, 10
  %s21 = sld [smem:[%s20]]
  %s22 = scalar_lea.smem %s0, 11
  %s23 = sld [smem:[%s22]]
  %s24 = scalar_lea.smem %s0, 12
  %s25 = sld [smem:[%s24]]
  %s26 = scalar_lea.smem %s0, 13
  %s27 = sld [smem:[%s26]]
  %s28 = scalar_lea.smem %s0, 14
  %s29 = sld [smem:[%s28]]
  %s30 = scalar_lea.smem %s0, 15
  %s31 = sld [smem:[%s30]]
  %s32 = scalar_lea.smem %s0, 16
  %s33 = sld [smem:[%s32]]
  %s34 = scalar_lea.smem %s0, 17
  %s35 = sld [smem:[%s34]]
  %s36 = scalar_lea.smem %s0, 18
  %s37 = sld [smem:[%s36]]
  %s38 = scalar_lea.smem %s0, 19
  %s39 = sld [smem:[%s38]]
  %s40 = scalar_lea.smem %s0, 20
  %s41 = sld [smem:[%s40]]
  %s42 = scalar_lea.smem %s0, 21
  %s43 = sld [smem:[%s42]]
  %s44 = scalar_lea.smem %s0, 22
  %s45 = sld [smem:[%s44]]
  %s46 = scalar_lea.smem %s0, 23
  %s47 = sld [smem:[%s46]]
  %s48 = scalar_lea.smem %s0, 24
  %s49 = sld [smem:[%s48]]
  %s50 = scalar_lea.smem %s0, 25
  %s51 = sld [smem:[%s50]]
  %s52 = scalar_lea.smem %s0, 26
  %s53 = sld [smem:[%s52]]
  %s54 = scalar_lea.smem %s0, 27
  %s55 = sld [smem:[%s54]]
  %s56 = scalar_lea.smem %s0, 28
  %s57 = sld [smem:[%s56]]
  %s58 = scalar_lea.smem %s0, 29
  %s59 = sld [smem:[%s58]]
  %s60 = scalar_lea.smem %s0, 30
  %s61 = sld [smem:[%s60]]
  %s62 = scalar_lea.smem %s0, 31
  %s63 = sld [smem:[%s62]]
  %s64 = scalar_lea.smem %s0, 32
  %s65 = sld [smem:[%s64]]
  %s66 = scalar_lea.smem %s0, 33
  %s67 = sld [smem:[%s66]]
  %s68 = scalar_lea.smem %s0, 34
  %s69 = sld [smem:[%s68]]
  %s70 = scalar_lea.smem %s0, 35
  %s71 = sld [smem:[%s70]]
  %s72 = scalar_lea.smem %s0, 36
  %s73 = sld [smem:[%s72]]
  %s74 = scalar_lea.smem %s0, 37
  %s75 = sld [smem:[%s74]]
  %s76 = scalar_lea.smem %s0, 38
  %s77 = sld [smem:[%s76]]
  %s78 = scalar_lea.smem %s0, 39
  %s79 = sld [smem:[%s78]]
  %s80 = scalar_lea.smem %s0, 40
  %s81 = sld [smem:[%s80]]
  %s82 = scalar_lea.smem %s0, 41
  %s83 = sld [smem:[%s82]]
  %s84 = sld [smem:[#allocation0]]
  $region174: #{transformer_forward.1} parent=0
    _
  %s86 = ssub.s32 1, %s84
  %s87 = scalar_select 0, %s86, %s84
  $region1: #{transformer_forward.1} parent=0
    #allocation2 [shape = 'u8[8192]{0}', space=vmem, size = 0x2000, scoped, tag = 'output window, operand 0, single buffered']
    #allocation3 [shape = 's32[1]{0}', space=sflag, size = 0x4, scoped, tag = 'scoped memory for transformer_forward.1']
    %88 = vsyncpa [#allocation3], 0
    // Predicated region
    $region2: #{transformer_forward.1} parent=1 // pred_check
      _
    $region3: #{transformer_forward.1} parent=1 // pred_check_branch
      %90 = sbr.rel (0) target = $region5
    $region4: #{transformer_forward.1} parent=1 // pred_region
      _
    $region5: #{transformer_forward.1} parent=1 // pred_fallthru
      _
    // Predicated region
    $region6: #{transformer_forward.1} parent=1 // pred_check
      _
    $region7: #{transformer_forward.1} parent=1 // pred_check_branch
      %92 = sbr.rel (0) target = $region9
    $region8: #{transformer_forward.1} parent=1 // pred_region
      _
    $region9: #{transformer_forward.1} parent=1 // pred_fallthru
      _
    // Predicated region
    $region10: #{transformer_forward.1} parent=1 // pred_check
      _
    $region11: #{transformer_forward.1} parent=1 // pred_check_branch
      %94 = sbr.rel (0) target = $region13
    $region12: #{transformer_forward.1} parent=1 // pred_region
      _
    $region13: #{transformer_forward.1} parent=1 // pred_fallthru
      _
    // Predicated region
    $region14: #{transformer_forward.1} parent=1 // pred_check
      _
    $region15: #{transformer_forward.1} parent=1 // pred_check_branch
      %96 = sbr.rel (0) target = $region17
    $region16: #{transformer_forward.1} parent=1 // pred_region
      _
    $region17: #{transformer_forward.1} parent=1 // pred_fallthru
      _
    // Predicated region
    $region18: #{transformer_forward.1} parent=1 // pred_check
      _
    $region19: #{transformer_forward.1} parent=1 // pred_check_branch
      %98 = sbr.rel (0) target = $region21
    $region20: #{transformer_forward.1} parent=1 // pred_region
      _
    $region21: #{transformer_forward.1} parent=1 // pred_fallthru
      _
    // Predicated region
    $region22: #{transformer_forward.1} parent=1 // pred_check
      _
    $region23: #{transformer_forward.1} parent=1 // pred_check_branch
      %100 = sbr.rel (0) target = $region25
    $region24: #{transformer_forward.1} parent=1 // pred_region
      _
    $region25: #{transformer_forward.1} parent=1 // pred_fallthru
      _
    // Predicated region
    $region26: #{transformer_forward.1} parent=1 // pred_check
      _
    $region27: #{transformer_forward.1} parent=1 // pred_check_branch
      %102 = sbr.rel (0) target = $region29
    $region28: #{transformer_forward.1} parent=1 // pred_region
      _
    $region29: #{transformer_forward.1} parent=1 // pred_fallthru
      _
    // Predicated region
    $region30: #{transformer_forward.1} parent=1 // pred_check
      _
    $region31: #{transformer_forward.1} parent=1 // pred_check_branch
      %104 = sbr.rel (0) target = $region33
    $region32: #{transformer_forward.1} parent=1 // pred_region
      _
    $region33: #{transformer_forward.1} parent=1 // pred_fallthru
      _
    // Predicated region
    $region34: #{transformer_forward.1} parent=1 // pred_check
      _
    $region35: #{transformer_forward.1} parent=1 // pred_check_branch
      %106 = sbr.rel (0) target = $region37
    $region36: #{transformer_forward.1} parent=1 // pred_region
      _
    $region37: #{transformer_forward.1} parent=1 // pred_fallthru
      _
    // Predicated region
    $region38: #{transformer_forward.1} parent=1 // pred_check
      _
    $region39: #{transformer_forward.1} parent=1 // pred_check_branch
      %108 = sbr.rel (0) target = $region41
    $region40: #{transformer_forward.1} parent=1 // pred_region
      _
    $region41: #{transformer_forward.1} parent=1 // pred_fallthru
      _
    // Predicated region
    $region42: #{transformer_forward.1} parent=1 // pred_check
      _
    $region43: #{transformer_forward.1} parent=1 // pred_check_branch
      %110 = sbr.rel (0) target = $region45
    $region44: #{transformer_forward.1} parent=1 // pred_region
      _
    $region45: #{transformer_forward.1} parent=1 // pred_fallthru
      _
    // Predicated region
    $region46: #{transformer_forward.1} parent=1 // pred_check
      _
    $region47: #{transformer_forward.1} parent=1 // pred_check_branch
      %112 = sbr.rel (0) target = $region49
    $region48: #{transformer_forward.1} parent=1 // pred_region
      _
    $region49: #{transformer_forward.1} parent=1 // pred_fallthru
      _
    // Predicated region
    $region50: #{transformer_forward.1} parent=1 // pred_check
      _
    $region51: #{transformer_forward.1} parent=1 // pred_check_branch
      %114 = sbr.rel (0) target = $region53
    $region52: #{transformer_forward.1} parent=1 // pred_region
      _
    $region53: #{transformer_forward.1} parent=1 // pred_fallthru
      _
    // Predicated region
    $region54: #{transformer_forward.1} parent=1 // pred_check
      _
    $region55: #{transformer_forward.1} parent=1 // pred_check_branch
      %116 = sbr.rel (0) target = $region57
    $region56: #{transformer_forward.1} parent=1 // pred_region
      _
    $region57: #{transformer_forward.1} parent=1 // pred_fallthru
      _
    // Predicated region
    $region58: #{transformer_forward.1} parent=1 // pred_check
      _
    $region59: #{transformer_forward.1} parent=1 // pred_check_branch
      %118 = sbr.rel (0) target = $region61
    $region60: #{transformer_forward.1} parent=1 // pred_region
      _
    $region61: #{transformer_forward.1} parent=1 // pred_fallthru
      _
    // Predicated region
    $region62: #{transformer_forward.1} parent=1 // pred_check
      _
    $region63: #{transformer_forward.1} parent=1 // pred_check_branch
      %120 = sbr.rel (0) target = $region65
    $region64: #{transformer_forward.1} parent=1 // pred_region
      _
    $region65: #{transformer_forward.1} parent=1 // pred_fallthru
      _
    // Predicated region
    $region66: #{transformer_forward.1} parent=1 // pred_check
      _
    $region67: #{transformer_forward.1} parent=1 // pred_check_branch
      %122 = sbr.rel (0) target = $region69
    $region68: #{transformer_forward.1} parent=1 // pred_region
      _
    $region69: #{transformer_forward.1} parent=1 // pred_fallthru
      _
    // Predicated region
    $region70: #{transformer_forward.1} parent=1 // pred_check
      _
    $region71: #{transformer_forward.1} parent=1 // pred_check_branch
      %124 = sbr.rel (0) target = $region73
    $region72: #{transformer_forward.1} parent=1 // pred_region
      _
    $region73: #{transformer_forward.1} parent=1 // pred_fallthru
      _
    // Predicated region
    $region74: #{transformer_forward.1} parent=1 // pred_check
      _
    $region75: #{transformer_forward.1} parent=1 // pred_check_branch
      %126 = sbr.rel (0) target = $region77
    $region76: #{transformer_forward.1} parent=1 // pred_region
      _
    $region77: #{transformer_forward.1} parent=1 // pred_fallthru
      _
    // Predicated region
    $region78: #{transformer_forward.1} parent=1 // pred_check
      _
    $region79: #{transformer_forward.1} parent=1 // pred_check_branch
      %128 = sbr.rel (0) target = $region81
    $region80: #{transformer_forward.1} parent=1 // pred_region
      _
    $region81: #{transformer_forward.1} parent=1 // pred_fallthru
      _
    // Predicated region
    $region82: #{transformer_forward.1} parent=1 // pred_check
      _
    $region83: #{transformer_forward.1} parent=1 // pred_check_branch
      %130 = sbr.rel (0) target = $region85
    $region84: #{transformer_forward.1} parent=1 // pred_region
      _
    $region85: #{transformer_forward.1} parent=1 // pred_fallthru
      _
    // Predicated region
    $region86: #{transformer_forward.1} parent=1 // pred_check
      _
    $region87: #{transformer_forward.1} parent=1 // pred_check_branch
      %132 = sbr.rel (0) target = $region89
    $region88: #{transformer_forward.1} parent=1 // pred_region
      _
    $region89: #{transformer_forward.1} parent=1 // pred_fallthru
      _
    // Predicated region
    $region90: #{transformer_forward.1} parent=1 // pred_check
      _
    $region91: #{transformer_forward.1} parent=1 // pred_check_branch
      %134 = sbr.rel (0) target = $region93
    $region92: #{transformer_forward.1} parent=1 // pred_region
      _
    $region93: #{transformer_forward.1} parent=1 // pred_fallthru
      _
    // Predicated region
    $region94: #{transformer_forward.1} parent=1 // pred_check
      _
    $region95: #{transformer_forward.1} parent=1 // pred_check_branch
      %136 = sbr.rel (0) target = $region97
    $region96: #{transformer_forward.1} parent=1 // pred_region
      _
    $region97: #{transformer_forward.1} parent=1 // pred_fallthru
      _
    // Predicated region
    $region98: #{transformer_forward.1} parent=1 // pred_check
      _
    $region99: #{transformer_forward.1} parent=1 // pred_check_branch
      %138 = sbr.rel (0) target = $region101
    $region100: #{transformer_forward.1} parent=1 // pred_region
      _
    $region101: #{transformer_forward.1} parent=1 // pred_fallthru
      _
    // Predicated region
    $region102: #{transformer_forward.1} parent=1 // pred_check
      _
    $region103: #{transformer_forward.1} parent=1 // pred_check_branch
      %140 = sbr.rel (0) target = $region105
    $region104: #{transformer_forward.1} parent=1 // pred_region
      _
    $region105: #{transformer_forward.1} parent=1 // pred_fallthru
      _
    // Predicated region
    $region106: #{transformer_forward.1} parent=1 // pred_check
      _
    $region107: #{transformer_forward.1} parent=1 // pred_check_branch
      %142 = sbr.rel (0) target = $region109
    $region108: #{transformer_forward.1} parent=1 // pred_region
      _
    $region109: #{transformer_forward.1} parent=1 // pred_fallthru
      _
    // Predicated region
    $region110: #{transformer_forward.1} parent=1 // pred_check
      _
    $region111: #{transformer_forward.1} parent=1 // pred_check_branch
      %144 = sbr.rel (0) target = $region113
    $region112: #{transformer_forward.1} parent=1 // pred_region
      _
    $region113: #{transformer_forward.1} parent=1 // pred_fallthru
      _
    // Predicated region
    $region114: #{transformer_forward.1} parent=1 // pred_check
      _
    $region115: #{transformer_forward.1} parent=1 // pred_check_branch
      %146 = sbr.rel (0) target = $region117
    $region116: #{transformer_forward.1} parent=1 // pred_region
      _
    $region117: #{transformer_forward.1} parent=1 // pred_fallthru
      _
    // Predicated region
    $region118: #{transformer_forward.1} parent=1 // pred_check
      _
    $region119: #{transformer_forward.1} parent=1 // pred_check_branch
      %148 = sbr.rel (0) target = $region121
    $region120: #{transformer_forward.1} parent=1 // pred_region
      _
    $region121: #{transformer_forward.1} parent=1 // pred_fallthru
      _
    // Predicated region
    $region122: #{transformer_forward.1} parent=1 // pred_check
      _
    $region123: #{transformer_forward.1} parent=1 // pred_check_branch
      %150 = sbr.rel (0) target = $region125
    $region124: #{transformer_forward.1} parent=1 // pred_region
      _
    $region125: #{transformer_forward.1} parent=1 // pred_fallthru
      _
    // Predicated region
    $region126: #{transformer_forward.1} parent=1 // pred_check
      _
    $region127: #{transformer_forward.1} parent=1 // pred_check_branch
      %152 = sbr.rel (0) target = $region129
    $region128: #{transformer_forward.1} parent=1 // pred_region
      _
    $region129: #{transformer_forward.1} parent=1 // pred_fallthru
      _
    // Predicated region
    $region130: #{transformer_forward.1} parent=1 // pred_check
      _
    $region131: #{transformer_forward.1} parent=1 // pred_check_branch
      %154 = sbr.rel (0) target = $region133
    $region132: #{transformer_forward.1} parent=1 // pred_region
      _
    $region133: #{transformer_forward.1} parent=1 // pred_fallthru
      _
    // Predicated region
    $region134: #{transformer_forward.1} parent=1 // pred_check
      _
    $region135: #{transformer_forward.1} parent=1 // pred_check_branch
      %156 = sbr.rel (0) target = $region137
    $region136: #{transformer_forward.1} parent=1 // pred_region
      _
    $region137: #{transformer_forward.1} parent=1 // pred_fallthru
      _
    // Predicated region
    $region138: #{transformer_forward.1} parent=1 // pred_check
      _
    $region139: #{transformer_forward.1} parent=1 // pred_check_branch
      %158 = sbr.rel (0) target = $region141
    $region140: #{transformer_forward.1} parent=1 // pred_region
      _
    $region141: #{transformer_forward.1} parent=1 // pred_fallthru
      _
    // Predicated region
    $region142: #{transformer_forward.1} parent=1 // pred_check
      _
    $region143: #{transformer_forward.1} parent=1 // pred_check_branch
      %160 = sbr.rel (0) target = $region145
    $region144: #{transformer_forward.1} parent=1 // pred_region
      _
    $region145: #{transformer_forward.1} parent=1 // pred_fallthru
      _
    // Predicated region
    $region146: #{transformer_forward.1} parent=1 // pred_check
      _
    $region147: #{transformer_forward.1} parent=1 // pred_check_branch
      %162 = sbr.rel (0) target = $region149
    $region148: #{transformer_forward.1} parent=1 // pred_region
      _
    $region149: #{transformer_forward.1} parent=1 // pred_fallthru
      _
    // Predicated region
    $region150: #{transformer_forward.1} parent=1 // pred_check
      _
    $region151: #{transformer_forward.1} parent=1 // pred_check_branch
      %164 = sbr.rel (0) target = $region153
    $region152: #{transformer_forward.1} parent=1 // pred_region
      _
    $region153: #{transformer_forward.1} parent=1 // pred_fallthru
      _
    // Predicated region
    $region154: #{transformer_forward.1} parent=1 // pred_check
      _
    $region155: #{transformer_forward.1} parent=1 // pred_check_branch
      %166 = sbr.rel (0) target = $region157
    $region156: #{transformer_forward.1} parent=1 // pred_region
      _
    $region157: #{transformer_forward.1} parent=1 // pred_fallthru
      _
    // Predicated region
    $region158: #{transformer_forward.1} parent=1 // pred_check
      _
    $region159: #{transformer_forward.1} parent=1 // pred_check_branch
      %168 = sbr.rel (0) target = $region161
    $region160: #{transformer_forward.1} parent=1 // pred_region
      _
    $region161: #{transformer_forward.1} parent=1 // pred_fallthru
      _
    // Predicated region
    $region162: #{transformer_forward.1} parent=1 // pred_check
      _
    $region163: #{transformer_forward.1} parent=1 // pred_check_branch
      %170 = sbr.rel (0) target = $region165
    $region164: #{transformer_forward.1} parent=1 // pred_region
      _
    $region165: #{transformer_forward.1} parent=1 // pred_fallthru
      _
    %v172 = vld [vmem:[%s1] sm:$0xff]
    %v173 = vld [vmem:[%s1 + $0x8] sm:$0xff]
    %v174 = vld [vmem:[%s5] sm:$0xff]
    %v175 = vld [vmem:[%s5 + $0x8] sm:$0xff]
    %v176 = vld [vmem:[%s27] sm:$0x1]
    %v177 = vld [vmem:[%s29] sm:$0x1]
    %vm178 = vcmask 261120
    %v179 = vsel %vm178, %v172, 0.0
    %180 = vadd.xlane.f32.xlu0 %v179
    %v181 = vpop.xlane.xlu0 %180
    %v182 = vsel %vm178, %v173, 0.0
    %183 = vadd.xlane.f32.xlu0 %v182
    %v184 = vpop.xlane.xlu0 %183
    %v185 = vrcp.pop 32.0
    %v186 = vmul.f32 32.0, %v185
    %v187 = vsub.f32 1.0, %v186
    %v188 = vmul.f32 %v185, %v187
    %v189 = vadd.f32 %v185, %v188
    %vm190 = vweird.f32 %v185
    %v191 = vsel %vm190, %v185, %v189
    %v192 = vmul.f32 %v181, %v191
    %v193 = vmul.f32 %v184, %v191
    %v194 = vsub.f32 %v172, %v192
    %v195 = vsub.f32 %v173, %v193
    %v196 = vmul.f32 %v194, %v194
    %v197 = vmul.f32 %v195, %v195
    %v198 = vsel %vm178, %v196, 0.0
    %199 = vadd.xlane.f32.xlu0 %v198
    %v200 = vpop.xlane.xlu0 %199
    %v201 = vsel %vm178, %v197, 0.0
    %202 = vadd.xlane.f32.xlu0 %v201
    %v203 = vpop.xlane.xlu0 %202
    %v204 = vmul.f32 %v200, %v191
    %v205 = vmul.f32 %v203, %v191
    %v206 = vadd.f32 %v204, 1e-06
    %v207 = vadd.f32 %v205, 1e-06
    %v208 = vrsqrt.pop %v206
    %v209 = vmul.f32 %v208, %v206
    %v210 = vmul.f32 %v209, %v208
    %v211 = vmul.f32 0.5, %v210
    %v212 = vsub.f32 1.5, %v211
    %v213 = vmul.f32 %v208, %v212
    %vm214 = vweird.f32 %v206
    %vm215 = vweird.f32 %v208
    %vm216 = vmor %vm214, %vm215
    %v217 = vsel %vm216, %v208, %v213
    %v218 = vrsqrt.pop %v207
    %v219 = vmul.f32 %v218, %v207
    %v220 = vmul.f32 %v219, %v218
    %v221 = vmul.f32 0.5, %v220
    %v222 = vsub.f32 1.5, %v221
    %v223 = vmul.f32 %v218, %v222
    %vm224 = vweird.f32 %v207
    %vm225 = vweird.f32 %v218
    %vm226 = vmor %vm224, %vm225
    %v227 = vsel %vm226, %v218, %v223
    %v228 = vmul.f32 %v194, %v217
    %v229 = vmul.f32 %v195, %v227
    %v231 = vperm.slane %v176, 0
    %v233 = vmul.f32 %v228, %v231
    %v234 = vmul.f32 %v229, %v231
    %v236 = vperm.slane %v177, 0
    %v238 = vadd.f32 %v233, %v236
    %v239 = vadd.f32 %v234, %v236
    %v240 = vld [vmem:[%s11] sm:$0xff]
    %v241 = vld [vmem:[%s11 + $0x8] sm:$0xff]
    %v242 = vld [vmem:[%s11 + $0x10] sm:$0xff]
    %v243 = vld [vmem:[%s11 + $0x18] sm:$0xff]
    %v244 = vld [vmem:[%s13] sm:$0x1]
    %v245 = vld [vmem:[%s15] sm:$0xff]
    %v246 = vld [vmem:[%s15 + $0x8] sm:$0xff]
    %v247 = vld [vmem:[%s15 + $0x10] sm:$0xff]
    %v248 = vld [vmem:[%s15 + $0x18] sm:$0xff]
    %v249 = vld [vmem:[%s17] sm:$0x1]
    %v250 = vpack.c.bf16 %v239, %v238
    %v251 = vpack.c.bf16 %v241, %v240
    %v252 = vpack.c.bf16 %v243, %v242
    %v254 = vperm.slane %v244, 0
    %v257 = vsel %vm178, %v250, 0
    %259 = vmatpush.bf16.msra.mxu0 0
    %260 = vmatpush.bf16.msra.mxu0 0
    %261 = vmatpush.bf16.msra.mxu0 0
    %262 = vmatpush.bf16.msra.mxu0 0
    %263 = vmatpush.bf16.msra.mxu0 0
    %264 = vmatpush.bf16.msra.mxu0 0
    %265 = vmatpush.bf16.msra.mxu0 %v252
    %266 = vmatpush.bf16.msra.mxu0 %v251
    %267 = vmatmul.bf16.gmra.mxu0 %v257
    %v268 = vpop.f32.mrf.mxu0
    %v269 = vadd.f32 %v254, %v268
    %v270 = vpop.f32.mrf.mxu0
    %v271 = vadd.f32 %v254, %v270
    %272 = vdwg.mxu0
    %v273 = vpack.c.bf16 %v269, %v269
    %v274 = vpack.c.bf16 %v271, %v271
    %v276 = vunpack.c.l.b16 %v273
    %v277 = vpack.c.b16 %v276, %v276
    %278 = vrot.lane.b32.xlu0 %v277, 96
    %v279 = vpop.permute.xlu0 %278
    %vm280 = vcmask 64512
    %v282 = vsel %vm280, %v273, 0
    %v285 = vsel %vm280, %v279, 0
    %287 = vmatpush.bf16.xpose.msra.mxu0 0
    %288 = vmatpush.bf16.xpose.msra.mxu0 0
    %289 = vmatpush.bf16.xpose.msra.mxu0 0
    %290 = vmatpush.bf16.xpose.msra.mxu0 0
    %291 = vmatpush.bf16.xpose.msra.mxu0 0
    %292 = vmatpush.bf16.xpose.msra.mxu0 0
    %293 = vmatpush.bf16.xpose.msra.mxu0 0
    %294 = vmatpush.bf16.xpose.msra.mxu0 %v285
    %295 = vmatmul.bf16.gmra.mxu0 %v282
    %v296 = vpop.f32.mrf.mxu0
    %v297 = vadd.f32 0.0, %v296
    %v298 = vpop.f32.mrf.mxu0
    %299 = vdwg.mxu0
    %v301 = vunpack.c.l.b16 %v274
    %v302 = vpack.c.b16 %v301, %v301
    %303 = vrot.lane.b32.xlu0 %v302, 96
    %v304 = vpop.permute.xlu0 %303
    %v306 = vsel %vm280, %v274, 0
    %v309 = vsel %vm280, %v304, 0
    %311 = vmatpush.bf16.xpose.msra.mxu0 0
    %312 = vmatpush.bf16.xpose.msra.mxu0 0
    %313 = vmatpush.bf16.xpose.msra.mxu0 0
    %314 = vmatpush.bf16.xpose.msra.mxu0 0
    %315 = vmatpush.bf16.xpose.msra.mxu0 0
    %316 = vmatpush.bf16.xpose.msra.mxu0 0
    %317 = vmatpush.bf16.xpose.msra.mxu0 0
    %318 = vmatpush.bf16.xpose.msra.mxu0 %v309
    %319 = vmatmul.bf16.gmra.mxu0 %v306
    %v320 = vpop.f32.mrf.mxu0
    %v321 = vadd.f32 0.0, %v320
    %v322 = vpop.f32.mrf.mxu0
    %323 = vdwg.mxu0
    %v324 = vmul.f32 %v297, 0.35355338
    %v325 = vmul.f32 %v321, 0.35355338
    %v326 = vadd.f32 %v324, %v174
    %v327 = vadd.f32 %v325, %v175
    %v328 = vsel %vm280, %v326, -inf
    %329 = vmax.xlane.f32.xlu0 %v328
    %v330 = vpop.xlane.xlu0 %329
    %v331 = vsel %vm280, %v327, -inf
    %332 = vmax.xlane.f32.xlu0 %v331
    %v333 = vpop.xlane.xlu0 %332
    %v334 = vsub.f32 %v326, %v330
    %v335 = vsub.f32 %v327, %v333
    %v336 = vmul.f32 %v334, 1.442695
    %v337 = vpow.pop %v336
    %v338 = vmul.f32 %v335, 1.442695
    %v339 = vpow.pop %v338
    %v340 = vsel %vm280, %v337, 0.0
    %341 = vadd.xlane.f32.xlu0 %v340
    %v342 = vpop.xlane.xlu0 %341
    %v343 = vsel %vm280, %v339, 0.0
    %344 = vadd.xlane.f32.xlu0 %v343
    %v345 = vpop.xlane.xlu0 %344
    %v346 = vrcp.pop %v342
    %v347 = vrcp.pop %v345
    %v348 = vmul.f32 %v337, %v346
    %v349 = vmul.f32 %v339, %v347
    %v350 = vpack.c.bf16 %v348, %v348
    %v351 = vpack.c.bf16 %v349, %v349
    %352 = vrot.lane.b32.xlu0 %v277, 64
    %v353 = vpop.permute.xlu0 %352
    %v355 = vsel %vm280, %v350, 0
    %vm357 = vcmask 1043456
    %v359 = vsel %vm357, %v353, 0
    %361 = vmatpush.bf16.msra.mxu0 0
    %362 = vmatpush.bf16.msra.mxu0 0
    %363 = vmatpush.bf16.msra.mxu0 0
    %364 = vmatpush.bf16.msra.mxu0 0
    %365 = vmatpush.bf16.msra.mxu0 0
    %366 = vmatpush.bf16.msra.mxu0 0
    %367 = vmatpush.bf16.msra.mxu0 0
    %368 = vmatpush.bf16.msra.mxu0 %v359
    %369 = vmatmul.bf16.gmra.mxu0 %v355
    %v370 = vpop.f32.mrf.mxu0
    %v371 = vadd.f32 0.0, %v370
    %v372 = vpop.f32.mrf.mxu0
    %373 = vdwg.mxu0
    %374 = vrot.lane.b32.xlu0 %v302, 64
    %v375 = vpop.permute.xlu0 %374
    %v377 = vsel %vm280, %v351, 0
    %v380 = vsel %vm357, %v375, 0
    %382 = vmatpush.bf16.msra.mxu0 0
    %383 = vmatpush.bf16.msra.mxu0 0
    %384 = vmatpush.bf16.msra.mxu0 0
    %385 = vmatpush.bf16.msra.mxu0 0
    %386 = vmatpush.bf16.msra.mxu0 0
    %387 = vmatpush.bf16.msra.mxu0 0
    %388 = vmatpush.bf16.msra.mxu0 0
    %389 = vmatpush.bf16.msra.mxu0 %v380
    %390 = vmatmul.bf16.gmra.mxu0 %v377
    %v391 = vpop.f32.mrf.mxu0
    %v392 = vadd.f32 0.0, %v391
    %v393 = vpop.f32.mrf.mxu0
    %394 = vdwg.mxu0
    %395 = vrot.lane.b32.xlu0 %v277, 120
    %v396 = vpop.permute.xlu0 %395
    %397 = vrot.lane.b32.xlu0 %v277, 88
    %v398 = vpop.permute.xlu0 %397
    %v400 = vsel %vm280, %v396, 0
    %v403 = vsel %vm280, %v398, 0
    %405 = vmatpush.bf16.xpose.msra.mxu0 0
    %406 = vmatpush.bf16.xpose.msra.mxu0 0
    %407 = vmatpush.bf16.xpose.msra.mxu0 0
    %408 = vmatpush.bf16.xpose.msra.mxu0 0
    %409 = vmatpush.bf16.xpose.msra.mxu0 0
    %410 = vmatpush.bf16.xpose.msra.mxu0 0
    %411 = vmatpush.bf16.xpose.msra.mxu0 0
    %412 = vmatpush.bf16.xpose.msra.mxu0 %v403
    %413 = vmatmul.bf16.gmra.mxu0 %v400
    %v414 = vpop.f32.mrf.mxu0
    %v415 = vadd.f32 0.0, %v414
    %v416 = vpop.f32.mrf.mxu0
    %417 = vdwg.mxu0
    %418 = vrot.lane.b32.xlu0 %v302, 120
    %v419 = vpop.permute.xlu0 %418
    %420 = vrot.lane.b32.xlu0 %v302, 88
    %v421 = vpop.permute.xlu0 %420
    %v423 = vsel %vm280, %v419, 0
    %v426 = vsel %vm280, %v421, 0
    %428 = vmatpush.bf16.xpose.msra.mxu0 0
    %429 = vmatpush.bf16.xpose.msra.mxu0 0
    %430 = vmatpush.bf16.xpose.msra.mxu0 0
    %431 = vmatpush.bf16.xpose.msra.mxu0 0
    %432 = vmatpush.bf16.xpose.msra.mxu0 0
    %433 = vmatpush.bf16.xpose.msra.mxu0 0
    %434 = vmatpush.bf16.xpose.msra.mxu0 0
    %435 = vmatpush.bf16.xpose.msra.mxu0 %v426
    %436 = vmatmul.bf16.gmra.mxu0 %v423
    %v437 = vpop.f32.mrf.mxu0
    %v438 = vadd.f32 0.0, %v437
    %v439 = vpop.f32.mrf.mxu0
    %440 = vdwg.mxu0
    %v441 = vmul.f32 %v415, 0.35355338
    %v442 = vmul.f32 %v438, 0.35355338
    %v443 = vadd.f32 %v441, %v174
    %v444 = vadd.f32 %v442, %v175
    %v445 = vsel %vm280, %v443, -inf
    %446 = vmax.xlane.f32.xlu0 %v445
    %v447 = vpop.xlane.xlu0 %446
    %v448 = vsel %vm280, %v444, -inf
    %449 = vmax.xlane.f32.xlu0 %v448
    %v450 = vpop.xlane.xlu0 %449
    %v451 = vsub.f32 %v443, %v447
    %v452 = vsub.f32 %v444, %v450
    %v453 = vmul.f32 %v451, 1.442695
    %v454 = vpow.pop %v453
    %v455 = vmul.f32 %v452, 1.442695
    %v456 = vpow.pop %v455
    %v457 = vsel %vm280, %v454, 0.0
    %458 = vadd.xlane.f32.xlu0 %v457
    %v459 = vpop.xlane.xlu0 %458
    %v460 = vsel %vm280, %v456, 0.0
    %461 = vadd.xlane.f32.xlu0 %v460
    %v462 = vpop.xlane.xlu0 %461
    %v463 = vrcp.pop %v459
    %v464 = vrcp.pop %v462
    %v465 = vmul.f32 %v454, %v463
    %v466 = vmul.f32 %v456, %v464
    %v467 = vpack.c.bf16 %v465, %v465
    %v468 = vpack.c.bf16 %v466, %v466
    %469 = vrot.lane.b32.xlu0 %v277, 56
    %v470 = vpop.permute.xlu0 %469
    %v472 = vsel %vm280, %v467, 0
    %v475 = vsel %vm357, %v470, 0
    %477 = vmatpush.bf16.msra.mxu0 0
    %478 = vmatpush.bf16.msra.mxu0 0
    %479 = vmatpush.bf16.msra.mxu0 0
    %480 = vmatpush.bf16.msra.mxu0 0
    %481 = vmatpush.bf16.msra.mxu0 0
    %482 = vmatpush.bf16.msra.mxu0 0
    %483 = vmatpush.bf16.msra.mxu0 0
    %484 = vmatpush.bf16.msra.mxu0 %v475
    %485 = vmatmul.bf16.gmra.mxu0 %v472
    %v486 = vpop.f32.mrf.mxu0
    %v487 = vadd.f32 0.0, %v486
    %v488 = vpop.f32.mrf.mxu0
    %489 = vdwg.mxu0
    %490 = vrot.lane.b32.xlu0 %v302, 56
    %v491 = vpop.permute.xlu0 %490
    %v493 = vsel %vm280, %v468, 0
    %v496 = vsel %vm357, %v491, 0
    %498 = vmatpush.bf16.msra.mxu0 0
    %499 = vmatpush.bf16.msra.mxu0 0
    %500 = vmatpush.bf16.msra.mxu0 0
    %501 = vmatpush.bf16.msra.mxu0 0
    %502 = vmatpush.bf16.msra.mxu0 0
    %503 = vmatpush.bf16.msra.mxu0 0
    %504 = vmatpush.bf16.msra.mxu0 0
    %505 = vmatpush.bf16.msra.mxu0 %v496
    %506 = vmatmul.bf16.gmra.mxu0 %v493
    %v507 = vpop.f32.mrf.mxu0
    %v508 = vadd.f32 0.0, %v507
    %v509 = vpop.f32.mrf.mxu0
    %510 = vdwg.mxu0
    %511 = vrot.lane.b32.xlu0 %v277, 112
    %v512 = vpop.permute.xlu0 %511
    %513 = vrot.lane.b32.xlu0 %v277, 80
    %v514 = vpop.permute.xlu0 %513
    %v516 = vsel %vm280, %v512, 0
    %v519 = vsel %vm280, %v514, 0
    %521 = vmatpush.bf16.xpose.msra.mxu0 0
    %522 = vmatpush.bf16.xpose.msra.mxu0 0
    %523 = vmatpush.bf16.xpose.msra.mxu0 0
    %524 = vmatpush.bf16.xpose.msra.mxu0 0
    %525 = vmatpush.bf16.xpose.msra.mxu0 0
    %526 = vmatpush.bf16.xpose.msra.mxu0 0
    %527 = vmatpush.bf16.xpose.msra.mxu0 0
    %528 = vmatpush.bf16.xpose.msra.mxu0 %v519
    %529 = vmatmul.bf16.gmra.mxu0 %v516
    %v530 = vpop.f32.mrf.mxu0
    %v531 = vadd.f32 0.0, %v530
    %v532 = vpop.f32.mrf.mxu0
    %533 = vdwg.mxu0
    %534 = vrot.lane.b32.xlu0 %v302, 112
    %v535 = vpop.permute.xlu0 %534
    %536 = vrot.lane.b32.xlu0 %v302, 80
    %v537 = vpop.permute.xlu0 %536
    %v539 = vsel %vm280, %v535, 0
    %v542 = vsel %vm280, %v537, 0
    %544 = vmatpush.bf16.xpose.msra.mxu0 0
    %545 = vmatpush.bf16.xpose.msra.mxu0 0
    %546 = vmatpush.bf16.xpose.msra.mxu0 0
    %547 = vmatpush.bf16.xpose.msra.mxu0 0
    %548 = vmatpush.bf16.xpose.msra.mxu0 0
    %549 = vmatpush.bf16.xpose.msra.mxu0 0
    %550 = vmatpush.bf16.xpose.msra.mxu0 0
    %551 = vmatpush.bf16.xpose.msra.mxu0 %v542
    %552 = vmatmul.bf16.gmra.mxu0 %v539
    %v553 = vpop.f32.mrf.mxu0
    %v554 = vadd.f32 0.0, %v553
    %v555 = vpop.f32.mrf.mxu0
    %556 = vdwg.mxu0
    %v557 = vmul.f32 %v531, 0.35355338
    %v558 = vmul.f32 %v554, 0.35355338
    %v559 = vadd.f32 %v557, %v174
    %v560 = vadd.f32 %v558, %v175
    %v561 = vsel %vm280, %v559, -inf
    %562 = vmax.xlane.f32.xlu0 %v561
    %v563 = vpop.xlane.xlu0 %562
    %v564 = vsel %vm280, %v560, -inf
    %565 = vmax.xlane.f32.xlu0 %v564
    %v566 = vpop.xlane.xlu0 %565
    %v567 = vsub.f32 %v559, %v563
    %v568 = vsub.f32 %v560, %v566
    %v569 = vmul.f32 %v567, 1.442695
    %v570 = vpow.pop %v569
    %v571 = vmul.f32 %v568, 1.442695
    %v572 = vpow.pop %v571
    %v573 = vsel %vm280, %v570, 0.0
    %574 = vadd.xlane.f32.xlu0 %v573
    %v575 = vpop.xlane.xlu0 %574
    %v576 = vsel %vm280, %v572, 0.0
    %577 = vadd.xlane.f32.xlu0 %v576
    %v578 = vpop.xlane.xlu0 %577
    %v579 = vrcp.pop %v575
    %v580 = vrcp.pop %v578
    %v581 = vmul.f32 %v570, %v579
    %v582 = vmul.f32 %v572, %v580
    %v583 = vpack.c.bf16 %v581, %v581
    %v584 = vpack.c.bf16 %v582, %v582
    %585 = vrot.lane.b32.xlu0 %v277, 48
    %v586 = vpop.permute.xlu0 %585
    %v588 = vsel %vm280, %v583, 0
    %v591 = vsel %vm357, %v586, 0
    %593 = vmatpush.bf16.msra.mxu0 0
    %594 = vmatpush.bf16.msra.mxu0 0
    %595 = vmatpush.bf16.msra.mxu0 0
    %596 = vmatpush.bf16.msra.mxu0 0
    %597 = vmatpush.bf16.msra.mxu0 0
    %598 = vmatpush.bf16.msra.mxu0 0
    %599 = vmatpush.bf16.msra.mxu0 0
    %600 = vmatpush.bf16.msra.mxu0 %v591
    %601 = vmatmul.bf16.gmra.mxu0 %v588
    %v602 = vpop.f32.mrf.mxu0
    %v603 = vadd.f32 0.0, %v602
    %v604 = vpop.f32.mrf.mxu0
    %605 = vdwg.mxu0
    %606 = vrot.lane.b32.xlu0 %v302, 48
    %v607 = vpop.permute.xlu0 %606
    %v609 = vsel %vm280, %v584, 0
    %v612 = vsel %vm357, %v607, 0
    %614 = vmatpush.bf16.msra.mxu0 0
    %615 = vmatpush.bf16.msra.mxu0 0
    %616 = vmatpush.bf16.msra.mxu0 0
    %617 = vmatpush.bf16.msra.mxu0 0
    %618 = vmatpush.bf16.msra.mxu0 0
    %619 = vmatpush.bf16.msra.mxu0 0
    %620 = vmatpush.bf16.msra.mxu0 0
    %621 = vmatpush.bf16.msra.mxu0 %v612
    %622 = vmatmul.bf16.gmra.mxu0 %v609
    %v623 = vpop.f32.mrf.mxu0
    %v624 = vadd.f32 0.0, %v623
    %v625 = vpop.f32.mrf.mxu0
    %626 = vdwg.mxu0
    %627 = vrot.lane.b32.xlu0 %v277, 104
    %v628 = vpop.permute.xlu0 %627
    %629 = vrot.lane.b32.xlu0 %v277, 72
    %v630 = vpop.permute.xlu0 %629
    %v632 = vsel %vm280, %v628, 0
    %v635 = vsel %vm280, %v630, 0
    %637 = vmatpush.bf16.xpose.msra.mxu0 0
    %638 = vmatpush.bf16.xpose.msra.mxu0 0
    %639 = vmatpush.bf16.xpose.msra.mxu0 0
    %640 = vmatpush.bf16.xpose.msra.mxu0 0
    %641 = vmatpush.bf16.xpose.msra.mxu0 0
    %642 = vmatpush.bf16.xpose.msra.mxu0 0
    %643 = vmatpush.bf16.xpose.msra.mxu0 0
    %644 = vmatpush.bf16.xpose.msra.mxu0 %v635
    %645 = vmatmul.bf16.gmra.mxu0 %v632
    %v646 = vpop.f32.mrf.mxu0
    %v647 = vadd.f32 0.0, %v646
    %v648 = vpop.f32.mrf.mxu0
    %649 = vdwg.mxu0
    %650 = vrot.lane.b32.xlu0 %v302, 104
    %v651 = vpop.permute.xlu0 %650
    %652 = vrot.lane.b32.xlu0 %v302, 72
    %v653 = vpop.permute.xlu0 %652
    %v655 = vsel %vm280, %v651, 0
    %v658 = vsel %vm280, %v653, 0
    %660 = vmatpush.bf16.xpose.msra.mxu0 0
    %661 = vmatpush.bf16.xpose.msra.mxu0 0
    %662 = vmatpush.bf16.xpose.msra.mxu0 0
    %663 = vmatpush.bf16.xpose.msra.mxu0 0
    %664 = vmatpush.bf16.xpose.msra.mxu0 0
    %665 = vmatpush.bf16.xpose.msra.mxu0 0
    %666 = vmatpush.bf16.xpose.msra.mxu0 0
    %667 = vmatpush.bf16.xpose.msra.mxu0 %v658
    %668 = vmatmul.bf16.gmra.mxu0 %v655
    %v669 = vpop.f32.mrf.mxu0
    %v670 = vadd.f32 0.0, %v669
    %v671 = vpop.f32.mrf.mxu0
    %672 = vdwg.mxu0
    %v673 = vmul.f32 %v647, 0.35355338
    %v674 = vmul.f32 %v670, 0.35355338
    %v675 = vadd.f32 %v673, %v174
    %v676 = vadd.f32 %v674, %v175
    %v677 = vsel %vm280, %v675, -inf
    %678 = vmax.xlane.f32.xlu0 %v677
    %v679 = vpop.xlane.xlu0 %678
    %v680 = vsel %vm280, %v676, -inf
    %681 = vmax.xlane.f32.xlu0 %v680
    %v682 = vpop.xlane.xlu0 %681
    %v683 = vsub.f32 %v675, %v679
    %v684 = vsub.f32 %v676, %v682
    %v685 = vmul.f32 %v683, 1.442695
    %v686 = vpow.pop %v685
    %v687 = vmul.f32 %v684, 1.442695
    %v688 = vpow.pop %v687
    %v689 = vsel %vm280, %v686, 0.0
    %690 = vadd.xlane.f32.xlu0 %v689
    %v691 = vpop.xlane.xlu0 %690
    %v692 = vsel %vm280, %v688, 0.0
    %693 = vadd.xlane.f32.xlu0 %v692
    %v694 = vpop.xlane.xlu0 %693
    %v695 = vrcp.pop %v691
    %v696 = vrcp.pop %v694
    %v697 = vmul.f32 %v686, %v695
    %v698 = vmul.f32 %v688, %v696
    %v699 = vpack.c.bf16 %v697, %v697
    %v700 = vpack.c.bf16 %v698, %v698
    %701 = vrot.lane.b32.xlu0 %v277, 40
    %v702 = vpop.permute.xlu0 %701
    %v704 = vsel %vm280, %v699, 0
    %v707 = vsel %vm357, %v702, 0
    %709 = vmatpush.bf16.msra.mxu0 0
    %710 = vmatpush.bf16.msra.mxu0 0
    %711 = vmatpush.bf16.msra.mxu0 0
    %712 = vmatpush.bf16.msra.mxu0 0
    %713 = vmatpush.bf16.msra.mxu0 0
    %714 = vmatpush.bf16.msra.mxu0 0
    %715 = vmatpush.bf16.msra.mxu0 0
    %716 = vmatpush.bf16.msra.mxu0 %v707
    %717 = vmatmul.bf16.gmra.mxu0 %v704
    %v718 = vpop.f32.mrf.mxu0
    %v719 = vadd.f32 0.0, %v718
    %v720 = vpop.f32.mrf.mxu0
    %721 = vdwg.mxu0
    %722 = vrot.lane.b32.xlu0 %v302, 40
    %v723 = vpop.permute.xlu0 %722
    %v725 = vsel %vm280, %v700, 0
    %v728 = vsel %vm357, %v723, 0
    %730 = vmatpush.bf16.msra.mxu0 0
    %731 = vmatpush.bf16.msra.mxu0 0
    %732 = vmatpush.bf16.msra.mxu0 0
    %733 = vmatpush.bf16.msra.mxu0 0
    %734 = vmatpush.bf16.msra.mxu0 0
    %735 = vmatpush.bf16.msra.mxu0 0
    %736 = vmatpush.bf16.msra.mxu0 0
    %737 = vmatpush.bf16.msra.mxu0 %v728
    %738 = vmatmul.bf16.gmra.mxu0 %v725
    %v739 = vpop.f32.mrf.mxu0
    %v740 = vadd.f32 0.0, %v739
    %v741 = vpop.f32.mrf.mxu0
    %742 = vdwg.mxu0
    %745 = vrot.lane.b32.xlu0 %v487, 8
    %v746 = vpop.permute.xlu0 %745
    %747 = vrot.lane.b32.xlu0 %v508, 8
    %v748 = vpop.permute.xlu0 %747
    %753 = vrot.lane.b32.xlu0 %v603, 16
    %v754 = vpop.permute.xlu0 %753
    %755 = vrot.lane.b32.xlu0 %v624, 16
    %v756 = vpop.permute.xlu0 %755
    %761 = vrot.lane.b32.xlu0 %v719, 24
    %v762 = vpop.permute.xlu0 %761
    %763 = vrot.lane.b32.xlu0 %v740, 24
    %v764 = vpop.permute.xlu0 %763
    %v767 = vsel %vm280, %v371, %v746
    %v768 = vsel %vm280, %v392, %v748
    %vm769 = vcmask 130048
    %v770 = vsel %vm769, %v767, %v754
    %v771 = vsel %vm769, %v768, %v756
    %vm772 = vcmask 195584
    %v773 = vsel %vm772, %v770, %v762
    %v774 = vsel %vm772, %v771, %v764
    %v775 = vpack.c.bf16 %v774, %v773
    %v776 = vpack.c.bf16 %v246, %v245
    %v777 = vpack.c.bf16 %v248, %v247
    %v779 = vperm.slane %v249, 0
    %v782 = vsel %vm178, %v775, 0
    %784 = vmatpush.bf16.msra.mxu0 0
    %785 = vmatpush.bf16.msra.mxu0 0
    %786 = vmatpush.bf16.msra.mxu0 0
    %787 = vmatpush.bf16.msra.mxu0 0
    %788 = vmatpush.bf16.msra.mxu0 0
    %789 = vmatpush.bf16.msra.mxu0 0
    %790 = vmatpush.bf16.msra.mxu0 %v777
    %791 = vmatpush.bf16.msra.mxu0 %v776
    %792 = vmatmul.bf16.gmra.mxu0 %v782
    %v793 = vpop.f32.mrf.mxu0
    %v794 = vadd.f32 %v779, %v793
    %v795 = vpop.f32.mrf.mxu0
    %v796 = vadd.f32 %v779, %v795
    %797 = vdwg.mxu0
    %v798 = vadd.f32 %v172, %v794
    %v799 = vadd.f32 %v173, %v796
    %v800 = vld [vmem:[%s31] sm:$0x1]
    %v801 = vld [vmem:[%s33] sm:$0x1]
    %v802 = vsel %vm178, %v798, 0.0
    %803 = vadd.xlane.f32.xlu0 %v802
    %v804 = vpop.xlane.xlu0 %803
    %v805 = vsel %vm178, %v799, 0.0
    %806 = vadd.xlane.f32.xlu0 %v805
    %v807 = vpop.xlane.xlu0 %806
    %v808 = vmul.f32 %v804, %v191
    %v809 = vmul.f32 %v807, %v191
    %v810 = vsub.f32 %v798, %v808
    %v811 = vsub.f32 %v799, %v809
    %v812 = vmul.f32 %v810, %v810
    %v813 = vmul.f32 %v811, %v811
    %v814 = vsel %vm178, %v812, 0.0
    %815 = vadd.xlane.f32.xlu0 %v814
    %v816 = vpop.xlane.xlu0 %815
    %v817 = vsel %vm178, %v813, 0.0
    %818 = vadd.xlane.f32.xlu0 %v817
    %v819 = vpop.xlane.xlu0 %818
    %v820 = vmul.f32 %v816, %v191
    %v821 = vmul.f32 %v819, %v191
    %v822 = vadd.f32 %v820, 1e-06
    %v823 = vadd.f32 %v821, 1e-06
    %v824 = vrsqrt.pop %v822
    %v825 = vmul.f32 %v824, %v822
    %v826 = vmul.f32 %v825, %v824
    %v827 = vmul.f32 0.5, %v826
    %v828 = vsub.f32 1.5, %v827
    %v829 = vmul.f32 %v824, %v828
    %vm830 = vweird.f32 %v822
    %vm831 = vweird.f32 %v824
    %vm832 = vmor %vm830, %vm831
    %v833 = vsel %vm832, %v824, %v829
    %v834 = vrsqrt.pop %v823
    %v835 = vmul.f32 %v834, %v823
    %v836 = vmul.f32 %v835, %v834
    %v837 = vmul.f32 0.5, %v836
    %v838 = vsub.f32 1.5, %v837
    %v839 = vmul.f32 %v834, %v838
    %vm840 = vweird.f32 %v823
    %vm841 = vweird.f32 %v834
    %vm842 = vmor %vm840, %vm841
    %v843 = vsel %vm842, %v834, %v839
    %v844 = vmul.f32 %v810, %v833
    %v845 = vmul.f32 %v811, %v843
    %v847 = vperm.slane %v800, 0
    %v849 = vmul.f32 %v844, %v847
    %v850 = vmul.f32 %v845, %v847
    %v852 = vperm.slane %v801, 0
    %v854 = vadd.f32 %v849, %v852
    %v855 = vadd.f32 %v850, %v852
    %v856 = vld [vmem:[%s19] sm:$0xff]
    %v857 = vld [vmem:[%s19 + $0x8] sm:$0xff]
    %v858 = vld [vmem:[%s19 + $0x10] sm:$0xff]
    %v859 = vld [vmem:[%s19 + $0x18] sm:$0xff]
    %v860 = vld [vmem:[%s21] sm:$0x1]
    %v861 = vld [vmem:[%s23] sm:$0xff]
    %v862 = vld [vmem:[%s23 + $0x8] sm:$0xff]
    %v863 = vld [vmem:[%s23 + $0x10] sm:$0xff]
    %v864 = vld [vmem:[%s23 + $0x18] sm:$0xff]
    %v865 = vld [vmem:[%s23 + $0x20] sm:$0xff]
    %v866 = vld [vmem:[%s23 + $0x28] sm:$0xff]
    %v867 = vld [vmem:[%s23 + $0x30] sm:$0xff]
    %v868 = vld [vmem:[%s23 + $0x38] sm:$0xff]
    %v869 = vld [vmem:[%s25] sm:$0x1]
    %v870 = vpack.c.bf16 %v855, %v854
    %v871 = vpack.c.bf16 %v857, %v856
    %v872 = vpack.c.bf16 %v859, %v858
    %v874 = vperm.slane %v860, 0
    %v877 = vsel %vm178, %v870, 0
    %879 = vmatpush.bf16.msra.mxu0 0
    %880 = vmatpush.bf16.msra.mxu0 0
    %881 = vmatpush.bf16.msra.mxu0 0
    %882 = vmatpush.bf16.msra.mxu0 0
    %883 = vmatpush.bf16.msra.mxu0 0
    %884 = vmatpush.bf16.msra.mxu0 0
    %885 = vmatpush.bf16.msra.mxu0 %v872
    %886 = vmatpush.bf16.msra.mxu0 %v871
    %887 = vmatmul.bf16.gmra.mxu0 %v877
    %v888 = vpop.f32.mrf.mxu0
    %v889 = vadd.f32 %v874, %v888
    %v890 = vpop.f32.mrf.mxu0
    %v891 = vadd.f32 %v874, %v890
    %892 = vdwg.mxu0
    %v893 = vmax.f32 %v889, 0.0
    %v894 = vmax.f32 %v891, 0.0
    %v895 = vpack.c.bf16 %v894, %v893
    %v896 = vpack.c.bf16 %v862, %v861
    %v897 = vpack.c.bf16 %v864, %v863
    %v898 = vpack.c.bf16 %v866, %v865
    %v899 = vpack.c.bf16 %v868, %v867
    %v901 = vperm.slane %v869, 0
    %vm903 = vcmask 523264
    %v905 = vsel %vm903, %v895, 0
    %907 = vmatpush.bf16.msra.mxu0 0
    %908 = vmatpush.bf16.msra.mxu0 0
    %909 = vmatpush.bf16.msra.mxu0 0
    %910 = vmatpush.bf16.msra.mxu0 0
    %911 = vmatpush.bf16.msra.mxu0 %v899
    %912 = vmatpush.bf16.msra.mxu0 %v898
    %913 = vmatpush.bf16.msra.mxu0 %v897
    %914 = vmatpush.bf16.msra.mxu0 %v896
    %915 = vmatmul.bf16.gmra.mxu0 %v905
    %v916 = vpop.f32.mrf.mxu0
    %v917 = vadd.f32 %v901, %v916
    %v918 = vpop.f32.mrf.mxu0
    %v919 = vadd.f32 %v901, %v918
    %920 = vdwg.mxu0
    %v921 = vadd.f32 %v798, %v917
    %v922 = vadd.f32 %v799, %v919
    %s923 = scalar_lea.vmem %s27, 1
    %v924 = vld [vmem:[%s923] sm:$0x1]
    %s925 = scalar_lea.vmem %s29, 1
    %v926 = vld [vmem:[%s925] sm:$0x1]
    %v927 = vsel %vm178, %v921, 0.0
    %928 = vadd.xlane.f32.xlu0 %v927
    %v929 = vpop.xlane.xlu0 %928
    %v930 = vsel %vm178, %v922, 0.0
    %931 = vadd.xlane.f32.xlu0 %v930
    %v932 = vpop.xlane.xlu0 %931
    %v933 = vmul.f32 %v929, %v191
    %v934 = vmul.f32 %v932, %v191
    %v935 = vsub.f32 %v921, %v933
    %v936 = vsub.f32 %v922, %v934
    %v937 = vmul.f32 %v935, %v935
    %v938 = vmul.f32 %v936, %v936
    %v939 = vsel %vm178, %v937, 0.0
    %940 = vadd.xlane.f32.xlu0 %v939
    %v941 = vpop.xlane.xlu0 %940
    %v942 = vsel %vm178, %v938, 0.0
    %943 = vadd.xlane.f32.xlu0 %v942
    %v944 = vpop.xlane.xlu0 %943
    %v945 = vmul.f32 %v941, %v191
    %v946 = vmul.f32 %v944, %v191
    %v947 = vadd.f32 %v945, 1e-06
    %v948 = vadd.f32 %v946, 1e-06
    %v949 = vrsqrt.pop %v947
    %v950 = vmul.f32 %v949, %v947
    %v951 = vmul.f32 %v950, %v949
    %v952 = vmul.f32 0.5, %v951
    %v953 = vsub.f32 1.5, %v952
    %v954 = vmul.f32 %v949, %v953
    %vm955 = vweird.f32 %v947
    %vm956 = vweird.f32 %v949
    %vm957 = vmor %vm955, %vm956
    %v958 = vsel %vm957, %v949, %v954
    %v959 = vrsqrt.pop %v948
    %v960 = vmul.f32 %v959, %v948
    %v961 = vmul.f32 %v960, %v959
    %v962 = vmul.f32 0.5, %v961
    %v963 = vsub.f32 1.5, %v962
    %v964 = vmul.f32 %v959, %v963
    %vm965 = vweird.f32 %v948
    %vm966 = vweird.f32 %v959
    %vm967 = vmor %vm965, %vm966
    %v968 = vsel %vm967, %v959, %v964
    %v969 = vmul.f32 %v935, %v958
    %v970 = vmul.f32 %v936, %v968
    %v972 = vperm.slane %v924, 0
    %v974 = vmul.f32 %v969, %v972
    %v975 = vmul.f32 %v970, %v972
    %v977 = vperm.slane %v926, 0
    %v979 = vadd.f32 %v974, %v977
    %v980 = vadd.f32 %v975, %v977
    %s981 = scalar_lea.vmem %s11, 32
    %v982 = vld [vmem:[%s981] sm:$0xff]
    %v983 = vld [vmem:[%s981 + $0x8] sm:$0xff]
    %v984 = vld [vmem:[%s981 + $0x10] sm:$0xff]
    %v985 = vld [vmem:[%s981 + $0x18] sm:$0xff]
    %s986 = scalar_lea.vmem %s13, 1
    %v987 = vld [vmem:[%s986] sm:$0x1]
    %s988 = scalar_lea.vmem %s15, 32
    %v989 = vld [vmem:[%s988] sm:$0xff]
    %v990 = vld [vmem:[%s988 + $0x8] sm:$0xff]
    %v991 = vld [vmem:[%s988 + $0x10] sm:$0xff]
    %v992 = vld [vmem:[%s988 + $0x18] sm:$0xff]
    %s993 = scalar_lea.vmem %s17, 1
    %v994 = vld [vmem:[%s993] sm:$0x1]
    %v995 = vpack.c.bf16 %v980, %v979
    %v996 = vpack.c.bf16 %v983, %v982
    %v997 = vpack.c.bf16 %v985, %v984
    %v999 = vperm.slane %v987, 0
    %v1002 = vsel %vm178, %v995, 0
    %1004 = vmatpush.bf16.msra.mxu0 0
    %1005 = vmatpush.bf16.msra.mxu0 0
    %1006 = vmatpush.bf16.msra.mxu0 0
    %1007 = vmatpush.bf16.msra.mxu0 0
    %1008 = vmatpush.bf16.msra.mxu0 0
    %1009 = vmatpush.bf16.msra.mxu0 0
    %1010 = vmatpush.bf16.msra.mxu0 %v997
    %1011 = vmatpush.bf16.msra.mxu0 %v996
    %1012 = vmatmul.bf16.gmra.mxu0 %v1002
    %v1013 = vpop.f32.mrf.mxu0
    %v1014 = vadd.f32 %v999, %v1013
    %v1015 = vpop.f32.mrf.mxu0
    %v1016 = vadd.f32 %v999, %v1015
    %1017 = vdwg.mxu0
    %v1018 = vpack.c.bf16 %v1014, %v1014
    %v1019 = vpack.c.bf16 %v1016, %v1016
    %v1021 = vunpack.c.l.b16 %v1018
    %v1022 = vpack.c.b16 %v1021, %v1021
    %1023 = vrot.lane.b32.xlu0 %v1022, 96
    %v1024 = vpop.permute.xlu0 %1023
    %v1026 = vsel %vm280, %v1018, 0
    %v1029 = vsel %vm280, %v1024, 0
    %1031 = vmatpush.bf16.xpose.msra.mxu0 0
    %1032 = vmatpush.bf16.xpose.msra.mxu0 0
    %1033 = vmatpush.bf16.xpose.msra.mxu0 0
    %1034 = vmatpush.bf16.xpose.msra.mxu0 0
    %1035 = vmatpush.bf16.xpose.msra.mxu0 0
    %1036 = vmatpush.bf16.xpose.msra.mxu0 0
    %1037 = vmatpush.bf16.xpose.msra.mxu0 0
    %1038 = vmatpush.bf16.xpose.msra.mxu0 %v1029
    %1039 = vmatmul.bf16.gmra.mxu0 %v1026
    %v1040 = vpop.f32.mrf.mxu0
    %v1041 = vadd.f32 0.0, %v1040
    %v1042 = vpop.f32.mrf.mxu0
    %1043 = vdwg.mxu0
    %v1045 = vunpack.c.l.b16 %v1019
    %v1046 = vpack.c.b16 %v1045, %v1045
    %1047 = vrot.lane.b32.xlu0 %v1046, 96
    %v1048 = vpop.permute.xlu0 %1047
    %v1050 = vsel %vm280, %v1019, 0
    %v1053 = vsel %vm280, %v1048, 0
    %1055 = vmatpush.bf16.xpose.msra.mxu0 0
    %1056 = vmatpush.bf16.xpose.msra.mxu0 0
    %1057 = vmatpush.bf16.xpose.msra.mxu0 0
    %1058 = vmatpush.bf16.xpose.msra.mxu0 0
    %1059 = vmatpush.bf16.xpose.msra.mxu0 0
    %1060 = vmatpush.bf16.xpose.msra.mxu0 0
    %1061 = vmatpush.bf16.xpose.msra.mxu0 0
    %1062 = vmatpush.bf16.xpose.msra.mxu0 %v1053
    %1063 = vmatmul.bf16.gmra.mxu0 %v1050
    %v1064 = vpop.f32.mrf.mxu0
    %v1065 = vadd.f32 0.0, %v1064
    %v1066 = vpop.f32.mrf.mxu0
    %1067 = vdwg.mxu0
    %v1068 = vmul.f32 %v1041, 0.35355338
    %v1069 = vmul.f32 %v1065, 0.35355338
    %v1070 = vadd.f32 %v1068, %v174
    %v1071 = vadd.f32 %v1069, %v175
    %v1072 = vsel %vm280, %v1070, -inf
    %1073 = vmax.xlane.f32.xlu0 %v1072
    %v1074 = vpop.xlane.xlu0 %1073
    %v1075 = vsel %vm280, %v1071, -inf
    %1076 = vmax.xlane.f32.xlu0 %v1075
    %v1077 = vpop.xlane.xlu0 %1076
    %v1078 = vsub.f32 %v1070, %v1074
    %v1079 = vsub.f32 %v1071, %v1077
    %v1080 = vmul.f32 %v1078, 1.442695
    %v1081 = vpow.pop %v1080
    %v1082 = vmul.f32 %v1079, 1.442695
    %v1083 = vpow.pop %v1082
    %v1084 = vsel %vm280, %v1081, 0.0
    %1085 = vadd.xlane.f32.xlu0 %v1084
    %v1086 = vpop.xlane.xlu0 %1085
    %v1087 = vsel %vm280, %v1083, 0.0
    %1088 = vadd.xlane.f32.xlu0 %v1087
    %v1089 = vpop.xlane.xlu0 %1088
    %v1090 = vrcp.pop %v1086
    %v1091 = vrcp.pop %v1089
    %v1092 = vmul.f32 %v1081, %v1090
    %v1093 = vmul.f32 %v1083, %v1091
    %v1094 = vpack.c.bf16 %v1092, %v1092
    %v1095 = vpack.c.bf16 %v1093, %v1093
    %1096 = vrot.lane.b32.xlu0 %v1022, 64
    %v1097 = vpop.permute.xlu0 %1096
    %v1099 = vsel %vm280, %v1094, 0
    %v1102 = vsel %vm357, %v1097, 0
    %1104 = vmatpush.bf16.msra.mxu0 0
    %1105 = vmatpush.bf16.msra.mxu0 0
    %1106 = vmatpush.bf16.msra.mxu0 0
    %1107 = vmatpush.bf16.msra.mxu0 0
    %1108 = vmatpush.bf16.msra.mxu0 0
    %1109 = vmatpush.bf16.msra.mxu0 0
    %1110 = vmatpush.bf16.msra.mxu0 0
    %1111 = vmatpush.bf16.msra.mxu0 %v1102
    %1112 = vmatmul.bf16.gmra.mxu0 %v1099
    %v1113 = vpop.f32.mrf.mxu0
    %v1114 = vadd.f32 0.0, %v1113
    %v1115 = vpop.f32.mrf.mxu0
    %1116 = vdwg.mxu0
    %1117 = vrot.lane.b32.xlu0 %v1046, 64
    %v1118 = vpop.permute.xlu0 %1117
    %v1120 = vsel %vm280, %v1095, 0
    %v1123 = vsel %vm357, %v1118, 0
    %1125 = vmatpush.bf16.msra.mxu0 0
    %1126 = vmatpush.bf16.msra.mxu0 0
    %1127 = vmatpush.bf16.msra.mxu0 0
    %1128 = vmatpush.bf16.msra.mxu0 0
    %1129 = vmatpush.bf16.msra.mxu0 0
    %1130 = vmatpush.bf16.msra.mxu0 0
    %1131 = vmatpush.bf16.msra.mxu0 0
    %1132 = vmatpush.bf16.msra.mxu0 %v1123
    %1133 = vmatmul.bf16.gmra.mxu0 %v1120
    %v1134 = vpop.f32.mrf.mxu0
    %v1135 = vadd.f32 0.0, %v1134
    %v1136 = vpop.f32.mrf.mxu0
    %1137 = vdwg.mxu0
    %1138 = vrot.lane.b32.xlu0 %v1022, 120
    %v1139 = vpop.permute.xlu0 %1138
    %1140 = vrot.lane.b32.xlu0 %v1022, 88
    %v1141 = vpop.permute.xlu0 %1140
    %v1143 = vsel %vm280, %v1139, 0
    %v1146 = vsel %vm280, %v1141, 0
    %1148 = vmatpush.bf16.xpose.msra.mxu0 0
    %1149 = vmatpush.bf16.xpose.msra.mxu0 0
    %1150 = vmatpush.bf16.xpose.msra.mxu0 0
    %1151 = vmatpush.bf16.xpose.msra.mxu0 0
    %1152 = vmatpush.bf16.xpose.msra.mxu0 0
    %1153 = vmatpush.bf16.xpose.msra.mxu0 0
    %1154 = vmatpush.bf16.xpose.msra.mxu0 0
    %1155 = vmatpush.bf16.xpose.msra.mxu0 %v1146
    %1156 = vmatmul.bf16.gmra.mxu0 %v1143
    %v1157 = vpop.f32.mrf.mxu0
    %v1158 = vadd.f32 0.0, %v1157
    %v1159 = vpop.f32.mrf.mxu0
    %1160 = vdwg.mxu0
    %1161 = vrot.lane.b32.xlu0 %v1046, 120
    %v1162 = vpop.permute.xlu0 %1161
    %1163 = vrot.lane.b32.xlu0 %v1046, 88
    %v1164 = vpop.permute.xlu0 %1163
    %v1166 = vsel %vm280, %v1162, 0
    %v1169 = vsel %vm280, %v1164, 0
    %1171 = vmatpush.bf16.xpose.msra.mxu0 0
    %1172 = vmatpush.bf16.xpose.msra.mxu0 0
    %1173 = vmatpush.bf16.xpose.msra.mxu0 0
    %1174 = vmatpush.bf16.xpose.msra.mxu0 0
    %1175 = vmatpush.bf16.xpose.msra.mxu0 0
    %1176 = vmatpush.bf16.xpose.msra.mxu0 0
    %1177 = vmatpush.bf16.xpose.msra.mxu0 0
    %1178 = vmatpush.bf16.xpose.msra.mxu0 %v1169
    %1179 = vmatmul.bf16.gmra.mxu0 %v1166
    %v1180 = vpop.f32.mrf.mxu0
    %v1181 = vadd.f32 0.0, %v1180
    %v1182 = vpop.f32.mrf.mxu0
    %1183 = vdwg.mxu0
    %v1184 = vmul.f32 %v1158, 0.35355338
    %v1185 = vmul.f32 %v1181, 0.35355338
    %v1186 = vadd.f32 %v1184, %v174
    %v1187 = vadd.f32 %v1185, %v175
    %v1188 = vsel %vm280, %v1186, -inf
    %1189 = vmax.xlane.f32.xlu0 %v1188
    %v1190 = vpop.xlane.xlu0 %1189
    %v1191 = vsel %vm280, %v1187, -inf
    %1192 = vmax.xlane.f32.xlu0 %v1191
    %v1193 = vpop.xlane.xlu0 %1192
    %v1194 = vsub.f32 %v1186, %v1190
    %v1195 = vsub.f32 %v1187, %v1193
    %v1196 = vmul.f32 %v1194, 1.442695
    %v1197 = vpow.pop %v1196
    %v1198 = vmul.f32 %v1195, 1.442695
    %v1199 = vpow.pop %v1198
    %v1200 = vsel %vm280, %v1197, 0.0
    %1201 = vadd.xlane.f32.xlu0 %v1200
    %v1202 = vpop.xlane.xlu0 %1201
    %v1203 = vsel %vm280, %v1199, 0.0
    %1204 = vadd.xlane.f32.xlu0 %v1203
    %v1205 = vpop.xlane.xlu0 %1204
    %v1206 = vrcp.pop %v1202
    %v1207 = vrcp.pop %v1205
    %v1208 = vmul.f32 %v1197, %v1206
    %v1209 = vmul.f32 %v1199, %v1207
    %v1210 = vpack.c.bf16 %v1208, %v1208
    %v1211 = vpack.c.bf16 %v1209, %v1209
    %1212 = vrot.lane.b32.xlu0 %v1022, 56
    %v1213 = vpop.permute.xlu0 %1212
    %v1215 = vsel %vm280, %v1210, 0
    %v1218 = vsel %vm357, %v1213, 0
    %1220 = vmatpush.bf16.msra.mxu0 0
    %1221 = vmatpush.bf16.msra.mxu0 0
    %1222 = vmatpush.bf16.msra.mxu0 0
    %1223 = vmatpush.bf16.msra.mxu0 0
    %1224 = vmatpush.bf16.msra.mxu0 0
    %1225 = vmatpush.bf16.msra.mxu0 0
    %1226 = vmatpush.bf16.msra.mxu0 0
    %1227 = vmatpush.bf16.msra.mxu0 %v1218
    %1228 = vmatmul.bf16.gmra.mxu0 %v1215
    %v1229 = vpop.f32.mrf.mxu0
    %v1230 = vadd.f32 0.0, %v1229
    %v1231 = vpop.f32.mrf.mxu0
    %1232 = vdwg.mxu0
    %1233 = vrot.lane.b32.xlu0 %v1046, 56
    %v1234 = vpop.permute.xlu0 %1233
    %v1236 = vsel %vm280, %v1211, 0
    %v1239 = vsel %vm357, %v1234, 0
    %1241 = vmatpush.bf16.msra.mxu0 0
    %1242 = vmatpush.bf16.msra.mxu0 0
    %1243 = vmatpush.bf16.msra.mxu0 0
    %1244 = vmatpush.bf16.msra.mxu0 0
    %1245 = vmatpush.bf16.msra.mxu0 0
    %1246 = vmatpush.bf16.msra.mxu0 0
    %1247 = vmatpush.bf16.msra.mxu0 0
    %1248 = vmatpush.bf16.msra.mxu0 %v1239
    %1249 = vmatmul.bf16.gmra.mxu0 %v1236
    %v1250 = vpop.f32.mrf.mxu0
    %v1251 = vadd.f32 0.0, %v1250
    %v1252 = vpop.f32.mrf.mxu0
    %1253 = vdwg.mxu0
    %1254 = vrot.lane.b32.xlu0 %v1022, 112
    %v1255 = vpop.permute.xlu0 %1254
    %1256 = vrot.lane.b32.xlu0 %v1022, 80
    %v1257 = vpop.permute.xlu0 %1256
    %v1259 = vsel %vm280, %v1255, 0
    %v1262 = vsel %vm280, %v1257, 0
    %1264 = vmatpush.bf16.xpose.msra.mxu0 0
    %1265 = vmatpush.bf16.xpose.msra.mxu0 0
    %1266 = vmatpush.bf16.xpose.msra.mxu0 0
    %1267 = vmatpush.bf16.xpose.msra.mxu0 0
    %1268 = vmatpush.bf16.xpose.msra.mxu0 0
    %1269 = vmatpush.bf16.xpose.msra.mxu0 0
    %1270 = vmatpush.bf16.xpose.msra.mxu0 0
    %1271 = vmatpush.bf16.xpose.msra.mxu0 %v1262
    %1272 = vmatmul.bf16.gmra.mxu0 %v1259
    %v1273 = vpop.f32.mrf.mxu0
    %v1274 = vadd.f32 0.0, %v1273
    %v1275 = vpop.f32.mrf.mxu0
    %1276 = vdwg.mxu0
    %1277 = vrot.lane.b32.xlu0 %v1046, 112
    %v1278 = vpop.permute.xlu0 %1277
    %1279 = vrot.lane.b32.xlu0 %v1046, 80
    %v1280 = vpop.permute.xlu0 %1279
    %v1282 = vsel %vm280, %v1278, 0
    %v1285 = vsel %vm280, %v1280, 0
    %1287 = vmatpush.bf16.xpose.msra.mxu0 0
    %1288 = vmatpush.bf16.xpose.msra.mxu0 0
    %1289 = vmatpush.bf16.xpose.msra.mxu0 0
    %1290 = vmatpush.bf16.xpose.msra.mxu0 0
    %1291 = vmatpush.bf16.xpose.msra.mxu0 0
    %1292 = vmatpush.bf16.xpose.msra.mxu0 0
    %1293 = vmatpush.bf16.xpose.msra.mxu0 0
    %1294 = vmatpush.bf16.xpose.msra.mxu0 %v1285
    %1295 = vmatmul.bf16.gmra.mxu0 %v1282
    %v1296 = vpop.f32.mrf.mxu0
    %v1297 = vadd.f32 0.0, %v1296
    %v1298 = vpop.f32.mrf.mxu0
    %1299 = vdwg.mxu0
    %v1300 = vmul.f32 %v1274, 0.35355338
    %v1301 = vmul.f32 %v1297, 0.35355338
    %v1302 = vadd.f32 %v1300, %v174
    %v1303 = vadd.f32 %v1301, %v175
    %v1304 = vsel %vm280, %v1302, -inf
    %1305 = vmax.xlane.f32.xlu0 %v1304
    %v1306 = vpop.xlane.xlu0 %1305
    %v1307 = vsel %vm280, %v1303, -inf
    %1308 = vmax.xlane.f32.xlu0 %v1307
    %v1309 = vpop.xlane.xlu0 %1308
    %v1310 = vsub.f32 %v1302, %v1306
    %v1311 = vsub.f32 %v1303, %v1309
    %v1312 = vmul.f32 %v1310, 1.442695
    %v1313 = vpow.pop %v1312
    %v1314 = vmul.f32 %v1311, 1.442695
    %v1315 = vpow.pop %v1314
    %v1316 = vsel %vm280, %v1313, 0.0
    %1317 = vadd.xlane.f32.xlu0 %v1316
    %v1318 = vpop.xlane.xlu0 %1317
    %v1319 = vsel %vm280, %v1315, 0.0
    %1320 = vadd.xlane.f32.xlu0 %v1319
    %v1321 = vpop.xlane.xlu0 %1320
    %v1322 = vrcp.pop %v1318
    %v1323 = vrcp.pop %v1321
    %v1324 = vmul.f32 %v1313, %v1322
    %v1325 = vmul.f32 %v1315, %v1323
    %v1326 = vpack.c.bf16 %v1324, %v1324
    %v1327 = vpack.c.bf16 %v1325, %v1325
    %1328 = vrot.lane.b32.xlu0 %v1022, 48
    %v1329 = vpop.permute.xlu0 %1328
    %v1331 = vsel %vm280, %v1326, 0
    %v1334 = vsel %vm357, %v1329, 0
    %1336 = vmatpush.bf16.msra.mxu0 0
    %1337 = vmatpush.bf16.msra.mxu0 0
    %1338 = vmatpush.bf16.msra.mxu0 0
    %1339 = vmatpush.bf16.msra.mxu0 0
    %1340 = vmatpush.bf16.msra.mxu0 0
    %1341 = vmatpush.bf16.msra.mxu0 0
    %1342 = vmatpush.bf16.msra.mxu0 0
    %1343 = vmatpush.bf16.msra.mxu0 %v1334
    %1344 = vmatmul.bf16.gmra.mxu0 %v1331
    %v1345 = vpop.f32.mrf.mxu0
    %v1346 = vadd.f32 0.0, %v1345
    %v1347 = vpop.f32.mrf.mxu0
    %1348 = vdwg.mxu0
    %1349 = vrot.lane.b32.xlu0 %v1046, 48
    %v1350 = vpop.permute.xlu0 %1349
    %v1352 = vsel %vm280, %v1327, 0
    %v1355 = vsel %vm357, %v1350, 0
    %1357 = vmatpush.bf16.msra.mxu0 0
    %1358 = vmatpush.bf16.msra.mxu0 0
    %1359 = vmatpush.bf16.msra.mxu0 0
    %1360 = vmatpush.bf16.msra.mxu0 0
    %1361 = vmatpush.bf16.msra.mxu0 0
    %1362 = vmatpush.bf16.msra.mxu0 0
    %1363 = vmatpush.bf16.msra.mxu0 0
    %1364 = vmatpush.bf16.msra.mxu0 %v1355
    %1365 = vmatmul.bf16.gmra.mxu0 %v1352
    %v1366 = vpop.f32.mrf.mxu0
    %v1367 = vadd.f32 0.0, %v1366
    %v1368 = vpop.f32.mrf.mxu0
    %1369 = vdwg.mxu0
    %1370 = vrot.lane.b32.xlu0 %v1022, 104
    %v1371 = vpop.permute.xlu0 %1370
    %1372 = vrot.lane.b32.xlu0 %v1022, 72
    %v1373 = vpop.permute.xlu0 %1372
    %v1375 = vsel %vm280, %v1371, 0
    %v1378 = vsel %vm280, %v1373, 0
    %1380 = vmatpush.bf16.xpose.msra.mxu0 0
    %1381 = vmatpush.bf16.xpose.msra.mxu0 0
    %1382 = vmatpush.bf16.xpose.msra.mxu0 0
    %1383 = vmatpush.bf16.xpose.msra.mxu0 0
    %1384 = vmatpush.bf16.xpose.msra.mxu0 0
    %1385 = vmatpush.bf16.xpose.msra.mxu0 0
    %1386 = vmatpush.bf16.xpose.msra.mxu0 0
    %1387 = vmatpush.bf16.xpose.msra.mxu0 %v1378
    %1388 = vmatmul.bf16.gmra.mxu0 %v1375
    %v1389 = vpop.f32.mrf.mxu0
    %v1390 = vadd.f32 0.0, %v1389
    %v1391 = vpop.f32.mrf.mxu0
    %1392 = vdwg.mxu0
    %1393 = vrot.lane.b32.xlu0 %v1046, 104
    %v1394 = vpop.permute.xlu0 %1393
    %1395 = vrot.lane.b32.xlu0 %v1046, 72
    %v1396 = vpop.permute.xlu0 %1395
    %v1398 = vsel %vm280, %v1394, 0
    %v1401 = vsel %vm280, %v1396, 0
    %1403 = vmatpush.bf16.xpose.msra.mxu0 0
    %1404 = vmatpush.bf16.xpose.msra.mxu0 0
    %1405 = vmatpush.bf16.xpose.msra.mxu0 0
    %1406 = vmatpush.bf16.xpose.msra.mxu0 0
    %1407 = vmatpush.bf16.xpose.msra.mxu0 0
    %1408 = vmatpush.bf16.xpose.msra.mxu0 0
    %1409 = vmatpush.bf16.xpose.msra.mxu0 0
    %1410 = vmatpush.bf16.xpose.msra.mxu0 %v1401
    %1411 = vmatmul.bf16.gmra.mxu0 %v1398
    %v1412 = vpop.f32.mrf.mxu0
    %v1413 = vadd.f32 0.0, %v1412
    %v1414 = vpop.f32.mrf.mxu0
    %1415 = vdwg.mxu0
    %v1416 = vmul.f32 %v1390, 0.35355338
    %v1417 = vmul.f32 %v1413, 0.35355338
    %v1418 = vadd.f32 %v1416, %v174
    %v1419 = vadd.f32 %v1417, %v175
    %v1420 = vsel %vm280, %v1418, -inf
    %1421 = vmax.xlane.f32.xlu0 %v1420
    %v1422 = vpop.xlane.xlu0 %1421
    %v1423 = vsel %vm280, %v1419, -inf
    %1424 = vmax.xlane.f32.xlu0 %v1423
    %v1425 = vpop.xlane.xlu0 %1424
    %v1426 = vsub.f32 %v1418, %v1422
    %v1427 = vsub.f32 %v1419, %v1425
    %v1428 = vmul.f32 %v1426, 1.442695
    %v1429 = vpow.pop %v1428
    %v1430 = vmul.f32 %v1427, 1.442695
    %v1431 = vpow.pop %v1430
    %v1432 = vsel %vm280, %v1429, 0.0
    %1433 = vadd.xlane.f32.xlu0 %v1432
    %v1434 = vpop.xlane.xlu0 %1433
    %v1435 = vsel %vm280, %v1431, 0.0
    %1436 = vadd.xlane.f32.xlu0 %v1435
    %v1437 = vpop.xlane.xlu0 %1436
    %v1438 = vrcp.pop %v1434
    %v1439 = vrcp.pop %v1437
    %v1440 = vmul.f32 %v1429, %v1438
    %v1441 = vmul.f32 %v1431, %v1439
    %v1442 = vpack.c.bf16 %v1440, %v1440
    %v1443 = vpack.c.bf16 %v1441, %v1441
    %1444 = vrot.lane.b32.xlu0 %v1022, 40
    %v1445 = vpop.permute.xlu0 %1444
    %v1447 = vsel %vm280, %v1442, 0
    %v1450 = vsel %vm357, %v1445, 0
    %1452 = vmatpush.bf16.msra.mxu0 0
    %1453 = vmatpush.bf16.msra.mxu0 0
    %1454 = vmatpush.bf16.msra.mxu0 0
    %1455 = vmatpush.bf16.msra.mxu0 0
    %1456 = vmatpush.bf16.msra.mxu0 0
    %1457 = vmatpush.bf16.msra.mxu0 0
    %1458 = vmatpush.bf16.msra.mxu0 0
    %1459 = vmatpush.bf16.msra.mxu0 %v1450
    %1460 = vmatmul.bf16.gmra.mxu0 %v1447
    %v1461 = vpop.f32.mrf.mxu0
    %v1462 = vadd.f32 0.0, %v1461
    %v1463 = vpop.f32.mrf.mxu0
    %1464 = vdwg.mxu0
    %1465 = vrot.lane.b32.xlu0 %v1046, 40
    %v1466 = vpop.permute.xlu0 %1465
    %v1468 = vsel %vm280, %v1443, 0
    %v1471 = vsel %vm357, %v1466, 0
    %1473 = vmatpush.bf16.msra.mxu0 0
    %1474 = vmatpush.bf16.msra.mxu0 0
    %1475 = vmatpush.bf16.msra.mxu0 0
    %1476 = vmatpush.bf16.msra.mxu0 0
    %1477 = vmatpush.bf16.msra.mxu0 0
    %1478 = vmatpush.bf16.msra.mxu0 0
    %1479 = vmatpush.bf16.msra.mxu0 0
    %1480 = vmatpush.bf16.msra.mxu0 %v1471
    %1481 = vmatmul.bf16.gmra.mxu0 %v1468
    %v1482 = vpop.f32.mrf.mxu0
    %v1483 = vadd.f32 0.0, %v1482
    %v1484 = vpop.f32.mrf.mxu0
    %1485 = vdwg.mxu0
    %1488 = vrot.lane.b32.xlu0 %v1230, 8
    %v1489 = vpop.permute.xlu0 %1488
    %1490 = vrot.lane.b32.xlu0 %v1251, 8
    %v1491 = vpop.permute.xlu0 %1490
    %1496 = vrot.lane.b32.xlu0 %v1346, 16
    %v1497 = vpop.permute.xlu0 %1496
    %1498 = vrot.lane.b32.xlu0 %v1367, 16
    %v1499 = vpop.permute.xlu0 %1498
    %1504 = vrot.lane.b32.xlu0 %v1462, 24
    %v1505 = vpop.permute.xlu0 %1504
    %1506 = vrot.lane.b32.xlu0 %v1483, 24
    %v1507 = vpop.permute.xlu0 %1506
    %v1510 = vsel %vm280, %v1114, %v1489
    %v1511 = vsel %vm280, %v1135, %v1491
    %v1512 = vsel %vm769, %v1510, %v1497
    %v1513 = vsel %vm769, %v1511, %v1499
    %v1514 = vsel %vm772, %v1512, %v1505
    %v1515 = vsel %vm772, %v1513, %v1507
    %v1516 = vpack.c.bf16 %v1515, %v1514
    %v1517 = vpack.c.bf16 %v990, %v989
    %v1518 = vpack.c.bf16 %v992, %v991
    %v1520 = vperm.slane %v994, 0
    %v1523 = vsel %vm178, %v1516, 0
    %1525 = vmatpush.bf16.msra.mxu0 0
    %1526 = vmatpush.bf16.msra.mxu0 0
    %1527 = vmatpush.bf16.msra.mxu0 0
    %1528 = vmatpush.bf16.msra.mxu0 0
    %1529 = vmatpush.bf16.msra.mxu0 0
    %1530 = vmatpush.bf16.msra.mxu0 0
    %1531 = vmatpush.bf16.msra.mxu0 %v1518
    %1532 = vmatpush.bf16.msra.mxu0 %v1517
    %1533 = vmatmul.bf16.gmra.mxu0 %v1523
    %v1534 = vpop.f32.mrf.mxu0
    %v1535 = vadd.f32 %v1520, %v1534
    %v1536 = vpop.f32.mrf.mxu0
    %v1537 = vadd.f32 %v1520, %v1536
    %1538 = vdwg.mxu0
    %v1539 = vadd.f32 %v921, %v1535
    %v1540 = vadd.f32 %v922, %v1537
    %s1541 = scalar_lea.vmem %s31, 1
    %v1542 = vld [vmem:[%s1541] sm:$0x1]
    %s1543 = scalar_lea.vmem %s33, 1
    %v1544 = vld [vmem:[%s1543] sm:$0x1]
    %v1545 = vsel %vm178, %v1539, 0.0
    %1546 = vadd.xlane.f32.xlu0 %v1545
    %v1547 = vpop.xlane.xlu0 %1546
    %v1548 = vsel %vm178, %v1540, 0.0
    %1549 = vadd.xlane.f32.xlu0 %v1548
    %v1550 = vpop.xlane.xlu0 %1549
    %v1551 = vmul.f32 %v1547, %v191
    %v1552 = vmul.f32 %v1550, %v191
    %v1553 = vsub.f32 %v1539, %v1551
    %v1554 = vsub.f32 %v1540, %v1552
    %v1555 = vmul.f32 %v1553, %v1553
    %v1556 = vmul.f32 %v1554, %v1554
    %v1557 = vsel %vm178, %v1555, 0.0
    %1558 = vadd.xlane.f32.xlu0 %v1557
    %v1559 = vpop.xlane.xlu0 %1558
    %v1560 = vsel %vm178, %v1556, 0.0
    %1561 = vadd.xlane.f32.xlu0 %v1560
    %v1562 = vpop.xlane.xlu0 %1561
    %v1563 = vmul.f32 %v1559, %v191
    %v1564 = vmul.f32 %v1562, %v191
    %v1565 = vadd.f32 %v1563, 1e-06
    %v1566 = vadd.f32 %v1564, 1e-06
    %v1567 = vrsqrt.pop %v1565
    %v1568 = vmul.f32 %v1567, %v1565
    %v1569 = vmul.f32 %v1568, %v1567
    %v1570 = vmul.f32 0.5, %v1569
    %v1571 = vsub.f32 1.5, %v1570
    %v1572 = vmul.f32 %v1567, %v1571
    %vm1573 = vweird.f32 %v1565
    %vm1574 = vweird.f32 %v1567
    %vm1575 = vmor %vm1573, %vm1574
    %v1576 = vsel %vm1575, %v1567, %v1572
    %v1577 = vrsqrt.pop %v1566
    %v1578 = vmul.f32 %v1577, %v1566
    %v1579 = vmul.f32 %v1578, %v1577
    %v1580 = vmul.f32 0.5, %v1579
    %v1581 = vsub.f32 1.5, %v1580
    %v1582 = vmul.f32 %v1577, %v1581
    %vm1583 = vweird.f32 %v1566
    %vm1584 = vweird.f32 %v1577
    %vm1585 = vmor %vm1583, %vm1584
    %v1586 = vsel %vm1585, %v1577, %v1582
    %v1587 = vmul.f32 %v1553, %v1576
    %v1588 = vmul.f32 %v1554, %v1586
    %v1590 = vperm.slane %v1542, 0
    %v1592 = vmul.f32 %v1587, %v1590
    %v1593 = vmul.f32 %v1588, %v1590
    %v1595 = vperm.slane %v1544, 0
    %v1597 = vadd.f32 %v1592, %v1595
    %v1598 = vadd.f32 %v1593, %v1595
    %s1599 = scalar_lea.vmem %s19, 32
    %v1600 = vld [vmem:[%s1599] sm:$0xff]
    %v1601 = vld [vmem:[%s1599 + $0x8] sm:$0xff]
    %v1602 = vld [vmem:[%s1599 + $0x10] sm:$0xff]
    %v1603 = vld [vmem:[%s1599 + $0x18] sm:$0xff]
    %s1604 = scalar_lea.vmem %s21, 1
    %v1605 = vld [vmem:[%s1604] sm:$0x1]
    %s1606 = scalar_lea.vmem %s23, 64
    %v1607 = vld [vmem:[%s1606] sm:$0xff]
    %v1608 = vld [vmem:[%s1606 + $0x8] sm:$0xff]
    %v1609 = vld [vmem:[%s1606 + $0x10] sm:$0xff]
    %v1610 = vld [vmem:[%s1606 + $0x18] sm:$0xff]
    %v1611 = vld [vmem:[%s1606 + $0x20] sm:$0xff]
    %v1612 = vld [vmem:[%s1606 + $0x28] sm:$0xff]
    %v1613 = vld [vmem:[%s1606 + $0x30] sm:$0xff]
    %v1614 = vld [vmem:[%s1606 + $0x38] sm:$0xff]
    %s1615 = scalar_lea.vmem %s25, 1
    %v1616 = vld [vmem:[%s1615] sm:$0x1]
    %v1617 = vpack.c.bf16 %v1598, %v1597
    %v1618 = vpack.c.bf16 %v1601, %v1600
    %v1619 = vpack.c.bf16 %v1603, %v1602
    %v1621 = vperm.slane %v1605, 0
    %v1624 = vsel %vm178, %v1617, 0
    %1626 = vmatpush.bf16.msra.mxu0 0
    %1627 = vmatpush.bf16.msra.mxu0 0
    %1628 = vmatpush.bf16.msra.mxu0 0
    %1629 = vmatpush.bf16.msra.mxu0 0
    %1630 = vmatpush.bf16.msra.mxu0 0
    %1631 = vmatpush.bf16.msra.mxu0 0
    %1632 = vmatpush.bf16.msra.mxu0 %v1619
    %1633 = vmatpush.bf16.msra.mxu0 %v1618
    %1634 = vmatmul.bf16.gmra.mxu0 %v1624
    %v1635 = vpop.f32.mrf.mxu0
    %v1636 = vadd.f32 %v1621, %v1635
    %v1637 = vpop.f32.mrf.mxu0
    %v1638 = vadd.f32 %v1621, %v1637
    %1639 = vdwg.mxu0
    %v1640 = vmax.f32 %v1636, 0.0
    %v1641 = vmax.f32 %v1638, 0.0
    %v1642 = vpack.c.bf16 %v1641, %v1640
    %v1643 = vpack.c.bf16 %v1608, %v1607
    %v1644 = vpack.c.bf16 %v1610, %v1609
    %v1645 = vpack.c.bf16 %v1612, %v1611
    %v1646 = vpack.c.bf16 %v1614, %v1613
    %v1648 = vperm.slane %v1616, 0
    %v1651 = vsel %vm903, %v1642, 0
    %1653 = vmatpush.bf16.msra.mxu0 0
    %1654 = vmatpush.bf16.msra.mxu0 0
    %1655 = vmatpush.bf16.msra.mxu0 0
    %1656 = vmatpush.bf16.msra.mxu0 0
    %1657 = vmatpush.bf16.msra.mxu0 %v1646
    %1658 = vmatpush.bf16.msra.mxu0 %v1645
    %1659 = vmatpush.bf16.msra.mxu0 %v1644
    %1660 = vmatpush.bf16.msra.mxu0 %v1643
    %1661 = vmatmul.bf16.gmra.mxu0 %v1651
    %v1662 = vpop.f32.mrf.mxu0
    %v1663 = vadd.f32 %v1648, %v1662
    %v1664 = vpop.f32.mrf.mxu0
    %v1665 = vadd.f32 %v1648, %v1664
    %1666 = vdwg.mxu0
    %v1667 = vadd.f32 %v1539, %v1663
    %v1668 = vadd.f32 %v1540, %v1665
    %v1669 = vld [vmem:[%s35] sm:$0x1]
    %v1670 = vld [vmem:[%s37] sm:$0x1]
    %v1671 = vsel %vm178, %v1667, 0.0
    %1672 = vadd.xlane.f32.xlu0 %v1671
    %v1673 = vpop.xlane.xlu0 %1672
    %v1674 = vsel %vm178, %v1668, 0.0
    %1675 = vadd.xlane.f32.xlu0 %v1674
    %v1676 = vpop.xlane.xlu0 %1675
    %v1677 = vmul.f32 %v1673, %v191
    %v1678 = vmul.f32 %v1676, %v191
    %v1679 = vsub.f32 %v1667, %v1677
    %v1680 = vsub.f32 %v1668, %v1678
    %v1681 = vmul.f32 %v1679, %v1679
    %v1682 = vmul.f32 %v1680, %v1680
    %v1683 = vsel %vm178, %v1681, 0.0
    %1684 = vadd.xlane.f32.xlu0 %v1683
    %v1685 = vpop.xlane.xlu0 %1684
    %v1686 = vsel %vm178, %v1682, 0.0
    %1687 = vadd.xlane.f32.xlu0 %v1686
    %v1688 = vpop.xlane.xlu0 %1687
    %v1689 = vmul.f32 %v1685, %v191
    %v1690 = vmul.f32 %v1688, %v191
    %v1691 = vadd.f32 %v1689, 1e-06
    %v1692 = vadd.f32 %v1690, 1e-06
    %v1693 = vrsqrt.pop %v1691
    %v1694 = vmul.f32 %v1693, %v1691
    %v1695 = vmul.f32 %v1694, %v1693
    %v1696 = vmul.f32 0.5, %v1695
    %v1697 = vsub.f32 1.5, %v1696
    %v1698 = vmul.f32 %v1693, %v1697
    %vm1699 = vweird.f32 %v1691
    %vm1700 = vweird.f32 %v1693
    %vm1701 = vmor %vm1699, %vm1700
    %v1702 = vsel %vm1701, %v1693, %v1698
    %v1703 = vrsqrt.pop %v1692
    %v1704 = vmul.f32 %v1703, %v1692
    %v1705 = vmul.f32 %v1704, %v1703
    %v1706 = vmul.f32 0.5, %v1705
    %v1707 = vsub.f32 1.5, %v1706
    %v1708 = vmul.f32 %v1703, %v1707
    %vm1709 = vweird.f32 %v1692
    %vm1710 = vweird.f32 %v1703
    %vm1711 = vmor %vm1709, %vm1710
    %v1712 = vsel %vm1711, %v1703, %v1708
    %v1713 = vmul.f32 %v1679, %v1702
    %v1714 = vmul.f32 %v1680, %v1712
    %v1716 = vperm.slane %v1669, 0
    %v1718 = vmul.f32 %v1713, %v1716
    %v1719 = vmul.f32 %v1714, %v1716
    %v1721 = vperm.slane %v1670, 0
    %v1723 = vadd.f32 %v1718, %v1721
    %v1724 = vadd.f32 %v1719, %v1721
    %v1725 = vld [vmem:[%s3] sm:$0xff]
    %v1726 = vld [vmem:[%s3 + $0x8] sm:$0xff]
    %v1727 = vld [vmem:[%s7] sm:$0xff]
    %v1728 = vld [vmem:[%s7 + $0x8] sm:$0xff]
    %v1729 = vld [vmem:[%s9] sm:$0xff]
    %v1730 = vld [vmem:[%s9 + $0x8] sm:$0xff]
    %v1731 = vld [vmem:[%s67] sm:$0x1]
    %v1732 = vld [vmem:[%s69] sm:$0x1]
    %v1733 = vsel %vm178, %v1725, 0.0
    %1734 = vadd.xlane.f32.xlu0 %v1733
    %v1735 = vpop.xlane.xlu0 %1734
    %v1736 = vsel %vm178, %v1726, 0.0
    %1737 = vadd.xlane.f32.xlu0 %v1736
    %v1738 = vpop.xlane.xlu0 %1737
    %v1739 = vmul.f32 %v1735, %v191
    %v1740 = vmul.f32 %v1738, %v191
    %v1741 = vsub.f32 %v1725, %v1739
    %v1742 = vsub.f32 %v1726, %v1740
    %v1743 = vmul.f32 %v1741, %v1741
    %v1744 = vmul.f32 %v1742, %v1742
    %v1745 = vsel %vm178, %v1743, 0.0
    %1746 = vadd.xlane.f32.xlu0 %v1745
    %v1747 = vpop.xlane.xlu0 %1746
    %v1748 = vsel %vm178, %v1744, 0.0
    %1749 = vadd.xlane.f32.xlu0 %v1748
    %v1750 = vpop.xlane.xlu0 %1749
    %v1751 = vmul.f32 %v1747, %v191
    %v1752 = vmul.f32 %v1750, %v191
    %v1753 = vadd.f32 %v1751, 1e-06
    %v1754 = vadd.f32 %v1752, 1e-06
    %v1755 = vrsqrt.pop %v1753
    %v1756 = vmul.f32 %v1755, %v1753
    %v1757 = vmul.f32 %v1756, %v1755
    %v1758 = vmul.f32 0.5, %v1757
    %v1759 = vsub.f32 1.5, %v1758
    %v1760 = vmul.f32 %v1755, %v1759
    %vm1761 = vweird.f32 %v1753
    %vm1762 = vweird.f32 %v1755
    %vm1763 = vmor %vm1761, %vm1762
    %v1764 = vsel %vm1763, %v1755, %v1760
    %v1765 = vrsqrt.pop %v1754
    %v1766 = vmul.f32 %v1765, %v1754
    %v1767 = vmul.f32 %v1766, %v1765
    %v1768 = vmul.f32 0.5, %v1767
    %v1769 = vsub.f32 1.5, %v1768
    %v1770 = vmul.f32 %v1765, %v1769
    %vm1771 = vweird.f32 %v1754
    %vm1772 = vweird.f32 %v1765
    %vm1773 = vmor %vm1771, %vm1772
    %v1774 = vsel %vm1773, %v1765, %v1770
    %v1775 = vmul.f32 %v1741, %v1764
    %v1776 = vmul.f32 %v1742, %v1774
    %v1778 = vperm.slane %v1731, 0
    %v1780 = vmul.f32 %v1775, %v1778
    %v1781 = vmul.f32 %v1776, %v1778
    %v1783 = vperm.slane %v1732, 0
    %v1785 = vadd.f32 %v1780, %v1783
    %v1786 = vadd.f32 %v1781, %v1783
    %v1787 = vld [vmem:[%s39] sm:$0xff]
    %v1788 = vld [vmem:[%s39 + $0x8] sm:$0xff]
    %v1789 = vld [vmem:[%s39 + $0x10] sm:$0xff]
    %v1790 = vld [vmem:[%s39 + $0x18] sm:$0xff]
    %v1791 = vld [vmem:[%s41] sm:$0x1]
    %v1792 = vld [vmem:[%s43] sm:$0xff]
    %v1793 = vld [vmem:[%s43 + $0x8] sm:$0xff]
    %v1794 = vld [vmem:[%s43 + $0x10] sm:$0xff]
    %v1795 = vld [vmem:[%s43 + $0x18] sm:$0xff]
    %v1796 = vld [vmem:[%s45] sm:$0x1]
    %v1797 = vpack.c.bf16 %v1786, %v1785
    %v1798 = vpack.c.bf16 %v1788, %v1787
    %v1799 = vpack.c.bf16 %v1790, %v1789
    %v1801 = vperm.slane %v1791, 0
    %v1804 = vsel %vm178, %v1797, 0
    %1806 = vmatpush.bf16.msra.mxu0 0
    %1807 = vmatpush.bf16.msra.mxu0 0
    %1808 = vmatpush.bf16.msra.mxu0 0
    %1809 = vmatpush.bf16.msra.mxu0 0
    %1810 = vmatpush.bf16.msra.mxu0 0
    %1811 = vmatpush.bf16.msra.mxu0 0
    %1812 = vmatpush.bf16.msra.mxu0 %v1799
    %1813 = vmatpush.bf16.msra.mxu0 %v1798
    %1814 = vmatmul.bf16.gmra.mxu0 %v1804
    %v1815 = vpop.f32.mrf.mxu0
    %v1816 = vadd.f32 %v1801, %v1815
    %v1817 = vpop.f32.mrf.mxu0
    %v1818 = vadd.f32 %v1801, %v1817
    %1819 = vdwg.mxu0
    %v1820 = vpack.c.bf16 %v1816, %v1816
    %v1821 = vpack.c.bf16 %v1818, %v1818
    %v1823 = vunpack.c.l.b16 %v1820
    %v1824 = vpack.c.b16 %v1823, %v1823
    %1825 = vrot.lane.b32.xlu0 %v1824, 96
    %v1826 = vpop.permute.xlu0 %1825
    %v1828 = vsel %vm280, %v1820, 0
    %v1831 = vsel %vm280, %v1826, 0
    %1833 = vmatpush.bf16.xpose.msra.mxu0 0
    %1834 = vmatpush.bf16.xpose.msra.mxu0 0
    %1835 = vmatpush.bf16.xpose.msra.mxu0 0
    %1836 = vmatpush.bf16.xpose.msra.mxu0 0
    %1837 = vmatpush.bf16.xpose.msra.mxu0 0
    %1838 = vmatpush.bf16.xpose.msra.mxu0 0
    %1839 = vmatpush.bf16.xpose.msra.mxu0 0
    %1840 = vmatpush.bf16.xpose.msra.mxu0 %v1831
    %1841 = vmatmul.bf16.gmra.mxu0 %v1828
    %v1842 = vpop.f32.mrf.mxu0
    %v1843 = vadd.f32 0.0, %v1842
    %v1844 = vpop.f32.mrf.mxu0
    %1845 = vdwg.mxu0
    %v1847 = vunpack.c.l.b16 %v1821
    %v1848 = vpack.c.b16 %v1847, %v1847
    %1849 = vrot.lane.b32.xlu0 %v1848, 96
    %v1850 = vpop.permute.xlu0 %1849
    %v1852 = vsel %vm280, %v1821, 0
    %v1855 = vsel %vm280, %v1850, 0
    %1857 = vmatpush.bf16.xpose.msra.mxu0 0
    %1858 = vmatpush.bf16.xpose.msra.mxu0 0
    %1859 = vmatpush.bf16.xpose.msra.mxu0 0
    %1860 = vmatpush.bf16.xpose.msra.mxu0 0
    %1861 = vmatpush.bf16.xpose.msra.mxu0 0
    %1862 = vmatpush.bf16.xpose.msra.mxu0 0
    %1863 = vmatpush.bf16.xpose.msra.mxu0 0
    %1864 = vmatpush.bf16.xpose.msra.mxu0 %v1855
    %1865 = vmatmul.bf16.gmra.mxu0 %v1852
    %v1866 = vpop.f32.mrf.mxu0
    %v1867 = vadd.f32 0.0, %v1866
    %v1868 = vpop.f32.mrf.mxu0
    %1869 = vdwg.mxu0
    %v1870 = vmul.f32 %v1843, 0.35355338
    %v1871 = vmul.f32 %v1867, 0.35355338
    %v1872 = vadd.f32 %v1870, %v1727
    %v1873 = vadd.f32 %v1871, %v1728
    %v1874 = vsel %vm280, %v1872, -inf
    %1875 = vmax.xlane.f32.xlu0 %v1874
    %v1876 = vpop.xlane.xlu0 %1875
    %v1877 = vsel %vm280, %v1873, -inf
    %1878 = vmax.xlane.f32.xlu0 %v1877
    %v1879 = vpop.xlane.xlu0 %1878
    %v1880 = vsub.f32 %v1872, %v1876
    %v1881 = vsub.f32 %v1873, %v1879
    %v1882 = vmul.f32 %v1880, 1.442695
    %v1883 = vpow.pop %v1882
    %v1884 = vmul.f32 %v1881, 1.442695
    %v1885 = vpow.pop %v1884
    %v1886 = vsel %vm280, %v1883, 0.0
    %1887 = vadd.xlane.f32.xlu0 %v1886
    %v1888 = vpop.xlane.xlu0 %1887
    %v1889 = vsel %vm280, %v1885, 0.0
    %1890 = vadd.xlane.f32.xlu0 %v1889
    %v1891 = vpop.xlane.xlu0 %1890
    %v1892 = vrcp.pop %v1888
    %v1893 = vrcp.pop %v1891
    %v1894 = vmul.f32 %v1883, %v1892
    %v1895 = vmul.f32 %v1885, %v1893
    %v1896 = vpack.c.bf16 %v1894, %v1894
    %v1897 = vpack.c.bf16 %v1895, %v1895
    %1898 = vrot.lane.b32.xlu0 %v1824, 64
    %v1899 = vpop.permute.xlu0 %1898
    %v1901 = vsel %vm280, %v1896, 0
    %v1904 = vsel %vm357, %v1899, 0
    %1906 = vmatpush.bf16.msra.mxu0 0
    %1907 = vmatpush.bf16.msra.mxu0 0
    %1908 = vmatpush.bf16.msra.mxu0 0
    %1909 = vmatpush.bf16.msra.mxu0 0
    %1910 = vmatpush.bf16.msra.mxu0 0
    %1911 = vmatpush.bf16.msra.mxu0 0
    %1912 = vmatpush.bf16.msra.mxu0 0
    %1913 = vmatpush.bf16.msra.mxu0 %v1904
    %1914 = vmatmul.bf16.gmra.mxu0 %v1901
    %v1915 = vpop.f32.mrf.mxu0
    %v1916 = vadd.f32 0.0, %v1915
    %v1917 = vpop.f32.mrf.mxu0
    %1918 = vdwg.mxu0
    %1919 = vrot.lane.b32.xlu0 %v1848, 64
    %v1920 = vpop.permute.xlu0 %1919
    %v1922 = vsel %vm280, %v1897, 0
    %v1925 = vsel %vm357, %v1920, 0
    %1927 = vmatpush.bf16.msra.mxu0 0
    %1928 = vmatpush.bf16.msra.mxu0 0
    %1929 = vmatpush.bf16.msra.mxu0 0
    %1930 = vmatpush.bf16.msra.mxu0 0
    %1931 = vmatpush.bf16.msra.mxu0 0
    %1932 = vmatpush.bf16.msra.mxu0 0
    %1933 = vmatpush.bf16.msra.mxu0 0
    %1934 = vmatpush.bf16.msra.mxu0 %v1925
    %1935 = vmatmul.bf16.gmra.mxu0 %v1922
    %v1936 = vpop.f32.mrf.mxu0
    %v1937 = vadd.f32 0.0, %v1936
    %v1938 = vpop.f32.mrf.mxu0
    %1939 = vdwg.mxu0
    %1940 = vrot.lane.b32.xlu0 %v1824, 120
    %v1941 = vpop.permute.xlu0 %1940
    %1942 = vrot.lane.b32.xlu0 %v1824, 88
    %v1943 = vpop.permute.xlu0 %1942
    %v1945 = vsel %vm280, %v1941, 0
    %v1948 = vsel %vm280, %v1943, 0
    %1950 = vmatpush.bf16.xpose.msra.mxu0 0
    %1951 = vmatpush.bf16.xpose.msra.mxu0 0
    %1952 = vmatpush.bf16.xpose.msra.mxu0 0
    %1953 = vmatpush.bf16.xpose.msra.mxu0 0
    %1954 = vmatpush.bf16.xpose.msra.mxu0 0
    %1955 = vmatpush.bf16.xpose.msra.mxu0 0
    %1956 = vmatpush.bf16.xpose.msra.mxu0 0
    %1957 = vmatpush.bf16.xpose.msra.mxu0 %v1948
    %1958 = vmatmul.bf16.gmra.mxu0 %v1945
    %v1959 = vpop.f32.mrf.mxu0
    %v1960 = vadd.f32 0.0, %v1959
    %v1961 = vpop.f32.mrf.mxu0
    %1962 = vdwg.mxu0
    %1963 = vrot.lane.b32.xlu0 %v1848, 120
    %v1964 = vpop.permute.xlu0 %1963
    %1965 = vrot.lane.b32.xlu0 %v1848, 88
    %v1966 = vpop.permute.xlu0 %1965
    %v1968 = vsel %vm280, %v1964, 0
    %v1971 = vsel %vm280, %v1966, 0
    %1973 = vmatpush.bf16.xpose.msra.mxu0 0
    %1974 = vmatpush.bf16.xpose.msra.mxu0 0
    %1975 = vmatpush.bf16.xpose.msra.mxu0 0
    %1976 = vmatpush.bf16.xpose.msra.mxu0 0
    %1977 = vmatpush.bf16.xpose.msra.mxu0 0
    %1978 = vmatpush.bf16.xpose.msra.mxu0 0
    %1979 = vmatpush.bf16.xpose.msra.mxu0 0
    %1980 = vmatpush.bf16.xpose.msra.mxu0 %v1971
    %1981 = vmatmul.bf16.gmra.mxu0 %v1968
    %v1982 = vpop.f32.mrf.mxu0
    %v1983 = vadd.f32 0.0, %v1982
    %v1984 = vpop.f32.mrf.mxu0
    %1985 = vdwg.mxu0
    %v1986 = vmul.f32 %v1960, 0.35355338
    %v1987 = vmul.f32 %v1983, 0.35355338
    %v1988 = vadd.f32 %v1986, %v1727
    %v1989 = vadd.f32 %v1987, %v1728
    %v1990 = vsel %vm280, %v1988, -inf
    %1991 = vmax.xlane.f32.xlu0 %v1990
    %v1992 = vpop.xlane.xlu0 %1991
    %v1993 = vsel %vm280, %v1989, -inf
    %1994 = vmax.xlane.f32.xlu0 %v1993
    %v1995 = vpop.xlane.xlu0 %1994
    %v1996 = vsub.f32 %v1988, %v1992
    %v1997 = vsub.f32 %v1989, %v1995
    %v1998 = vmul.f32 %v1996, 1.442695
    %v1999 = vpow.pop %v1998
    %v2000 = vmul.f32 %v1997, 1.442695
    %v2001 = vpow.pop %v2000
    %v2002 = vsel %vm280, %v1999, 0.0
    %2003 = vadd.xlane.f32.xlu0 %v2002
    %v2004 = vpop.xlane.xlu0 %2003
    %v2005 = vsel %vm280, %v2001, 0.0
    %2006 = vadd.xlane.f32.xlu0 %v2005
    %v2007 = vpop.xlane.xlu0 %2006
    %v2008 = vrcp.pop %v2004
    %v2009 = vrcp.pop %v2007
    %v2010 = vmul.f32 %v1999, %v2008
    %v2011 = vmul.f32 %v2001, %v2009
    %v2012 = vpack.c.bf16 %v2010, %v2010
    %v2013 = vpack.c.bf16 %v2011, %v2011
    %2014 = vrot.lane.b32.xlu0 %v1824, 56
    %v2015 = vpop.permute.xlu0 %2014
    %v2017 = vsel %vm280, %v2012, 0
    %v2020 = vsel %vm357, %v2015, 0
    %2022 = vmatpush.bf16.msra.mxu0 0
    %2023 = vmatpush.bf16.msra.mxu0 0
    %2024 = vmatpush.bf16.msra.mxu0 0
    %2025 = vmatpush.bf16.msra.mxu0 0
    %2026 = vmatpush.bf16.msra.mxu0 0
    %2027 = vmatpush.bf16.msra.mxu0 0
    %2028 = vmatpush.bf16.msra.mxu0 0
    %2029 = vmatpush.bf16.msra.mxu0 %v2020
    %2030 = vmatmul.bf16.gmra.mxu0 %v2017
    %v2031 = vpop.f32.mrf.mxu0
    %v2032 = vadd.f32 0.0, %v2031
    %v2033 = vpop.f32.mrf.mxu0
    %2034 = vdwg.mxu0
    %2035 = vrot.lane.b32.xlu0 %v1848, 56
    %v2036 = vpop.permute.xlu0 %2035
    %v2038 = vsel %vm280, %v2013, 0
    %v2041 = vsel %vm357, %v2036, 0
    %2043 = vmatpush.bf16.msra.mxu0 0
    %2044 = vmatpush.bf16.msra.mxu0 0
    %2045 = vmatpush.bf16.msra.mxu0 0
    %2046 = vmatpush.bf16.msra.mxu0 0
    %2047 = vmatpush.bf16.msra.mxu0 0
    %2048 = vmatpush.bf16.msra.mxu0 0
    %2049 = vmatpush.bf16.msra.mxu0 0
    %2050 = vmatpush.bf16.msra.mxu0 %v2041
    %2051 = vmatmul.bf16.gmra.mxu0 %v2038
    %v2052 = vpop.f32.mrf.mxu0
    %v2053 = vadd.f32 0.0, %v2052
    %v2054 = vpop.f32.mrf.mxu0
    %2055 = vdwg.mxu0
    %2056 = vrot.lane.b32.xlu0 %v1824, 112
    %v2057 = vpop.permute.xlu0 %2056
    %2058 = vrot.lane.b32.xlu0 %v1824, 80
    %v2059 = vpop.permute.xlu0 %2058
    %v2061 = vsel %vm280, %v2057, 0
    %v2064 = vsel %vm280, %v2059, 0
    %2066 = vmatpush.bf16.xpose.msra.mxu0 0
    %2067 = vmatpush.bf16.xpose.msra.mxu0 0
    %2068 = vmatpush.bf16.xpose.msra.mxu0 0
    %2069 = vmatpush.bf16.xpose.msra.mxu0 0
    %2070 = vmatpush.bf16.xpose.msra.mxu0 0
    %2071 = vmatpush.bf16.xpose.msra.mxu0 0
    %2072 = vmatpush.bf16.xpose.msra.mxu0 0
    %2073 = vmatpush.bf16.xpose.msra.mxu0 %v2064
    %2074 = vmatmul.bf16.gmra.mxu0 %v2061
    %v2075 = vpop.f32.mrf.mxu0
    %v2076 = vadd.f32 0.0, %v2075
    %v2077 = vpop.f32.mrf.mxu0
    %2078 = vdwg.mxu0
    %2079 = vrot.lane.b32.xlu0 %v1848, 112
    %v2080 = vpop.permute.xlu0 %2079
    %2081 = vrot.lane.b32.xlu0 %v1848, 80
    %v2082 = vpop.permute.xlu0 %2081
    %v2084 = vsel %vm280, %v2080, 0
    %v2087 = vsel %vm280, %v2082, 0
    %2089 = vmatpush.bf16.xpose.msra.mxu0 0
    %2090 = vmatpush.bf16.xpose.msra.mxu0 0
    %2091 = vmatpush.bf16.xpose.msra.mxu0 0
    %2092 = vmatpush.bf16.xpose.msra.mxu0 0
    %2093 = vmatpush.bf16.xpose.msra.mxu0 0
    %2094 = vmatpush.bf16.xpose.msra.mxu0 0
    %2095 = vmatpush.bf16.xpose.msra.mxu0 0
    %2096 = vmatpush.bf16.xpose.msra.mxu0 %v2087
    %2097 = vmatmul.bf16.gmra.mxu0 %v2084
    %v2098 = vpop.f32.mrf.mxu0
    %v2099 = vadd.f32 0.0, %v2098
    %v2100 = vpop.f32.mrf.mxu0
    %2101 = vdwg.mxu0
    %v2102 = vmul.f32 %v2076, 0.35355338
    %v2103 = vmul.f32 %v2099, 0.35355338
    %v2104 = vadd.f32 %v2102, %v1727
    %v2105 = vadd.f32 %v2103, %v1728
    %v2106 = vsel %vm280, %v2104, -inf
    %2107 = vmax.xlane.f32.xlu0 %v2106
    %v2108 = vpop.xlane.xlu0 %2107
    %v2109 = vsel %vm280, %v2105, -inf
    %2110 = vmax.xlane.f32.xlu0 %v2109
    %v2111 = vpop.xlane.xlu0 %2110
    %v2112 = vsub.f32 %v2104, %v2108
    %v2113 = vsub.f32 %v2105, %v2111
    %v2114 = vmul.f32 %v2112, 1.442695
    %v2115 = vpow.pop %v2114
    %v2116 = vmul.f32 %v2113, 1.442695
    %v2117 = vpow.pop %v2116
    %v2118 = vsel %vm280, %v2115, 0.0
    %2119 = vadd.xlane.f32.xlu0 %v2118
    %v2120 = vpop.xlane.xlu0 %2119
    %v2121 = vsel %vm280, %v2117, 0.0
    %2122 = vadd.xlane.f32.xlu0 %v2121
    %v2123 = vpop.xlane.xlu0 %2122
    %v2124 = vrcp.pop %v2120
    %v2125 = vrcp.pop %v2123
    %v2126 = vmul.f32 %v2115, %v2124
    %v2127 = vmul.f32 %v2117, %v2125
    %v2128 = vpack.c.bf16 %v2126, %v2126
    %v2129 = vpack.c.bf16 %v2127, %v2127
    %2130 = vrot.lane.b32.xlu0 %v1824, 48
    %v2131 = vpop.permute.xlu0 %2130
    %v2133 = vsel %vm280, %v2128, 0
    %v2136 = vsel %vm357, %v2131, 0
    %2138 = vmatpush.bf16.msra.mxu0 0
    %2139 = vmatpush.bf16.msra.mxu0 0
    %2140 = vmatpush.bf16.msra.mxu0 0
    %2141 = vmatpush.bf16.msra.mxu0 0
    %2142 = vmatpush.bf16.msra.mxu0 0
    %2143 = vmatpush.bf16.msra.mxu0 0
    %2144 = vmatpush.bf16.msra.mxu0 0
    %2145 = vmatpush.bf16.msra.mxu0 %v2136
    %2146 = vmatmul.bf16.gmra.mxu0 %v2133
    %v2147 = vpop.f32.mrf.mxu0
    %v2148 = vadd.f32 0.0, %v2147
    %v2149 = vpop.f32.mrf.mxu0
    %2150 = vdwg.mxu0
    %2151 = vrot.lane.b32.xlu0 %v1848, 48
    %v2152 = vpop.permute.xlu0 %2151
    %v2154 = vsel %vm280, %v2129, 0
    %v2157 = vsel %vm357, %v2152, 0
    %2159 = vmatpush.bf16.msra.mxu0 0
    %2160 = vmatpush.bf16.msra.mxu0 0
    %2161 = vmatpush.bf16.msra.mxu0 0
    %2162 = vmatpush.bf16.msra.mxu0 0
    %2163 = vmatpush.bf16.msra.mxu0 0
    %2164 = vmatpush.bf16.msra.mxu0 0
    %2165 = vmatpush.bf16.msra.mxu0 0
    %2166 = vmatpush.bf16.msra.mxu0 %v2157
    %2167 = vmatmul.bf16.gmra.mxu0 %v2154
    %v2168 = vpop.f32.mrf.mxu0
    %v2169 = vadd.f32 0.0, %v2168
    %v2170 = vpop.f32.mrf.mxu0
    %2171 = vdwg.mxu0
    %2172 = vrot.lane.b32.xlu0 %v1824, 104
    %v2173 = vpop.permute.xlu0 %2172
    %2174 = vrot.lane.b32.xlu0 %v1824, 72
    %v2175 = vpop.permute.xlu0 %2174
    %v2177 = vsel %vm280, %v2173, 0
    %v2180 = vsel %vm280, %v2175, 0
    %2182 = vmatpush.bf16.xpose.msra.mxu0 0
    %2183 = vmatpush.bf16.xpose.msra.mxu0 0
    %2184 = vmatpush.bf16.xpose.msra.mxu0 0
    %2185 = vmatpush.bf16.xpose.msra.mxu0 0
    %2186 = vmatpush.bf16.xpose.msra.mxu0 0
    %2187 = vmatpush.bf16.xpose.msra.mxu0 0
    %2188 = vmatpush.bf16.xpose.msra.mxu0 0
    %2189 = vmatpush.bf16.xpose.msra.mxu0 %v2180
    %2190 = vmatmul.bf16.gmra.mxu0 %v2177
    %v2191 = vpop.f32.mrf.mxu0
    %v2192 = vadd.f32 0.0, %v2191
    %v2193 = vpop.f32.mrf.mxu0
    %2194 = vdwg.mxu0
    %2195 = vrot.lane.b32.xlu0 %v1848, 104
    %v2196 = vpop.permute.xlu0 %2195
    %2197 = vrot.lane.b32.xlu0 %v1848, 72
    %v2198 = vpop.permute.xlu0 %2197
    %v2200 = vsel %vm280, %v2196, 0
    %v2203 = vsel %vm280, %v2198, 0
    %2205 = vmatpush.bf16.xpose.msra.mxu0 0
    %2206 = vmatpush.bf16.xpose.msra.mxu0 0
    %2207 = vmatpush.bf16.xpose.msra.mxu0 0
    %2208 = vmatpush.bf16.xpose.msra.mxu0 0
    %2209 = vmatpush.bf16.xpose.msra.mxu0 0
    %2210 = vmatpush.bf16.xpose.msra.mxu0 0
    %2211 = vmatpush.bf16.xpose.msra.mxu0 0
    %2212 = vmatpush.bf16.xpose.msra.mxu0 %v2203
    %2213 = vmatmul.bf16.gmra.mxu0 %v2200
    %v2214 = vpop.f32.mrf.mxu0
    %v2215 = vadd.f32 0.0, %v2214
    %v2216 = vpop.f32.mrf.mxu0
    %2217 = vdwg.mxu0
    %v2218 = vmul.f32 %v2192, 0.35355338
    %v2219 = vmul.f32 %v2215, 0.35355338
    %v2220 = vadd.f32 %v2218, %v1727
    %v2221 = vadd.f32 %v2219, %v1728
    %v2222 = vsel %vm280, %v2220, -inf
    %2223 = vmax.xlane.f32.xlu0 %v2222
    %v2224 = vpop.xlane.xlu0 %2223
    %v2225 = vsel %vm280, %v2221, -inf
    %2226 = vmax.xlane.f32.xlu0 %v2225
    %v2227 = vpop.xlane.xlu0 %2226
    %v2228 = vsub.f32 %v2220, %v2224
    %v2229 = vsub.f32 %v2221, %v2227
    %v2230 = vmul.f32 %v2228, 1.442695
    %v2231 = vpow.pop %v2230
    %v2232 = vmul.f32 %v2229, 1.442695
    %v2233 = vpow.pop %v2232
    %v2234 = vsel %vm280, %v2231, 0.0
    %2235 = vadd.xlane.f32.xlu0 %v2234
    %v2236 = vpop.xlane.xlu0 %2235
    %v2237 = vsel %vm280, %v2233, 0.0
    %2238 = vadd.xlane.f32.xlu0 %v2237
    %v2239 = vpop.xlane.xlu0 %2238
    %v2240 = vrcp.pop %v2236
    %v2241 = vrcp.pop %v2239
    %v2242 = vmul.f32 %v2231, %v2240
    %v2243 = vmul.f32 %v2233, %v2241
    %v2244 = vpack.c.bf16 %v2242, %v2242
    %v2245 = vpack.c.bf16 %v2243, %v2243
    %2246 = vrot.lane.b32.xlu0 %v1824, 40
    %v2247 = vpop.permute.xlu0 %2246
    %v2249 = vsel %vm280, %v2244, 0
    %v2252 = vsel %vm357, %v2247, 0
    %2254 = vmatpush.bf16.msra.mxu0 0
    %2255 = vmatpush.bf16.msra.mxu0 0
    %2256 = vmatpush.bf16.msra.mxu0 0
    %2257 = vmatpush.bf16.msra.mxu0 0
    %2258 = vmatpush.bf16.msra.mxu0 0
    %2259 = vmatpush.bf16.msra.mxu0 0
    %2260 = vmatpush.bf16.msra.mxu0 0
    %2261 = vmatpush.bf16.msra.mxu0 %v2252
    %2262 = vmatmul.bf16.gmra.mxu0 %v2249
    %v2263 = vpop.f32.mrf.mxu0
    %v2264 = vadd.f32 0.0, %v2263
    %v2265 = vpop.f32.mrf.mxu0
    %2266 = vdwg.mxu0
    %2267 = vrot.lane.b32.xlu0 %v1848, 40
    %v2268 = vpop.permute.xlu0 %2267
    %v2270 = vsel %vm280, %v2245, 0
    %v2273 = vsel %vm357, %v2268, 0
    %2275 = vmatpush.bf16.msra.mxu0 0
    %2276 = vmatpush.bf16.msra.mxu0 0
    %2277 = vmatpush.bf16.msra.mxu0 0
    %2278 = vmatpush.bf16.msra.mxu0 0
    %2279 = vmatpush.bf16.msra.mxu0 0
    %2280 = vmatpush.bf16.msra.mxu0 0
    %2281 = vmatpush.bf16.msra.mxu0 0
    %2282 = vmatpush.bf16.msra.mxu0 %v2273
    %2283 = vmatmul.bf16.gmra.mxu0 %v2270
    %v2284 = vpop.f32.mrf.mxu0
    %v2285 = vadd.f32 0.0, %v2284
    %v2286 = vpop.f32.mrf.mxu0
    %2287 = vdwg.mxu0
    %2290 = vrot.lane.b32.xlu0 %v2032, 8
    %v2291 = vpop.permute.xlu0 %2290
    %2292 = vrot.lane.b32.xlu0 %v2053, 8
    %v2293 = vpop.permute.xlu0 %2292
    %2298 = vrot.lane.b32.xlu0 %v2148, 16
    %v2299 = vpop.permute.xlu0 %2298
    %2300 = vrot.lane.b32.xlu0 %v2169, 16
    %v2301 = vpop.permute.xlu0 %2300
    %2306 = vrot.lane.b32.xlu0 %v2264, 24
    %v2307 = vpop.permute.xlu0 %2306
    %2308 = vrot.lane.b32.xlu0 %v2285, 24
    %v2309 = vpop.permute.xlu0 %2308
    %v2312 = vsel %vm280, %v1916, %v2291
    %v2313 = vsel %vm280, %v1937, %v2293
    %v2314 = vsel %vm769, %v2312, %v2299
    %v2315 = vsel %vm769, %v2313, %v2301
    %v2316 = vsel %vm772, %v2314, %v2307
    %v2317 = vsel %vm772, %v2315, %v2309
    %v2318 = vpack.c.bf16 %v2317, %v2316
    %v2319 = vpack.c.bf16 %v1793, %v1792
    %v2320 = vpack.c.bf16 %v1795, %v1794
    %v2322 = vperm.slane %v1796, 0
    %v2325 = vsel %vm178, %v2318, 0
    %2327 = vmatpush.bf16.msra.mxu0 0
    %2328 = vmatpush.bf16.msra.mxu0 0
    %2329 = vmatpush.bf16.msra.mxu0 0
    %2330 = vmatpush.bf16.msra.mxu0 0
    %2331 = vmatpush.bf16.msra.mxu0 0
    %2332 = vmatpush.bf16.msra.mxu0 0
    %2333 = vmatpush.bf16.msra.mxu0 %v2320
    %2334 = vmatpush.bf16.msra.mxu0 %v2319
    %2335 = vmatmul.bf16.gmra.mxu0 %v2325
    %v2336 = vpop.f32.mrf.mxu0
    %v2337 = vadd.f32 %v2322, %v2336
    %v2338 = vpop.f32.mrf.mxu0
    %v2339 = vadd.f32 %v2322, %v2338
    %2340 = vdwg.mxu0
    %v2341 = vadd.f32 %v1725, %v2337
    %v2342 = vadd.f32 %v1726, %v2339
    %v2343 = vld [vmem:[%s71] sm:$0x1]
    %v2344 = vld [vmem:[%s73] sm:$0x1]
    %v2345 = vsel %vm178, %v2341, 0.0
    %2346 = vadd.xlane.f32.xlu0 %v2345
    %v2347 = vpop.xlane.xlu0 %2346
    %v2348 = vsel %vm178, %v2342, 0.0
    %2349 = vadd.xlane.f32.xlu0 %v2348
    %v2350 = vpop.xlane.xlu0 %2349
    %v2351 = vmul.f32 %v2347, %v191
    %v2352 = vmul.f32 %v2350, %v191
    %v2353 = vsub.f32 %v2341, %v2351
    %v2354 = vsub.f32 %v2342, %v2352
    %v2355 = vmul.f32 %v2353, %v2353
    %v2356 = vmul.f32 %v2354, %v2354
    %v2357 = vsel %vm178, %v2355, 0.0
    %2358 = vadd.xlane.f32.xlu0 %v2357
    %v2359 = vpop.xlane.xlu0 %2358
    %v2360 = vsel %vm178, %v2356, 0.0
    %2361 = vadd.xlane.f32.xlu0 %v2360
    %v2362 = vpop.xlane.xlu0 %2361
    %v2363 = vmul.f32 %v2359, %v191
    %v2364 = vmul.f32 %v2362, %v191
    %v2365 = vadd.f32 %v2363, 1e-06
    %v2366 = vadd.f32 %v2364, 1e-06
    %v2367 = vrsqrt.pop %v2365
    %v2368 = vmul.f32 %v2367, %v2365
    %v2369 = vmul.f32 %v2368, %v2367
    %v2370 = vmul.f32 0.5, %v2369
    %v2371 = vsub.f32 1.5, %v2370
    %v2372 = vmul.f32 %v2367, %v2371
    %vm2373 = vweird.f32 %v2365
    %vm2374 = vweird.f32 %v2367
    %vm2375 = vmor %vm2373, %vm2374
    %v2376 = vsel %vm2375, %v2367, %v2372
    %v2377 = vrsqrt.pop %v2366
    %v2378 = vmul.f32 %v2377, %v2366
    %v2379 = vmul.f32 %v2378, %v2377
    %v2380 = vmul.f32 0.5, %v2379
    %v2381 = vsub.f32 1.5, %v2380
    %v2382 = vmul.f32 %v2377, %v2381
    %vm2383 = vweird.f32 %v2366
    %vm2384 = vweird.f32 %v2377
    %vm2385 = vmor %vm2383, %vm2384
    %v2386 = vsel %vm2385, %v2377, %v2382
    %v2387 = vmul.f32 %v2353, %v2376
    %v2388 = vmul.f32 %v2354, %v2386
    %v2390 = vperm.slane %v2343, 0
    %v2392 = vmul.f32 %v2387, %v2390
    %v2393 = vmul.f32 %v2388, %v2390
    %v2395 = vperm.slane %v2344, 0
    %v2397 = vadd.f32 %v2392, %v2395
    %v2398 = vadd.f32 %v2393, %v2395
    %v2399 = vld [vmem:[%s47] sm:$0xff]
    %v2400 = vld [vmem:[%s47 + $0x8] sm:$0xff]
    %v2401 = vld [vmem:[%s47 + $0x10] sm:$0xff]
    %v2402 = vld [vmem:[%s47 + $0x18] sm:$0xff]
    %v2403 = vld [vmem:[%s49] sm:$0x1]
    %v2404 = vld [vmem:[%s51] sm:$0xff]
    %v2405 = vld [vmem:[%s51 + $0x8] sm:$0xff]
    %v2406 = vld [vmem:[%s51 + $0x10] sm:$0xff]
    %v2407 = vld [vmem:[%s51 + $0x18] sm:$0xff]
    %v2408 = vld [vmem:[%s53] sm:$0x1]
    %v2409 = vld [vmem:[%s55] sm:$0xff]
    %v2410 = vld [vmem:[%s55 + $0x8] sm:$0xff]
    %v2411 = vld [vmem:[%s55 + $0x10] sm:$0xff]
    %v2412 = vld [vmem:[%s55 + $0x18] sm:$0xff]
    %v2413 = vld [vmem:[%s57] sm:$0x1]
    %v2414 = vpack.c.bf16 %v2398, %v2397
    %v2415 = vpack.c.bf16 %v2400, %v2399
    %v2416 = vpack.c.bf16 %v2402, %v2401
    %v2418 = vperm.slane %v2403, 0
    %v2421 = vsel %vm178, %v2414, 0
    %2423 = vmatpush.bf16.msra.mxu0 0
    %2424 = vmatpush.bf16.msra.mxu0 0
    %2425 = vmatpush.bf16.msra.mxu0 0
    %2426 = vmatpush.bf16.msra.mxu0 0
    %2427 = vmatpush.bf16.msra.mxu0 0
    %2428 = vmatpush.bf16.msra.mxu0 0
    %2429 = vmatpush.bf16.msra.mxu0 %v2416
    %2430 = vmatpush.bf16.msra.mxu0 %v2415
    %2431 = vmatmul.bf16.gmra.mxu0 %v2421
    %v2432 = vpop.f32.mrf.mxu0
    %v2433 = vadd.f32 %v2418, %v2432
    %v2434 = vpop.f32.mrf.mxu0
    %v2435 = vadd.f32 %v2418, %v2434
    %2436 = vdwg.mxu0
    %v2437 = vpack.c.bf16 %v1724, %v1723
    %v2438 = vpack.c.bf16 %v2405, %v2404
    %v2439 = vpack.c.bf16 %v2407, %v2406
    %v2441 = vperm.slane %v2408, 0
    %v2444 = vsel %vm178, %v2437, 0
    %2446 = vmatpush.bf16.msra.mxu0 0
    %2447 = vmatpush.bf16.msra.mxu0 0
    %2448 = vmatpush.bf16.msra.mxu0 0
    %2449 = vmatpush.bf16.msra.mxu0 0
    %2450 = vmatpush.bf16.msra.mxu0 0
    %2451 = vmatpush.bf16.msra.mxu0 0
    %2452 = vmatpush.bf16.msra.mxu0 %v2439
    %2453 = vmatpush.bf16.msra.mxu0 %v2438
    %2454 = vmatmul.bf16.gmra.mxu0 %v2444
    %v2455 = vpop.f32.mrf.mxu0
    %v2456 = vadd.f32 %v2441, %v2455
    %v2457 = vpop.f32.mrf.mxu0
    %v2458 = vadd.f32 %v2441, %v2457
    %2459 = vdwg.mxu0
    %v2460 = vpack.c.bf16 %v2433, %v2433
    %v2461 = vpack.c.bf16 %v2435, %v2435
    %v2462 = vpack.c.bf16 %v2456, %v2456
    %v2463 = vpack.c.bf16 %v2458, %v2458
    %v2465 = vsel %vm280, %v2460, 0
    %v2468 = vsel %vm280, %v2462, 0
    %2470 = vmatpush.bf16.xpose.msra.mxu0 0
    %2471 = vmatpush.bf16.xpose.msra.mxu0 0
    %2472 = vmatpush.bf16.xpose.msra.mxu0 0
    %2473 = vmatpush.bf16.xpose.msra.mxu0 0
    %2474 = vmatpush.bf16.xpose.msra.mxu0 0
    %2475 = vmatpush.bf16.xpose.msra.mxu0 0
    %2476 = vmatpush.bf16.xpose.msra.mxu0 0
    %2477 = vmatpush.bf16.xpose.msra.mxu0 %v2468
    %2478 = vmatmul.bf16.gmra.mxu0 %v2465
    %v2479 = vpop.f32.mrf.mxu0
    %v2480 = vadd.f32 0.0, %v2479
    %v2481 = vpop.f32.mrf.mxu0
    %2482 = vdwg.mxu0
    %v2484 = vsel %vm280, %v2461, 0
    %v2487 = vsel %vm280, %v2463, 0
    %2489 = vmatpush.bf16.xpose.msra.mxu0 0
    %2490 = vmatpush.bf16.xpose.msra.mxu0 0
    %2491 = vmatpush.bf16.xpose.msra.mxu0 0
    %2492 = vmatpush.bf16.xpose.msra.mxu0 0
    %2493 = vmatpush.bf16.xpose.msra.mxu0 0
    %2494 = vmatpush.bf16.xpose.msra.mxu0 0
    %2495 = vmatpush.bf16.xpose.msra.mxu0 0
    %2496 = vmatpush.bf16.xpose.msra.mxu0 %v2487
    %2497 = vmatmul.bf16.gmra.mxu0 %v2484
    %v2498 = vpop.f32.mrf.mxu0
    %v2499 = vadd.f32 0.0, %v2498
    %v2500 = vpop.f32.mrf.mxu0
    %2501 = vdwg.mxu0
    %v2502 = vmul.f32 %v2480, 0.35355338
    %v2503 = vmul.f32 %v2499, 0.35355338
    %v2504 = vadd.f32 %v2502, %v1729
    %v2505 = vadd.f32 %v2503, %v1730
    %v2506 = vsel %vm280, %v2504, -inf
    %2507 = vmax.xlane.f32.xlu0 %v2506
    %v2508 = vpop.xlane.xlu0 %2507
    %v2509 = vsel %vm280, %v2505, -inf
    %2510 = vmax.xlane.f32.xlu0 %v2509
    %v2511 = vpop.xlane.xlu0 %2510
    %v2512 = vsub.f32 %v2504, %v2508
    %v2513 = vsub.f32 %v2505, %v2511
    %v2514 = vmul.f32 %v2512, 1.442695
    %v2515 = vpow.pop %v2514
    %v2516 = vmul.f32 %v2513, 1.442695
    %v2517 = vpow.pop %v2516
    %v2518 = vsel %vm280, %v2515, 0.0
    %2519 = vadd.xlane.f32.xlu0 %v2518
    %v2520 = vpop.xlane.xlu0 %2519
    %v2521 = vsel %vm280, %v2517, 0.0
    %2522 = vadd.xlane.f32.xlu0 %v2521
    %v2523 = vpop.xlane.xlu0 %2522
    %v2524 = vrcp.pop %v2520
    %v2525 = vrcp.pop %v2523
    %v2526 = vmul.f32 %v2515, %v2524
    %v2527 = vmul.f32 %v2517, %v2525
    %v2528 = vpack.c.bf16 %v2526, %v2526
    %v2529 = vpack.c.bf16 %v2527, %v2527
    %v2531 = vunpack.c.l.b16 %v2462
    %v2532 = vpack.c.b16 %v2531, %v2531
    %2533 = vrot.lane.b32.xlu0 %v2532, 96
    %v2534 = vpop.permute.xlu0 %2533
    %v2536 = vsel %vm280, %v2528, 0
    %v2539 = vsel %vm357, %v2534, 0
    %2541 = vmatpush.bf16.msra.mxu0 0
    %2542 = vmatpush.bf16.msra.mxu0 0
    %2543 = vmatpush.bf16.msra.mxu0 0
    %2544 = vmatpush.bf16.msra.mxu0 0
    %2545 = vmatpush.bf16.msra.mxu0 0
    %2546 = vmatpush.bf16.msra.mxu0 0
    %2547 = vmatpush.bf16.msra.mxu0 0
    %2548 = vmatpush.bf16.msra.mxu0 %v2539
    %2549 = vmatmul.bf16.gmra.mxu0 %v2536
    %v2550 = vpop.f32.mrf.mxu0
    %v2551 = vadd.f32 0.0, %v2550
    %v2552 = vpop.f32.mrf.mxu0
    %2553 = vdwg.mxu0
    %v2555 = vunpack.c.l.b16 %v2463
    %v2556 = vpack.c.b16 %v2555, %v2555
    %2557 = vrot.lane.b32.xlu0 %v2556, 96
    %v2558 = vpop.permute.xlu0 %2557
    %v2560 = vsel %vm280, %v2529, 0
    %v2563 = vsel %vm357, %v2558, 0
    %2565 = vmatpush.bf16.msra.mxu0 0
    %2566 = vmatpush.bf16.msra.mxu0 0
    %2567 = vmatpush.bf16.msra.mxu0 0
    %2568 = vmatpush.bf16.msra.mxu0 0
    %2569 = vmatpush.bf16.msra.mxu0 0
    %2570 = vmatpush.bf16.msra.mxu0 0
    %2571 = vmatpush.bf16.msra.mxu0 0
    %2572 = vmatpush.bf16.msra.mxu0 %v2563
    %2573 = vmatmul.bf16.gmra.mxu0 %v2560
    %v2574 = vpop.f32.mrf.mxu0
    %v2575 = vadd.f32 0.0, %v2574
    %v2576 = vpop.f32.mrf.mxu0
    %2577 = vdwg.mxu0
    %v2579 = vunpack.c.l.b16 %v2460
    %v2580 = vpack.c.b16 %v2579, %v2579
    %2581 = vrot.lane.b32.xlu0 %v2580, 120
    %v2582 = vpop.permute.xlu0 %2581
    %2583 = vrot.lane.b32.xlu0 %v2532, 120
    %v2584 = vpop.permute.xlu0 %2583
    %v2586 = vsel %vm280, %v2582, 0
    %v2589 = vsel %vm280, %v2584, 0
    %2591 = vmatpush.bf16.xpose.msra.mxu0 0
    %2592 = vmatpush.bf16.xpose.msra.mxu0 0
    %2593 = vmatpush.bf16.xpose.msra.mxu0 0
    %2594 = vmatpush.bf16.xpose.msra.mxu0 0
    %2595 = vmatpush.bf16.xpose.msra.mxu0 0
    %2596 = vmatpush.bf16.xpose.msra.mxu0 0
    %2597 = vmatpush.bf16.xpose.msra.mxu0 0
    %2598 = vmatpush.bf16.xpose.msra.mxu0 %v2589
    %2599 = vmatmul.bf16.gmra.mxu0 %v2586
    %v2600 = vpop.f32.mrf.mxu0
    %v2601 = vadd.f32 0.0, %v2600
    %v2602 = vpop.f32.mrf.mxu0
    %2603 = vdwg.mxu0
    %v2605 = vunpack.c.l.b16 %v2461
    %v2606 = vpack.c.b16 %v2605, %v2605
    %2607 = vrot.lane.b32.xlu0 %v2606, 120
    %v2608 = vpop.permute.xlu0 %2607
    %2609 = vrot.lane.b32.xlu0 %v2556, 120
    %v2610 = vpop.permute.xlu0 %2609
    %v2612 = vsel %vm280, %v2608, 0
    %v2615 = vsel %vm280, %v2610, 0
    %2617 = vmatpush.bf16.xpose.msra.mxu0 0
    %2618 = vmatpush.bf16.xpose.msra.mxu0 0
    %2619 = vmatpush.bf16.xpose.msra.mxu0 0
    %2620 = vmatpush.bf16.xpose.msra.mxu0 0
    %2621 = vmatpush.bf16.xpose.msra.mxu0 0
    %2622 = vmatpush.bf16.xpose.msra.mxu0 0
    %2623 = vmatpush.bf16.xpose.msra.mxu0 0
    %2624 = vmatpush.bf16.xpose.msra.mxu0 %v2615
    %2625 = vmatmul.bf16.gmra.mxu0 %v2612
    %v2626 = vpop.f32.mrf.mxu0
    %v2627 = vadd.f32 0.0, %v2626
    %v2628 = vpop.f32.mrf.mxu0
    %2629 = vdwg.mxu0
    %v2630 = vmul.f32 %v2601, 0.35355338
    %v2631 = vmul.f32 %v2627, 0.35355338
    %v2632 = vadd.f32 %v2630, %v1729
    %v2633 = vadd.f32 %v2631, %v1730
    %v2634 = vsel %vm280, %v2632, -inf
    %2635 = vmax.xlane.f32.xlu0 %v2634
    %v2636 = vpop.xlane.xlu0 %2635
    %v2637 = vsel %vm280, %v2633, -inf
    %2638 = vmax.xlane.f32.xlu0 %v2637
    %v2639 = vpop.xlane.xlu0 %2638
    %v2640 = vsub.f32 %v2632, %v2636
    %v2641 = vsub.f32 %v2633, %v2639
    %v2642 = vmul.f32 %v2640, 1.442695
    %v2643 = vpow.pop %v2642
    %v2644 = vmul.f32 %v2641, 1.442695
    %v2645 = vpow.pop %v2644
    %v2646 = vsel %vm280, %v2643, 0.0
    %2647 = vadd.xlane.f32.xlu0 %v2646
    %v2648 = vpop.xlane.xlu0 %2647
    %v2649 = vsel %vm280, %v2645, 0.0
    %2650 = vadd.xlane.f32.xlu0 %v2649
    %v2651 = vpop.xlane.xlu0 %2650
    %v2652 = vrcp.pop %v2648
    %v2653 = vrcp.pop %v2651
    %v2654 = vmul.f32 %v2643, %v2652
    %v2655 = vmul.f32 %v2645, %v2653
    %v2656 = vpack.c.bf16 %v2654, %v2654
    %v2657 = vpack.c.bf16 %v2655, %v2655
    %2658 = vrot.lane.b32.xlu0 %v2532, 88
    %v2659 = vpop.permute.xlu0 %2658
    %v2661 = vsel %vm280, %v2656, 0
    %v2664 = vsel %vm357, %v2659, 0
    %2666 = vmatpush.bf16.msra.mxu0 0
    %2667 = vmatpush.bf16.msra.mxu0 0
    %2668 = vmatpush.bf16.msra.mxu0 0
    %2669 = vmatpush.bf16.msra.mxu0 0
    %2670 = vmatpush.bf16.msra.mxu0 0
    %2671 = vmatpush.bf16.msra.mxu0 0
    %2672 = vmatpush.bf16.msra.mxu0 0
    %2673 = vmatpush.bf16.msra.mxu0 %v2664
    %2674 = vmatmul.bf16.gmra.mxu0 %v2661
    %v2675 = vpop.f32.mrf.mxu0
    %v2676 = vadd.f32 0.0, %v2675
    %v2677 = vpop.f32.mrf.mxu0
    %2678 = vdwg.mxu0
    %2679 = vrot.lane.b32.xlu0 %v2556, 88
    %v2680 = vpop.permute.xlu0 %2679
    %v2682 = vsel %vm280, %v2657, 0
    %v2685 = vsel %vm357, %v2680, 0
    %2687 = vmatpush.bf16.msra.mxu0 0
    %2688 = vmatpush.bf16.msra.mxu0 0
    %2689 = vmatpush.bf16.msra.mxu0 0
    %2690 = vmatpush.bf16.msra.mxu0 0
    %2691 = vmatpush.bf16.msra.mxu0 0
    %2692 = vmatpush.bf16.msra.mxu0 0
    %2693 = vmatpush.bf16.msra.mxu0 0
    %2694 = vmatpush.bf16.msra.mxu0 %v2685
    %2695 = vmatmul.bf16.gmra.mxu0 %v2682
    %v2696 = vpop.f32.mrf.mxu0
    %v2697 = vadd.f32 0.0, %v2696
    %v2698 = vpop.f32.mrf.mxu0
    %2699 = vdwg.mxu0
    %2700 = vrot.lane.b32.xlu0 %v2580, 112
    %v2701 = vpop.permute.xlu0 %2700
    %2702 = vrot.lane.b32.xlu0 %v2532, 112
    %v2703 = vpop.permute.xlu0 %2702
    %v2705 = vsel %vm280, %v2701, 0
    %v2708 = vsel %vm280, %v2703, 0
    %2710 = vmatpush.bf16.xpose.msra.mxu0 0
    %2711 = vmatpush.bf16.xpose.msra.mxu0 0
    %2712 = vmatpush.bf16.xpose.msra.mxu0 0
    %2713 = vmatpush.bf16.xpose.msra.mxu0 0
    %2714 = vmatpush.bf16.xpose.msra.mxu0 0
    %2715 = vmatpush.bf16.xpose.msra.mxu0 0
    %2716 = vmatpush.bf16.xpose.msra.mxu0 0
    %2717 = vmatpush.bf16.xpose.msra.mxu0 %v2708
    %2718 = vmatmul.bf16.gmra.mxu0 %v2705
    %v2719 = vpop.f32.mrf.mxu0
    %v2720 = vadd.f32 0.0, %v2719
    %v2721 = vpop.f32.mrf.mxu0
    %2722 = vdwg.mxu0
    %2723 = vrot.lane.b32.xlu0 %v2606, 112
    %v2724 = vpop.permute.xlu0 %2723
    %2725 = vrot.lane.b32.xlu0 %v2556, 112
    %v2726 = vpop.permute.xlu0 %2725
    %v2728 = vsel %vm280, %v2724, 0
    %v2731 = vsel %vm280, %v2726, 0
    %2733 = vmatpush.bf16.xpose.msra.mxu0 0
    %2734 = vmatpush.bf16.xpose.msra.mxu0 0
    %2735 = vmatpush.bf16.xpose.msra.mxu0 0
    %2736 = vmatpush.bf16.xpose.msra.mxu0 0
    %2737 = vmatpush.bf16.xpose.msra.mxu0 0
    %2738 = vmatpush.bf16.xpose.msra.mxu0 0
    %2739 = vmatpush.bf16.xpose.msra.mxu0 0
    %2740 = vmatpush.bf16.xpose.msra.mxu0 %v2731
    %2741 = vmatmul.bf16.gmra.mxu0 %v2728
    %v2742 = vpop.f32.mrf.mxu0
    %v2743 = vadd.f32 0.0, %v2742
    %v2744 = vpop.f32.mrf.mxu0
    %2745 = vdwg.mxu0
    %v2746 = vmul.f32 %v2720, 0.35355338
    %v2747 = vmul.f32 %v2743, 0.35355338
    %v2748 = vadd.f32 %v2746, %v1729
    %v2749 = vadd.f32 %v2747, %v1730
    %v2750 = vsel %vm280, %v2748, -inf
    %2751 = vmax.xlane.f32.xlu0 %v2750
    %v2752 = vpop.xlane.xlu0 %2751
    %v2753 = vsel %vm280, %v2749, -inf
    %2754 = vmax.xlane.f32.xlu0 %v2753
    %v2755 = vpop.xlane.xlu0 %2754
    %v2756 = vsub.f32 %v2748, %v2752
    %v2757 = vsub.f32 %v2749, %v2755
    %v2758 = vmul.f32 %v2756, 1.442695
    %v2759 = vpow.pop %v2758
    %v2760 = vmul.f32 %v2757, 1.442695
    %v2761 = vpow.pop %v2760
    %v2762 = vsel %vm280, %v2759, 0.0
    %2763 = vadd.xlane.f32.xlu0 %v2762
    %v2764 = vpop.xlane.xlu0 %2763
    %v2765 = vsel %vm280, %v2761, 0.0
    %2766 = vadd.xlane.f32.xlu0 %v2765
    %v2767 = vpop.xlane.xlu0 %2766
    %v2768 = vrcp.pop %v2764
    %v2769 = vrcp.pop %v2767
    %v2770 = vmul.f32 %v2759, %v2768
    %v2771 = vmul.f32 %v2761, %v2769
    %v2772 = vpack.c.bf16 %v2770, %v2770
    %v2773 = vpack.c.bf16 %v2771, %v2771
    %2774 = vrot.lane.b32.xlu0 %v2532, 80
    %v2775 = vpop.permute.xlu0 %2774
    %v2777 = vsel %vm280, %v2772, 0
    %v2780 = vsel %vm357, %v2775, 0
    %2782 = vmatpush.bf16.msra.mxu0 0
    %2783 = vmatpush.bf16.msra.mxu0 0
    %2784 = vmatpush.bf16.msra.mxu0 0
    %2785 = vmatpush.bf16.msra.mxu0 0
    %2786 = vmatpush.bf16.msra.mxu0 0
    %2787 = vmatpush.bf16.msra.mxu0 0
    %2788 = vmatpush.bf16.msra.mxu0 0
    %2789 = vmatpush.bf16.msra.mxu0 %v2780
    %2790 = vmatmul.bf16.gmra.mxu0 %v2777
    %v2791 = vpop.f32.mrf.mxu0
    %v2792 = vadd.f32 0.0, %v2791
    %v2793 = vpop.f32.mrf.mxu0
    %2794 = vdwg.mxu0
    %2795 = vrot.lane.b32.xlu0 %v2556, 80
    %v2796 = vpop.permute.xlu0 %2795
    %v2798 = vsel %vm280, %v2773, 0
    %v2801 = vsel %vm357, %v2796, 0
    %2803 = vmatpush.bf16.msra.mxu0 0
    %2804 = vmatpush.bf16.msra.mxu0 0
    %2805 = vmatpush.bf16.msra.mxu0 0
    %2806 = vmatpush.bf16.msra.mxu0 0
    %2807 = vmatpush.bf16.msra.mxu0 0
    %2808 = vmatpush.bf16.msra.mxu0 0
    %2809 = vmatpush.bf16.msra.mxu0 0
    %2810 = vmatpush.bf16.msra.mxu0 %v2801
    %2811 = vmatmul.bf16.gmra.mxu0 %v2798
    %v2812 = vpop.f32.mrf.mxu0
    %v2813 = vadd.f32 0.0, %v2812
    %v2814 = vpop.f32.mrf.mxu0
    %2815 = vdwg.mxu0
    %2816 = vrot.lane.b32.xlu0 %v2580, 104
    %v2817 = vpop.permute.xlu0 %2816
    %2818 = vrot.lane.b32.xlu0 %v2532, 104
    %v2819 = vpop.permute.xlu0 %2818
    %v2821 = vsel %vm280, %v2817, 0
    %v2824 = vsel %vm280, %v2819, 0
    %2826 = vmatpush.bf16.xpose.msra.mxu0 0
    %2827 = vmatpush.bf16.xpose.msra.mxu0 0
    %2828 = vmatpush.bf16.xpose.msra.mxu0 0
    %2829 = vmatpush.bf16.xpose.msra.mxu0 0
    %2830 = vmatpush.bf16.xpose.msra.mxu0 0
    %2831 = vmatpush.bf16.xpose.msra.mxu0 0
    %2832 = vmatpush.bf16.xpose.msra.mxu0 0
    %2833 = vmatpush.bf16.xpose.msra.mxu0 %v2824
    %2834 = vmatmul.bf16.gmra.mxu0 %v2821
    %v2835 = vpop.f32.mrf.mxu0
    %v2836 = vadd.f32 0.0, %v2835
    %v2837 = vpop.f32.mrf.mxu0
    %2838 = vdwg.mxu0
    %2839 = vrot.lane.b32.xlu0 %v2606, 104
    %v2840 = vpop.permute.xlu0 %2839
    %2841 = vrot.lane.b32.xlu0 %v2556, 104
    %v2842 = vpop.permute.xlu0 %2841
    %v2844 = vsel %vm280, %v2840, 0
    %v2847 = vsel %vm280, %v2842, 0
    %2849 = vmatpush.bf16.xpose.msra.mxu0 0
    %2850 = vmatpush.bf16.xpose.msra.mxu0 0
    %2851 = vmatpush.bf16.xpose.msra.mxu0 0
    %2852 = vmatpush.bf16.xpose.msra.mxu0 0
    %2853 = vmatpush.bf16.xpose.msra.mxu0 0
    %2854 = vmatpush.bf16.xpose.msra.mxu0 0
    %2855 = vmatpush.bf16.xpose.msra.mxu0 0
    %2856 = vmatpush.bf16.xpose.msra.mxu0 %v2847
    %2857 = vmatmul.bf16.gmra.mxu0 %v2844
    %v2858 = vpop.f32.mrf.mxu0
    %v2859 = vadd.f32 0.0, %v2858
    %v2860 = vpop.f32.mrf.mxu0
    %2861 = vdwg.mxu0
    %v2862 = vmul.f32 %v2836, 0.35355338
    %v2863 = vmul.f32 %v2859, 0.35355338
    %v2864 = vadd.f32 %v2862, %v1729
    %v2865 = vadd.f32 %v2863, %v1730
    %v2866 = vsel %vm280, %v2864, -inf
    %2867 = vmax.xlane.f32.xlu0 %v2866
    %v2868 = vpop.xlane.xlu0 %2867
    %v2869 = vsel %vm280, %v2865, -inf
    %2870 = vmax.xlane.f32.xlu0 %v2869
    %v2871 = vpop.xlane.xlu0 %2870
    %v2872 = vsub.f32 %v2864, %v2868
    %v2873 = vsub.f32 %v2865, %v2871
    %v2874 = vmul.f32 %v2872, 1.442695
    %v2875 = vpow.pop %v2874
    %v2876 = vmul.f32 %v2873, 1.442695
    %v2877 = vpow.pop %v2876
    %v2878 = vsel %vm280, %v2875, 0.0
    %2879 = vadd.xlane.f32.xlu0 %v2878
    %v2880 = vpop.xlane.xlu0 %2879
    %v2881 = vsel %vm280, %v2877, 0.0
    %2882 = vadd.xlane.f32.xlu0 %v2881
    %v2883 = vpop.xlane.xlu0 %2882
    %v2884 = vrcp.pop %v2880
    %v2885 = vrcp.pop %v2883
    %v2886 = vmul.f32 %v2875, %v2884
    %v2887 = vmul.f32 %v2877, %v2885
    %v2888 = vpack.c.bf16 %v2886, %v2886
    %v2889 = vpack.c.bf16 %v2887, %v2887
    %2890 = vrot.lane.b32.xlu0 %v2532, 72
    %v2891 = vpop.permute.xlu0 %2890
    %v2893 = vsel %vm280, %v2888, 0
    %v2896 = vsel %vm357, %v2891, 0
    %2898 = vmatpush.bf16.msra.mxu0 0
    %2899 = vmatpush.bf16.msra.mxu0 0
    %2900 = vmatpush.bf16.msra.mxu0 0
    %2901 = vmatpush.bf16.msra.mxu0 0
    %2902 = vmatpush.bf16.msra.mxu0 0
    %2903 = vmatpush.bf16.msra.mxu0 0
    %2904 = vmatpush.bf16.msra.mxu0 0
    %2905 = vmatpush.bf16.msra.mxu0 %v2896
    %2906 = vmatmul.bf16.gmra.mxu0 %v2893
    %v2907 = vpop.f32.mrf.mxu0
    %v2908 = vadd.f32 0.0, %v2907
    %v2909 = vpop.f32.mrf.mxu0
    %2910 = vdwg.mxu0
    %2911 = vrot.lane.b32.xlu0 %v2556, 72
    %v2912 = vpop.permute.xlu0 %2911
    %v2914 = vsel %vm280, %v2889, 0
    %v2917 = vsel %vm357, %v2912, 0
    %2919 = vmatpush.bf16.msra.mxu0 0
    %2920 = vmatpush.bf16.msra.mxu0 0
    %2921 = vmatpush.bf16.msra.mxu0 0
    %2922 = vmatpush.bf16.msra.mxu0 0
    %2923 = vmatpush.bf16.msra.mxu0 0
    %2924 = vmatpush.bf16.msra.mxu0 0
    %2925 = vmatpush.bf16.msra.mxu0 0
    %2926 = vmatpush.bf16.msra.mxu0 %v2917
    %2927 = vmatmul.bf16.gmra.mxu0 %v2914
    %v2928 = vpop.f32.mrf.mxu0
    %v2929 = vadd.f32 0.0, %v2928
    %v2930 = vpop.f32.mrf.mxu0
    %2931 = vdwg.mxu0
    %2934 = vrot.lane.b32.xlu0 %v2676, 8
    %v2935 = vpop.permute.xlu0 %2934
    %2936 = vrot.lane.b32.xlu0 %v2697, 8
    %v2937 = vpop.permute.xlu0 %2936
    %2942 = vrot.lane.b32.xlu0 %v2792, 16
    %v2943 = vpop.permute.xlu0 %2942
    %2944 = vrot.lane.b32.xlu0 %v2813, 16
    %v2945 = vpop.permute.xlu0 %2944
    %2950 = vrot.lane.b32.xlu0 %v2908, 24
    %v2951 = vpop.permute.xlu0 %2950
    %2952 = vrot.lane.b32.xlu0 %v2929, 24
    %v2953 = vpop.permute.xlu0 %2952
    %v2956 = vsel %vm280, %v2551, %v2935
    %v2957 = vsel %vm280, %v2575, %v2937
    %v2958 = vsel %vm769, %v2956, %v2943
    %v2959 = vsel %vm769, %v2957, %v2945
    %v2960 = vsel %vm772, %v2958, %v2951
    %v2961 = vsel %vm772, %v2959, %v2953
    %v2962 = vpack.c.bf16 %v2961, %v2960
    %v2963 = vpack.c.bf16 %v2410, %v2409
    %v2964 = vpack.c.bf16 %v2412, %v2411
    %v2966 = vperm.slane %v2413, 0
    %v2969 = vsel %vm178, %v2962, 0
    %2971 = vmatpush.bf16.msra.mxu0 0
    %2972 = vmatpush.bf16.msra.mxu0 0
    %2973 = vmatpush.bf16.msra.mxu0 0
    %2974 = vmatpush.bf16.msra.mxu0 0
    %2975 = vmatpush.bf16.msra.mxu0 0
    %2976 = vmatpush.bf16.msra.mxu0 0
    %2977 = vmatpush.bf16.msra.mxu0 %v2964
    %2978 = vmatpush.bf16.msra.mxu0 %v2963
    %2979 = vmatmul.bf16.gmra.mxu0 %v2969
    %v2980 = vpop.f32.mrf.mxu0
    %v2981 = vadd.f32 %v2966, %v2980
    %v2982 = vpop.f32.mrf.mxu0
    %v2983 = vadd.f32 %v2966, %v2982
    %2984 = vdwg.mxu0
    %v2985 = vadd.f32 %v2341, %v2981
    %v2986 = vadd.f32 %v2342, %v2983
    %v2987 = vld [vmem:[%s75] sm:$0x1]
    %v2988 = vld [vmem:[%s77] sm:$0x1]
    %v2989 = vsel %vm178, %v2985, 0.0
    %2990 = vadd.xlane.f32.xlu0 %v2989
    %v2991 = vpop.xlane.xlu0 %2990
    %v2992 = vsel %vm178, %v2986, 0.0
    %2993 = vadd.xlane.f32.xlu0 %v2992
    %v2994 = vpop.xlane.xlu0 %2993
    %v2995 = vmul.f32 %v2991, %v191
    %v2996 = vmul.f32 %v2994, %v191
    %v2997 = vsub.f32 %v2985, %v2995
    %v2998 = vsub.f32 %v2986, %v2996
    %v2999 = vmul.f32 %v2997, %v2997
    %v3000 = vmul.f32 %v2998, %v2998
    %v3001 = vsel %vm178, %v2999, 0.0
    %3002 = vadd.xlane.f32.xlu0 %v3001
    %v3003 = vpop.xlane.xlu0 %3002
    %v3004 = vsel %vm178, %v3000, 0.0
    %3005 = vadd.xlane.f32.xlu0 %v3004
    %v3006 = vpop.xlane.xlu0 %3005
    %v3007 = vmul.f32 %v3003, %v191
    %v3008 = vmul.f32 %v3006, %v191
    %v3009 = vadd.f32 %v3007, 1e-06
    %v3010 = vadd.f32 %v3008, 1e-06
    %v3011 = vrsqrt.pop %v3009
    %v3012 = vmul.f32 %v3011, %v3009
    %v3013 = vmul.f32 %v3012, %v3011
    %v3014 = vmul.f32 0.5, %v3013
    %v3015 = vsub.f32 1.5, %v3014
    %v3016 = vmul.f32 %v3011, %v3015
    %vm3017 = vweird.f32 %v3009
    %vm3018 = vweird.f32 %v3011
    %vm3019 = vmor %vm3017, %vm3018
    %v3020 = vsel %vm3019, %v3011, %v3016
    %v3021 = vrsqrt.pop %v3010
    %v3022 = vmul.f32 %v3021, %v3010
    %v3023 = vmul.f32 %v3022, %v3021
    %v3024 = vmul.f32 0.5, %v3023
    %v3025 = vsub.f32 1.5, %v3024
    %v3026 = vmul.f32 %v3021, %v3025
    %vm3027 = vweird.f32 %v3010
    %vm3028 = vweird.f32 %v3021
    %vm3029 = vmor %vm3027, %vm3028
    %v3030 = vsel %vm3029, %v3021, %v3026
    %v3031 = vmul.f32 %v2997, %v3020
    %v3032 = vmul.f32 %v2998, %v3030
    %v3034 = vperm.slane %v2987, 0
    %v3036 = vmul.f32 %v3031, %v3034
    %v3037 = vmul.f32 %v3032, %v3034
    %v3039 = vperm.slane %v2988, 0
    %v3041 = vadd.f32 %v3036, %v3039
    %v3042 = vadd.f32 %v3037, %v3039
    %v3043 = vld [vmem:[%s59] sm:$0xff]
    %v3044 = vld [vmem:[%s59 + $0x8] sm:$0xff]
    %v3045 = vld [vmem:[%s59 + $0x10] sm:$0xff]
    %v3046 = vld [vmem:[%s59 + $0x18] sm:$0xff]
    %v3047 = vld [vmem:[%s61] sm:$0x1]
    %v3048 = vld [vmem:[%s63] sm:$0xff]
    %v3049 = vld [vmem:[%s63 + $0x8] sm:$0xff]
    %v3050 = vld [vmem:[%s63 + $0x10] sm:$0xff]
    %v3051 = vld [vmem:[%s63 + $0x18] sm:$0xff]
    %v3052 = vld [vmem:[%s63 + $0x20] sm:$0xff]
    %v3053 = vld [vmem:[%s63 + $0x28] sm:$0xff]
    %v3054 = vld [vmem:[%s63 + $0x30] sm:$0xff]
    %v3055 = vld [vmem:[%s63 + $0x38] sm:$0xff]
    %v3056 = vld [vmem:[%s65] sm:$0x1]
    %v3057 = vpack.c.bf16 %v3042, %v3041
    %v3058 = vpack.c.bf16 %v3044, %v3043
    %v3059 = vpack.c.bf16 %v3046, %v3045
    %v3061 = vperm.slane %v3047, 0
    %v3064 = vsel %vm178, %v3057, 0
    %3066 = vmatpush.bf16.msra.mxu0 0
    %3067 = vmatpush.bf16.msra.mxu0 0
    %3068 = vmatpush.bf16.msra.mxu0 0
    %3069 = vmatpush.bf16.msra.mxu0 0
    %3070 = vmatpush.bf16.msra.mxu0 0
    %3071 = vmatpush.bf16.msra.mxu0 0
    %3072 = vmatpush.bf16.msra.mxu0 %v3059
    %3073 = vmatpush.bf16.msra.mxu0 %v3058
    %3074 = vmatmul.bf16.gmra.mxu0 %v3064
    %v3075 = vpop.f32.mrf.mxu0
    %v3076 = vadd.f32 %v3061, %v3075
    %v3077 = vpop.f32.mrf.mxu0
    %v3078 = vadd.f32 %v3061, %v3077
    %3079 = vdwg.mxu0
    %v3080 = vmax.f32 %v3076, 0.0
    %v3081 = vmax.f32 %v3078, 0.0
    %v3082 = vpack.c.bf16 %v3081, %v3080
    %v3083 = vpack.c.bf16 %v3049, %v3048
    %v3084 = vpack.c.bf16 %v3051, %v3050
    %v3085 = vpack.c.bf16 %v3053, %v3052
    %v3086 = vpack.c.bf16 %v3055, %v3054
    %v3088 = vperm.slane %v3056, 0
    %v3091 = vsel %vm903, %v3082, 0
    %3093 = vmatpush.bf16.msra.mxu0 0
    %3094 = vmatpush.bf16.msra.mxu0 0
    %3095 = vmatpush.bf16.msra.mxu0 0
    %3096 = vmatpush.bf16.msra.mxu0 0
    %3097 = vmatpush.bf16.msra.mxu0 %v3086
    %3098 = vmatpush.bf16.msra.mxu0 %v3085
    %3099 = vmatpush.bf16.msra.mxu0 %v3084
    %3100 = vmatpush.bf16.msra.mxu0 %v3083
    %3101 = vmatmul.bf16.gmra.mxu0 %v3091
    %v3102 = vpop.f32.mrf.mxu0
    %v3103 = vadd.f32 %v3088, %v3102
    %v3104 = vpop.f32.mrf.mxu0
    %v3105 = vadd.f32 %v3088, %v3104
    %3106 = vdwg.mxu0
    %v3107 = vadd.f32 %v2985, %v3103
    %v3108 = vadd.f32 %v2986, %v3105
    %s3109 = scalar_lea.vmem %s67, 1
    %v3110 = vld [vmem:[%s3109] sm:$0x1]
    %s3111 = scalar_lea.vmem %s69, 1
    %v3112 = vld [vmem:[%s3111] sm:$0x1]
    %v3113 = vsel %vm178, %v3107, 0.0
    %3114 = vadd.xlane.f32.xlu0 %v3113
    %v3115 = vpop.xlane.xlu0 %3114
    %v3116 = vsel %vm178, %v3108, 0.0
    %3117 = vadd.xlane.f32.xlu0 %v3116
    %v3118 = vpop.xlane.xlu0 %3117
    %v3119 = vmul.f32 %v3115, %v191
    %v3120 = vmul.f32 %v3118, %v191
    %v3121 = vsub.f32 %v3107, %v3119
    %v3122 = vsub.f32 %v3108, %v3120
    %v3123 = vmul.f32 %v3121, %v3121
    %v3124 = vmul.f32 %v3122, %v3122
    %v3125 = vsel %vm178, %v3123, 0.0
    %3126 = vadd.xlane.f32.xlu0 %v3125
    %v3127 = vpop.xlane.xlu0 %3126
    %v3128 = vsel %vm178, %v3124, 0.0
    %3129 = vadd.xlane.f32.xlu0 %v3128
    %v3130 = vpop.xlane.xlu0 %3129
    %v3131 = vmul.f32 %v3127, %v191
    %v3132 = vmul.f32 %v3130, %v191
    %v3133 = vadd.f32 %v3131, 1e-06
    %v3134 = vadd.f32 %v3132, 1e-06
    %v3135 = vrsqrt.pop %v3133
    %v3136 = vmul.f32 %v3135, %v3133
    %v3137 = vmul.f32 %v3136, %v3135
    %v3138 = vmul.f32 0.5, %v3137
    %v3139 = vsub.f32 1.5, %v3138
    %v3140 = vmul.f32 %v3135, %v3139
    %vm3141 = vweird.f32 %v3133
    %vm3142 = vweird.f32 %v3135
    %vm3143 = vmor %vm3141, %vm3142
    %v3144 = vsel %vm3143, %v3135, %v3140
    %v3145 = vrsqrt.pop %v3134
    %v3146 = vmul.f32 %v3145, %v3134
    %v3147 = vmul.f32 %v3146, %v3145
    %v3148 = vmul.f32 0.5, %v3147
    %v3149 = vsub.f32 1.5, %v3148
    %v3150 = vmul.f32 %v3145, %v3149
    %vm3151 = vweird.f32 %v3134
    %vm3152 = vweird.f32 %v3145
    %vm3153 = vmor %vm3151, %vm3152
    %v3154 = vsel %vm3153, %v3145, %v3150
    %v3155 = vmul.f32 %v3121, %v3144
    %v3156 = vmul.f32 %v3122, %v3154
    %v3158 = vperm.slane %v3110, 0
    %v3160 = vmul.f32 %v3155, %v3158
    %v3161 = vmul.f32 %v3156, %v3158
    %v3163 = vperm.slane %v3112, 0
    %v3165 = vadd.f32 %v3160, %v3163
    %v3166 = vadd.f32 %v3161, %v3163
    %s3167 = scalar_lea.vmem %s39, 32
    %v3168 = vld [vmem:[%s3167] sm:$0xff]
    %v3169 = vld [vmem:[%s3167 + $0x8] sm:$0xff]
    %v3170 = vld [vmem:[%s3167 + $0x10] sm:$0xff]
    %v3171 = vld [vmem:[%s3167 + $0x18] sm:$0xff]
    %s3172 = scalar_lea.vmem %s41, 1
    %v3173 = vld [vmem:[%s3172] sm:$0x1]
    %s3174 = scalar_lea.vmem %s43, 32
    %v3175 = vld [vmem:[%s3174] sm:$0xff]
    %v3176 = vld [vmem:[%s3174 + $0x8] sm:$0xff]
    %v3177 = vld [vmem:[%s3174 + $0x10] sm:$0xff]
    %v3178 = vld [vmem:[%s3174 + $0x18] sm:$0xff]
    %s3179 = scalar_lea.vmem %s45, 1
    %v3180 = vld [vmem:[%s3179] sm:$0x1]
    %v3181 = vpack.c.bf16 %v3166, %v3165
    %v3182 = vpack.c.bf16 %v3169, %v3168
    %v3183 = vpack.c.bf16 %v3171, %v3170
    %v3185 = vperm.slane %v3173, 0
    %v3188 = vsel %vm178, %v3181, 0
    %3190 = vmatpush.bf16.msra.mxu0 0
    %3191 = vmatpush.bf16.msra.mxu0 0
    %3192 = vmatpush.bf16.msra.mxu0 0
    %3193 = vmatpush.bf16.msra.mxu0 0
    %3194 = vmatpush.bf16.msra.mxu0 0
    %3195 = vmatpush.bf16.msra.mxu0 0
    %3196 = vmatpush.bf16.msra.mxu0 %v3183
    %3197 = vmatpush.bf16.msra.mxu0 %v3182
    %3198 = vmatmul.bf16.gmra.mxu0 %v3188
    %v3199 = vpop.f32.mrf.mxu0
    %v3200 = vadd.f32 %v3185, %v3199
    %v3201 = vpop.f32.mrf.mxu0
    %v3202 = vadd.f32 %v3185, %v3201
    %3203 = vdwg.mxu0
    %v3204 = vpack.c.bf16 %v3200, %v3200
    %v3205 = vpack.c.bf16 %v3202, %v3202
    %v3207 = vunpack.c.l.b16 %v3204
    %v3208 = vpack.c.b16 %v3207, %v3207
    %3209 = vrot.lane.b32.xlu0 %v3208, 96
    %v3210 = vpop.permute.xlu0 %3209
    %v3212 = vsel %vm280, %v3204, 0
    %v3215 = vsel %vm280, %v3210, 0
    %3217 = vmatpush.bf16.xpose.msra.mxu0 0
    %3218 = vmatpush.bf16.xpose.msra.mxu0 0
    %3219 = vmatpush.bf16.xpose.msra.mxu0 0
    %3220 = vmatpush.bf16.xpose.msra.mxu0 0
    %3221 = vmatpush.bf16.xpose.msra.mxu0 0
    %3222 = vmatpush.bf16.xpose.msra.mxu0 0
    %3223 = vmatpush.bf16.xpose.msra.mxu0 0
    %3224 = vmatpush.bf16.xpose.msra.mxu0 %v3215
    %3225 = vmatmul.bf16.gmra.mxu0 %v3212
    %v3226 = vpop.f32.mrf.mxu0
    %v3227 = vadd.f32 0.0, %v3226
    %v3228 = vpop.f32.mrf.mxu0
    %3229 = vdwg.mxu0
    %v3231 = vunpack.c.l.b16 %v3205
    %v3232 = vpack.c.b16 %v3231, %v3231
    %3233 = vrot.lane.b32.xlu0 %v3232, 96
    %v3234 = vpop.permute.xlu0 %3233
    %v3236 = vsel %vm280, %v3205, 0
    %v3239 = vsel %vm280, %v3234, 0
    %3241 = vmatpush.bf16.xpose.msra.mxu0 0
    %3242 = vmatpush.bf16.xpose.msra.mxu0 0
    %3243 = vmatpush.bf16.xpose.msra.mxu0 0
    %3244 = vmatpush.bf16.xpose.msra.mxu0 0
    %3245 = vmatpush.bf16.xpose.msra.mxu0 0
    %3246 = vmatpush.bf16.xpose.msra.mxu0 0
    %3247 = vmatpush.bf16.xpose.msra.mxu0 0
    %3248 = vmatpush.bf16.xpose.msra.mxu0 %v3239
    %3249 = vmatmul.bf16.gmra.mxu0 %v3236
    %v3250 = vpop.f32.mrf.mxu0
    %v3251 = vadd.f32 0.0, %v3250
    %v3252 = vpop.f32.mrf.mxu0
    %3253 = vdwg.mxu0
    %v3254 = vmul.f32 %v3227, 0.35355338
    %v3255 = vmul.f32 %v3251, 0.35355338
    %v3256 = vadd.f32 %v3254, %v1727
    %v3257 = vadd.f32 %v3255, %v1728
    %v3258 = vsel %vm280, %v3256, -inf
    %3259 = vmax.xlane.f32.xlu0 %v3258
    %v3260 = vpop.xlane.xlu0 %3259
    %v3261 = vsel %vm280, %v3257, -inf
    %3262 = vmax.xlane.f32.xlu0 %v3261
    %v3263 = vpop.xlane.xlu0 %3262
    %v3264 = vsub.f32 %v3256, %v3260
    %v3265 = vsub.f32 %v3257, %v3263
    %v3266 = vmul.f32 %v3264, 1.442695
    %v3267 = vpow.pop %v3266
    %v3268 = vmul.f32 %v3265, 1.442695
    %v3269 = vpow.pop %v3268
    %v3270 = vsel %vm280, %v3267, 0.0
    %3271 = vadd.xlane.f32.xlu0 %v3270
    %v3272 = vpop.xlane.xlu0 %3271
    %v3273 = vsel %vm280, %v3269, 0.0
    %3274 = vadd.xlane.f32.xlu0 %v3273
    %v3275 = vpop.xlane.xlu0 %3274
    %v3276 = vrcp.pop %v3272
    %v3277 = vrcp.pop %v3275
    %v3278 = vmul.f32 %v3267, %v3276
    %v3279 = vmul.f32 %v3269, %v3277
    %v3280 = vpack.c.bf16 %v3278, %v3278
    %v3281 = vpack.c.bf16 %v3279, %v3279
    %3282 = vrot.lane.b32.xlu0 %v3208, 64
    %v3283 = vpop.permute.xlu0 %3282
    %v3285 = vsel %vm280, %v3280, 0
    %v3288 = vsel %vm357, %v3283, 0
    %3290 = vmatpush.bf16.msra.mxu0 0
    %3291 = vmatpush.bf16.msra.mxu0 0
    %3292 = vmatpush.bf16.msra.mxu0 0
    %3293 = vmatpush.bf16.msra.mxu0 0
    %3294 = vmatpush.bf16.msra.mxu0 0
    %3295 = vmatpush.bf16.msra.mxu0 0
    %3296 = vmatpush.bf16.msra.mxu0 0
    %3297 = vmatpush.bf16.msra.mxu0 %v3288
    %3298 = vmatmul.bf16.gmra.mxu0 %v3285
    %v3299 = vpop.f32.mrf.mxu0
    %v3300 = vadd.f32 0.0, %v3299
    %v3301 = vpop.f32.mrf.mxu0
    %3302 = vdwg.mxu0
    %3303 = vrot.lane.b32.xlu0 %v3232, 64
    %v3304 = vpop.permute.xlu0 %3303
    %v3306 = vsel %vm280, %v3281, 0
    %v3309 = vsel %vm357, %v3304, 0
    %3311 = vmatpush.bf16.msra.mxu0 0
    %3312 = vmatpush.bf16.msra.mxu0 0
    %3313 = vmatpush.bf16.msra.mxu0 0
    %3314 = vmatpush.bf16.msra.mxu0 0
    %3315 = vmatpush.bf16.msra.mxu0 0
    %3316 = vmatpush.bf16.msra.mxu0 0
    %3317 = vmatpush.bf16.msra.mxu0 0
    %3318 = vmatpush.bf16.msra.mxu0 %v3309
    %3319 = vmatmul.bf16.gmra.mxu0 %v3306
    %v3320 = vpop.f32.mrf.mxu0
    %v3321 = vadd.f32 0.0, %v3320
    %v3322 = vpop.f32.mrf.mxu0
    %3323 = vdwg.mxu0
    %3324 = vrot.lane.b32.xlu0 %v3208, 120
    %v3325 = vpop.permute.xlu0 %3324
    %3326 = vrot.lane.b32.xlu0 %v3208, 88
    %v3327 = vpop.permute.xlu0 %3326
    %v3329 = vsel %vm280, %v3325, 0
    %v3332 = vsel %vm280, %v3327, 0
    %3334 = vmatpush.bf16.xpose.msra.mxu0 0
    %3335 = vmatpush.bf16.xpose.msra.mxu0 0
    %3336 = vmatpush.bf16.xpose.msra.mxu0 0
    %3337 = vmatpush.bf16.xpose.msra.mxu0 0
    %3338 = vmatpush.bf16.xpose.msra.mxu0 0
    %3339 = vmatpush.bf16.xpose.msra.mxu0 0
    %3340 = vmatpush.bf16.xpose.msra.mxu0 0
    %3341 = vmatpush.bf16.xpose.msra.mxu0 %v3332
    %3342 = vmatmul.bf16.gmra.mxu0 %v3329
    %v3343 = vpop.f32.mrf.mxu0
    %v3344 = vadd.f32 0.0, %v3343
    %v3345 = vpop.f32.mrf.mxu0
    %3346 = vdwg.mxu0
    %3347 = vrot.lane.b32.xlu0 %v3232, 120
    %v3348 = vpop.permute.xlu0 %3347
    %3349 = vrot.lane.b32.xlu0 %v3232, 88
    %v3350 = vpop.permute.xlu0 %3349
    %v3352 = vsel %vm280, %v3348, 0
    %v3355 = vsel %vm280, %v3350, 0
    %3357 = vmatpush.bf16.xpose.msra.mxu0 0
    %3358 = vmatpush.bf16.xpose.msra.mxu0 0
    %3359 = vmatpush.bf16.xpose.msra.mxu0 0
    %3360 = vmatpush.bf16.xpose.msra.mxu0 0
    %3361 = vmatpush.bf16.xpose.msra.mxu0 0
    %3362 = vmatpush.bf16.xpose.msra.mxu0 0
    %3363 = vmatpush.bf16.xpose.msra.mxu0 0
    %3364 = vmatpush.bf16.xpose.msra.mxu0 %v3355
    %3365 = vmatmul.bf16.gmra.mxu0 %v3352
    %v3366 = vpop.f32.mrf.mxu0
    %v3367 = vadd.f32 0.0, %v3366
    %v3368 = vpop.f32.mrf.mxu0
    %3369 = vdwg.mxu0
    %v3370 = vmul.f32 %v3344, 0.35355338
    %v3371 = vmul.f32 %v3367, 0.35355338
    %v3372 = vadd.f32 %v3370, %v1727
    %v3373 = vadd.f32 %v3371, %v1728
    %v3374 = vsel %vm280, %v3372, -inf
    %3375 = vmax.xlane.f32.xlu0 %v3374
    %v3376 = vpop.xlane.xlu0 %3375
    %v3377 = vsel %vm280, %v3373, -inf
    %3378 = vmax.xlane.f32.xlu0 %v3377
    %v3379 = vpop.xlane.xlu0 %3378
    %v3380 = vsub.f32 %v3372, %v3376
    %v3381 = vsub.f32 %v3373, %v3379
    %v3382 = vmul.f32 %v3380, 1.442695
    %v3383 = vpow.pop %v3382
    %v3384 = vmul.f32 %v3381, 1.442695
    %v3385 = vpow.pop %v3384
    %v3386 = vsel %vm280, %v3383, 0.0
    %3387 = vadd.xlane.f32.xlu0 %v3386
    %v3388 = vpop.xlane.xlu0 %3387
    %v3389 = vsel %vm280, %v3385, 0.0
    %3390 = vadd.xlane.f32.xlu0 %v3389
    %v3391 = vpop.xlane.xlu0 %3390
    %v3392 = vrcp.pop %v3388
    %v3393 = vrcp.pop %v3391
    %v3394 = vmul.f32 %v3383, %v3392
    %v3395 = vmul.f32 %v3385, %v3393
    %v3396 = vpack.c.bf16 %v3394, %v3394
    %v3397 = vpack.c.bf16 %v3395, %v3395
    %3398 = vrot.lane.b32.xlu0 %v3208, 56
    %v3399 = vpop.permute.xlu0 %3398
    %v3401 = vsel %vm280, %v3396, 0
    %v3404 = vsel %vm357, %v3399, 0
    %3406 = vmatpush.bf16.msra.mxu0 0
    %3407 = vmatpush.bf16.msra.mxu0 0
    %3408 = vmatpush.bf16.msra.mxu0 0
    %3409 = vmatpush.bf16.msra.mxu0 0
    %3410 = vmatpush.bf16.msra.mxu0 0
    %3411 = vmatpush.bf16.msra.mxu0 0
    %3412 = vmatpush.bf16.msra.mxu0 0
    %3413 = vmatpush.bf16.msra.mxu0 %v3404
    %3414 = vmatmul.bf16.gmra.mxu0 %v3401
    %v3415 = vpop.f32.mrf.mxu0
    %v3416 = vadd.f32 0.0, %v3415
    %v3417 = vpop.f32.mrf.mxu0
    %3418 = vdwg.mxu0
    %3419 = vrot.lane.b32.xlu0 %v3232, 56
    %v3420 = vpop.permute.xlu0 %3419
    %v3422 = vsel %vm280, %v3397, 0
    %v3425 = vsel %vm357, %v3420, 0
    %3427 = vmatpush.bf16.msra.mxu0 0
    %3428 = vmatpush.bf16.msra.mxu0 0
    %3429 = vmatpush.bf16.msra.mxu0 0
    %3430 = vmatpush.bf16.msra.mxu0 0
    %3431 = vmatpush.bf16.msra.mxu0 0
    %3432 = vmatpush.bf16.msra.mxu0 0
    %3433 = vmatpush.bf16.msra.mxu0 0
    %3434 = vmatpush.bf16.msra.mxu0 %v3425
    %3435 = vmatmul.bf16.gmra.mxu0 %v3422
    %v3436 = vpop.f32.mrf.mxu0
    %v3437 = vadd.f32 0.0, %v3436
    %v3438 = vpop.f32.mrf.mxu0
    %3439 = vdwg.mxu0
    %3440 = vrot.lane.b32.xlu0 %v3208, 112
    %v3441 = vpop.permute.xlu0 %3440
    %3442 = vrot.lane.b32.xlu0 %v3208, 80
    %v3443 = vpop.permute.xlu0 %3442
    %v3445 = vsel %vm280, %v3441, 0
    %v3448 = vsel %vm280, %v3443, 0
    %3450 = vmatpush.bf16.xpose.msra.mxu0 0
    %3451 = vmatpush.bf16.xpose.msra.mxu0 0
    %3452 = vmatpush.bf16.xpose.msra.mxu0 0
    %3453 = vmatpush.bf16.xpose.msra.mxu0 0
    %3454 = vmatpush.bf16.xpose.msra.mxu0 0
    %3455 = vmatpush.bf16.xpose.msra.mxu0 0
    %3456 = vmatpush.bf16.xpose.msra.mxu0 0
    %3457 = vmatpush.bf16.xpose.msra.mxu0 %v3448
    %3458 = vmatmul.bf16.gmra.mxu0 %v3445
    %v3459 = vpop.f32.mrf.mxu0
    %v3460 = vadd.f32 0.0, %v3459
    %v3461 = vpop.f32.mrf.mxu0
    %3462 = vdwg.mxu0
    %3463 = vrot.lane.b32.xlu0 %v3232, 112
    %v3464 = vpop.permute.xlu0 %3463
    %3465 = vrot.lane.b32.xlu0 %v3232, 80
    %v3466 = vpop.permute.xlu0 %3465
    %v3468 = vsel %vm280, %v3464, 0
    %v3471 = vsel %vm280, %v3466, 0
    %3473 = vmatpush.bf16.xpose.msra.mxu0 0
    %3474 = vmatpush.bf16.xpose.msra.mxu0 0
    %3475 = vmatpush.bf16.xpose.msra.mxu0 0
    %3476 = vmatpush.bf16.xpose.msra.mxu0 0
    %3477 = vmatpush.bf16.xpose.msra.mxu0 0
    %3478 = vmatpush.bf16.xpose.msra.mxu0 0
    %3479 = vmatpush.bf16.xpose.msra.mxu0 0
    %3480 = vmatpush.bf16.xpose.msra.mxu0 %v3471
    %3481 = vmatmul.bf16.gmra.mxu0 %v3468
    %v3482 = vpop.f32.mrf.mxu0
    %v3483 = vadd.f32 0.0, %v3482
    %v3484 = vpop.f32.mrf.mxu0
    %3485 = vdwg.mxu0
    %v3486 = vmul.f32 %v3460, 0.35355338
    %v3487 = vmul.f32 %v3483, 0.35355338
    %v3488 = vadd.f32 %v3486, %v1727
    %v3489 = vadd.f32 %v3487, %v1728
    %v3490 = vsel %vm280, %v3488, -inf
    %3491 = vmax.xlane.f32.xlu0 %v3490
    %v3492 = vpop.xlane.xlu0 %3491
    %v3493 = vsel %vm280, %v3489, -inf
    %3494 = vmax.xlane.f32.xlu0 %v3493
    %v3495 = vpop.xlane.xlu0 %3494
    %v3496 = vsub.f32 %v3488, %v3492
    %v3497 = vsub.f32 %v3489, %v3495
    %v3498 = vmul.f32 %v3496, 1.442695
    %v3499 = vpow.pop %v3498
    %v3500 = vmul.f32 %v3497, 1.442695
    %v3501 = vpow.pop %v3500
    %v3502 = vsel %vm280, %v3499, 0.0
    %3503 = vadd.xlane.f32.xlu0 %v3502
    %v3504 = vpop.xlane.xlu0 %3503
    %v3505 = vsel %vm280, %v3501, 0.0
    %3506 = vadd.xlane.f32.xlu0 %v3505
    %v3507 = vpop.xlane.xlu0 %3506
    %v3508 = vrcp.pop %v3504
    %v3509 = vrcp.pop %v3507
    %v3510 = vmul.f32 %v3499, %v3508
    %v3511 = vmul.f32 %v3501, %v3509
    %v3512 = vpack.c.bf16 %v3510, %v3510
    %v3513 = vpack.c.bf16 %v3511, %v3511
    %3514 = vrot.lane.b32.xlu0 %v3208, 48
    %v3515 = vpop.permute.xlu0 %3514
    %v3517 = vsel %vm280, %v3512, 0
    %v3520 = vsel %vm357, %v3515, 0
    %3522 = vmatpush.bf16.msra.mxu0 0
    %3523 = vmatpush.bf16.msra.mxu0 0
    %3524 = vmatpush.bf16.msra.mxu0 0
    %3525 = vmatpush.bf16.msra.mxu0 0
    %3526 = vmatpush.bf16.msra.mxu0 0
    %3527 = vmatpush.bf16.msra.mxu0 0
    %3528 = vmatpush.bf16.msra.mxu0 0
    %3529 = vmatpush.bf16.msra.mxu0 %v3520
    %3530 = vmatmul.bf16.gmra.mxu0 %v3517
    %v3531 = vpop.f32.mrf.mxu0
    %v3532 = vadd.f32 0.0, %v3531
    %v3533 = vpop.f32.mrf.mxu0
    %3534 = vdwg.mxu0
    %3535 = vrot.lane.b32.xlu0 %v3232, 48
    %v3536 = vpop.permute.xlu0 %3535
    %v3538 = vsel %vm280, %v3513, 0
    %v3541 = vsel %vm357, %v3536, 0
    %3543 = vmatpush.bf16.msra.mxu0 0
    %3544 = vmatpush.bf16.msra.mxu0 0
    %3545 = vmatpush.bf16.msra.mxu0 0
    %3546 = vmatpush.bf16.msra.mxu0 0
    %3547 = vmatpush.bf16.msra.mxu0 0
    %3548 = vmatpush.bf16.msra.mxu0 0
    %3549 = vmatpush.bf16.msra.mxu0 0
    %3550 = vmatpush.bf16.msra.mxu0 %v3541
    %3551 = vmatmul.bf16.gmra.mxu0 %v3538
    %v3552 = vpop.f32.mrf.mxu0
    %v3553 = vadd.f32 0.0, %v3552
    %v3554 = vpop.f32.mrf.mxu0
    %3555 = vdwg.mxu0
    %3556 = vrot.lane.b32.xlu0 %v3208, 104
    %v3557 = vpop.permute.xlu0 %3556
    %3558 = vrot.lane.b32.xlu0 %v3208, 72
    %v3559 = vpop.permute.xlu0 %3558
    %v3561 = vsel %vm280, %v3557, 0
    %v3564 = vsel %vm280, %v3559, 0
    %3566 = vmatpush.bf16.xpose.msra.mxu0 0
    %3567 = vmatpush.bf16.xpose.msra.mxu0 0
    %3568 = vmatpush.bf16.xpose.msra.mxu0 0
    %3569 = vmatpush.bf16.xpose.msra.mxu0 0
    %3570 = vmatpush.bf16.xpose.msra.mxu0 0
    %3571 = vmatpush.bf16.xpose.msra.mxu0 0
    %3572 = vmatpush.bf16.xpose.msra.mxu0 0
    %3573 = vmatpush.bf16.xpose.msra.mxu0 %v3564
    %3574 = vmatmul.bf16.gmra.mxu0 %v3561
    %v3575 = vpop.f32.mrf.mxu0
    %v3576 = vadd.f32 0.0, %v3575
    %v3577 = vpop.f32.mrf.mxu0
    %3578 = vdwg.mxu0
    %3579 = vrot.lane.b32.xlu0 %v3232, 104
    %v3580 = vpop.permute.xlu0 %3579
    %3581 = vrot.lane.b32.xlu0 %v3232, 72
    %v3582 = vpop.permute.xlu0 %3581
    %v3584 = vsel %vm280, %v3580, 0
    %v3587 = vsel %vm280, %v3582, 0
    %3589 = vmatpush.bf16.xpose.msra.mxu0 0
    %3590 = vmatpush.bf16.xpose.msra.mxu0 0
    %3591 = vmatpush.bf16.xpose.msra.mxu0 0
    %3592 = vmatpush.bf16.xpose.msra.mxu0 0
    %3593 = vmatpush.bf16.xpose.msra.mxu0 0
    %3594 = vmatpush.bf16.xpose.msra.mxu0 0
    %3595 = vmatpush.bf16.xpose.msra.mxu0 0
    %3596 = vmatpush.bf16.xpose.msra.mxu0 %v3587
    %3597 = vmatmul.bf16.gmra.mxu0 %v3584
    %v3598 = vpop.f32.mrf.mxu0
    %v3599 = vadd.f32 0.0, %v3598
    %v3600 = vpop.f32.mrf.mxu0
    %3601 = vdwg.mxu0
    %v3602 = vmul.f32 %v3576, 0.35355338
    %v3603 = vmul.f32 %v3599, 0.35355338
    %v3604 = vadd.f32 %v3602, %v1727
    %v3605 = vadd.f32 %v3603, %v1728
    %v3606 = vsel %vm280, %v3604, -inf
    %3607 = vmax.xlane.f32.xlu0 %v3606
    %v3608 = vpop.xlane.xlu0 %3607
    %v3609 = vsel %vm280, %v3605, -inf
    %3610 = vmax.xlane.f32.xlu0 %v3609
    %v3611 = vpop.xlane.xlu0 %3610
    %v3612 = vsub.f32 %v3604, %v3608
    %v3613 = vsub.f32 %v3605, %v3611
    %v3614 = vmul.f32 %v3612, 1.442695
    %v3615 = vpow.pop %v3614
    %v3616 = vmul.f32 %v3613, 1.442695
    %v3617 = vpow.pop %v3616
    %v3618 = vsel %vm280, %v3615, 0.0
    %3619 = vadd.xlane.f32.xlu0 %v3618
    %v3620 = vpop.xlane.xlu0 %3619
    %v3621 = vsel %vm280, %v3617, 0.0
    %3622 = vadd.xlane.f32.xlu0 %v3621
    %v3623 = vpop.xlane.xlu0 %3622
    %v3624 = vrcp.pop %v3620
    %v3625 = vrcp.pop %v3623
    %v3626 = vmul.f32 %v3615, %v3624
    %v3627 = vmul.f32 %v3617, %v3625
    %v3628 = vpack.c.bf16 %v3626, %v3626
    %v3629 = vpack.c.bf16 %v3627, %v3627
    %3630 = vrot.lane.b32.xlu0 %v3208, 40
    %v3631 = vpop.permute.xlu0 %3630
    %v3633 = vsel %vm280, %v3628, 0
    %v3636 = vsel %vm357, %v3631, 0
    %3638 = vmatpush.bf16.msra.mxu0 0
    %3639 = vmatpush.bf16.msra.mxu0 0
    %3640 = vmatpush.bf16.msra.mxu0 0
    %3641 = vmatpush.bf16.msra.mxu0 0
    %3642 = vmatpush.bf16.msra.mxu0 0
    %3643 = vmatpush.bf16.msra.mxu0 0
    %3644 = vmatpush.bf16.msra.mxu0 0
    %3645 = vmatpush.bf16.msra.mxu0 %v3636
    %3646 = vmatmul.bf16.gmra.mxu0 %v3633
    %v3647 = vpop.f32.mrf.mxu0
    %v3648 = vadd.f32 0.0, %v3647
    %v3649 = vpop.f32.mrf.mxu0
    %3650 = vdwg.mxu0
    %3651 = vrot.lane.b32.xlu0 %v3232, 40
    %v3652 = vpop.permute.xlu0 %3651
    %v3654 = vsel %vm280, %v3629, 0
    %v3657 = vsel %vm357, %v3652, 0
    %3659 = vmatpush.bf16.msra.mxu0 0
    %3660 = vmatpush.bf16.msra.mxu0 0
    %3661 = vmatpush.bf16.msra.mxu0 0
    %3662 = vmatpush.bf16.msra.mxu0 0
    %3663 = vmatpush.bf16.msra.mxu0 0
    %3664 = vmatpush.bf16.msra.mxu0 0
    %3665 = vmatpush.bf16.msra.mxu0 0
    %3666 = vmatpush.bf16.msra.mxu0 %v3657
    %3667 = vmatmul.bf16.gmra.mxu0 %v3654
    %v3668 = vpop.f32.mrf.mxu0
    %v3669 = vadd.f32 0.0, %v3668
    %v3670 = vpop.f32.mrf.mxu0
    %3671 = vdwg.mxu0
    %3674 = vrot.lane.b32.xlu0 %v3416, 8
    %v3675 = vpop.permute.xlu0 %3674
    %3676 = vrot.lane.b32.xlu0 %v3437, 8
    %v3677 = vpop.permute.xlu0 %3676
    %3682 = vrot.lane.b32.xlu0 %v3532, 16
    %v3683 = vpop.permute.xlu0 %3682
    %3684 = vrot.lane.b32.xlu0 %v3553, 16
    %v3685 = vpop.permute.xlu0 %3684
    %3690 = vrot.lane.b32.xlu0 %v3648, 24
    %v3691 = vpop.permute.xlu0 %3690
    %3692 = vrot.lane.b32.xlu0 %v3669, 24
    %v3693 = vpop.permute.xlu0 %3692
    %v3696 = vsel %vm280, %v3300, %v3675
    %v3697 = vsel %vm280, %v3321, %v3677
    %v3698 = vsel %vm769, %v3696, %v3683
    %v3699 = vsel %vm769, %v3697, %v3685
    %v3700 = vsel %vm772, %v3698, %v3691
    %v3701 = vsel %vm772, %v3699, %v3693
    %v3702 = vpack.c.bf16 %v3701, %v3700
    %v3703 = vpack.c.bf16 %v3176, %v3175
    %v3704 = vpack.c.bf16 %v3178, %v3177
    %v3706 = vperm.slane %v3180, 0
    %v3709 = vsel %vm178, %v3702, 0
    %3711 = vmatpush.bf16.msra.mxu0 0
    %3712 = vmatpush.bf16.msra.mxu0 0
    %3713 = vmatpush.bf16.msra.mxu0 0
    %3714 = vmatpush.bf16.msra.mxu0 0
    %3715 = vmatpush.bf16.msra.mxu0 0
    %3716 = vmatpush.bf16.msra.mxu0 0
    %3717 = vmatpush.bf16.msra.mxu0 %v3704
    %3718 = vmatpush.bf16.msra.mxu0 %v3703
    %3719 = vmatmul.bf16.gmra.mxu0 %v3709
    %v3720 = vpop.f32.mrf.mxu0
    %v3721 = vadd.f32 %v3706, %v3720
    %v3722 = vpop.f32.mrf.mxu0
    %v3723 = vadd.f32 %v3706, %v3722
    %3724 = vdwg.mxu0
    %v3725 = vadd.f32 %v3107, %v3721
    %v3726 = vadd.f32 %v3108, %v3723
    %s3727 = scalar_lea.vmem %s71, 1
    %v3728 = vld [vmem:[%s3727] sm:$0x1]
    %s3729 = scalar_lea.vmem %s73, 1
    %v3730 = vld [vmem:[%s3729] sm:$0x1]
    %v3731 = vsel %vm178, %v3725, 0.0
    %3732 = vadd.xlane.f32.xlu0 %v3731
    %v3733 = vpop.xlane.xlu0 %3732
    %v3734 = vsel %vm178, %v3726, 0.0
    %3735 = vadd.xlane.f32.xlu0 %v3734
    %v3736 = vpop.xlane.xlu0 %3735
    %v3737 = vmul.f32 %v3733, %v191
    %v3738 = vmul.f32 %v3736, %v191
    %v3739 = vsub.f32 %v3725, %v3737
    %v3740 = vsub.f32 %v3726, %v3738
    %v3741 = vmul.f32 %v3739, %v3739
    %v3742 = vmul.f32 %v3740, %v3740
    %v3743 = vsel %vm178, %v3741, 0.0
    %3744 = vadd.xlane.f32.xlu0 %v3743
    %v3745 = vpop.xlane.xlu0 %3744
    %v3746 = vsel %vm178, %v3742, 0.0
    %3747 = vadd.xlane.f32.xlu0 %v3746
    %v3748 = vpop.xlane.xlu0 %3747
    %v3749 = vmul.f32 %v3745, %v191
    %v3750 = vmul.f32 %v3748, %v191
    %v3751 = vadd.f32 %v3749, 1e-06
    %v3752 = vadd.f32 %v3750, 1e-06
    %v3753 = vrsqrt.pop %v3751
    %v3754 = vmul.f32 %v3753, %v3751
    %v3755 = vmul.f32 %v3754, %v3753
    %v3756 = vmul.f32 0.5, %v3755
    %v3757 = vsub.f32 1.5, %v3756
    %v3758 = vmul.f32 %v3753, %v3757
    %vm3759 = vweird.f32 %v3751
    %vm3760 = vweird.f32 %v3753
    %vm3761 = vmor %vm3759, %vm3760
    %v3762 = vsel %vm3761, %v3753, %v3758
    %v3763 = vrsqrt.pop %v3752
    %v3764 = vmul.f32 %v3763, %v3752
    %v3765 = vmul.f32 %v3764, %v3763
    %v3766 = vmul.f32 0.5, %v3765
    %v3767 = vsub.f32 1.5, %v3766
    %v3768 = vmul.f32 %v3763, %v3767
    %vm3769 = vweird.f32 %v3752
    %vm3770 = vweird.f32 %v3763
    %vm3771 = vmor %vm3769, %vm3770
    %v3772 = vsel %vm3771, %v3763, %v3768
    %v3773 = vmul.f32 %v3739, %v3762
    %v3774 = vmul.f32 %v3740, %v3772
    %v3776 = vperm.slane %v3728, 0
    %v3778 = vmul.f32 %v3773, %v3776
    %v3779 = vmul.f32 %v3774, %v3776
    %v3781 = vperm.slane %v3730, 0
    %v3783 = vadd.f32 %v3778, %v3781
    %v3784 = vadd.f32 %v3779, %v3781
    %s3785 = scalar_lea.vmem %s47, 32
    %v3786 = vld [vmem:[%s3785] sm:$0xff]
    %v3787 = vld [vmem:[%s3785 + $0x8] sm:$0xff]
    %v3788 = vld [vmem:[%s3785 + $0x10] sm:$0xff]
    %v3789 = vld [vmem:[%s3785 + $0x18] sm:$0xff]
    %s3790 = scalar_lea.vmem %s49, 1
    %v3791 = vld [vmem:[%s3790] sm:$0x1]
    %s3792 = scalar_lea.vmem %s51, 32
    %v3793 = vld [vmem:[%s3792] sm:$0xff]
    %v3794 = vld [vmem:[%s3792 + $0x8] sm:$0xff]
    %v3795 = vld [vmem:[%s3792 + $0x10] sm:$0xff]
    %v3796 = vld [vmem:[%s3792 + $0x18] sm:$0xff]
    %s3797 = scalar_lea.vmem %s53, 1
    %v3798 = vld [vmem:[%s3797] sm:$0x1]
    %s3799 = scalar_lea.vmem %s55, 32
    %v3800 = vld [vmem:[%s3799] sm:$0xff]
    %v3801 = vld [vmem:[%s3799 + $0x8] sm:$0xff]
    %v3802 = vld [vmem:[%s3799 + $0x10] sm:$0xff]
    %v3803 = vld [vmem:[%s3799 + $0x18] sm:$0xff]
    %s3804 = scalar_lea.vmem %s57, 1
    %v3805 = vld [vmem:[%s3804] sm:$0x1]
    %v3806 = vpack.c.bf16 %v3784, %v3783
    %v3807 = vpack.c.bf16 %v3787, %v3786
    %v3808 = vpack.c.bf16 %v3789, %v3788
    %v3810 = vperm.slane %v3791, 0
    %v3813 = vsel %vm178, %v3806, 0
    %3815 = vmatpush.bf16.msra.mxu0 0
    %3816 = vmatpush.bf16.msra.mxu0 0
    %3817 = vmatpush.bf16.msra.mxu0 0
    %3818 = vmatpush.bf16.msra.mxu0 0
    %3819 = vmatpush.bf16.msra.mxu0 0
    %3820 = vmatpush.bf16.msra.mxu0 0
    %3821 = vmatpush.bf16.msra.mxu0 %v3808
    %3822 = vmatpush.bf16.msra.mxu0 %v3807
    %3823 = vmatmul.bf16.gmra.mxu0 %v3813
    %v3824 = vpop.f32.mrf.mxu0
    %v3825 = vadd.f32 %v3810, %v3824
    %v3826 = vpop.f32.mrf.mxu0
    %v3827 = vadd.f32 %v3810, %v3826
    %3828 = vdwg.mxu0
    %v3829 = vpack.c.bf16 %v3794, %v3793
    %v3830 = vpack.c.bf16 %v3796, %v3795
    %v3832 = vperm.slane %v3798, 0
    %3834 = vmatpush.bf16.msra.mxu0 0
    %3835 = vmatpush.bf16.msra.mxu0 0
    %3836 = vmatpush.bf16.msra.mxu0 0
    %3837 = vmatpush.bf16.msra.mxu0 0
    %3838 = vmatpush.bf16.msra.mxu0 0
    %3839 = vmatpush.bf16.msra.mxu0 0
    %3840 = vmatpush.bf16.msra.mxu0 %v3830
    %3841 = vmatpush.bf16.msra.mxu0 %v3829
    %3842 = vmatmul.bf16.gmra.mxu0 %v2444
    %v3843 = vpop.f32.mrf.mxu0
    %v3844 = vadd.f32 %v3832, %v3843
    %v3845 = vpop.f32.mrf.mxu0
    %v3846 = vadd.f32 %v3832, %v3845
    %3847 = vdwg.mxu0
    %v3848 = vpack.c.bf16 %v3825, %v3825
    %v3849 = vpack.c.bf16 %v3827, %v3827
    %v3850 = vpack.c.bf16 %v3844, %v3844
    %v3851 = vpack.c.bf16 %v3846, %v3846
    %v3853 = vsel %vm280, %v3848, 0
    %v3856 = vsel %vm280, %v3850, 0
    %3858 = vmatpush.bf16.xpose.msra.mxu0 0
    %3859 = vmatpush.bf16.xpose.msra.mxu0 0
    %3860 = vmatpush.bf16.xpose.msra.mxu0 0
    %3861 = vmatpush.bf16.xpose.msra.mxu0 0
    %3862 = vmatpush.bf16.xpose.msra.mxu0 0
    %3863 = vmatpush.bf16.xpose.msra.mxu0 0
    %3864 = vmatpush.bf16.xpose.msra.mxu0 0
    %3865 = vmatpush.bf16.xpose.msra.mxu0 %v3856
    %3866 = vmatmul.bf16.gmra.mxu0 %v3853
    %v3867 = vpop.f32.mrf.mxu0
    %v3868 = vadd.f32 0.0, %v3867
    %v3869 = vpop.f32.mrf.mxu0
    %3870 = vdwg.mxu0
    %v3872 = vsel %vm280, %v3849, 0
    %v3875 = vsel %vm280, %v3851, 0
    %3877 = vmatpush.bf16.xpose.msra.mxu0 0
    %3878 = vmatpush.bf16.xpose.msra.mxu0 0
    %3879 = vmatpush.bf16.xpose.msra.mxu0 0
    %3880 = vmatpush.bf16.xpose.msra.mxu0 0
    %3881 = vmatpush.bf16.xpose.msra.mxu0 0
    %3882 = vmatpush.bf16.xpose.msra.mxu0 0
    %3883 = vmatpush.bf16.xpose.msra.mxu0 0
    %3884 = vmatpush.bf16.xpose.msra.mxu0 %v3875
    %3885 = vmatmul.bf16.gmra.mxu0 %v3872
    %v3886 = vpop.f32.mrf.mxu0
    %v3887 = vadd.f32 0.0, %v3886
    %v3888 = vpop.f32.mrf.mxu0
    %3889 = vdwg.mxu0
    %v3890 = vmul.f32 %v3868, 0.35355338
    %v3891 = vmul.f32 %v3887, 0.35355338
    %v3892 = vadd.f32 %v3890, %v1729
    %v3893 = vadd.f32 %v3891, %v1730
    %v3894 = vsel %vm280, %v3892, -inf
    %3895 = vmax.xlane.f32.xlu0 %v3894
    %v3896 = vpop.xlane.xlu0 %3895
    %v3897 = vsel %vm280, %v3893, -inf
    %3898 = vmax.xlane.f32.xlu0 %v3897
    %v3899 = vpop.xlane.xlu0 %3898
    %v3900 = vsub.f32 %v3892, %v3896
    %v3901 = vsub.f32 %v3893, %v3899
    %v3902 = vmul.f32 %v3900, 1.442695
    %v3903 = vpow.pop %v3902
    %v3904 = vmul.f32 %v3901, 1.442695
    %v3905 = vpow.pop %v3904
    %v3906 = vsel %vm280, %v3903, 0.0
    %3907 = vadd.xlane.f32.xlu0 %v3906
    %v3908 = vpop.xlane.xlu0 %3907
    %v3909 = vsel %vm280, %v3905, 0.0
    %3910 = vadd.xlane.f32.xlu0 %v3909
    %v3911 = vpop.xlane.xlu0 %3910
    %v3912 = vrcp.pop %v3908
    %v3913 = vrcp.pop %v3911
    %v3914 = vmul.f32 %v3903, %v3912
    %v3915 = vmul.f32 %v3905, %v3913
    %v3916 = vpack.c.bf16 %v3914, %v3914
    %v3917 = vpack.c.bf16 %v3915, %v3915
    %v3919 = vunpack.c.l.b16 %v3850
    %v3920 = vpack.c.b16 %v3919, %v3919
    %3921 = vrot.lane.b32.xlu0 %v3920, 96
    %v3922 = vpop.permute.xlu0 %3921
    %v3924 = vsel %vm280, %v3916, 0
    %v3927 = vsel %vm357, %v3922, 0
    %3929 = vmatpush.bf16.msra.mxu0 0
    %3930 = vmatpush.bf16.msra.mxu0 0
    %3931 = vmatpush.bf16.msra.mxu0 0
    %3932 = vmatpush.bf16.msra.mxu0 0
    %3933 = vmatpush.bf16.msra.mxu0 0
    %3934 = vmatpush.bf16.msra.mxu0 0
    %3935 = vmatpush.bf16.msra.mxu0 0
    %3936 = vmatpush.bf16.msra.mxu0 %v3927
    %3937 = vmatmul.bf16.gmra.mxu0 %v3924
    %v3938 = vpop.f32.mrf.mxu0
    %v3939 = vadd.f32 0.0, %v3938
    %v3940 = vpop.f32.mrf.mxu0
    %3941 = vdwg.mxu0
    %v3943 = vunpack.c.l.b16 %v3851
    %v3944 = vpack.c.b16 %v3943, %v3943
    %3945 = vrot.lane.b32.xlu0 %v3944, 96
    %v3946 = vpop.permute.xlu0 %3945
    %v3948 = vsel %vm280, %v3917, 0
    %v3951 = vsel %vm357, %v3946, 0
    %3953 = vmatpush.bf16.msra.mxu0 0
    %3954 = vmatpush.bf16.msra.mxu0 0
    %3955 = vmatpush.bf16.msra.mxu0 0
    %3956 = vmatpush.bf16.msra.mxu0 0
    %3957 = vmatpush.bf16.msra.mxu0 0
    %3958 = vmatpush.bf16.msra.mxu0 0
    %3959 = vmatpush.bf16.msra.mxu0 0
    %3960 = vmatpush.bf16.msra.mxu0 %v3951
    %3961 = vmatmul.bf16.gmra.mxu0 %v3948
    %v3962 = vpop.f32.mrf.mxu0
    %v3963 = vadd.f32 0.0, %v3962
    %v3964 = vpop.f32.mrf.mxu0
    %3965 = vdwg.mxu0
    %v3967 = vunpack.c.l.b16 %v3848
    %v3968 = vpack.c.b16 %v3967, %v3967
    %3969 = vrot.lane.b32.xlu0 %v3968, 120
    %v3970 = vpop.permute.xlu0 %3969
    %3971 = vrot.lane.b32.xlu0 %v3920, 120
    %v3972 = vpop.permute.xlu0 %3971
    %v3974 = vsel %vm280, %v3970, 0
    %v3977 = vsel %vm280, %v3972, 0
    %3979 = vmatpush.bf16.xpose.msra.mxu0 0
    %3980 = vmatpush.bf16.xpose.msra.mxu0 0
    %3981 = vmatpush.bf16.xpose.msra.mxu0 0
    %3982 = vmatpush.bf16.xpose.msra.mxu0 0
    %3983 = vmatpush.bf16.xpose.msra.mxu0 0
    %3984 = vmatpush.bf16.xpose.msra.mxu0 0
    %3985 = vmatpush.bf16.xpose.msra.mxu0 0
    %3986 = vmatpush.bf16.xpose.msra.mxu0 %v3977
    %3987 = vmatmul.bf16.gmra.mxu0 %v3974
    %v3988 = vpop.f32.mrf.mxu0
    %v3989 = vadd.f32 0.0, %v3988
    %v3990 = vpop.f32.mrf.mxu0
    %3991 = vdwg.mxu0
    %v3993 = vunpack.c.l.b16 %v3849
    %v3994 = vpack.c.b16 %v3993, %v3993
    %3995 = vrot.lane.b32.xlu0 %v3994, 120
    %v3996 = vpop.permute.xlu0 %3995
    %3997 = vrot.lane.b32.xlu0 %v3944, 120
    %v3998 = vpop.permute.xlu0 %3997
    %v4000 = vsel %vm280, %v3996, 0
    %v4003 = vsel %vm280, %v3998, 0
    %4005 = vmatpush.bf16.xpose.msra.mxu0 0
    %4006 = vmatpush.bf16.xpose.msra.mxu0 0
    %4007 = vmatpush.bf16.xpose.msra.mxu0 0
    %4008 = vmatpush.bf16.xpose.msra.mxu0 0
    %4009 = vmatpush.bf16.xpose.msra.mxu0 0
    %4010 = vmatpush.bf16.xpose.msra.mxu0 0
    %4011 = vmatpush.bf16.xpose.msra.mxu0 0
    %4012 = vmatpush.bf16.xpose.msra.mxu0 %v4003
    %4013 = vmatmul.bf16.gmra.mxu0 %v4000
    %v4014 = vpop.f32.mrf.mxu0
    %v4015 = vadd.f32 0.0, %v4014
    %v4016 = vpop.f32.mrf.mxu0
    %4017 = vdwg.mxu0
    %v4018 = vmul.f32 %v3989, 0.35355338
    %v4019 = vmul.f32 %v4015, 0.35355338
    %v4020 = vadd.f32 %v4018, %v1729
    %v4021 = vadd.f32 %v4019, %v1730
    %v4022 = vsel %vm280, %v4020, -inf
    %4023 = vmax.xlane.f32.xlu0 %v4022
    %v4024 = vpop.xlane.xlu0 %4023
    %v4025 = vsel %vm280, %v4021, -inf
    %4026 = vmax.xlane.f32.xlu0 %v4025
    %v4027 = vpop.xlane.xlu0 %4026
    %v4028 = vsub.f32 %v4020, %v4024
    %v4029 = vsub.f32 %v4021, %v4027
    %v4030 = vmul.f32 %v4028, 1.442695
    %v4031 = vpow.pop %v4030
    %v4032 = vmul.f32 %v4029, 1.442695
    %v4033 = vpow.pop %v4032
    %v4034 = vsel %vm280, %v4031, 0.0
    %4035 = vadd.xlane.f32.xlu0 %v4034
    %v4036 = vpop.xlane.xlu0 %4035
    %v4037 = vsel %vm280, %v4033, 0.0
    %4038 = vadd.xlane.f32.xlu0 %v4037
    %v4039 = vpop.xlane.xlu0 %4038
    %v4040 = vrcp.pop %v4036
    %v4041 = vrcp.pop %v4039
    %v4042 = vmul.f32 %v4031, %v4040
    %v4043 = vmul.f32 %v4033, %v4041
    %v4044 = vpack.c.bf16 %v4042, %v4042
    %v4045 = vpack.c.bf16 %v4043, %v4043
    %4046 = vrot.lane.b32.xlu0 %v3920, 88
    %v4047 = vpop.permute.xlu0 %4046
    %v4049 = vsel %vm280, %v4044, 0
    %v4052 = vsel %vm357, %v4047, 0
    %4054 = vmatpush.bf16.msra.mxu0 0
    %4055 = vmatpush.bf16.msra.mxu0 0
    %4056 = vmatpush.bf16.msra.mxu0 0
    %4057 = vmatpush.bf16.msra.mxu0 0
    %4058 = vmatpush.bf16.msra.mxu0 0
    %4059 = vmatpush.bf16.msra.mxu0 0
    %4060 = vmatpush.bf16.msra.mxu0 0
    %4061 = vmatpush.bf16.msra.mxu0 %v4052
    %4062 = vmatmul.bf16.gmra.mxu0 %v4049
    %v4063 = vpop.f32.mrf.mxu0
    %v4064 = vadd.f32 0.0, %v4063
    %v4065 = vpop.f32.mrf.mxu0
    %4066 = vdwg.mxu0
    %4067 = vrot.lane.b32.xlu0 %v3944, 88
    %v4068 = vpop.permute.xlu0 %4067
    %v4070 = vsel %vm280, %v4045, 0
    %v4073 = vsel %vm357, %v4068, 0
    %4075 = vmatpush.bf16.msra.mxu0 0
    %4076 = vmatpush.bf16.msra.mxu0 0
    %4077 = vmatpush.bf16.msra.mxu0 0
    %4078 = vmatpush.bf16.msra.mxu0 0
    %4079 = vmatpush.bf16.msra.mxu0 0
    %4080 = vmatpush.bf16.msra.mxu0 0
    %4081 = vmatpush.bf16.msra.mxu0 0
    %4082 = vmatpush.bf16.msra.mxu0 %v4073
    %4083 = vmatmul.bf16.gmra.mxu0 %v4070
    %v4084 = vpop.f32.mrf.mxu0
    %v4085 = vadd.f32 0.0, %v4084
    %v4086 = vpop.f32.mrf.mxu0
    %4087 = vdwg.mxu0
    %4088 = vrot.lane.b32.xlu0 %v3968, 112
    %v4089 = vpop.permute.xlu0 %4088
    %4090 = vrot.lane.b32.xlu0 %v3920, 112
    %v4091 = vpop.permute.xlu0 %4090
    %v4093 = vsel %vm280, %v4089, 0
    %v4096 = vsel %vm280, %v4091, 0
    %4098 = vmatpush.bf16.xpose.msra.mxu0 0
    %4099 = vmatpush.bf16.xpose.msra.mxu0 0
    %4100 = vmatpush.bf16.xpose.msra.mxu0 0
    %4101 = vmatpush.bf16.xpose.msra.mxu0 0
    %4102 = vmatpush.bf16.xpose.msra.mxu0 0
    %4103 = vmatpush.bf16.xpose.msra.mxu0 0
    %4104 = vmatpush.bf16.xpose.msra.mxu0 0
    %4105 = vmatpush.bf16.xpose.msra.mxu0 %v4096
    %4106 = vmatmul.bf16.gmra.mxu0 %v4093
    %v4107 = vpop.f32.mrf.mxu0
    %v4108 = vadd.f32 0.0, %v4107
    %v4109 = vpop.f32.mrf.mxu0
    %4110 = vdwg.mxu0
    %4111 = vrot.lane.b32.xlu0 %v3994, 112
    %v4112 = vpop.permute.xlu0 %4111
    %4113 = vrot.lane.b32.xlu0 %v3944, 112
    %v4114 = vpop.permute.xlu0 %4113
    %v4116 = vsel %vm280, %v4112, 0
    %v4119 = vsel %vm280, %v4114, 0
    %4121 = vmatpush.bf16.xpose.msra.mxu0 0
    %4122 = vmatpush.bf16.xpose.msra.mxu0 0
    %4123 = vmatpush.bf16.xpose.msra.mxu0 0
    %4124 = vmatpush.bf16.xpose.msra.mxu0 0
    %4125 = vmatpush.bf16.xpose.msra.mxu0 0
    %4126 = vmatpush.bf16.xpose.msra.mxu0 0
    %4127 = vmatpush.bf16.xpose.msra.mxu0 0
    %4128 = vmatpush.bf16.xpose.msra.mxu0 %v4119
    %4129 = vmatmul.bf16.gmra.mxu0 %v4116
    %v4130 = vpop.f32.mrf.mxu0
    %v4131 = vadd.f32 0.0, %v4130
    %v4132 = vpop.f32.mrf.mxu0
    %4133 = vdwg.mxu0
    %v4134 = vmul.f32 %v4108, 0.35355338
    %v4135 = vmul.f32 %v4131, 0.35355338
    %v4136 = vadd.f32 %v4134, %v1729
    %v4137 = vadd.f32 %v4135, %v1730
    %v4138 = vsel %vm280, %v4136, -inf
    %4139 = vmax.xlane.f32.xlu0 %v4138
    %v4140 = vpop.xlane.xlu0 %4139
    %v4141 = vsel %vm280, %v4137, -inf
    %4142 = vmax.xlane.f32.xlu0 %v4141
    %v4143 = vpop.xlane.xlu0 %4142
    %v4144 = vsub.f32 %v4136, %v4140
    %v4145 = vsub.f32 %v4137, %v4143
    %v4146 = vmul.f32 %v4144, 1.442695
    %v4147 = vpow.pop %v4146
    %v4148 = vmul.f32 %v4145, 1.442695
    %v4149 = vpow.pop %v4148
    %v4150 = vsel %vm280, %v4147, 0.0
    %4151 = vadd.xlane.f32.xlu0 %v4150
    %v4152 = vpop.xlane.xlu0 %4151
    %v4153 = vsel %vm280, %v4149, 0.0
    %4154 = vadd.xlane.f32.xlu0 %v4153
    %v4155 = vpop.xlane.xlu0 %4154
    %v4156 = vrcp.pop %v4152
    %v4157 = vrcp.pop %v4155
    %v4158 = vmul.f32 %v4147, %v4156
    %v4159 = vmul.f32 %v4149, %v4157
    %v4160 = vpack.c.bf16 %v4158, %v4158
    %v4161 = vpack.c.bf16 %v4159, %v4159
    %4162 = vrot.lane.b32.xlu0 %v3920, 80
    %v4163 = vpop.permute.xlu0 %4162
    %v4165 = vsel %vm280, %v4160, 0
    %v4168 = vsel %vm357, %v4163, 0
    %4170 = vmatpush.bf16.msra.mxu0 0
    %4171 = vmatpush.bf16.msra.mxu0 0
    %4172 = vmatpush.bf16.msra.mxu0 0
    %4173 = vmatpush.bf16.msra.mxu0 0
    %4174 = vmatpush.bf16.msra.mxu0 0
    %4175 = vmatpush.bf16.msra.mxu0 0
    %4176 = vmatpush.bf16.msra.mxu0 0
    %4177 = vmatpush.bf16.msra.mxu0 %v4168
    %4178 = vmatmul.bf16.gmra.mxu0 %v4165
    %v4179 = vpop.f32.mrf.mxu0
    %v4180 = vadd.f32 0.0, %v4179
    %v4181 = vpop.f32.mrf.mxu0
    %4182 = vdwg.mxu0
    %4183 = vrot.lane.b32.xlu0 %v3944, 80
    %v4184 = vpop.permute.xlu0 %4183
    %v4186 = vsel %vm280, %v4161, 0
    %v4189 = vsel %vm357, %v4184, 0
    %4191 = vmatpush.bf16.msra.mxu0 0
    %4192 = vmatpush.bf16.msra.mxu0 0
    %4193 = vmatpush.bf16.msra.mxu0 0
    %4194 = vmatpush.bf16.msra.mxu0 0
    %4195 = vmatpush.bf16.msra.mxu0 0
    %4196 = vmatpush.bf16.msra.mxu0 0
    %4197 = vmatpush.bf16.msra.mxu0 0
    %4198 = vmatpush.bf16.msra.mxu0 %v4189
    %4199 = vmatmul.bf16.gmra.mxu0 %v4186
    %v4200 = vpop.f32.mrf.mxu0
    %v4201 = vadd.f32 0.0, %v4200
    %v4202 = vpop.f32.mrf.mxu0
    %4203 = vdwg.mxu0
    %4204 = vrot.lane.b32.xlu0 %v3968, 104
    %v4205 = vpop.permute.xlu0 %4204
    %4206 = vrot.lane.b32.xlu0 %v3920, 104
    %v4207 = vpop.permute.xlu0 %4206
    %v4209 = vsel %vm280, %v4205, 0
    %v4212 = vsel %vm280, %v4207, 0
    %4214 = vmatpush.bf16.xpose.msra.mxu0 0
    %4215 = vmatpush.bf16.xpose.msra.mxu0 0
    %4216 = vmatpush.bf16.xpose.msra.mxu0 0
    %4217 = vmatpush.bf16.xpose.msra.mxu0 0
    %4218 = vmatpush.bf16.xpose.msra.mxu0 0
    %4219 = vmatpush.bf16.xpose.msra.mxu0 0
    %4220 = vmatpush.bf16.xpose.msra.mxu0 0
    %4221 = vmatpush.bf16.xpose.msra.mxu0 %v4212
    %4222 = vmatmul.bf16.gmra.mxu0 %v4209
    %v4223 = vpop.f32.mrf.mxu0
    %v4224 = vadd.f32 0.0, %v4223
    %v4225 = vpop.f32.mrf.mxu0
    %4226 = vdwg.mxu0
    %4227 = vrot.lane.b32.xlu0 %v3994, 104
    %v4228 = vpop.permute.xlu0 %4227
    %4229 = vrot.lane.b32.xlu0 %v3944, 104
    %v4230 = vpop.permute.xlu0 %4229
    %v4232 = vsel %vm280, %v4228, 0
    %v4235 = vsel %vm280, %v4230, 0
    %4237 = vmatpush.bf16.xpose.msra.mxu0 0
    %4238 = vmatpush.bf16.xpose.msra.mxu0 0
    %4239 = vmatpush.bf16.xpose.msra.mxu0 0
    %4240 = vmatpush.bf16.xpose.msra.mxu0 0
    %4241 = vmatpush.bf16.xpose.msra.mxu0 0
    %4242 = vmatpush.bf16.xpose.msra.mxu0 0
    %4243 = vmatpush.bf16.xpose.msra.mxu0 0
    %4244 = vmatpush.bf16.xpose.msra.mxu0 %v4235
    %4245 = vmatmul.bf16.gmra.mxu0 %v4232
    %v4246 = vpop.f32.mrf.mxu0
    %v4247 = vadd.f32 0.0, %v4246
    %v4248 = vpop.f32.mrf.mxu0
    %4249 = vdwg.mxu0
    %v4250 = vmul.f32 %v4224, 0.35355338
    %v4251 = vmul.f32 %v4247, 0.35355338
    %v4252 = vadd.f32 %v4250, %v1729
    %v4253 = vadd.f32 %v4251, %v1730
    %v4254 = vsel %vm280, %v4252, -inf
    %4255 = vmax.xlane.f32.xlu0 %v4254
    %v4256 = vpop.xlane.xlu0 %4255
    %v4257 = vsel %vm280, %v4253, -inf
    %4258 = vmax.xlane.f32.xlu0 %v4257
    %v4259 = vpop.xlane.xlu0 %4258
    %v4260 = vsub.f32 %v4252, %v4256
    %v4261 = vsub.f32 %v4253, %v4259
    %v4262 = vmul.f32 %v4260, 1.442695
    %v4263 = vpow.pop %v4262
    %v4264 = vmul.f32 %v4261, 1.442695
    %v4265 = vpow.pop %v4264
    %v4266 = vsel %vm280, %v4263, 0.0
    %4267 = vadd.xlane.f32.xlu0 %v4266
    %v4268 = vpop.xlane.xlu0 %4267
    %v4269 = vsel %vm280, %v4265, 0.0
    %4270 = vadd.xlane.f32.xlu0 %v4269
    %v4271 = vpop.xlane.xlu0 %4270
    %v4272 = vrcp.pop %v4268
    %v4273 = vrcp.pop %v4271
    %v4274 = vmul.f32 %v4263, %v4272
    %v4275 = vmul.f32 %v4265, %v4273
    %v4276 = vpack.c.bf16 %v4274, %v4274
    %v4277 = vpack.c.bf16 %v4275, %v4275
    %4278 = vrot.lane.b32.xlu0 %v3920, 72
    %v4279 = vpop.permute.xlu0 %4278
    %v4281 = vsel %vm280, %v4276, 0
    %v4284 = vsel %vm357, %v4279, 0
    %4286 = vmatpush.bf16.msra.mxu0 0
    %4287 = vmatpush.bf16.msra.mxu0 0
    %4288 = vmatpush.bf16.msra.mxu0 0
    %4289 = vmatpush.bf16.msra.mxu0 0
    %4290 = vmatpush.bf16.msra.mxu0 0
    %4291 = vmatpush.bf16.msra.mxu0 0
    %4292 = vmatpush.bf16.msra.mxu0 0
    %4293 = vmatpush.bf16.msra.mxu0 %v4284
    %4294 = vmatmul.bf16.gmra.mxu0 %v4281
    %v4295 = vpop.f32.mrf.mxu0
    %v4296 = vadd.f32 0.0, %v4295
    %v4297 = vpop.f32.mrf.mxu0
    %4298 = vdwg.mxu0
    %4299 = vrot.lane.b32.xlu0 %v3944, 72
    %v4300 = vpop.permute.xlu0 %4299
    %v4302 = vsel %vm280, %v4277, 0
    %v4305 = vsel %vm357, %v4300, 0
    %4307 = vmatpush.bf16.msra.mxu0 0
    %4308 = vmatpush.bf16.msra.mxu0 0
    %4309 = vmatpush.bf16.msra.mxu0 0
    %4310 = vmatpush.bf16.msra.mxu0 0
    %4311 = vmatpush.bf16.msra.mxu0 0
    %4312 = vmatpush.bf16.msra.mxu0 0
    %4313 = vmatpush.bf16.msra.mxu0 0
    %4314 = vmatpush.bf16.msra.mxu0 %v4305
    %4315 = vmatmul.bf16.gmra.mxu0 %v4302
    %v4316 = vpop.f32.mrf.mxu0
    %v4317 = vadd.f32 0.0, %v4316
    %v4318 = vpop.f32.mrf.mxu0
    %4319 = vdwg.mxu0
    %4322 = vrot.lane.b32.xlu0 %v4064, 8
    %v4323 = vpop.permute.xlu0 %4322
    %4324 = vrot.lane.b32.xlu0 %v4085, 8
    %v4325 = vpop.permute.xlu0 %4324
    %4330 = vrot.lane.b32.xlu0 %v4180, 16
    %v4331 = vpop.permute.xlu0 %4330
    %4332 = vrot.lane.b32.xlu0 %v4201, 16
    %v4333 = vpop.permute.xlu0 %4332
    %4338 = vrot.lane.b32.xlu0 %v4296, 24
    %v4339 = vpop.permute.xlu0 %4338
    %4340 = vrot.lane.b32.xlu0 %v4317, 24
    %v4341 = vpop.permute.xlu0 %4340
    %v4344 = vsel %vm280, %v3939, %v4323
    %v4345 = vsel %vm280, %v3963, %v4325
    %v4346 = vsel %vm769, %v4344, %v4331
    %v4347 = vsel %vm769, %v4345, %v4333
    %v4348 = vsel %vm772, %v4346, %v4339
    %v4349 = vsel %vm772, %v4347, %v4341
    %v4350 = vpack.c.bf16 %v4349, %v4348
    %v4351 = vpack.c.bf16 %v3801, %v3800
    %v4352 = vpack.c.bf16 %v3803, %v3802
    %v4354 = vperm.slane %v3805, 0
    %v4357 = vsel %vm178, %v4350, 0
    %4359 = vmatpush.bf16.msra.mxu0 0
    %4360 = vmatpush.bf16.msra.mxu0 0
    %4361 = vmatpush.bf16.msra.mxu0 0
    %4362 = vmatpush.bf16.msra.mxu0 0
    %4363 = vmatpush.bf16.msra.mxu0 0
    %4364 = vmatpush.bf16.msra.mxu0 0
    %4365 = vmatpush.bf16.msra.mxu0 %v4352
    %4366 = vmatpush.bf16.msra.mxu0 %v4351
    %4367 = vmatmul.bf16.gmra.mxu0 %v4357
    %v4368 = vpop.f32.mrf.mxu0
    %v4369 = vadd.f32 %v4354, %v4368
    %v4370 = vpop.f32.mrf.mxu0
    %v4371 = vadd.f32 %v4354, %v4370
    %4372 = vdwg.mxu0
    %v4373 = vadd.f32 %v3725, %v4369
    %v4374 = vadd.f32 %v3726, %v4371
    %s4375 = scalar_lea.vmem %s75, 1
    %v4376 = vld [vmem:[%s4375] sm:$0x1]
    %s4377 = scalar_lea.vmem %s77, 1
    %v4378 = vld [vmem:[%s4377] sm:$0x1]
    %v4379 = vsel %vm178, %v4373, 0.0
    %4380 = vadd.xlane.f32.xlu0 %v4379
    %v4381 = vpop.xlane.xlu0 %4380
    %v4382 = vsel %vm178, %v4374, 0.0
    %4383 = vadd.xlane.f32.xlu0 %v4382
    %v4384 = vpop.xlane.xlu0 %4383
    %v4385 = vmul.f32 %v4381, %v191
    %v4386 = vmul.f32 %v4384, %v191
    %v4387 = vsub.f32 %v4373, %v4385
    %v4388 = vsub.f32 %v4374, %v4386
    %v4389 = vmul.f32 %v4387, %v4387
    %v4390 = vmul.f32 %v4388, %v4388
    %v4391 = vsel %vm178, %v4389, 0.0
    %4392 = vadd.xlane.f32.xlu0 %v4391
    %v4393 = vpop.xlane.xlu0 %4392
    %v4394 = vsel %vm178, %v4390, 0.0
    %4395 = vadd.xlane.f32.xlu0 %v4394
    %v4396 = vpop.xlane.xlu0 %4395
    %v4397 = vmul.f32 %v4393, %v191
    %v4398 = vmul.f32 %v4396, %v191
    %v4399 = vadd.f32 %v4397, 1e-06
    %v4400 = vadd.f32 %v4398, 1e-06
    %v4401 = vrsqrt.pop %v4399
    %v4402 = vmul.f32 %v4401, %v4399
    %v4403 = vmul.f32 %v4402, %v4401
    %v4404 = vmul.f32 0.5, %v4403
    %v4405 = vsub.f32 1.5, %v4404
    %v4406 = vmul.f32 %v4401, %v4405
    %vm4407 = vweird.f32 %v4399
    %vm4408 = vweird.f32 %v4401
    %vm4409 = vmor %vm4407, %vm4408
    %v4410 = vsel %vm4409, %v4401, %v4406
    %v4411 = vrsqrt.pop %v4400
    %v4412 = vmul.f32 %v4411, %v4400
    %v4413 = vmul.f32 %v4412, %v4411
    %v4414 = vmul.f32 0.5, %v4413
    %v4415 = vsub.f32 1.5, %v4414
    %v4416 = vmul.f32 %v4411, %v4415
    %vm4417 = vweird.f32 %v4400
    %vm4418 = vweird.f32 %v4411
    %vm4419 = vmor %vm4417, %vm4418
    %v4420 = vsel %vm4419, %v4411, %v4416
    %v4421 = vmul.f32 %v4387, %v4410
    %v4422 = vmul.f32 %v4388, %v4420
    %v4424 = vperm.slane %v4376, 0
    %v4426 = vmul.f32 %v4421, %v4424
    %v4427 = vmul.f32 %v4422, %v4424
    %v4429 = vperm.slane %v4378, 0
    %v4431 = vadd.f32 %v4426, %v4429
    %v4432 = vadd.f32 %v4427, %v4429
    %s4433 = scalar_lea.vmem %s59, 32
    %v4434 = vld [vmem:[%s4433] sm:$0xff]
    %v4435 = vld [vmem:[%s4433 + $0x8] sm:$0xff]
    %v4436 = vld [vmem:[%s4433 + $0x10] sm:$0xff]
    %v4437 = vld [vmem:[%s4433 + $0x18] sm:$0xff]
    %s4438 = scalar_lea.vmem %s61, 1
    %v4439 = vld [vmem:[%s4438] sm:$0x1]
    %s4440 = scalar_lea.vmem %s63, 64
    %v4441 = vld [vmem:[%s4440] sm:$0xff]
    %v4442 = vld [vmem:[%s4440 + $0x8] sm:$0xff]
    %v4443 = vld [vmem:[%s4440 + $0x10] sm:$0xff]
    %v4444 = vld [vmem:[%s4440 + $0x18] sm:$0xff]
    %v4445 = vld [vmem:[%s4440 + $0x20] sm:$0xff]
    %v4446 = vld [vmem:[%s4440 + $0x28] sm:$0xff]
    %v4447 = vld [vmem:[%s4440 + $0x30] sm:$0xff]
    %v4448 = vld [vmem:[%s4440 + $0x38] sm:$0xff]
    %s4449 = scalar_lea.vmem %s65, 1
    %v4450 = vld [vmem:[%s4449] sm:$0x1]
    %v4451 = vpack.c.bf16 %v4432, %v4431
    %v4452 = vpack.c.bf16 %v4435, %v4434
    %v4453 = vpack.c.bf16 %v4437, %v4436
    %v4455 = vperm.slane %v4439, 0
    %v4458 = vsel %vm178, %v4451, 0
    %4460 = vmatpush.bf16.msra.mxu0 0
    %4461 = vmatpush.bf16.msra.mxu0 0
    %4462 = vmatpush.bf16.msra.mxu0 0
    %4463 = vmatpush.bf16.msra.mxu0 0
    %4464 = vmatpush.bf16.msra.mxu0 0
    %4465 = vmatpush.bf16.msra.mxu0 0
    %4466 = vmatpush.bf16.msra.mxu0 %v4453
    %4467 = vmatpush.bf16.msra.mxu0 %v4452
    %4468 = vmatmul.bf16.gmra.mxu0 %v4458
    %v4469 = vpop.f32.mrf.mxu0
    %v4470 = vadd.f32 %v4455, %v4469
    %v4471 = vpop.f32.mrf.mxu0
    %v4472 = vadd.f32 %v4455, %v4471
    %4473 = vdwg.mxu0
    %v4474 = vmax.f32 %v4470, 0.0
    %v4475 = vmax.f32 %v4472, 0.0
    %v4476 = vpack.c.bf16 %v4475, %v4474
    %v4477 = vpack.c.bf16 %v4442, %v4441
    %v4478 = vpack.c.bf16 %v4444, %v4443
    %v4479 = vpack.c.bf16 %v4446, %v4445
    %v4480 = vpack.c.bf16 %v4448, %v4447
    %v4482 = vperm.slane %v4450, 0
    %v4485 = vsel %vm903, %v4476, 0
    %4487 = vmatpush.bf16.msra.mxu0 0
    %4488 = vmatpush.bf16.msra.mxu0 0
    %4489 = vmatpush.bf16.msra.mxu0 0
    %4490 = vmatpush.bf16.msra.mxu0 0
    %4491 = vmatpush.bf16.msra.mxu0 %v4480
    %4492 = vmatpush.bf16.msra.mxu0 %v4479
    %4493 = vmatpush.bf16.msra.mxu0 %v4478
    %4494 = vmatpush.bf16.msra.mxu0 %v4477
    %4495 = vmatmul.bf16.gmra.mxu0 %v4485
    %v4496 = vpop.f32.mrf.mxu0
    %v4497 = vadd.f32 %v4482, %v4496
    %v4498 = vpop.f32.mrf.mxu0
    %v4499 = vadd.f32 %v4482, %v4498
    %4500 = vdwg.mxu0
    %v4501 = vadd.f32 %v4373, %v4497
    %v4502 = vadd.f32 %v4374, %v4499
    %v4503 = vld [vmem:[%s79] sm:$0x1]
    %v4504 = vld [vmem:[%s81] sm:$0x1]
    %v4505 = vsel %vm178, %v4501, 0.0
    %4506 = vadd.xlane.f32.xlu0 %v4505
    %v4507 = vpop.xlane.xlu0 %4506
    %v4508 = vsel %vm178, %v4502, 0.0
    %4509 = vadd.xlane.f32.xlu0 %v4508
    %v4510 = vpop.xlane.xlu0 %4509
    %v4511 = vmul.f32 %v4507, %v191
    %v4512 = vmul.f32 %v4510, %v191
    %v4513 = vsub.f32 %v4501, %v4511
    %v4514 = vsub.f32 %v4502, %v4512
    %v4515 = vmul.f32 %v4513, %v4513
    %v4516 = vmul.f32 %v4514, %v4514
    %v4517 = vsel %vm178, %v4515, 0.0
    %4518 = vadd.xlane.f32.xlu0 %v4517
    %v4519 = vpop.xlane.xlu0 %4518
    %v4520 = vsel %vm178, %v4516, 0.0
    %4521 = vadd.xlane.f32.xlu0 %v4520
    %v4522 = vpop.xlane.xlu0 %4521
    %v4523 = vmul.f32 %v4519, %v191
    %v4524 = vmul.f32 %v4522, %v191
    %v4525 = vadd.f32 %v4523, 1e-06
    %v4526 = vadd.f32 %v4524, 1e-06
    %v4527 = vrsqrt.pop %v4525
    %v4528 = vmul.f32 %v4527, %v4525
    %v4529 = vmul.f32 %v4528, %v4527
    %v4530 = vmul.f32 0.5, %v4529
    %v4531 = vsub.f32 1.5, %v4530
    %v4532 = vmul.f32 %v4527, %v4531
    %vm4533 = vweird.f32 %v4525
    %vm4534 = vweird.f32 %v4527
    %vm4535 = vmor %vm4533, %vm4534
    %v4536 = vsel %vm4535, %v4527, %v4532
    %v4537 = vrsqrt.pop %v4526
    %v4538 = vmul.f32 %v4537, %v4526
    %v4539 = vmul.f32 %v4538, %v4537
    %v4540 = vmul.f32 0.5, %v4539
    %v4541 = vsub.f32 1.5, %v4540
    %v4542 = vmul.f32 %v4537, %v4541
    %vm4543 = vweird.f32 %v4526
    %vm4544 = vweird.f32 %v4537
    %vm4545 = vmor %vm4543, %vm4544
    %v4546 = vsel %vm4545, %v4537, %v4542
    %v4547 = vmul.f32 %v4513, %v4536
    %v4548 = vmul.f32 %v4514, %v4546
    %v4550 = vperm.slane %v4503, 0
    %v4552 = vmul.f32 %v4547, %v4550
    %v4553 = vmul.f32 %v4548, %v4550
    %v4555 = vperm.slane %v4504, 0
    %v4557 = vadd.f32 %v4552, %v4555
    %v4558 = vadd.f32 %v4553, %v4555
    %4559 = vst.msk [vmem:[#allocation2] sm:$0xff] %vm178, %v4557
    %4560 = vst.msk [vmem:[#allocation2 + $0x8] sm:$0xff] %vm178, %v4558
    // Predicated region
    $region166: #{transformer_forward.1} parent=1 // pred_check
      _
    $region167: #{transformer_forward.1} parent=1 // pred_check_branch
      %4562 = sbr.rel (0) target = $region169
    $region168: #{transformer_forward.1} parent=1 // pred_region
      %4564 = vsyncadd [#allocation3], 0
      %s4565 = sshll.u32 [#allocation2], 4
      %s4566 = int_to_ptr.vmem [resolvable:$true] %s4565
      %s4567 = sshll.u32 %s83, 4
      %s4568 = int_to_ptr.hbm [resolvable:$true] %s4567
      %4573 = dma.vmem_to_hbm [thread:$0]  %s4566, 256, %s4568, [#allocation3], 128, 128, 8
    $region169: #{transformer_forward.1} parent=1 // pred_fallthru
      _
    // Predicated region
    $region170: #{transformer_forward.1} parent=1 // pred_check
      _
    $region171: #{transformer_forward.1} parent=1 // pred_check_branch
      %4575 = sbr.rel (0) target = $region173
    $region172: #{transformer_forward.1} parent=1 // pred_region
      %4577 = dma.done [#allocation3], 256
    $region173: #{transformer_forward.1} parent=1 // pred_fallthru
      _
    %4578 = vsyncpa [#allocation3], 1

</llo_original>
